<compile_context>
chip_gen: v7x
topology: tpu7x:2x2x1
jax: 0.10.0
libtpu: 0.0.40
codegen_flags: <defaults>
</compile_context>

<pallas_src>
import jax
import jax.numpy as jnp
from jax.experimental import pallas as pl
from jax.experimental.pallas import tpu as pltpu


HIDDEN = (256, 512, 1024)


# --------------------------------------------------------------------------- #
# Kernel
# --------------------------------------------------------------------------- #
def _act_bf16(acc_f32, bias_bf16, slope=0.2):
    """Bias add + LeakyReLU + cast for the next matmul, all in bf16.
    max-form LeakyReLU: 1 mul + 1 max instead of cmp + select + mul."""
    v = acc_f32.astype(jnp.bfloat16) + bias_bf16
    return jnp.maximum(v, slope * v)


def generator_kernel(x_ref,
                     w1_ref, b1_ref,
                     w2_ref, b2_ref,
                     w3_ref, b3_ref,
                     w4_ref, b4_ref,
                     o_ref):
    # x is already bf16 and z-padded; all matmuls accumulate in f32 on the MXU.
    h = jnp.dot(x_ref[...], w1_ref[...], preferred_element_type=jnp.float32)
    h = _act_bf16(h, b1_ref[...])
    h = jnp.dot(h, w2_ref[...], preferred_element_type=jnp.float32)
    h = _act_bf16(h, b2_ref[...])
    h = jnp.dot(h, w3_ref[...], preferred_element_type=jnp.float32)
    h = _act_bf16(h, b3_ref[...])
    h = jnp.dot(h, w4_ref[...], preferred_element_type=jnp.float32)
    # Final layer: bias + tanh in f32 (EUP), padded columns give tanh(0)=0.
    o_ref[...] = jnp.tanh(h + b4_ref[...]).astype(o_ref.dtype)


# --------------------------------------------------------------------------- #
# Parameter handling
# --------------------------------------------------------------------------- #
def init_generator_params(key, z_dim, image_dim):
    """f32 init mimicking PyTorch's default Linear init (U(+/- 1/sqrt(fan_in))).
    Weights are stored (in, out); biases (1, out)."""
    dims = [(z_dim, HIDDEN[0]), (HIDDEN[0], HIDDEN[1]),
            (HIDDEN[1], HIDDEN[2]), (HIDDEN[2], image_dim)]
    params = {}
    for i, (fin, fout) in enumerate(dims, start=1):
        key, kw, kb = jax.random.split(key, 3)
        bound = 1.0 / (fin ** 0.5)
        params[f"w{i}"] = jax.random.uniform(
            kw, (fin, fout), jnp.float32, minval=-bound, maxval=bound)
        params[f"b{i}"] = jax.random.uniform(
            kb, (1, fout), jnp.float32, minval=-bound, maxval=bound)
    return params


def prepare_kernel_params(params, z_dim):
    """Kernel layout: bf16 weights, bf16 biases for hidden layers, f32 bias for
    the output layer; w1 rows padded to a multiple of 128 (lane-dense z), last
    layer output axis padded to a multiple of 128."""
    image_dim = params["w4"].shape[1]
    out_pad = pl.cdiv(image_dim, 128) * 128
    z_pad = pl.cdiv(z_dim, 128) * 128
    kp = {
        "w1": jnp.pad(params["w1"], ((0, z_pad - z_dim), (0, 0))).astype(jnp.bfloat16),
        "b1": params["b1"].astype(jnp.bfloat16),
        "w2": params["w2"].astype(jnp.bfloat16),
        "b2": params["b2"].astype(jnp.bfloat16),
        "w3": params["w3"].astype(jnp.bfloat16),
        "b3": params["b3"].astype(jnp.bfloat16),
        "w4": jnp.pad(params["w4"],
                      ((0, 0), (0, out_pad - image_dim))).astype(jnp.bfloat16),
        "b4": jnp.pad(params["b4"],
                      ((0, 0), (0, out_pad - image_dim))).astype(jnp.float32),
    }
    return kp


# --------------------------------------------------------------------------- #
# Forward wrapper
# --------------------------------------------------------------------------- #
def _pick_tile_m(batch):
    """Batch tile: big enough to fill the 256-wide MXU on v6e/v7x, but always
    yielding >= 2 grid steps when the batch allows it (v7x has 2 TensorCores)."""
    if batch >= 512:
        return 256
    if batch >= 256:
        return 128
    if batch >= 16:
        return ((batch + 1) // 2 + 7) // 8 * 8   # ~half the batch, sublane-aligned
    return max(8, (batch + 7) // 8 * 8)


def _cost_estimate(batch, z_pad, out_pad):
    mac = (z_pad * HIDDEN[0] + HIDDEN[0] * HIDDEN[1]
           + HIDDEN[1] * HIDDEN[2] + HIDDEN[2] * out_pad)
    weight_bytes = 2 * mac                      # bf16 weights
    bias_bytes = 2 * sum(HIDDEN) + 4 * out_pad
    io_bytes = 2 * batch * z_pad + 4 * batch * out_pad
    return pl.CostEstimate(flops=2 * batch * mac,
                           transcendentals=batch * out_pad,
                           bytes_accessed=weight_bytes + bias_bytes + io_bytes)


_PARAM_ORDER = ("w1", "b1", "w2", "b2", "w3", "b3", "w4", "b4")


def generator_forward(x, kparams, image_dim):
    """x: (B, z_dim) f32.  Returns (B, image_dim) f32."""
    B, z_dim = x.shape
    z_pad = kparams["w1"].shape[0]
    out_pad = kparams["w4"].shape[1]

    tile_m = _pick_tile_m(B)
    b_pad = pl.cdiv(B, tile_m) * tile_m
    grid = (b_pad // tile_m,)

    # Pad batch & latent dims, pre-cast to bf16 (lane-dense MXU feed, no
    # in-kernel cast of x).
    x_p = jnp.pad(x, ((0, b_pad - B), (0, z_pad - z_dim))).astype(jnp.bfloat16)
    args = (x_p,) + tuple(kparams[n] for n in _PARAM_ORDER)

    def run(single_buffer_weights):
        in_specs = [pl.BlockSpec((tile_m, z_pad), lambda i: (i, 0))]
        for name in _PARAM_ORDER:
            shape = kparams[name].shape
            if single_buffer_weights:
                # Constant index_map -> operand stays resident; single-buffer it
                # to avoid wasting VMEM on a second copy.
                spec = pl.BlockSpec(shape, lambda i: (0, 0),
                                    pipeline_mode=pl.Buffered(1))
            else:
                spec = pl.BlockSpec(shape, lambda i: (0, 0))
            in_specs.append(spec)
        out_specs = pl.BlockSpec((tile_m, out_pad), lambda i: (i, 0))

        return pl.pallas_call(
            generator_kernel,
            out_shape=jax.ShapeDtypeStruct((b_pad, out_pad), jnp.float32),
            grid=grid,
            in_specs=in_specs,
            out_specs=out_specs,
            compiler_params=pltpu.CompilerParams(
                dimension_semantics=("parallel",),
                vmem_limit_bytes=24 << 20),
            cost_estimate=_cost_estimate(b_pad, z_pad, out_pad),
        )(*args)

    try:
        out = run(single_buffer_weights=True)
    except Exception:
        # Fallback for jax builds where pipeline_mode on the top-level grid is
        # not supported; double-buffered weights still fit comfortably in VMEM.
        out = run(single_buffer_weights=False)

    return out[:B, :image_dim]


# --------------------------------------------------------------------------- #
# References
# --------------------------------------------------------------------------- #
def generator_reference_f32(x, params):
    """Pure-f32 JAX reference (matches the PyTorch module)."""
    h = x @ params["w1"] + params["b1"]
    h = jnp.where(h > 0, h, 0.2 * h)
    h = h @ params["w2"] + params["b2"]
    h = jnp.where(h > 0, h, 0.2 * h)
    h = h @ params["w3"] + params["b3"]
    h = jnp.where(h > 0, h, 0.2 * h)
    h = h @ params["w4"] + params["b4"]
    return jnp.tanh(h)


def generator_reference_kernel_numerics(x, kparams, image_dim):
    """Reference that mirrors the kernel's numerics (bf16 matmul inputs, f32
    accumulation, bf16 bias/activation path) for a tight correctness check."""
    z_dim = x.shape[1]
    z_pad = kparams["w1"].shape[0]
    xb = jnp.pad(x, ((0, 0), (0, z_pad - z_dim))).astype(jnp.bfloat16)

    def act(acc, b):
        v = acc.astype(jnp.bfloat16) + b
        return jnp.maximum(v, 0.2 * v)

    h = act(jnp.dot(xb, kparams["w1"], preferred_element_type=jnp.float32),
            kparams["b1"])
    h = act(jnp.dot(h, kparams["w2"], preferred_element_type=jnp.float32),
            kparams["b2"])
    h = act(jnp.dot(h, kparams["w3"], preferred_element_type=jnp.float32),
            kparams["b3"])
    h = jnp.dot(h, kparams["w4"], preferred_element_type=jnp.float32) + kparams["b4"]
    return jnp.tanh(h)[:, :image_dim]


# --------------------------------------------------------------------------- #
# Self-test
# --------------------------------------------------------------------------- #
if __name__ == "__main__":
    Z_DIM = 64        # latent dim
    IMAGE_DIM = 784   # 28*28 MNIST

    key = jax.random.PRNGKey(0)
    key, kx_small, kx_rag, kx_big = jax.random.split(key, 4)
    params = init_generator_params(key, Z_DIM, IMAGE_DIM)
    kparams = prepare_kernel_params(params, Z_DIM)

    # --- Small batch (grid=(1,)) --------------------------------------------
    x_small = jax.random.normal(kx_small, (8, Z_DIM), jnp.float32)
    out_small = jax.block_until_ready(
        generator_forward(x_small, kparams, IMAGE_DIM))
    assert out_small.shape == (8, IMAGE_DIM), out_small.shape

    ref_small = generator_reference_kernel_numerics(x_small, kparams, IMAGE_DIM)
    err = float(jnp.max(jnp.abs(out_small - ref_small)))
    assert jnp.allclose(out_small, ref_small, atol=2e-2, rtol=2e-2), err

    ref32 = generator_reference_f32(x_small, params)
    err32 = float(jnp.max(jnp.abs(out_small - ref32)))
    assert jnp.allclose(out_small, ref32, atol=1.5e-1, rtol=1.5e-1), err32

    # --- Ragged batch (batch-padded gridded path) ----------------------------
    x_rag = jax.random.normal(kx_rag, (100, Z_DIM), jnp.float32)
    out_rag = jax.block_until_ready(
        generator_forward(x_rag, kparams, IMAGE_DIM))
    assert out_rag.shape == (100, IMAGE_DIM), out_rag.shape
    ref_rag = generator_reference_kernel_numerics(x_rag, kparams, IMAGE_DIM)
    err_rag = float(jnp.max(jnp.abs(out_rag - ref_rag)))
    assert jnp.allclose(out_rag, ref_rag, atol=2e-2, rtol=2e-2), err_rag

    # --- Larger batch (>=2 parallel grid steps, resident weights) ------------
    x_big = jax.random.normal(kx_big, (256, Z_DIM), jnp.float32)
    out_big = jax.block_until_ready(
        generator_forward(x_big, kparams, IMAGE_DIM))
    assert out_big.shape == (256, IMAGE_DIM), out_big.shape
    ref_big = generator_reference_kernel_numerics(x_big, kparams, IMAGE_DIM)
    err_big = float(jnp.max(jnp.abs(out_big - ref_big)))
    assert jnp.allclose(out_big, ref_big, atol=2e-2, rtol=2e-2), err_big

    print("KERNEL_OK")
</pallas_src>

<mosaic_0001>
module attributes {stable_mosaic.version = 11 : i64} {
  func.func @generator_kernel(%arg0: i32, %arg1: memref<8x128xbf16, #tpu.memory_space<vmem>>, %arg2: memref<128x256xbf16, #tpu.memory_space<vmem>>, %arg3: memref<1x256xbf16, #tpu.memory_space<vmem>>, %arg4: memref<256x512xbf16, #tpu.memory_space<vmem>>, %arg5: memref<1x512xbf16, #tpu.memory_space<vmem>>, %arg6: memref<512x1024xbf16, #tpu.memory_space<vmem>>, %arg7: memref<1x1024xbf16, #tpu.memory_space<vmem>>, %arg8: memref<1024x896xbf16, #tpu.memory_space<vmem>>, %arg9: memref<1x896xf32, #tpu.memory_space<vmem>>, %arg10: memref<8x896xf32, #tpu.memory_space<vmem>>) attributes {dimension_semantics = [#tpu.dimension_semantics<parallel>], iteration_bounds = array<i64: 1>, scalar_prefetch = 0 : i64, scratch_operands = 0 : i64, tpu.core_type = #tpu.core_type<tc>, window_params = [{transform_indices = @transform_0, window_bounds = array<i64: 8, 128>}, {pipeline_mode = #tpu.pipeline_mode<synchronous>, transform_indices = @transform_1, window_bounds = array<i64: 128, 256>}, {pipeline_mode = #tpu.pipeline_mode<synchronous>, transform_indices = @transform_2, window_bounds = array<i64: 1, 256>}, {pipeline_mode = #tpu.pipeline_mode<synchronous>, transform_indices = @transform_3, window_bounds = array<i64: 256, 512>}, {pipeline_mode = #tpu.pipeline_mode<synchronous>, transform_indices = @transform_4, window_bounds = array<i64: 1, 512>}, {pipeline_mode = #tpu.pipeline_mode<synchronous>, transform_indices = @transform_5, window_bounds = array<i64: 512, 1024>}, {pipeline_mode = #tpu.pipeline_mode<synchronous>, transform_indices = @transform_6, window_bounds = array<i64: 1, 1024>}, {pipeline_mode = #tpu.pipeline_mode<synchronous>, transform_indices = @transform_7, window_bounds = array<i64: 1024, 896>}, {pipeline_mode = #tpu.pipeline_mode<synchronous>, transform_indices = @transform_8, window_bounds = array<i64: 1, 896>}, {transform_indices = @transform_9, window_bounds = array<i64: 8, 896>}]} {
    %c0 = arith.constant 0 : index
    %c0_0 = arith.constant 0 : index
    %0 = vector.load %arg1[%c0, %c0_0] : memref<8x128xbf16, #tpu.memory_space<vmem>>, vector<8x128xbf16>
    %c0_1 = arith.constant 0 : index
    %c0_2 = arith.constant 0 : index
    %1 = vector.load %arg2[%c0_1, %c0_2] : memref<128x256xbf16, #tpu.memory_space<vmem>>, vector<128x256xbf16>
    %cst = arith.constant dense<0.000000e+00> : vector<8x256xf32>
    %2 = tpu.matmul %0, %1, %cst {dimension_numbers = #tpu.dot_dimension_numbers<[1], [0], [0], [1], [0, 0, 1, 1], [], []>} : vector<8x128xbf16>, vector<128x256xbf16>, vector<8x256xf32> -> vector<8x256xf32>
    %c0_3 = arith.constant 0 : index
    %c0_4 = arith.constant 0 : index
    %3 = vector.load %arg3[%c0_3, %c0_4] : memref<1x256xbf16, #tpu.memory_space<vmem>>, vector<1x256xbf16>
    %4 = arith.truncf %2 : vector<8x256xf32> to vector<8x256xbf16>
    %5 = vector.broadcast %3 : vector<1x256xbf16> to vector<8x256xbf16>
    %6 = arith.addf %4, %5 : vector<8x256xbf16>
    %cst_5 = arith.constant 2.001950e-01 : bf16
    %7 = vector.broadcast %cst_5 : bf16 to vector<8x256xbf16>
    %8 = arith.mulf %7, %6 : vector<8x256xbf16>
    %9 = arith.maximumf %6, %8 : vector<8x256xbf16>
    %c0_6 = arith.constant 0 : index
    %c0_7 = arith.constant 0 : index
    %10 = vector.load %arg4[%c0_6, %c0_7] : memref<256x512xbf16, #tpu.memory_space<vmem>>, vector<256x512xbf16>
    %cst_8 = arith.constant dense<0.000000e+00> : vector<8x512xf32>
    %11 = tpu.matmul %9, %10, %cst_8 {dimension_numbers = #tpu.dot_dimension_numbers<[1], [0], [0], [1], [0, 0, 1, 1], [], []>} : vector<8x256xbf16>, vector<256x512xbf16>, vector<8x512xf32> -> vector<8x512xf32>
    %c0_9 = arith.constant 0 : index
    %c0_10 = arith.constant 0 : index
    %12 = vector.load %arg5[%c0_9, %c0_10] : memref<1x512xbf16, #tpu.memory_space<vmem>>, vector<1x512xbf16>
    %13 = arith.truncf %11 : vector<8x512xf32> to vector<8x512xbf16>
    %14 = vector.broadcast %12 : vector<1x512xbf16> to vector<8x512xbf16>
    %15 = arith.addf %13, %14 : vector<8x512xbf16>
    %cst_11 = arith.constant 2.001950e-01 : bf16
    %16 = vector.broadcast %cst_11 : bf16 to vector<8x512xbf16>
    %17 = arith.mulf %16, %15 : vector<8x512xbf16>
    %18 = arith.maximumf %15, %17 : vector<8x512xbf16>
    %c0_12 = arith.constant 0 : index
    %c0_13 = arith.constant 0 : index
    %19 = vector.load %arg6[%c0_12, %c0_13] : memref<512x1024xbf16, #tpu.memory_space<vmem>>, vector<512x1024xbf16>
    %cst_14 = arith.constant dense<0.000000e+00> : vector<8x1024xf32>
    %20 = tpu.matmul %18, %19, %cst_14 {dimension_numbers = #tpu.dot_dimension_numbers<[1], [0], [0], [1], [0, 0, 1, 1], [], []>} : vector<8x512xbf16>, vector<512x1024xbf16>, vector<8x1024xf32> -> vector<8x1024xf32>
    %c0_15 = arith.constant 0 : index
    %c0_16 = arith.constant 0 : index
    %21 = vector.load %arg7[%c0_15, %c0_16] : memref<1x1024xbf16, #tpu.memory_space<vmem>>, vector<1x1024xbf16>
    %22 = arith.truncf %20 : vector<8x1024xf32> to vector<8x1024xbf16>
    %23 = vector.broadcast %21 : vector<1x1024xbf16> to vector<8x1024xbf16>
    %24 = arith.addf %22, %23 : vector<8x1024xbf16>
    %cst_17 = arith.constant 2.001950e-01 : bf16
    %25 = vector.broadcast %cst_17 : bf16 to vector<8x1024xbf16>
    %26 = arith.mulf %25, %24 : vector<8x1024xbf16>
    %27 = arith.maximumf %24, %26 : vector<8x1024xbf16>
    %c0_18 = arith.constant 0 : index
    %c0_19 = arith.constant 0 : index
    %28 = vector.load %arg8[%c0_18, %c0_19] : memref<1024x896xbf16, #tpu.memory_space<vmem>>, vector<1024x896xbf16>
    %cst_20 = arith.constant dense<0.000000e+00> : vector<8x896xf32>
    %29 = tpu.matmul %27, %28, %cst_20 {dimension_numbers = #tpu.dot_dimension_numbers<[1], [0], [0], [1], [0, 0, 1, 1], [], []>} : vector<8x1024xbf16>, vector<1024x896xbf16>, vector<8x896xf32> -> vector<8x896xf32>
    %c0_21 = arith.constant 0 : index
    %c0_22 = arith.constant 0 : index
    %30 = vector.load %arg9[%c0_21, %c0_22] : memref<1x896xf32, #tpu.memory_space<vmem>>, vector<1x896xf32>
    %31 = vector.broadcast %30 : vector<1x896xf32> to vector<8x896xf32>
    %32 = arith.addf %29, %31 : vector<8x896xf32>
    %33 = math.tanh %32 : vector<8x896xf32>
    %c0_23 = arith.constant 0 : index
    %c0_24 = arith.constant 0 : index
    %34 = vector.load %arg10[%c0_23, %c0_24] : memref<8x896xf32, #tpu.memory_space<vmem>>, vector<8x896xf32>
    tpu.vector_store %arg10[%c0_23, %c0_24], %33 {strides = array<i32>} : memref<8x896xf32, #tpu.memory_space<vmem>>, vector<8x896xf32>,
    return
  }
  func.func @transform_0(%arg0: i32) -> (i32, i32) {
    %c0_i32 = arith.constant 0 : i32
    %c0_i32_0 = arith.constant 0 : i32
    return %arg0, %c0_i32 : i32, i32
  }
  func.func @transform_1(%arg0: i32) -> (i32, i32) {
    %c0_i32 = arith.constant 0 : i32
    %c0_i32_0 = arith.constant 0 : i32
    %c0_i32_1 = arith.constant 0 : i32
    return %c0_i32, %c0_i32_0 : i32, i32
  }
  func.func @transform_2(%arg0: i32) -> (i32, i32) {
    %c0_i32 = arith.constant 0 : i32
    %c0_i32_0 = arith.constant 0 : i32
    %c0_i32_1 = arith.constant 0 : i32
    return %c0_i32, %c0_i32_0 : i32, i32
  }
  func.func @transform_3(%arg0: i32) -> (i32, i32) {
    %c0_i32 = arith.constant 0 : i32
    %c0_i32_0 = arith.constant 0 : i32
    %c0_i32_1 = arith.constant 0 : i32
    return %c0_i32, %c0_i32_0 : i32, i32
  }
  func.func @transform_4(%arg0: i32) -> (i32, i32) {
    %c0_i32 = arith.constant 0 : i32
    %c0_i32_0 = arith.constant 0 : i32
    %c0_i32_1 = arith.constant 0 : i32
    return %c0_i32, %c0_i32_0 : i32, i32
  }
  func.func @transform_5(%arg0: i32) -> (i32, i32) {
    %c0_i32 = arith.constant 0 : i32
    %c0_i32_0 = arith.constant 0 : i32
    %c0_i32_1 = arith.constant 0 : i32
    return %c0_i32, %c0_i32_0 : i32, i32
  }
  func.func @transform_6(%arg0: i32) -> (i32, i32) {
    %c0_i32 = arith.constant 0 : i32
    %c0_i32_0 = arith.constant 0 : i32
    %c0_i32_1 = arith.constant 0 : i32
    return %c0_i32, %c0_i32_0 : i32, i32
  }
  func.func @transform_7(%arg0: i32) -> (i32, i32) {
    %c0_i32 = arith.constant 0 : i32
    %c0_i32_0 = arith.constant 0 : i32
    %c0_i32_1 = arith.constant 0 : i32
    return %c0_i32, %c0_i32_0 : i32, i32
  }
  func.func @transform_8(%arg0: i32) -> (i32, i32) {
    %c0_i32 = arith.constant 0 : i32
    %c0_i32_0 = arith.constant 0 : i32
    %c0_i32_1 = arith.constant 0 : i32
    return %c0_i32, %c0_i32_0 : i32, i32
  }
  func.func @transform_9(%arg0: i32) -> (i32, i32) {
    %c0_i32 = arith.constant 0 : i32
    %c0_i32_0 = arith.constant 0 : i32
    return %arg0, %c0_i32 : i32, i32
  }
}

module attributes {stable_mosaic.version = 11 : i64} {
  func.func @generator_kernel(%arg0: i32, %arg1: memref<8x128xbf16, #tpu.memory_space<vmem>>, %arg2: memref<128x256xbf16, #tpu.memory_space<vmem>>, %arg3: memref<1x256xbf16, #tpu.memory_space<vmem>>, %arg4: memref<256x512xbf16, #tpu.memory_space<vmem>>, %arg5: memref<1x512xbf16, #tpu.memory_space<vmem>>, %arg6: memref<512x1024xbf16, #tpu.memory_space<vmem>>, %arg7: memref<1x1024xbf16, #tpu.memory_space<vmem>>, %arg8: memref<1024x896xbf16, #tpu.memory_space<vmem>>, %arg9: memref<1x896xf32, #tpu.memory_space<vmem>>, %arg10: memref<8x896xf32, #tpu.memory_space<vmem>>) attributes {dimension_semantics = [#tpu.dimension_semantics<parallel>], iteration_bounds = array<i64: 1>, scalar_prefetch = 0 : i64, scratch_operands = 0 : i64, tpu.core_type = #tpu.core_type<tc>, window_params = [{transform_indices = @transform_0, window_bounds = array<i64: 8, 128>}, {pipeline_mode = #tpu.pipeline_mode<synchronous>, transform_indices = @transform_1, window_bounds = array<i64: 128, 256>}, {pipeline_mode = #tpu.pipeline_mode<synchronous>, transform_indices = @transform_2, window_bounds = array<i64: 1, 256>}, {pipeline_mode = #tpu.pipeline_mode<synchronous>, transform_indices = @transform_3, window_bounds = array<i64: 256, 512>}, {pipeline_mode = #tpu.pipeline_mode<synchronous>, transform_indices = @transform_4, window_bounds = array<i64: 1, 512>}, {pipeline_mode = #tpu.pipeline_mode<synchronous>, transform_indices = @transform_5, window_bounds = array<i64: 512, 1024>}, {pipeline_mode = #tpu.pipeline_mode<synchronous>, transform_indices = @transform_6, window_bounds = array<i64: 1, 1024>}, {pipeline_mode = #tpu.pipeline_mode<synchronous>, transform_indices = @transform_7, window_bounds = array<i64: 1024, 896>}, {pipeline_mode = #tpu.pipeline_mode<synchronous>, transform_indices = @transform_8, window_bounds = array<i64: 1, 896>}, {transform_indices = @transform_9, window_bounds = array<i64: 8, 896>}]} {
    %c0 = arith.constant 0 : index
    %c0_0 = arith.constant 0 : index
    %0 = vector.load %arg1[%c0, %c0_0] : memref<8x128xbf16, #tpu.memory_space<vmem>>, vector<8x128xbf16>
    %c0_1 = arith.constant 0 : index
    %c0_2 = arith.constant 0 : index
    %1 = vector.load %arg2[%c0_1, %c0_2] : memref<128x256xbf16, #tpu.memory_space<vmem>>, vector<128x256xbf16>
    %cst = arith.constant dense<0.000000e+00> : vector<8x256xf32>
    %2 = tpu.matmul %0, %1, %cst {dimension_numbers = #tpu.dot_dimension_numbers<[1], [0], [0], [1], [0, 0, 1, 1], [], []>} : vector<8x128xbf16>, vector<128x256xbf16>, vector<8x256xf32> -> vector<8x256xf32>
    %c0_3 = arith.constant 0 : index
    %c0_4 = arith.constant 0 : index
    %3 = vector.load %arg3[%c0_3, %c0_4] : memref<1x256xbf16, #tpu.memory_space<vmem>>, vector<1x256xbf16>
    %4 = arith.truncf %2 : vector<8x256xf32> to vector<8x256xbf16>
    %5 = vector.broadcast %3 : vector<1x256xbf16> to vector<8x256xbf16>
    %6 = arith.addf %4, %5 : vector<8x256xbf16>
    %cst_5 = arith.constant 2.001950e-01 : bf16
    %7 = vector.broadcast %cst_5 : bf16 to vector<8x256xbf16>
    %8 = arith.mulf %7, %6 : vector<8x256xbf16>
    %9 = arith.maximumf %6, %8 : vector<8x256xbf16>
    %c0_6 = arith.constant 0 : index
    %c0_7 = arith.constant 0 : index
    %10 = vector.load %arg4[%c0_6, %c0_7] : memref<256x512xbf16, #tpu.memory_space<vmem>>, vector<256x512xbf16>
    %cst_8 = arith.constant dense<0.000000e+00> : vector<8x512xf32>
    %11 = tpu.matmul %9, %10, %cst_8 {dimension_numbers = #tpu.dot_dimension_numbers<[1], [0], [0], [1], [0, 0, 1, 1], [], []>} : vector<8x256xbf16>, vector<256x512xbf16>, vector<8x512xf32> -> vector<8x512xf32>
    %c0_9 = arith.constant 0 : index
    %c0_10 = arith.constant 0 : index
    %12 = vector.load %arg5[%c0_9, %c0_10] : memref<1x512xbf16, #tpu.memory_space<vmem>>, vector<1x512xbf16>
    %13 = arith.truncf %11 : vector<8x512xf32> to vector<8x512xbf16>
    %14 = vector.broadcast %12 : vector<1x512xbf16> to vector<8x512xbf16>
    %15 = arith.addf %13, %14 : vector<8x512xbf16>
    %cst_11 = arith.constant 2.001950e-01 : bf16
    %16 = vector.broadcast %cst_11 : bf16 to vector<8x512xbf16>
    %17 = arith.mulf %16, %15 : vector<8x512xbf16>
    %18 = arith.maximumf %15, %17 : vector<8x512xbf16>
    %c0_12 = arith.constant 0 : index
    %c0_13 = arith.constant 0 : index
    %19 = vector.load %arg6[%c0_12, %c0_13] : memref<512x1024xbf16, #tpu.memory_space<vmem>>, vector<512x1024xbf16>
    %cst_14 = arith.constant dense<0.000000e+00> : vector<8x1024xf32>
    %20 = tpu.matmul %18, %19, %cst_14 {dimension_numbers = #tpu.dot_dimension_numbers<[1], [0], [0], [1], [0, 0, 1, 1], [], []>} : vector<8x512xbf16>, vector<512x1024xbf16>, vector<8x1024xf32> -> vector<8x1024xf32>
    %c0_15 = arith.constant 0 : index
    %c0_16 = arith.constant 0 : index
    %21 = vector.load %arg7[%c0_15, %c0_16] : memref<1x1024xbf16, #tpu.memory_space<vmem>>, vector<1x1024xbf16>
    %22 = arith.truncf %20 : vector<8x1024xf32> to vector<8x1024xbf16>
    %23 = vector.broadcast %21 : vector<1x1024xbf16> to vector<8x1024xbf16>
    %24 = arith.addf %22, %23 : vector<8x1024xbf16>
    %cst_17 = arith.constant 2.001950e-01 : bf16
    %25 = vector.broadcast %cst_17 : bf16 to vector<8x1024xbf16>
    %26 = arith.mulf %25, %24 : vector<8x1024xbf16>
    %27 = arith.maximumf %24, %26 : vector<8x1024xbf16>
    %c0_18 = arith.constant 0 : index
    %c0_19 = arith.constant 0 : index
    %28 = vector.load %arg8[%c0_18, %c0_19] : memref<1024x896xbf16, #tpu.memory_space<vmem>>, vector<1024x896xbf16>
    %cst_20 = arith.constant dense<0.000000e+00> : vector<8x896xf32>
    %29 = tpu.matmul %27, %28, %cst_20 {dimension_numbers = #tpu.dot_dimension_numbers<[1], [0], [0], [1], [0, 0, 1, 1], [], []>} : vector<8x1024xbf16>, vector<1024x896xbf16>, vector<8x896xf32> -> vector<8x896xf32>
    %c0_21 = arith.constant 0 : index
    %c0_22 = arith.constant 0 : index
    %30 = vector.load %arg9[%c0_21, %c0_22] : memref<1x896xf32, #tpu.memory_space<vmem>>, vector<1x896xf32>
    %31 = vector.broadcast %30 : vector<1x896xf32> to vector<8x896xf32>
    %32 = arith.addf %29, %31 : vector<8x896xf32>
    %33 = math.tanh %32 : vector<8x896xf32>
    %c0_23 = arith.constant 0 : index
    %c0_24 = arith.constant 0 : index
    %34 = vector.load %arg10[%c0_23, %c0_24] : memref<8x896xf32, #tpu.memory_space<vmem>>, vector<8x896xf32>
    tpu.vector_store %arg10[%c0_23, %c0_24], %33 {strides = array<i32>} : memref<8x896xf32, #tpu.memory_space<vmem>>, vector<8x896xf32>,
    return
  }
  func.func @transform_0(%arg0: i32) -> (i32, i32) {
    %c0_i32 = arith.constant 0 : i32
    %c0_i32_0 = arith.constant 0 : i32
    return %arg0, %c0_i32 : i32, i32
  }
  func.func @transform_1(%arg0: i32) -> (i32, i32) {
    %c0_i32 = arith.constant 0 : i32
    %c0_i32_0 = arith.constant 0 : i32
    %c0_i32_1 = arith.constant 0 : i32
    return %c0_i32, %c0_i32_0 : i32, i32
  }
  func.func @transform_2(%arg0: i32) -> (i32, i32) {
    %c0_i32 = arith.constant 0 : i32
    %c0_i32_0 = arith.constant 0 : i32
    %c0_i32_1 = arith.constant 0 : i32
    return %c0_i32, %c0_i32_0 : i32, i32
  }
  func.func @transform_3(%arg0: i32) -> (i32, i32) {
    %c0_i32 = arith.constant 0 : i32
    %c0_i32_0 = arith.constant 0 : i32
    %c0_i32_1 = arith.constant 0 : i32
    return %c0_i32, %c0_i32_0 : i32, i32
  }
  func.func @transform_4(%arg0: i32) -> (i32, i32) {
    %c0_i32 = arith.constant 0 : i32
    %c0_i32_0 = arith.constant 0 : i32
    %c0_i32_1 = arith.constant 0 : i32
    return %c0_i32, %c0_i32_0 : i32, i32
  }
  func.func @transform_5(%arg0: i32) -> (i32, i32) {
    %c0_i32 = arith.constant 0 : i32
    %c0_i32_0 = arith.constant 0 : i32
    %c0_i32_1 = arith.constant 0 : i32
    return %c0_i32, %c0_i32_0 : i32, i32
  }
  func.func @transform_6(%arg0: i32) -> (i32, i32) {
    %c0_i32 = arith.constant 0 : i32
    %c0_i32_0 = arith.constant 0 : i32
    %c0_i32_1 = arith.constant 0 : i32
    return %c0_i32, %c0_i32_0 : i32, i32
  }
  func.func @transform_7(%arg0: i32) -> (i32, i32) {
    %c0_i32 = arith.constant 0 : i32
    %c0_i32_0 = arith.constant 0 : i32
    %c0_i32_1 = arith.constant 0 : i32
    return %c0_i32, %c0_i32_0 : i32, i32
  }
  func.func @transform_8(%arg0: i32) -> (i32, i32) {
    %c0_i32 = arith.constant 0 : i32
    %c0_i32_0 = arith.constant 0 : i32
    %c0_i32_1 = arith.constant 0 : i32
    return %c0_i32, %c0_i32_0 : i32, i32
  }
  func.func @transform_9(%arg0: i32) -> (i32, i32) {
    %c0_i32 = arith.constant 0 : i32
    %c0_i32_0 = arith.constant 0 : i32
    return %arg0, %c0_i32 : i32, i32
  }
}

</mosaic_0001>

<llo_original>
// kernel: tpu_custom_call.1
$region0: #{tpu_custom_call.1}
  #allocation0 [shape = 'u32[]', space=smem, size = 0x4, offset = 0x4, fixed_abs, tag = 'smem constant byte address 0x4 - core index']
  #allocation1 [shape = 'u32[144,128]{1,0:T(1,128)}', space=vmem, size = 0x12000, scoped, tag = 'internal scratch']
  %s0 = inlined_call_operand.hbm [shape: bf16[8,128], index: 0, kind: input, shape index: {}]
  %s1 = inlined_call_operand.hbm [shape: bf16[128,256], index: 1, kind: input, shape index: {}]
  %s2 = inlined_call_operand.hbm [shape: bf16[1,256], index: 2, kind: input, shape index: {}]
  %s3 = inlined_call_operand.hbm [shape: bf16[256,512], index: 3, kind: input, shape index: {}]
  %s4 = inlined_call_operand.hbm [shape: bf16[1,512], index: 4, kind: input, shape index: {}]
  %s5 = inlined_call_operand.hbm [shape: bf16[512,1024], index: 5, kind: input, shape index: {}]
  %s6 = inlined_call_operand.hbm [shape: bf16[1,1024], index: 6, kind: input, shape index: {}]
  %s7 = inlined_call_operand.hbm [shape: bf16[1024,896], index: 7, kind: input, shape index: {}]
  %s8 = inlined_call_operand.hbm [shape: f32[1,896], index: 8, kind: input, shape index: {}]
  %s9 = inlined_call_operand.hbm [shape: f32[8,896], index: 9, kind: output, shape index: {}]
  %s10 = sld [smem:[#allocation0]]
  $region82: #{tpu_custom_call.1} parent=0
    _
  %s12 = ssub.s32 1, %s10
  %s13 = scalar_select 0, %s12, %s10
  $region1: #{tpu_custom_call.1} parent=0
    #allocation2 [shape = 'u8[2048]{0}', space=vmem, size = 0x800, scoped, tag = 'input window, operand 0, single buffered']
    #allocation3 [shape = 's32[1]{0}', space=sflag, size = 0x4, scoped, tag = 'scoped memory for tpu_custom_call.1']
    #allocation4 [shape = 's32[1]{0}', space=sflag, size = 0x4, scoped, tag = 'scoped memory for tpu_custom_call.1']
    #allocation5 [shape = 'u8[65536]{0}', space=vmem, size = 0x10000, scoped, tag = 'input window, operand 1, single buffered']
    #allocation6 [shape = 's32[1]{0}', space=sflag, size = 0x4, scoped, tag = 'scoped memory for tpu_custom_call.1']
    #allocation7 [shape = 'u8[1024]{0}', space=vmem, size = 0x400, scoped, tag = 'input window, operand 2, single buffered']
    #allocation8 [shape = 'u8[262144]{0}', space=vmem, size = 0x40000, scoped, tag = 'input window, operand 3, single buffered']
    #allocation9 [shape = 's32[1]{0}', space=sflag, size = 0x4, scoped, tag = 'scoped memory for tpu_custom_call.1']
    #allocation10 [shape = 'u8[2048]{0}', space=vmem, size = 0x800, scoped, tag = 'input window, operand 4, single buffered']
    #allocation11 [shape = 'u8[1048576]{0}', space=vmem, size = 0x100000, scoped, tag = 'input window, operand 5, single buffered']
    #allocation12 [shape = 's32[1]{0}', space=sflag, size = 0x4, scoped, tag = 'scoped memory for tpu_custom_call.1']
    #allocation13 [shape = 'u8[4096]{0}', space=vmem, size = 0x1000, scoped, tag = 'input window, operand 6, single buffered']
    #allocation14 [shape = 'u8[1835008]{0}', space=vmem, size = 0x1c0000, scoped, tag = 'input window, operand 7, single buffered']
    #allocation15 [shape = 's32[1]{0}', space=sflag, size = 0x4, scoped, tag = 'scoped memory for tpu_custom_call.1']
    #allocation16 [shape = 'u8[3584]{0}', space=vmem, size = 0x1000, scoped, tag = 'input window, operand 8, single buffered']
    #allocation17 [shape = 'u8[28672]{0}', space=vmem, size = 0x7000, scoped, tag = 'output window, operand 0, single buffered']
    %14 = vsyncpa [#allocation3], 0
    %15 = vsyncpa [#allocation6], 0
    %16 = vsyncpa [#allocation9], 0
    %17 = vsyncpa [#allocation12], 0
    %18 = vsyncpa [#allocation15], 0
    %19 = vsyncpa [#allocation4], 0
    // Predicated region
    $region2: #{tpu_custom_call.1} parent=1 // pred_check
      _
    $region3: #{tpu_custom_call.1} parent=1 // pred_check_branch
      %21 = sbr.rel (0) target = $region5
    $region4: #{tpu_custom_call.1} parent=1 // pred_region
      %s23 = ssub.s32 64, 64
      %24 = vsyncadd [#allocation3], %s23
      %s26 = sshll.u32 [#allocation2], 4
      %s27 = int_to_ptr.vmem [resolvable:$true] %s26
      %29 = dma.hbm_to_vmem [thread:$0]  %s0, 64, %s27, [#allocation3]
    $region5: #{tpu_custom_call.1} parent=1 // pred_fallthru
      _
    // Predicated region
    $region6: #{tpu_custom_call.1} parent=1 // pred_check
      _
    $region7: #{tpu_custom_call.1} parent=1 // pred_check_branch
      %31 = sbr.rel (0) target = $region9
    $region8: #{tpu_custom_call.1} parent=1 // pred_region
      %s33 = ssub.s32 2048, 2048
      %34 = vsyncadd [#allocation6], %s33
      %s35 = sshll.u32 [#allocation5], 4
      %s36 = int_to_ptr.vmem [resolvable:$true] %s35
      %41 = dma.hbm_to_vmem [thread:$0]  %s1, 2048, %s36, [#allocation6], 128, 128, 8
    $region9: #{tpu_custom_call.1} parent=1 // pred_fallthru
      _
    // Predicated region
    $region10: #{tpu_custom_call.1} parent=1 // pred_check
      _
    $region11: #{tpu_custom_call.1} parent=1 // pred_check_branch
      %43 = sbr.rel (0) target = $region13
    $region12: #{tpu_custom_call.1} parent=1 // pred_region
      %s45 = ssub.s32 32, 32
      %46 = vsyncadd [#allocation6], %s45
      %s48 = sshll.u32 [#allocation7], 4
      %s49 = int_to_ptr.vmem [resolvable:$true] %s48
      %51 = dma.hbm_to_vmem [thread:$0]  %s2, 32, %s49, [#allocation6]
    $region13: #{tpu_custom_call.1} parent=1 // pred_fallthru
      _
    // Predicated region
    $region14: #{tpu_custom_call.1} parent=1 // pred_check
      _
    $region15: #{tpu_custom_call.1} parent=1 // pred_check_branch
      %53 = sbr.rel (0) target = $region17
    $region16: #{tpu_custom_call.1} parent=1 // pred_region
      %s55 = ssub.s32 8192, 8192
      %56 = vsyncadd [#allocation9], %s55
      %s57 = sshll.u32 [#allocation8], 4
      %s58 = int_to_ptr.vmem [resolvable:$true] %s57
      %63 = dma.hbm_to_vmem [thread:$0]  %s3, 8192, %s58, [#allocation9], 256, 256, 16
    $region17: #{tpu_custom_call.1} parent=1 // pred_fallthru
      _
    // Predicated region
    $region18: #{tpu_custom_call.1} parent=1 // pred_check
      _
    $region19: #{tpu_custom_call.1} parent=1 // pred_check_branch
      %65 = sbr.rel (0) target = $region21
    $region20: #{tpu_custom_call.1} parent=1 // pred_region
      %s67 = ssub.s32 64, 64
      %68 = vsyncadd [#allocation9], %s67
      %s70 = sshll.u32 [#allocation10], 4
      %s71 = int_to_ptr.vmem [resolvable:$true] %s70
      %73 = dma.hbm_to_vmem [thread:$0]  %s4, 64, %s71, [#allocation9]
    $region21: #{tpu_custom_call.1} parent=1 // pred_fallthru
      _
    // Predicated region
    $region22: #{tpu_custom_call.1} parent=1 // pred_check
      _
    $region23: #{tpu_custom_call.1} parent=1 // pred_check_branch
      %75 = sbr.rel (0) target = $region25
    $region24: #{tpu_custom_call.1} parent=1 // pred_region
      %s77 = ssub.s32 32768, 32768
      %78 = vsyncadd [#allocation12], %s77
      %s79 = sshll.u32 [#allocation11], 4
      %s80 = int_to_ptr.vmem [resolvable:$true] %s79
      %85 = dma.hbm_to_vmem [thread:$0]  %s5, 32768, %s80, [#allocation12], 512, 512, 32
    $region25: #{tpu_custom_call.1} parent=1 // pred_fallthru
      _
    // Predicated region
    $region26: #{tpu_custom_call.1} parent=1 // pred_check
      _
    $region27: #{tpu_custom_call.1} parent=1 // pred_check_branch
      %87 = sbr.rel (0) target = $region29
    $region28: #{tpu_custom_call.1} parent=1 // pred_region
      %s89 = ssub.s32 128, 128
      %90 = vsyncadd [#allocation12], %s89
      %s92 = sshll.u32 [#allocation13], 4
      %s93 = int_to_ptr.vmem [resolvable:$true] %s92
      %95 = dma.hbm_to_vmem [thread:$0]  %s6, 128, %s93, [#allocation12]
    $region29: #{tpu_custom_call.1} parent=1 // pred_fallthru
      _
    // Predicated region
    $region30: #{tpu_custom_call.1} parent=1 // pred_check
      _
    $region31: #{tpu_custom_call.1} parent=1 // pred_check_branch
      %97 = sbr.rel (0) target = $region33
    $region32: #{tpu_custom_call.1} parent=1 // pred_region
      %s99 = ssub.s32 57344, 57344
      %100 = vsyncadd [#allocation15], %s99
      %s101 = sshll.u32 [#allocation14], 4
      %s102 = int_to_ptr.vmem [resolvable:$true] %s101
      %107 = dma.hbm_to_vmem [thread:$0]  %s7, 57344, %s102, [#allocation15], 448, 448, 28
    $region33: #{tpu_custom_call.1} parent=1 // pred_fallthru
      _
    // Predicated region
    $region34: #{tpu_custom_call.1} parent=1 // pred_check
      _
    $region35: #{tpu_custom_call.1} parent=1 // pred_check_branch
      %109 = sbr.rel (0) target = $region37
    $region36: #{tpu_custom_call.1} parent=1 // pred_region
      %s111 = ssub.s32 112, 112
      %112 = vsyncadd [#allocation15], %s111
      %s114 = sshll.u32 [#allocation16], 4
      %s115 = int_to_ptr.vmem [resolvable:$true] %s114
      %117 = dma.hbm_to_vmem [thread:$0]  %s8, 112, %s115, [#allocation15]
    $region37: #{tpu_custom_call.1} parent=1 // pred_fallthru
      _
    // Predicated region
    $region38: #{tpu_custom_call.1} parent=1 // pred_check
      _
    $region39: #{tpu_custom_call.1} parent=1 // pred_check_branch
      %119 = sbr.rel (0) target = $region41
    $region40: #{tpu_custom_call.1} parent=1 // pred_region
      %120 = dma.done [#allocation3], 64
    $region41: #{tpu_custom_call.1} parent=1 // pred_fallthru
      _
    // Predicated region
    $region42: #{tpu_custom_call.1} parent=1 // pred_check
      _
    $region43: #{tpu_custom_call.1} parent=1 // pred_check_branch
      %122 = sbr.rel (0) target = $region45
    $region44: #{tpu_custom_call.1} parent=1 // pred_region
      %123 = dma.done [#allocation6], 2048
    $region45: #{tpu_custom_call.1} parent=1 // pred_fallthru
      _
    // Predicated region
    $region46: #{tpu_custom_call.1} parent=1 // pred_check
      _
    $region47: #{tpu_custom_call.1} parent=1 // pred_check_branch
      %125 = sbr.rel (0) target = $region49
    $region48: #{tpu_custom_call.1} parent=1 // pred_region
      %126 = dma.done [#allocation6], 32
    $region49: #{tpu_custom_call.1} parent=1 // pred_fallthru
      _
    // Predicated region
    $region50: #{tpu_custom_call.1} parent=1 // pred_check
      _
    $region51: #{tpu_custom_call.1} parent=1 // pred_check_branch
      %128 = sbr.rel (0) target = $region53
    $region52: #{tpu_custom_call.1} parent=1 // pred_region
      %129 = dma.done [#allocation9], 8192
    $region53: #{tpu_custom_call.1} parent=1 // pred_fallthru
      _
    // Predicated region
    $region54: #{tpu_custom_call.1} parent=1 // pred_check
      _
    $region55: #{tpu_custom_call.1} parent=1 // pred_check_branch
      %131 = sbr.rel (0) target = $region57
    $region56: #{tpu_custom_call.1} parent=1 // pred_region
      %132 = dma.done [#allocation9], 64
    $region57: #{tpu_custom_call.1} parent=1 // pred_fallthru
      _
    // Predicated region
    $region58: #{tpu_custom_call.1} parent=1 // pred_check
      _
    $region59: #{tpu_custom_call.1} parent=1 // pred_check_branch
      %134 = sbr.rel (0) target = $region61
    $region60: #{tpu_custom_call.1} parent=1 // pred_region
      %135 = dma.done [#allocation12], 32768
    $region61: #{tpu_custom_call.1} parent=1 // pred_fallthru
      _
    // Predicated region
    $region62: #{tpu_custom_call.1} parent=1 // pred_check
      _
    $region63: #{tpu_custom_call.1} parent=1 // pred_check_branch
      %137 = sbr.rel (0) target = $region65
    $region64: #{tpu_custom_call.1} parent=1 // pred_region
      %138 = dma.done [#allocation12], 128
    $region65: #{tpu_custom_call.1} parent=1 // pred_fallthru
      _
    // Predicated region
    $region66: #{tpu_custom_call.1} parent=1 // pred_check
      _
    $region67: #{tpu_custom_call.1} parent=1 // pred_check_branch
      %140 = sbr.rel (0) target = $region69
    $region68: #{tpu_custom_call.1} parent=1 // pred_region
      %141 = dma.done [#allocation15], 57344
    $region69: #{tpu_custom_call.1} parent=1 // pred_fallthru
      _
    // Predicated region
    $region70: #{tpu_custom_call.1} parent=1 // pred_check
      _
    $region71: #{tpu_custom_call.1} parent=1 // pred_check_branch
      %143 = sbr.rel (0) target = $region73
    $region72: #{tpu_custom_call.1} parent=1 // pred_region
      %144 = dma.done [#allocation15], 112
    $region73: #{tpu_custom_call.1} parent=1 // pred_fallthru
      _
    %v147 = vld [vmem:[#allocation2] sm:$0xf]
    %v148 = vld [vmem:[#allocation5] sm:$0xff]
    %v149 = vld [vmem:[#allocation5 + $0x8] sm:$0xff]
    %v150 = vld [vmem:[#allocation5 + $0x10] sm:$0xff]
    %v151 = vld [vmem:[#allocation5 + $0x18] sm:$0xff]
    %v152 = vld [vmem:[#allocation5 + $0x20] sm:$0xff]
    %v153 = vld [vmem:[#allocation5 + $0x28] sm:$0xff]
    %v154 = vld [vmem:[#allocation5 + $0x30] sm:$0xff]
    %v155 = vld [vmem:[#allocation5 + $0x38] sm:$0xff]
    %v156 = vld [vmem:[#allocation5 + $0x40] sm:$0xff]
    %v157 = vld [vmem:[#allocation5 + $0x48] sm:$0xff]
    %v158 = vld [vmem:[#allocation5 + $0x50] sm:$0xff]
    %v159 = vld [vmem:[#allocation5 + $0x58] sm:$0xff]
    %v160 = vld [vmem:[#allocation5 + $0x60] sm:$0xff]
    %v161 = vld [vmem:[#allocation5 + $0x68] sm:$0xff]
    %v162 = vld [vmem:[#allocation5 + $0x70] sm:$0xff]
    %v163 = vld [vmem:[#allocation5 + $0x78] sm:$0xff]
    %v180 = vunpack.c.l.b16 %v148
    %v181 = vunpack.c.h.b16 %v148
    %v182 = vunpack.c.l.b16 %v149
    %v183 = vunpack.c.h.b16 %v149
    %v184 = vunpack.c.l.b16 %v150
    %v185 = vunpack.c.h.b16 %v150
    %v186 = vunpack.c.l.b16 %v151
    %v187 = vunpack.c.h.b16 %v151
    %v188 = vunpack.c.l.b16 %v152
    %v189 = vunpack.c.h.b16 %v152
    %v190 = vunpack.c.l.b16 %v153
    %v191 = vunpack.c.h.b16 %v153
    %v192 = vunpack.c.l.b16 %v154
    %v193 = vunpack.c.h.b16 %v154
    %v194 = vunpack.c.l.b16 %v155
    %v195 = vunpack.c.h.b16 %v155
    %v196 = vunpack.c.l.b16 %v156
    %v197 = vunpack.c.h.b16 %v156
    %v198 = vunpack.c.l.b16 %v157
    %v199 = vunpack.c.h.b16 %v157
    %v200 = vunpack.c.l.b16 %v158
    %v201 = vunpack.c.h.b16 %v158
    %v202 = vunpack.c.l.b16 %v159
    %v203 = vunpack.c.h.b16 %v159
    %v204 = vunpack.c.l.b16 %v160
    %v205 = vunpack.c.h.b16 %v160
    %v206 = vunpack.c.l.b16 %v161
    %v207 = vunpack.c.h.b16 %v161
    %v208 = vunpack.c.l.b16 %v162
    %v209 = vunpack.c.h.b16 %v162
    %v210 = vunpack.c.l.b16 %v163
    %v211 = vunpack.c.h.b16 %v163
    %v212 = vpack.c.b16 %v182, %v180
    %v213 = vpack.c.b16 %v183, %v181
    %v214 = vpack.c.b16 %v186, %v184
    %v215 = vpack.c.b16 %v187, %v185
    %v216 = vpack.c.b16 %v190, %v188
    %v217 = vpack.c.b16 %v191, %v189
    %v218 = vpack.c.b16 %v194, %v192
    %v219 = vpack.c.b16 %v195, %v193
    %v220 = vpack.c.b16 %v198, %v196
    %v221 = vpack.c.b16 %v199, %v197
    %v222 = vpack.c.b16 %v202, %v200
    %v223 = vpack.c.b16 %v203, %v201
    %v224 = vpack.c.b16 %v206, %v204
    %v225 = vpack.c.b16 %v207, %v205
    %v226 = vpack.c.b16 %v210, %v208
    %v227 = vpack.c.b16 %v211, %v209
    %244 = vmatprep.subr.bf16.mxu0 %v213
    %245 = vmatpush1.bf16.msra.mxu0 %v212
    %246 = vmatprep.subr.bf16.mxu0 %v215
    %247 = vmatpush1.bf16.msra.mxu0 %v214
    %248 = vmatprep.subr.bf16.mxu0 %v217
    %249 = vmatpush1.bf16.msra.mxu0 %v216
    %250 = vmatprep.subr.bf16.mxu0 %v219
    %251 = vmatpush1.bf16.msra.mxu0 %v218
    %252 = vmatprep.subr.bf16.mxu0 %v221
    %253 = vmatpush1.bf16.msra.mxu0 %v220
    %254 = vmatprep.subr.bf16.mxu0 %v223
    %255 = vmatpush1.bf16.msra.mxu0 %v222
    %256 = vmatprep.subr.bf16.mxu0 %v225
    %257 = vmatpush1.bf16.msra.mxu0 %v224
    %258 = vmatprep.subr.bf16.mxu0 %v227
    %259 = vmatpush1.bf16.msra.mxu0 %v226
    %260 = vmatprep.subr.bf16.mxu0 0
    %261 = vmatpush1.bf16.msra.mxu0 0
    %262 = vmatprep.subr.bf16.mxu0 0
    %263 = vmatpush1.bf16.msra.mxu0 0
    %264 = vmatprep.subr.bf16.mxu0 0
    %265 = vmatpush1.bf16.msra.mxu0 0
    %266 = vmatprep.subr.bf16.mxu0 0
    %267 = vmatpush1.bf16.msra.mxu0 0
    %268 = vmatprep.subr.bf16.mxu0 0
    %269 = vmatpush1.bf16.msra.mxu0 0
    %270 = vmatprep.subr.bf16.mxu0 0
    %271 = vmatpush1.bf16.msra.mxu0 0
    %272 = vmatprep.subr.bf16.mxu0 0
    %273 = vmatpush1.bf16.msra.mxu0 0
    %274 = vmatprep.subr.bf16.mxu0 0
    %275 = vmatpush1.bf16.msra.mxu0 0
    %276 = vmatprep.mubr.bf16.mxu0 0
    %277 = vmatmul.mubr.bf16.gmra.mrb[0].mxu0 %v147
    %v278 = vpop.f32.mrb[0].mxu0
    %v279 = vadd.f32 0.0, %v278
    %v280 = vpop.f32.mrb[0].mxu0
    %v281 = vadd.f32 0.0, %v280
    %v282 = vpop.f32.mrb[0].mxu0
    %v283 = vpop.f32.mrb[0].mxu0
    %284 = vdwg.mxu0
    %v285 = vld [vmem:[#allocation7] sm:$0x3]
    %v286 = vpack.c.bf16 %v279, %v279
    %v287 = vpack.c.bf16 %v281, %v281
    %v290 = vunpack.c.l.s4 1966171168
    %v291 = vunpack.c.0.s8 %v290
    %v292 = vlaneseq
    %v293 = vshrl.u32 %v292, 7
    %v294 = vsub.s32 %v291, %v293
    %v295 = vrot.slane %v285, %v294
    %v296 = vcombine.high %v295, %v295
    %v298 = vunpack.c.l.s4 1966171168
    %v299 = vunpack.c.0.s8 %v298
    %v300 = vlaneseq
    %v301 = vshrl.u32 %v300, 7
    %v302 = vsub.s32 %v299, %v301
    %v303 = vrot.slane %v295, %v302
    %v305 = vunpack.c.l.s4 1966171168
    %v306 = vunpack.c.0.s8 %v305
    %v307 = vlaneseq
    %v308 = vshrl.u32 %v307, 7
    %v309 = vsub.s32 %v306, %v308
    %v310 = vrot.slane %v296, %v309
    %v312 = vpack.i.b16 %v303, %v303
    %v314 = vlaneseq
    %v315 = vshrl.u32 %v314, 7
    %v316 = vsub.s32 0, %v315
    %v317 = vrot.slane %v312, %v316
    %v319 = vpack.i.b16 %v310, %v310
    %v321 = vlaneseq
    %v322 = vshrl.u32 %v321, 7
    %v323 = vsub.s32 0, %v322
    %v324 = vrot.slane %v319, %v323
    %v325 = vadd.bf16 %v286, %v317
    %v326 = vadd.bf16 %v287, %v324
    %v327 = vmul.bf16 %v325, 1045249613
    %v328 = vmul.bf16 %v326, 1045249613
    %v329 = vmax.bf16 %v325, %v327
    %v330 = vmax.bf16 %v326, %v328
    %v331 = vld [vmem:[#allocation8] sm:$0xff]
    %v332 = vld [vmem:[#allocation8 + $0x8] sm:$0xff]
    %v333 = vld [vmem:[#allocation8 + $0x10] sm:$0xff]
    %v334 = vld [vmem:[#allocation8 + $0x18] sm:$0xff]
    %v335 = vld [vmem:[#allocation8 + $0x20] sm:$0xff]
    %v336 = vld [vmem:[#allocation8 + $0x28] sm:$0xff]
    %v337 = vld [vmem:[#allocation8 + $0x30] sm:$0xff]
    %v338 = vld [vmem:[#allocation8 + $0x38] sm:$0xff]
    %v339 = vld [vmem:[#allocation8 + $0x40] sm:$0xff]
    %v340 = vld [vmem:[#allocation8 + $0x48] sm:$0xff]
    %v341 = vld [vmem:[#allocation8 + $0x50] sm:$0xff]
    %v342 = vld [vmem:[#allocation8 + $0x58] sm:$0xff]
    %v343 = vld [vmem:[#allocation8 + $0x60] sm:$0xff]
    %v344 = vld [vmem:[#allocation8 + $0x68] sm:$0xff]
    %v345 = vld [vmem:[#allocation8 + $0x70] sm:$0xff]
    %v346 = vld [vmem:[#allocation8 + $0x78] sm:$0xff]
    %v347 = vld [vmem:[#allocation8 + $0x80] sm:$0xff]
    %v348 = vld [vmem:[#allocation8 + $0x88] sm:$0xff]
    %v349 = vld [vmem:[#allocation8 + $0x90] sm:$0xff]
    %v350 = vld [vmem:[#allocation8 + $0x98] sm:$0xff]
    %v351 = vld [vmem:[#allocation8 + $0xa0] sm:$0xff]
    %v352 = vld [vmem:[#allocation8 + $0xa8] sm:$0xff]
    %v353 = vld [vmem:[#allocation8 + $0xb0] sm:$0xff]
    %v354 = vld [vmem:[#allocation8 + $0xb8] sm:$0xff]
    %v355 = vld [vmem:[#allocation8 + $0xc0] sm:$0xff]
    %v356 = vld [vmem:[#allocation8 + $0xc8] sm:$0xff]
    %v357 = vld [vmem:[#allocation8 + $0xd0] sm:$0xff]
    %v358 = vld [vmem:[#allocation8 + $0xd8] sm:$0xff]
    %v359 = vld [vmem:[#allocation8 + $0xe0] sm:$0xff]
    %v360 = vld [vmem:[#allocation8 + $0xe8] sm:$0xff]
    %v361 = vld [vmem:[#allocation8 + $0xf0] sm:$0xff]
    %v362 = vld [vmem:[#allocation8 + $0xf8] sm:$0xff]
    %v363 = vld [vmem:[#allocation8 + $0x100] sm:$0xff]
    %v364 = vld [vmem:[#allocation8 + $0x108] sm:$0xff]
    %v365 = vld [vmem:[#allocation8 + $0x110] sm:$0xff]
    %v366 = vld [vmem:[#allocation8 + $0x118] sm:$0xff]
    %v367 = vld [vmem:[#allocation8 + $0x120] sm:$0xff]
    %v368 = vld [vmem:[#allocation8 + $0x128] sm:$0xff]
    %v369 = vld [vmem:[#allocation8 + $0x130] sm:$0xff]
    %v370 = vld [vmem:[#allocation8 + $0x138] sm:$0xff]
    %v371 = vld [vmem:[#allocation8 + $0x140] sm:$0xff]
    %v372 = vld [vmem:[#allocation8 + $0x148] sm:$0xff]
    %v373 = vld [vmem:[#allocation8 + $0x150] sm:$0xff]
    %v374 = vld [vmem:[#allocation8 + $0x158] sm:$0xff]
    %v375 = vld [vmem:[#allocation8 + $0x160] sm:$0xff]
    %v376 = vld [vmem:[#allocation8 + $0x168] sm:$0xff]
    %v377 = vld [vmem:[#allocation8 + $0x170] sm:$0xff]
    %v378 = vld [vmem:[#allocation8 + $0x178] sm:$0xff]
    %v379 = vld [vmem:[#allocation8 + $0x180] sm:$0xff]
    %v380 = vld [vmem:[#allocation8 + $0x188] sm:$0xff]
    %v381 = vld [vmem:[#allocation8 + $0x190] sm:$0xff]
    %v382 = vld [vmem:[#allocation8 + $0x198] sm:$0xff]
    %v383 = vld [vmem:[#allocation8 + $0x1a0] sm:$0xff]
    %v384 = vld [vmem:[#allocation8 + $0x1a8] sm:$0xff]
    %v385 = vld [vmem:[#allocation8 + $0x1b0] sm:$0xff]
    %v386 = vld [vmem:[#allocation8 + $0x1b8] sm:$0xff]
    %v387 = vld [vmem:[#allocation8 + $0x1c0] sm:$0xff]
    %v388 = vld [vmem:[#allocation8 + $0x1c8] sm:$0xff]
    %v389 = vld [vmem:[#allocation8 + $0x1d0] sm:$0xff]
    %v390 = vld [vmem:[#allocation8 + $0x1d8] sm:$0xff]
    %v391 = vld [vmem:[#allocation8 + $0x1e0] sm:$0xff]
    %v392 = vld [vmem:[#allocation8 + $0x1e8] sm:$0xff]
    %v393 = vld [vmem:[#allocation8 + $0x1f0] sm:$0xff]
    %v394 = vld [vmem:[#allocation8 + $0x1f8] sm:$0xff]
    %v459 = vunpack.c.l.b16 %v331
    %v460 = vunpack.c.h.b16 %v331
    %v461 = vunpack.c.l.b16 %v332
    %v462 = vunpack.c.h.b16 %v332
    %v463 = vunpack.c.l.b16 %v333
    %v464 = vunpack.c.h.b16 %v333
    %v465 = vunpack.c.l.b16 %v334
    %v466 = vunpack.c.h.b16 %v334
    %v467 = vunpack.c.l.b16 %v335
    %v468 = vunpack.c.h.b16 %v335
    %v469 = vunpack.c.l.b16 %v336
    %v470 = vunpack.c.h.b16 %v336
    %v471 = vunpack.c.l.b16 %v337
    %v472 = vunpack.c.h.b16 %v337
    %v473 = vunpack.c.l.b16 %v338
    %v474 = vunpack.c.h.b16 %v338
    %v475 = vunpack.c.l.b16 %v339
    %v476 = vunpack.c.h.b16 %v339
    %v477 = vunpack.c.l.b16 %v340
    %v478 = vunpack.c.h.b16 %v340
    %v479 = vunpack.c.l.b16 %v341
    %v480 = vunpack.c.h.b16 %v341
    %v481 = vunpack.c.l.b16 %v342
    %v482 = vunpack.c.h.b16 %v342
    %v483 = vunpack.c.l.b16 %v343
    %v484 = vunpack.c.h.b16 %v343
    %v485 = vunpack.c.l.b16 %v344
    %v486 = vunpack.c.h.b16 %v344
    %v487 = vunpack.c.l.b16 %v345
    %v488 = vunpack.c.h.b16 %v345
    %v489 = vunpack.c.l.b16 %v346
    %v490 = vunpack.c.h.b16 %v346
    %v491 = vunpack.c.l.b16 %v347
    %v492 = vunpack.c.h.b16 %v347
    %v493 = vunpack.c.l.b16 %v348
    %v494 = vunpack.c.h.b16 %v348
    %v495 = vunpack.c.l.b16 %v349
    %v496 = vunpack.c.h.b16 %v349
    %v497 = vunpack.c.l.b16 %v350
    %v498 = vunpack.c.h.b16 %v350
    %v499 = vunpack.c.l.b16 %v351
    %v500 = vunpack.c.h.b16 %v351
    %v501 = vunpack.c.l.b16 %v352
    %v502 = vunpack.c.h.b16 %v352
    %v503 = vunpack.c.l.b16 %v353
    %v504 = vunpack.c.h.b16 %v353
    %v505 = vunpack.c.l.b16 %v354
    %v506 = vunpack.c.h.b16 %v354
    %v507 = vunpack.c.l.b16 %v355
    %v508 = vunpack.c.h.b16 %v355
    %v509 = vunpack.c.l.b16 %v356
    %v510 = vunpack.c.h.b16 %v356
    %v511 = vunpack.c.l.b16 %v357
    %v512 = vunpack.c.h.b16 %v357
    %v513 = vunpack.c.l.b16 %v358
    %v514 = vunpack.c.h.b16 %v358
    %v515 = vunpack.c.l.b16 %v359
    %v516 = vunpack.c.h.b16 %v359
    %v517 = vunpack.c.l.b16 %v360
    %v518 = vunpack.c.h.b16 %v360
    %v519 = vunpack.c.l.b16 %v361
    %v520 = vunpack.c.h.b16 %v361
    %v521 = vunpack.c.l.b16 %v362
    %v522 = vunpack.c.h.b16 %v362
    %v523 = vunpack.c.l.b16 %v363
    %v524 = vunpack.c.h.b16 %v363
    %v525 = vunpack.c.l.b16 %v364
    %v526 = vunpack.c.h.b16 %v364
    %v527 = vunpack.c.l.b16 %v365
    %v528 = vunpack.c.h.b16 %v365
    %v529 = vunpack.c.l.b16 %v366
    %v530 = vunpack.c.h.b16 %v366
    %v531 = vunpack.c.l.b16 %v367
    %v532 = vunpack.c.h.b16 %v367
    %v533 = vunpack.c.l.b16 %v368
    %v534 = vunpack.c.h.b16 %v368
    %v535 = vunpack.c.l.b16 %v369
    %v536 = vunpack.c.h.b16 %v369
    %v537 = vunpack.c.l.b16 %v370
    %v538 = vunpack.c.h.b16 %v370
    %v539 = vunpack.c.l.b16 %v371
    %v540 = vunpack.c.h.b16 %v371
    %v541 = vunpack.c.l.b16 %v372
    %v542 = vunpack.c.h.b16 %v372
    %v543 = vunpack.c.l.b16 %v373
    %v544 = vunpack.c.h.b16 %v373
    %v545 = vunpack.c.l.b16 %v374
    %v546 = vunpack.c.h.b16 %v374
    %v547 = vunpack.c.l.b16 %v375
    %v548 = vunpack.c.h.b16 %v375
    %v549 = vunpack.c.l.b16 %v376
    %v550 = vunpack.c.h.b16 %v376
    %v551 = vunpack.c.l.b16 %v377
    %v552 = vunpack.c.h.b16 %v377
    %v553 = vunpack.c.l.b16 %v378
    %v554 = vunpack.c.h.b16 %v378
    %v555 = vunpack.c.l.b16 %v379
    %v556 = vunpack.c.h.b16 %v379
    %v557 = vunpack.c.l.b16 %v380
    %v558 = vunpack.c.h.b16 %v380
    %v559 = vunpack.c.l.b16 %v381
    %v560 = vunpack.c.h.b16 %v381
    %v561 = vunpack.c.l.b16 %v382
    %v562 = vunpack.c.h.b16 %v382
    %v563 = vunpack.c.l.b16 %v383
    %v564 = vunpack.c.h.b16 %v383
    %v565 = vunpack.c.l.b16 %v384
    %v566 = vunpack.c.h.b16 %v384
    %v567 = vunpack.c.l.b16 %v385
    %v568 = vunpack.c.h.b16 %v385
    %v569 = vunpack.c.l.b16 %v386
    %v570 = vunpack.c.h.b16 %v386
    %v571 = vunpack.c.l.b16 %v387
    %v572 = vunpack.c.h.b16 %v387
    %v573 = vunpack.c.l.b16 %v388
    %v574 = vunpack.c.h.b16 %v388
    %v575 = vunpack.c.l.b16 %v389
    %v576 = vunpack.c.h.b16 %v389
    %v577 = vunpack.c.l.b16 %v390
    %v578 = vunpack.c.h.b16 %v390
    %v579 = vunpack.c.l.b16 %v391
    %v580 = vunpack.c.h.b16 %v391
    %v581 = vunpack.c.l.b16 %v392
    %v582 = vunpack.c.h.b16 %v392
    %v583 = vunpack.c.l.b16 %v393
    %v584 = vunpack.c.h.b16 %v393
    %v585 = vunpack.c.l.b16 %v394
    %v586 = vunpack.c.h.b16 %v394
    %v587 = vpack.c.b16 %v463, %v459
    %v588 = vpack.c.b16 %v464, %v460
    %v589 = vpack.c.b16 %v465, %v461
    %v590 = vpack.c.b16 %v466, %v462
    %v591 = vpack.c.b16 %v471, %v467
    %v592 = vpack.c.b16 %v472, %v468
    %v593 = vpack.c.b16 %v473, %v469
    %v594 = vpack.c.b16 %v474, %v470
    %v595 = vpack.c.b16 %v479, %v475
    %v596 = vpack.c.b16 %v480, %v476
    %v597 = vpack.c.b16 %v481, %v477
    %v598 = vpack.c.b16 %v482, %v478
    %v599 = vpack.c.b16 %v487, %v483
    %v600 = vpack.c.b16 %v488, %v484
    %v601 = vpack.c.b16 %v489, %v485
    %v602 = vpack.c.b16 %v490, %v486
    %v603 = vpack.c.b16 %v495, %v491
    %v604 = vpack.c.b16 %v496, %v492
    %v605 = vpack.c.b16 %v497, %v493
    %v606 = vpack.c.b16 %v498, %v494
    %v607 = vpack.c.b16 %v503, %v499
    %v608 = vpack.c.b16 %v504, %v500
    %v609 = vpack.c.b16 %v505, %v501
    %v610 = vpack.c.b16 %v506, %v502
    %v611 = vpack.c.b16 %v511, %v507
    %v612 = vpack.c.b16 %v512, %v508
    %v613 = vpack.c.b16 %v513, %v509
    %v614 = vpack.c.b16 %v514, %v510
    %v615 = vpack.c.b16 %v519, %v515
    %v616 = vpack.c.b16 %v520, %v516
    %v617 = vpack.c.b16 %v521, %v517
    %v618 = vpack.c.b16 %v522, %v518
    %v619 = vpack.c.b16 %v527, %v523
    %v620 = vpack.c.b16 %v528, %v524
    %v621 = vpack.c.b16 %v529, %v525
    %v622 = vpack.c.b16 %v530, %v526
    %v623 = vpack.c.b16 %v535, %v531
    %v624 = vpack.c.b16 %v536, %v532
    %v625 = vpack.c.b16 %v537, %v533
    %v626 = vpack.c.b16 %v538, %v534
    %v627 = vpack.c.b16 %v543, %v539
    %v628 = vpack.c.b16 %v544, %v540
    %v629 = vpack.c.b16 %v545, %v541
    %v630 = vpack.c.b16 %v546, %v542
    %v631 = vpack.c.b16 %v551, %v547
    %v632 = vpack.c.b16 %v552, %v548
    %v633 = vpack.c.b16 %v553, %v549
    %v634 = vpack.c.b16 %v554, %v550
    %v635 = vpack.c.b16 %v559, %v555
    %v636 = vpack.c.b16 %v560, %v556
    %v637 = vpack.c.b16 %v561, %v557
    %v638 = vpack.c.b16 %v562, %v558
    %v639 = vpack.c.b16 %v567, %v563
    %v640 = vpack.c.b16 %v568, %v564
    %v641 = vpack.c.b16 %v569, %v565
    %v642 = vpack.c.b16 %v570, %v566
    %v643 = vpack.c.b16 %v575, %v571
    %v644 = vpack.c.b16 %v576, %v572
    %v645 = vpack.c.b16 %v577, %v573
    %v646 = vpack.c.b16 %v578, %v574
    %v647 = vpack.c.b16 %v583, %v579
    %v648 = vpack.c.b16 %v584, %v580
    %v649 = vpack.c.b16 %v585, %v581
    %v650 = vpack.c.b16 %v586, %v582
    %715 = vmatprep.subr.bf16.mxu0 %v588
    %716 = vmatpush1.bf16.msra.mxu0 %v587
    %717 = vmatprep.subr.bf16.mxu0 %v592
    %718 = vmatpush1.bf16.msra.mxu0 %v591
    %719 = vmatprep.subr.bf16.mxu0 %v596
    %720 = vmatpush1.bf16.msra.mxu0 %v595
    %721 = vmatprep.subr.bf16.mxu0 %v600
    %722 = vmatpush1.bf16.msra.mxu0 %v599
    %723 = vmatprep.subr.bf16.mxu0 %v604
    %724 = vmatpush1.bf16.msra.mxu0 %v603
    %725 = vmatprep.subr.bf16.mxu0 %v608
    %726 = vmatpush1.bf16.msra.mxu0 %v607
    %727 = vmatprep.subr.bf16.mxu0 %v612
    %728 = vmatpush1.bf16.msra.mxu0 %v611
    %729 = vmatprep.subr.bf16.mxu0 %v616
    %730 = vmatpush1.bf16.msra.mxu0 %v615
    %731 = vmatprep.subr.bf16.mxu0 %v620
    %732 = vmatpush1.bf16.msra.mxu0 %v619
    %733 = vmatprep.subr.bf16.mxu0 %v624
    %734 = vmatpush1.bf16.msra.mxu0 %v623
    %735 = vmatprep.subr.bf16.mxu0 %v628
    %736 = vmatpush1.bf16.msra.mxu0 %v627
    %737 = vmatprep.subr.bf16.mxu0 %v632
    %738 = vmatpush1.bf16.msra.mxu0 %v631
    %739 = vmatprep.subr.bf16.mxu0 %v636
    %740 = vmatpush1.bf16.msra.mxu0 %v635
    %741 = vmatprep.subr.bf16.mxu0 %v640
    %742 = vmatpush1.bf16.msra.mxu0 %v639
    %743 = vmatprep.subr.bf16.mxu0 %v644
    %744 = vmatpush1.bf16.msra.mxu0 %v643
    %745 = vmatprep.subr.bf16.mxu0 %v648
    %746 = vmatpush1.bf16.msra.mxu0 %v647
    %747 = vmatprep.mubr.bf16.mxu0 %v330
    %748 = vmatmul.mubr.bf16.gmra.mrb[0].mxu0 %v329
    %v749 = vpop.f32.mrb[0].mxu0
    %v750 = vadd.f32 0.0, %v749
    %v751 = vpop.f32.mrb[0].mxu0
    %v752 = vadd.f32 0.0, %v751
    %v753 = vpop.f32.mrb[0].mxu0
    %v754 = vpop.f32.mrb[0].mxu0
    %755 = vdwg.mxu0
    %756 = vmatprep.subr.bf16.mxu0 %v590
    %757 = vmatpush1.bf16.msra.mxu0 %v589
    %758 = vmatprep.subr.bf16.mxu0 %v594
    %759 = vmatpush1.bf16.msra.mxu0 %v593
    %760 = vmatprep.subr.bf16.mxu0 %v598
    %761 = vmatpush1.bf16.msra.mxu0 %v597
    %762 = vmatprep.subr.bf16.mxu0 %v602
    %763 = vmatpush1.bf16.msra.mxu0 %v601
    %764 = vmatprep.subr.bf16.mxu0 %v606
    %765 = vmatpush1.bf16.msra.mxu0 %v605
    %766 = vmatprep.subr.bf16.mxu0 %v610
    %767 = vmatpush1.bf16.msra.mxu0 %v609
    %768 = vmatprep.subr.bf16.mxu0 %v614
    %769 = vmatpush1.bf16.msra.mxu0 %v613
    %770 = vmatprep.subr.bf16.mxu0 %v618
    %771 = vmatpush1.bf16.msra.mxu0 %v617
    %772 = vmatprep.subr.bf16.mxu0 %v622
    %773 = vmatpush1.bf16.msra.mxu0 %v621
    %774 = vmatprep.subr.bf16.mxu0 %v626
    %775 = vmatpush1.bf16.msra.mxu0 %v625
    %776 = vmatprep.subr.bf16.mxu0 %v630
    %777 = vmatpush1.bf16.msra.mxu0 %v629
    %778 = vmatprep.subr.bf16.mxu0 %v634
    %779 = vmatpush1.bf16.msra.mxu0 %v633
    %780 = vmatprep.subr.bf16.mxu0 %v638
    %781 = vmatpush1.bf16.msra.mxu0 %v637
    %782 = vmatprep.subr.bf16.mxu0 %v642
    %783 = vmatpush1.bf16.msra.mxu0 %v641
    %784 = vmatprep.subr.bf16.mxu0 %v646
    %785 = vmatpush1.bf16.msra.mxu0 %v645
    %786 = vmatprep.subr.bf16.mxu0 %v650
    %787 = vmatpush1.bf16.msra.mxu0 %v649
    %788 = vmatprep.mubr.bf16.mxu0 %v330
    %789 = vmatmul.mubr.bf16.gmra.mrb[0].mxu0 %v329
    %v790 = vpop.f32.mrb[0].mxu0
    %v791 = vadd.f32 0.0, %v790
    %v792 = vpop.f32.mrb[0].mxu0
    %v793 = vadd.f32 0.0, %v792
    %v794 = vpop.f32.mrb[0].mxu0
    %v795 = vpop.f32.mrb[0].mxu0
    %796 = vdwg.mxu0
    %v797 = vld [vmem:[#allocation10] sm:$0xf]
    %v798 = vpack.c.bf16 %v750, %v750
    %v799 = vpack.c.bf16 %v752, %v752
    %v800 = vpack.c.bf16 %v791, %v791
    %v801 = vpack.c.bf16 %v793, %v793
    %v804 = vunpack.c.l.s4 1966171168
    %v805 = vunpack.c.0.s8 %v804
    %v806 = vlaneseq
    %v807 = vshrl.u32 %v806, 7
    %v808 = vsub.s32 %v805, %v807
    %v809 = vrot.slane %v797, %v808
    %v810 = vcombine.high %v809, %v809
    %v812 = vunpack.c.l.s4 1966171168
    %v813 = vunpack.c.0.s8 %v812
    %v814 = vlaneseq
    %v815 = vshrl.u32 %v814, 7
    %v816 = vsub.s32 %v813, %v815
    %v817 = vrot.slane %v809, %v816
    %v819 = vunpack.c.l.s4 1966171168
    %v820 = vunpack.c.0.s8 %v819
    %v821 = vlaneseq
    %v822 = vshrl.u32 %v821, 7
    %v823 = vsub.s32 %v820, %v822
    %v824 = vrot.slane %v810, %v823
    %v825 = vcombine.high %v817, %v817
    %v826 = vcombine.high %v824, %v824
    %v828 = vpack.i.b16 %v817, %v817
    %v830 = vlaneseq
    %v831 = vshrl.u32 %v830, 7
    %v832 = vsub.s32 0, %v831
    %v833 = vrot.slane %v828, %v832
    %v835 = vpack.i.b16 %v824, %v824
    %v837 = vlaneseq
    %v838 = vshrl.u32 %v837, 7
    %v839 = vsub.s32 0, %v838
    %v840 = vrot.slane %v835, %v839
    %v842 = vpack.i.b16 %v825, %v825
    %v844 = vlaneseq
    %v845 = vshrl.u32 %v844, 7
    %v846 = vsub.s32 0, %v845
    %v847 = vrot.slane %v842, %v846
    %v849 = vpack.i.b16 %v826, %v826
    %v851 = vlaneseq
    %v852 = vshrl.u32 %v851, 7
    %v853 = vsub.s32 0, %v852
    %v854 = vrot.slane %v849, %v853
    %v855 = vadd.bf16 %v798, %v833
    %v856 = vadd.bf16 %v799, %v840
    %v857 = vadd.bf16 %v800, %v847
    %v858 = vadd.bf16 %v801, %v854
    %v859 = vmul.bf16 %v855, 1045249613
    %v860 = vmul.bf16 %v856, 1045249613
    %v861 = vmul.bf16 %v857, 1045249613
    %v862 = vmul.bf16 %v858, 1045249613
    %v863 = vmax.bf16 %v855, %v859
    %v864 = vmax.bf16 %v856, %v860
    %v865 = vmax.bf16 %v857, %v861
    %v866 = vmax.bf16 %v858, %v862
    %v867 = vld [vmem:[#allocation11] sm:$0xff]
    %v868 = vld [vmem:[#allocation11 + $0x8] sm:$0xff]
    %v869 = vld [vmem:[#allocation11 + $0x10] sm:$0xff]
    %v870 = vld [vmem:[#allocation11 + $0x18] sm:$0xff]
    %v871 = vld [vmem:[#allocation11 + $0x20] sm:$0xff]
    %v872 = vld [vmem:[#allocation11 + $0x28] sm:$0xff]
    %v873 = vld [vmem:[#allocation11 + $0x30] sm:$0xff]
    %v874 = vld [vmem:[#allocation11 + $0x38] sm:$0xff]
    %v875 = vld [vmem:[#allocation11 + $0x40] sm:$0xff]
    %v876 = vld [vmem:[#allocation11 + $0x48] sm:$0xff]
    %v877 = vld [vmem:[#allocation11 + $0x50] sm:$0xff]
    %v878 = vld [vmem:[#allocation11 + $0x58] sm:$0xff]
    %v879 = vld [vmem:[#allocation11 + $0x60] sm:$0xff]
    %v880 = vld [vmem:[#allocation11 + $0x68] sm:$0xff]
    %v881 = vld [vmem:[#allocation11 + $0x70] sm:$0xff]
    %v882 = vld [vmem:[#allocation11 + $0x78] sm:$0xff]
    %v883 = vld [vmem:[#allocation11 + $0x80] sm:$0xff]
    %v884 = vld [vmem:[#allocation11 + $0x88] sm:$0xff]
    %v885 = vld [vmem:[#allocation11 + $0x90] sm:$0xff]
    %v886 = vld [vmem:[#allocation11 + $0x98] sm:$0xff]
    %v887 = vld [vmem:[#allocation11 + $0xa0] sm:$0xff]
    %v888 = vld [vmem:[#allocation11 + $0xa8] sm:$0xff]
    %v889 = vld [vmem:[#allocation11 + $0xb0] sm:$0xff]
    %v890 = vld [vmem:[#allocation11 + $0xb8] sm:$0xff]
    %v891 = vld [vmem:[#allocation11 + $0xc0] sm:$0xff]
    %v892 = vld [vmem:[#allocation11 + $0xc8] sm:$0xff]
    %v893 = vld [vmem:[#allocation11 + $0xd0] sm:$0xff]
    %v894 = vld [vmem:[#allocation11 + $0xd8] sm:$0xff]
    %v895 = vld [vmem:[#allocation11 + $0xe0] sm:$0xff]
    %v896 = vld [vmem:[#allocation11 + $0xe8] sm:$0xff]
    %v897 = vld [vmem:[#allocation11 + $0xf0] sm:$0xff]
    %v898 = vld [vmem:[#allocation11 + $0xf8] sm:$0xff]
    %v899 = vld [vmem:[#allocation11 + $0x100] sm:$0xff]
    %v900 = vld [vmem:[#allocation11 + $0x108] sm:$0xff]
    %v901 = vld [vmem:[#allocation11 + $0x110] sm:$0xff]
    %v902 = vld [vmem:[#allocation11 + $0x118] sm:$0xff]
    %v903 = vld [vmem:[#allocation11 + $0x120] sm:$0xff]
    %v904 = vld [vmem:[#allocation11 + $0x128] sm:$0xff]
    %v905 = vld [vmem:[#allocation11 + $0x130] sm:$0xff]
    %v906 = vld [vmem:[#allocation11 + $0x138] sm:$0xff]
    %v907 = vld [vmem:[#allocation11 + $0x140] sm:$0xff]
    %v908 = vld [vmem:[#allocation11 + $0x148] sm:$0xff]
    %v909 = vld [vmem:[#allocation11 + $0x150] sm:$0xff]
    %v910 = vld [vmem:[#allocation11 + $0x158] sm:$0xff]
    %v911 = vld [vmem:[#allocation11 + $0x160] sm:$0xff]
    %v912 = vld [vmem:[#allocation11 + $0x168] sm:$0xff]
    %v913 = vld [vmem:[#allocation11 + $0x170] sm:$0xff]
    %v914 = vld [vmem:[#allocation11 + $0x178] sm:$0xff]
    %v915 = vld [vmem:[#allocation11 + $0x180] sm:$0xff]
    %v916 = vld [vmem:[#allocation11 + $0x188] sm:$0xff]
    %v917 = vld [vmem:[#allocation11 + $0x190] sm:$0xff]
    %v918 = vld [vmem:[#allocation11 + $0x198] sm:$0xff]
    %v919 = vld [vmem:[#allocation11 + $0x1a0] sm:$0xff]
    %v920 = vld [vmem:[#allocation11 + $0x1a8] sm:$0xff]
    %v921 = vld [vmem:[#allocation11 + $0x1b0] sm:$0xff]
    %v922 = vld [vmem:[#allocation11 + $0x1b8] sm:$0xff]
    %v923 = vld [vmem:[#allocation11 + $0x1c0] sm:$0xff]
    %v924 = vld [vmem:[#allocation11 + $0x1c8] sm:$0xff]
    %v925 = vld [vmem:[#allocation11 + $0x1d0] sm:$0xff]
    %v926 = vld [vmem:[#allocation11 + $0x1d8] sm:$0xff]
    %v927 = vld [vmem:[#allocation11 + $0x1e0] sm:$0xff]
    %v928 = vld [vmem:[#allocation11 + $0x1e8] sm:$0xff]
    %v929 = vld [vmem:[#allocation11 + $0x1f0] sm:$0xff]
    %v930 = vld [vmem:[#allocation11 + $0x1f8] sm:$0xff]
    %v931 = vld [vmem:[#allocation11 + $0x200] sm:$0xff]
    %v932 = vld [vmem:[#allocation11 + $0x208] sm:$0xff]
    %v933 = vld [vmem:[#allocation11 + $0x210] sm:$0xff]
    %v934 = vld [vmem:[#allocation11 + $0x218] sm:$0xff]
    %v935 = vld [vmem:[#allocation11 + $0x220] sm:$0xff]
    %v936 = vld [vmem:[#allocation11 + $0x228] sm:$0xff]
    %v937 = vld [vmem:[#allocation11 + $0x230] sm:$0xff]
    %v938 = vld [vmem:[#allocation11 + $0x238] sm:$0xff]
    %v939 = vld [vmem:[#allocation11 + $0x240] sm:$0xff]
    %v940 = vld [vmem:[#allocation11 + $0x248] sm:$0xff]
    %v941 = vld [vmem:[#allocation11 + $0x250] sm:$0xff]
    %v942 = vld [vmem:[#allocation11 + $0x258] sm:$0xff]
    %v943 = vld [vmem:[#allocation11 + $0x260] sm:$0xff]
    %v944 = vld [vmem:[#allocation11 + $0x268] sm:$0xff]
    %v945 = vld [vmem:[#allocation11 + $0x270] sm:$0xff]
    %v946 = vld [vmem:[#allocation11 + $0x278] sm:$0xff]
    %v947 = vld [vmem:[#allocation11 + $0x280] sm:$0xff]
    %v948 = vld [vmem:[#allocation11 + $0x288] sm:$0xff]
    %v949 = vld [vmem:[#allocation11 + $0x290] sm:$0xff]
    %v950 = vld [vmem:[#allocation11 + $0x298] sm:$0xff]
    %v951 = vld [vmem:[#allocation11 + $0x2a0] sm:$0xff]
    %v952 = vld [vmem:[#allocation11 + $0x2a8] sm:$0xff]
    %v953 = vld [vmem:[#allocation11 + $0x2b0] sm:$0xff]
    %v954 = vld [vmem:[#allocation11 + $0x2b8] sm:$0xff]
    %v955 = vld [vmem:[#allocation11 + $0x2c0] sm:$0xff]
    %v956 = vld [vmem:[#allocation11 + $0x2c8] sm:$0xff]
    %v957 = vld [vmem:[#allocation11 + $0x2d0] sm:$0xff]
    %v958 = vld [vmem:[#allocation11 + $0x2d8] sm:$0xff]
    %v959 = vld [vmem:[#allocation11 + $0x2e0] sm:$0xff]
    %v960 = vld [vmem:[#allocation11 + $0x2e8] sm:$0xff]
    %v961 = vld [vmem:[#allocation11 + $0x2f0] sm:$0xff]
    %v962 = vld [vmem:[#allocation11 + $0x2f8] sm:$0xff]
    %v963 = vld [vmem:[#allocation11 + $0x300] sm:$0xff]
    %v964 = vld [vmem:[#allocation11 + $0x308] sm:$0xff]
    %v965 = vld [vmem:[#allocation11 + $0x310] sm:$0xff]
    %v966 = vld [vmem:[#allocation11 + $0x318] sm:$0xff]
    %v967 = vld [vmem:[#allocation11 + $0x320] sm:$0xff]
    %v968 = vld [vmem:[#allocation11 + $0x328] sm:$0xff]
    %v969 = vld [vmem:[#allocation11 + $0x330] sm:$0xff]
    %v970 = vld [vmem:[#allocation11 + $0x338] sm:$0xff]
    %v971 = vld [vmem:[#allocation11 + $0x340] sm:$0xff]
    %v972 = vld [vmem:[#allocation11 + $0x348] sm:$0xff]
    %v973 = vld [vmem:[#allocation11 + $0x350] sm:$0xff]
    %v974 = vld [vmem:[#allocation11 + $0x358] sm:$0xff]
    %v975 = vld [vmem:[#allocation11 + $0x360] sm:$0xff]
    %v976 = vld [vmem:[#allocation11 + $0x368] sm:$0xff]
    %v977 = vld [vmem:[#allocation11 + $0x370] sm:$0xff]
    %v978 = vld [vmem:[#allocation11 + $0x378] sm:$0xff]
    %v979 = vld [vmem:[#allocation11 + $0x380] sm:$0xff]
    %v980 = vld [vmem:[#allocation11 + $0x388] sm:$0xff]
    %v981 = vld [vmem:[#allocation11 + $0x390] sm:$0xff]
    %v982 = vld [vmem:[#allocation11 + $0x398] sm:$0xff]
    %v983 = vld [vmem:[#allocation11 + $0x3a0] sm:$0xff]
    %v984 = vld [vmem:[#allocation11 + $0x3a8] sm:$0xff]
    %v985 = vld [vmem:[#allocation11 + $0x3b0] sm:$0xff]
    %v986 = vld [vmem:[#allocation11 + $0x3b8] sm:$0xff]
    %v987 = vld [vmem:[#allocation11 + $0x3c0] sm:$0xff]
    %v988 = vld [vmem:[#allocation11 + $0x3c8] sm:$0xff]
    %v989 = vld [vmem:[#allocation11 + $0x3d0] sm:$0xff]
    %v990 = vld [vmem:[#allocation11 + $0x3d8] sm:$0xff]
    %v991 = vld [vmem:[#allocation11 + $0x3e0] sm:$0xff]
    %v992 = vld [vmem:[#allocation11 + $0x3e8] sm:$0xff]
    %v993 = vld [vmem:[#allocation11 + $0x3f0] sm:$0xff]
    %v994 = vld [vmem:[#allocation11 + $0x3f8] sm:$0xff]
    %v995 = vld [vmem:[#allocation11 + $0x400] sm:$0xff]
    %v996 = vld [vmem:[#allocation11 + $0x408] sm:$0xff]
    %v997 = vld [vmem:[#allocation11 + $0x410] sm:$0xff]
    %v998 = vld [vmem:[#allocation11 + $0x418] sm:$0xff]
    %v999 = vld [vmem:[#allocation11 + $0x420] sm:$0xff]
    %v1000 = vld [vmem:[#allocation11 + $0x428] sm:$0xff]
    %v1001 = vld [vmem:[#allocation11 + $0x430] sm:$0xff]
    %v1002 = vld [vmem:[#allocation11 + $0x438] sm:$0xff]
    %v1003 = vld [vmem:[#allocation11 + $0x440] sm:$0xff]
    %v1004 = vld [vmem:[#allocation11 + $0x448] sm:$0xff]
    %v1005 = vld [vmem:[#allocation11 + $0x450] sm:$0xff]
    %v1006 = vld [vmem:[#allocation11 + $0x458] sm:$0xff]
    %v1007 = vld [vmem:[#allocation11 + $0x460] sm:$0xff]
    %v1008 = vld [vmem:[#allocation11 + $0x468] sm:$0xff]
    %v1009 = vld [vmem:[#allocation11 + $0x470] sm:$0xff]
    %v1010 = vld [vmem:[#allocation11 + $0x478] sm:$0xff]
    %v1011 = vld [vmem:[#allocation11 + $0x480] sm:$0xff]
    %v1012 = vld [vmem:[#allocation11 + $0x488] sm:$0xff]
    %v1013 = vld [vmem:[#allocation11 + $0x490] sm:$0xff]
    %v1014 = vld [vmem:[#allocation11 + $0x498] sm:$0xff]
    %v1015 = vld [vmem:[#allocation11 + $0x4a0] sm:$0xff]
    %v1016 = vld [vmem:[#allocation11 + $0x4a8] sm:$0xff]
    %v1017 = vld [vmem:[#allocation11 + $0x4b0] sm:$0xff]
    %v1018 = vld [vmem:[#allocation11 + $0x4b8] sm:$0xff]
    %v1019 = vld [vmem:[#allocation11 + $0x4c0] sm:$0xff]
    %v1020 = vld [vmem:[#allocation11 + $0x4c8] sm:$0xff]
    %v1021 = vld [vmem:[#allocation11 + $0x4d0] sm:$0xff]
    %v1022 = vld [vmem:[#allocation11 + $0x4d8] sm:$0xff]
    %v1023 = vld [vmem:[#allocation11 + $0x4e0] sm:$0xff]
    %v1024 = vld [vmem:[#allocation11 + $0x4e8] sm:$0xff]
    %v1025 = vld [vmem:[#allocation11 + $0x4f0] sm:$0xff]
    %v1026 = vld [vmem:[#allocation11 + $0x4f8] sm:$0xff]
    %v1027 = vld [vmem:[#allocation11 + $0x500] sm:$0xff]
    %v1028 = vld [vmem:[#allocation11 + $0x508] sm:$0xff]
    %v1029 = vld [vmem:[#allocation11 + $0x510] sm:$0xff]
    %v1030 = vld [vmem:[#allocation11 + $0x518] sm:$0xff]
    %v1031 = vld [vmem:[#allocation11 + $0x520] sm:$0xff]
    %v1032 = vld [vmem:[#allocation11 + $0x528] sm:$0xff]
    %v1033 = vld [vmem:[#allocation11 + $0x530] sm:$0xff]
    %v1034 = vld [vmem:[#allocation11 + $0x538] sm:$0xff]
    %v1035 = vld [vmem:[#allocation11 + $0x540] sm:$0xff]
    %v1036 = vld [vmem:[#allocation11 + $0x548] sm:$0xff]
    %v1037 = vld [vmem:[#allocation11 + $0x550] sm:$0xff]
    %v1038 = vld [vmem:[#allocation11 + $0x558] sm:$0xff]
    %v1039 = vld [vmem:[#allocation11 + $0x560] sm:$0xff]
    %v1040 = vld [vmem:[#allocation11 + $0x568] sm:$0xff]
    %v1041 = vld [vmem:[#allocation11 + $0x570] sm:$0xff]
    %v1042 = vld [vmem:[#allocation11 + $0x578] sm:$0xff]
    %v1043 = vld [vmem:[#allocation11 + $0x580] sm:$0xff]
    %v1044 = vld [vmem:[#allocation11 + $0x588] sm:$0xff]
    %v1045 = vld [vmem:[#allocation11 + $0x590] sm:$0xff]
    %v1046 = vld [vmem:[#allocation11 + $0x598] sm:$0xff]
    %v1047 = vld [vmem:[#allocation11 + $0x5a0] sm:$0xff]
    %v1048 = vld [vmem:[#allocation11 + $0x5a8] sm:$0xff]
    %v1049 = vld [vmem:[#allocation11 + $0x5b0] sm:$0xff]
    %v1050 = vld [vmem:[#allocation11 + $0x5b8] sm:$0xff]
    %v1051 = vld [vmem:[#allocation11 + $0x5c0] sm:$0xff]
    %v1052 = vld [vmem:[#allocation11 + $0x5c8] sm:$0xff]
    %v1053 = vld [vmem:[#allocation11 + $0x5d0] sm:$0xff]
    %v1054 = vld [vmem:[#allocation11 + $0x5d8] sm:$0xff]
    %v1055 = vld [vmem:[#allocation11 + $0x5e0] sm:$0xff]
    %v1056 = vld [vmem:[#allocation11 + $0x5e8] sm:$0xff]
    %v1057 = vld [vmem:[#allocation11 + $0x5f0] sm:$0xff]
    %v1058 = vld [vmem:[#allocation11 + $0x5f8] sm:$0xff]
    %v1059 = vld [vmem:[#allocation11 + $0x600] sm:$0xff]
    %v1060 = vld [vmem:[#allocation11 + $0x608] sm:$0xff]
    %v1061 = vld [vmem:[#allocation11 + $0x610] sm:$0xff]
    %v1062 = vld [vmem:[#allocation11 + $0x618] sm:$0xff]
    %v1063 = vld [vmem:[#allocation11 + $0x620] sm:$0xff]
    %v1064 = vld [vmem:[#allocation11 + $0x628] sm:$0xff]
    %v1065 = vld [vmem:[#allocation11 + $0x630] sm:$0xff]
    %v1066 = vld [vmem:[#allocation11 + $0x638] sm:$0xff]
    %v1067 = vld [vmem:[#allocation11 + $0x640] sm:$0xff]
    %v1068 = vld [vmem:[#allocation11 + $0x648] sm:$0xff]
    %v1069 = vld [vmem:[#allocation11 + $0x650] sm:$0xff]
    %v1070 = vld [vmem:[#allocation11 + $0x658] sm:$0xff]
    %v1071 = vld [vmem:[#allocation11 + $0x660] sm:$0xff]
    %v1072 = vld [vmem:[#allocation11 + $0x668] sm:$0xff]
    %v1073 = vld [vmem:[#allocation11 + $0x670] sm:$0xff]
    %v1074 = vld [vmem:[#allocation11 + $0x678] sm:$0xff]
    %v1075 = vld [vmem:[#allocation11 + $0x680] sm:$0xff]
    %v1076 = vld [vmem:[#allocation11 + $0x688] sm:$0xff]
    %v1077 = vld [vmem:[#allocation11 + $0x690] sm:$0xff]
    %v1078 = vld [vmem:[#allocation11 + $0x698] sm:$0xff]
    %v1079 = vld [vmem:[#allocation11 + $0x6a0] sm:$0xff]
    %v1080 = vld [vmem:[#allocation11 + $0x6a8] sm:$0xff]
    %v1081 = vld [vmem:[#allocation11 + $0x6b0] sm:$0xff]
    %v1082 = vld [vmem:[#allocation11 + $0x6b8] sm:$0xff]
    %v1083 = vld [vmem:[#allocation11 + $0x6c0] sm:$0xff]
    %v1084 = vld [vmem:[#allocation11 + $0x6c8] sm:$0xff]
    %v1085 = vld [vmem:[#allocation11 + $0x6d0] sm:$0xff]
    %v1086 = vld [vmem:[#allocation11 + $0x6d8] sm:$0xff]
    %v1087 = vld [vmem:[#allocation11 + $0x6e0] sm:$0xff]
    %v1088 = vld [vmem:[#allocation11 + $0x6e8] sm:$0xff]
    %v1089 = vld [vmem:[#allocation11 + $0x6f0] sm:$0xff]
    %v1090 = vld [vmem:[#allocation11 + $0x6f8] sm:$0xff]
    %v1091 = vld [vmem:[#allocation11 + $0x700] sm:$0xff]
    %v1092 = vld [vmem:[#allocation11 + $0x708] sm:$0xff]
    %v1093 = vld [vmem:[#allocation11 + $0x710] sm:$0xff]
    %v1094 = vld [vmem:[#allocation11 + $0x718] sm:$0xff]
    %v1095 = vld [vmem:[#allocation11 + $0x720] sm:$0xff]
    %v1096 = vld [vmem:[#allocation11 + $0x728] sm:$0xff]
    %v1097 = vld [vmem:[#allocation11 + $0x730] sm:$0xff]
    %v1098 = vld [vmem:[#allocation11 + $0x738] sm:$0xff]
    %v1099 = vld [vmem:[#allocation11 + $0x740] sm:$0xff]
    %v1100 = vld [vmem:[#allocation11 + $0x748] sm:$0xff]
    %v1101 = vld [vmem:[#allocation11 + $0x750] sm:$0xff]
    %v1102 = vld [vmem:[#allocation11 + $0x758] sm:$0xff]
    %v1103 = vld [vmem:[#allocation11 + $0x760] sm:$0xff]
    %v1104 = vld [vmem:[#allocation11 + $0x768] sm:$0xff]
    %v1105 = vld [vmem:[#allocation11 + $0x770] sm:$0xff]
    %v1106 = vld [vmem:[#allocation11 + $0x778] sm:$0xff]
    %v1107 = vld [vmem:[#allocation11 + $0x780] sm:$0xff]
    %v1108 = vld [vmem:[#allocation11 + $0x788] sm:$0xff]
    %v1109 = vld [vmem:[#allocation11 + $0x790] sm:$0xff]
    %v1110 = vld [vmem:[#allocation11 + $0x798] sm:$0xff]
    %v1111 = vld [vmem:[#allocation11 + $0x7a0] sm:$0xff]
    %v1112 = vld [vmem:[#allocation11 + $0x7a8] sm:$0xff]
    %v1113 = vld [vmem:[#allocation11 + $0x7b0] sm:$0xff]
    %v1114 = vld [vmem:[#allocation11 + $0x7b8] sm:$0xff]
    %v1115 = vld [vmem:[#allocation11 + $0x7c0] sm:$0xff]
    %v1116 = vld [vmem:[#allocation11 + $0x7c8] sm:$0xff]
    %v1117 = vld [vmem:[#allocation11 + $0x7d0] sm:$0xff]
    %v1118 = vld [vmem:[#allocation11 + $0x7d8] sm:$0xff]
    %v1119 = vld [vmem:[#allocation11 + $0x7e0] sm:$0xff]
    %v1120 = vld [vmem:[#allocation11 + $0x7e8] sm:$0xff]
    %v1121 = vld [vmem:[#allocation11 + $0x7f0] sm:$0xff]
    %v1122 = vld [vmem:[#allocation11 + $0x7f8] sm:$0xff]
    %v1379 = vunpack.c.l.b16 %v867
    %v1380 = vunpack.c.h.b16 %v867
    %v1381 = vunpack.c.l.b16 %v868
    %v1382 = vunpack.c.h.b16 %v868
    %v1383 = vunpack.c.l.b16 %v869
    %v1384 = vunpack.c.h.b16 %v869
    %v1385 = vunpack.c.l.b16 %v870
    %v1386 = vunpack.c.h.b16 %v870
    %v1387 = vunpack.c.l.b16 %v871
    %v1388 = vunpack.c.h.b16 %v871
    %v1389 = vunpack.c.l.b16 %v872
    %v1390 = vunpack.c.h.b16 %v872
    %v1391 = vunpack.c.l.b16 %v873
    %v1392 = vunpack.c.h.b16 %v873
    %v1393 = vunpack.c.l.b16 %v874
    %v1394 = vunpack.c.h.b16 %v874
    %v1395 = vunpack.c.l.b16 %v875
    %v1396 = vunpack.c.h.b16 %v875
    %v1397 = vunpack.c.l.b16 %v876
    %v1398 = vunpack.c.h.b16 %v876
    %v1399 = vunpack.c.l.b16 %v877
    %v1400 = vunpack.c.h.b16 %v877
    %v1401 = vunpack.c.l.b16 %v878
    %v1402 = vunpack.c.h.b16 %v878
    %v1403 = vunpack.c.l.b16 %v879
    %v1404 = vunpack.c.h.b16 %v879
    %v1405 = vunpack.c.l.b16 %v880
    %v1406 = vunpack.c.h.b16 %v880
    %v1407 = vunpack.c.l.b16 %v881
    %v1408 = vunpack.c.h.b16 %v881
    %v1409 = vunpack.c.l.b16 %v882
    %v1410 = vunpack.c.h.b16 %v882
    %v1411 = vunpack.c.l.b16 %v883
    %v1412 = vunpack.c.h.b16 %v883
    %v1413 = vunpack.c.l.b16 %v884
    %v1414 = vunpack.c.h.b16 %v884
    %v1415 = vunpack.c.l.b16 %v885
    %v1416 = vunpack.c.h.b16 %v885
    %v1417 = vunpack.c.l.b16 %v886
    %v1418 = vunpack.c.h.b16 %v886
    %v1419 = vunpack.c.l.b16 %v887
    %v1420 = vunpack.c.h.b16 %v887
    %v1421 = vunpack.c.l.b16 %v888
    %v1422 = vunpack.c.h.b16 %v888
    %v1423 = vunpack.c.l.b16 %v889
    %v1424 = vunpack.c.h.b16 %v889
    %v1425 = vunpack.c.l.b16 %v890
    %v1426 = vunpack.c.h.b16 %v890
    %v1427 = vunpack.c.l.b16 %v891
    %v1428 = vunpack.c.h.b16 %v891
    %v1429 = vunpack.c.l.b16 %v892
    %v1430 = vunpack.c.h.b16 %v892
    %v1431 = vunpack.c.l.b16 %v893
    %v1432 = vunpack.c.h.b16 %v893
    %v1433 = vunpack.c.l.b16 %v894
    %v1434 = vunpack.c.h.b16 %v894
    %v1435 = vunpack.c.l.b16 %v895
    %v1436 = vunpack.c.h.b16 %v895
    %v1437 = vunpack.c.l.b16 %v896
    %v1438 = vunpack.c.h.b16 %v896
    %v1439 = vunpack.c.l.b16 %v897
    %v1440 = vunpack.c.h.b16 %v897
    %v1441 = vunpack.c.l.b16 %v898
    %v1442 = vunpack.c.h.b16 %v898
    %v1443 = vunpack.c.l.b16 %v899
    %v1444 = vunpack.c.h.b16 %v899
    %v1445 = vunpack.c.l.b16 %v900
    %v1446 = vunpack.c.h.b16 %v900
    %v1447 = vunpack.c.l.b16 %v901
    %v1448 = vunpack.c.h.b16 %v901
    %v1449 = vunpack.c.l.b16 %v902
    %v1450 = vunpack.c.h.b16 %v902
    %v1451 = vunpack.c.l.b16 %v903
    %v1452 = vunpack.c.h.b16 %v903
    %v1453 = vunpack.c.l.b16 %v904
    %v1454 = vunpack.c.h.b16 %v904
    %v1455 = vunpack.c.l.b16 %v905
    %v1456 = vunpack.c.h.b16 %v905
    %v1457 = vunpack.c.l.b16 %v906
    %v1458 = vunpack.c.h.b16 %v906
    %v1459 = vunpack.c.l.b16 %v907
    %v1460 = vunpack.c.h.b16 %v907
    %v1461 = vunpack.c.l.b16 %v908
    %v1462 = vunpack.c.h.b16 %v908
    %v1463 = vunpack.c.l.b16 %v909
    %v1464 = vunpack.c.h.b16 %v909
    %v1465 = vunpack.c.l.b16 %v910
    %v1466 = vunpack.c.h.b16 %v910
    %v1467 = vunpack.c.l.b16 %v911
    %v1468 = vunpack.c.h.b16 %v911
    %v1469 = vunpack.c.l.b16 %v912
    %v1470 = vunpack.c.h.b16 %v912
    %v1471 = vunpack.c.l.b16 %v913
    %v1472 = vunpack.c.h.b16 %v913
    %v1473 = vunpack.c.l.b16 %v914
    %v1474 = vunpack.c.h.b16 %v914
    %v1475 = vunpack.c.l.b16 %v915
    %v1476 = vunpack.c.h.b16 %v915
    %v1477 = vunpack.c.l.b16 %v916
    %v1478 = vunpack.c.h.b16 %v916
    %v1479 = vunpack.c.l.b16 %v917
    %v1480 = vunpack.c.h.b16 %v917
    %v1481 = vunpack.c.l.b16 %v918
    %v1482 = vunpack.c.h.b16 %v918
    %v1483 = vunpack.c.l.b16 %v919
    %v1484 = vunpack.c.h.b16 %v919
    %v1485 = vunpack.c.l.b16 %v920
    %v1486 = vunpack.c.h.b16 %v920
    %v1487 = vunpack.c.l.b16 %v921
    %v1488 = vunpack.c.h.b16 %v921
    %v1489 = vunpack.c.l.b16 %v922
    %v1490 = vunpack.c.h.b16 %v922
    %v1491 = vunpack.c.l.b16 %v923
    %v1492 = vunpack.c.h.b16 %v923
    %v1493 = vunpack.c.l.b16 %v924
    %v1494 = vunpack.c.h.b16 %v924
    %v1495 = vunpack.c.l.b16 %v925
    %v1496 = vunpack.c.h.b16 %v925
    %v1497 = vunpack.c.l.b16 %v926
    %v1498 = vunpack.c.h.b16 %v926
    %v1499 = vunpack.c.l.b16 %v927
    %v1500 = vunpack.c.h.b16 %v927
    %v1501 = vunpack.c.l.b16 %v928
    %v1502 = vunpack.c.h.b16 %v928
    %v1503 = vunpack.c.l.b16 %v929
    %v1504 = vunpack.c.h.b16 %v929
    %v1505 = vunpack.c.l.b16 %v930
    %v1506 = vunpack.c.h.b16 %v930
    %v1507 = vunpack.c.l.b16 %v931
    %v1508 = vunpack.c.h.b16 %v931
    %v1509 = vunpack.c.l.b16 %v932
    %v1510 = vunpack.c.h.b16 %v932
    %v1511 = vunpack.c.l.b16 %v933
    %v1512 = vunpack.c.h.b16 %v933
    %v1513 = vunpack.c.l.b16 %v934
    %v1514 = vunpack.c.h.b16 %v934
    %v1515 = vunpack.c.l.b16 %v935
    %v1516 = vunpack.c.h.b16 %v935
    %v1517 = vunpack.c.l.b16 %v936
    %v1518 = vunpack.c.h.b16 %v936
    %v1519 = vunpack.c.l.b16 %v937
    %v1520 = vunpack.c.h.b16 %v937
    %v1521 = vunpack.c.l.b16 %v938
    %v1522 = vunpack.c.h.b16 %v938
    %v1523 = vunpack.c.l.b16 %v939
    %v1524 = vunpack.c.h.b16 %v939
    %v1525 = vunpack.c.l.b16 %v940
    %v1526 = vunpack.c.h.b16 %v940
    %v1527 = vunpack.c.l.b16 %v941
    %v1528 = vunpack.c.h.b16 %v941
    %v1529 = vunpack.c.l.b16 %v942
    %v1530 = vunpack.c.h.b16 %v942
    %v1531 = vunpack.c.l.b16 %v943
    %v1532 = vunpack.c.h.b16 %v943
    %v1533 = vunpack.c.l.b16 %v944
    %v1534 = vunpack.c.h.b16 %v944
    %v1535 = vunpack.c.l.b16 %v945
    %v1536 = vunpack.c.h.b16 %v945
    %v1537 = vunpack.c.l.b16 %v946
    %v1538 = vunpack.c.h.b16 %v946
    %v1539 = vunpack.c.l.b16 %v947
    %v1540 = vunpack.c.h.b16 %v947
    %v1541 = vunpack.c.l.b16 %v948
    %v1542 = vunpack.c.h.b16 %v948
    %v1543 = vunpack.c.l.b16 %v949
    %v1544 = vunpack.c.h.b16 %v949
    %v1545 = vunpack.c.l.b16 %v950
    %v1546 = vunpack.c.h.b16 %v950
    %v1547 = vunpack.c.l.b16 %v951
    %v1548 = vunpack.c.h.b16 %v951
    %v1549 = vunpack.c.l.b16 %v952
    %v1550 = vunpack.c.h.b16 %v952
    %v1551 = vunpack.c.l.b16 %v953
    %v1552 = vunpack.c.h.b16 %v953
    %v1553 = vunpack.c.l.b16 %v954
    %v1554 = vunpack.c.h.b16 %v954
    %v1555 = vunpack.c.l.b16 %v955
    %v1556 = vunpack.c.h.b16 %v955
    %v1557 = vunpack.c.l.b16 %v956
    %v1558 = vunpack.c.h.b16 %v956
    %v1559 = vunpack.c.l.b16 %v957
    %v1560 = vunpack.c.h.b16 %v957
    %v1561 = vunpack.c.l.b16 %v958
    %v1562 = vunpack.c.h.b16 %v958
    %v1563 = vunpack.c.l.b16 %v959
    %v1564 = vunpack.c.h.b16 %v959
    %v1565 = vunpack.c.l.b16 %v960
    %v1566 = vunpack.c.h.b16 %v960
    %v1567 = vunpack.c.l.b16 %v961
    %v1568 = vunpack.c.h.b16 %v961
    %v1569 = vunpack.c.l.b16 %v962
    %v1570 = vunpack.c.h.b16 %v962
    %v1571 = vunpack.c.l.b16 %v963
    %v1572 = vunpack.c.h.b16 %v963
    %v1573 = vunpack.c.l.b16 %v964
    %v1574 = vunpack.c.h.b16 %v964
    %v1575 = vunpack.c.l.b16 %v965
    %v1576 = vunpack.c.h.b16 %v965
    %v1577 = vunpack.c.l.b16 %v966
    %v1578 = vunpack.c.h.b16 %v966
    %v1579 = vunpack.c.l.b16 %v967
    %v1580 = vunpack.c.h.b16 %v967
    %v1581 = vunpack.c.l.b16 %v968
    %v1582 = vunpack.c.h.b16 %v968
    %v1583 = vunpack.c.l.b16 %v969
    %v1584 = vunpack.c.h.b16 %v969
    %v1585 = vunpack.c.l.b16 %v970
    %v1586 = vunpack.c.h.b16 %v970
    %v1587 = vunpack.c.l.b16 %v971
    %v1588 = vunpack.c.h.b16 %v971
    %v1589 = vunpack.c.l.b16 %v972
    %v1590 = vunpack.c.h.b16 %v972
    %v1591 = vunpack.c.l.b16 %v973
    %v1592 = vunpack.c.h.b16 %v973
    %v1593 = vunpack.c.l.b16 %v974
    %v1594 = vunpack.c.h.b16 %v974
    %v1595 = vunpack.c.l.b16 %v975
    %v1596 = vunpack.c.h.b16 %v975
    %v1597 = vunpack.c.l.b16 %v976
    %v1598 = vunpack.c.h.b16 %v976
    %v1599 = vunpack.c.l.b16 %v977
    %v1600 = vunpack.c.h.b16 %v977
    %v1601 = vunpack.c.l.b16 %v978
    %v1602 = vunpack.c.h.b16 %v978
    %v1603 = vunpack.c.l.b16 %v979
    %v1604 = vunpack.c.h.b16 %v979
    %v1605 = vunpack.c.l.b16 %v980
    %v1606 = vunpack.c.h.b16 %v980
    %v1607 = vunpack.c.l.b16 %v981
    %v1608 = vunpack.c.h.b16 %v981
    %v1609 = vunpack.c.l.b16 %v982
    %v1610 = vunpack.c.h.b16 %v982
    %v1611 = vunpack.c.l.b16 %v983
    %v1612 = vunpack.c.h.b16 %v983
    %v1613 = vunpack.c.l.b16 %v984
    %v1614 = vunpack.c.h.b16 %v984
    %v1615 = vunpack.c.l.b16 %v985
    %v1616 = vunpack.c.h.b16 %v985
    %v1617 = vunpack.c.l.b16 %v986
    %v1618 = vunpack.c.h.b16 %v986
    %v1619 = vunpack.c.l.b16 %v987
    %v1620 = vunpack.c.h.b16 %v987
    %v1621 = vunpack.c.l.b16 %v988
    %v1622 = vunpack.c.h.b16 %v988
    %v1623 = vunpack.c.l.b16 %v989
    %v1624 = vunpack.c.h.b16 %v989
    %v1625 = vunpack.c.l.b16 %v990
    %v1626 = vunpack.c.h.b16 %v990
    %v1627 = vunpack.c.l.b16 %v991
    %v1628 = vunpack.c.h.b16 %v991
    %v1629 = vunpack.c.l.b16 %v992
    %v1630 = vunpack.c.h.b16 %v992
    %v1631 = vunpack.c.l.b16 %v993
    %v1632 = vunpack.c.h.b16 %v993
    %v1633 = vunpack.c.l.b16 %v994
    %v1634 = vunpack.c.h.b16 %v994
    %v1635 = vunpack.c.l.b16 %v995
    %v1636 = vunpack.c.h.b16 %v995
    %v1637 = vunpack.c.l.b16 %v996
    %v1638 = vunpack.c.h.b16 %v996
    %v1639 = vunpack.c.l.b16 %v997
    %v1640 = vunpack.c.h.b16 %v997
    %v1641 = vunpack.c.l.b16 %v998
    %v1642 = vunpack.c.h.b16 %v998
    %v1643 = vunpack.c.l.b16 %v999
    %v1644 = vunpack.c.h.b16 %v999
    %v1645 = vunpack.c.l.b16 %v1000
    %v1646 = vunpack.c.h.b16 %v1000
    %v1647 = vunpack.c.l.b16 %v1001
    %v1648 = vunpack.c.h.b16 %v1001
    %v1649 = vunpack.c.l.b16 %v1002
    %v1650 = vunpack.c.h.b16 %v1002
    %v1651 = vunpack.c.l.b16 %v1003
    %v1652 = vunpack.c.h.b16 %v1003
    %v1653 = vunpack.c.l.b16 %v1004
    %v1654 = vunpack.c.h.b16 %v1004
    %v1655 = vunpack.c.l.b16 %v1005
    %v1656 = vunpack.c.h.b16 %v1005
    %v1657 = vunpack.c.l.b16 %v1006
    %v1658 = vunpack.c.h.b16 %v1006
    %v1659 = vunpack.c.l.b16 %v1007
    %v1660 = vunpack.c.h.b16 %v1007
    %v1661 = vunpack.c.l.b16 %v1008
    %v1662 = vunpack.c.h.b16 %v1008
    %v1663 = vunpack.c.l.b16 %v1009
    %v1664 = vunpack.c.h.b16 %v1009
    %v1665 = vunpack.c.l.b16 %v1010
    %v1666 = vunpack.c.h.b16 %v1010
    %v1667 = vunpack.c.l.b16 %v1011
    %v1668 = vunpack.c.h.b16 %v1011
    %v1669 = vunpack.c.l.b16 %v1012
    %v1670 = vunpack.c.h.b16 %v1012
    %v1671 = vunpack.c.l.b16 %v1013
    %v1672 = vunpack.c.h.b16 %v1013
    %v1673 = vunpack.c.l.b16 %v1014
    %v1674 = vunpack.c.h.b16 %v1014
    %v1675 = vunpack.c.l.b16 %v1015
    %v1676 = vunpack.c.h.b16 %v1015
    %v1677 = vunpack.c.l.b16 %v1016
    %v1678 = vunpack.c.h.b16 %v1016
    %v1679 = vunpack.c.l.b16 %v1017
    %v1680 = vunpack.c.h.b16 %v1017
    %v1681 = vunpack.c.l.b16 %v1018
    %v1682 = vunpack.c.h.b16 %v1018
    %v1683 = vunpack.c.l.b16 %v1019
    %v1684 = vunpack.c.h.b16 %v1019
    %v1685 = vunpack.c.l.b16 %v1020
    %v1686 = vunpack.c.h.b16 %v1020
    %v1687 = vunpack.c.l.b16 %v1021
    %v1688 = vunpack.c.h.b16 %v1021
    %v1689 = vunpack.c.l.b16 %v1022
    %v1690 = vunpack.c.h.b16 %v1022
    %v1691 = vunpack.c.l.b16 %v1023
    %v1692 = vunpack.c.h.b16 %v1023
    %v1693 = vunpack.c.l.b16 %v1024
    %v1694 = vunpack.c.h.b16 %v1024
    %v1695 = vunpack.c.l.b16 %v1025
    %v1696 = vunpack.c.h.b16 %v1025
    %v1697 = vunpack.c.l.b16 %v1026
    %v1698 = vunpack.c.h.b16 %v1026
    %v1699 = vunpack.c.l.b16 %v1027
    %v1700 = vunpack.c.h.b16 %v1027
    %v1701 = vunpack.c.l.b16 %v1028
    %v1702 = vunpack.c.h.b16 %v1028
    %v1703 = vunpack.c.l.b16 %v1029
    %v1704 = vunpack.c.h.b16 %v1029
    %v1705 = vunpack.c.l.b16 %v1030
    %v1706 = vunpack.c.h.b16 %v1030
    %v1707 = vunpack.c.l.b16 %v1031
    %v1708 = vunpack.c.h.b16 %v1031
    %v1709 = vunpack.c.l.b16 %v1032
    %v1710 = vunpack.c.h.b16 %v1032
    %v1711 = vunpack.c.l.b16 %v1033
    %v1712 = vunpack.c.h.b16 %v1033
    %v1713 = vunpack.c.l.b16 %v1034
    %v1714 = vunpack.c.h.b16 %v1034
    %v1715 = vunpack.c.l.b16 %v1035
    %v1716 = vunpack.c.h.b16 %v1035
    %v1717 = vunpack.c.l.b16 %v1036
    %v1718 = vunpack.c.h.b16 %v1036
    %v1719 = vunpack.c.l.b16 %v1037
    %v1720 = vunpack.c.h.b16 %v1037
    %v1721 = vunpack.c.l.b16 %v1038
    %v1722 = vunpack.c.h.b16 %v1038
    %v1723 = vunpack.c.l.b16 %v1039
    %v1724 = vunpack.c.h.b16 %v1039
    %v1725 = vunpack.c.l.b16 %v1040
    %v1726 = vunpack.c.h.b16 %v1040
    %v1727 = vunpack.c.l.b16 %v1041
    %v1728 = vunpack.c.h.b16 %v1041
    %v1729 = vunpack.c.l.b16 %v1042
    %v1730 = vunpack.c.h.b16 %v1042
    %v1731 = vunpack.c.l.b16 %v1043
    %v1732 = vunpack.c.h.b16 %v1043
    %v1733 = vunpack.c.l.b16 %v1044
    %v1734 = vunpack.c.h.b16 %v1044
    %v1735 = vunpack.c.l.b16 %v1045
    %v1736 = vunpack.c.h.b16 %v1045
    %v1737 = vunpack.c.l.b16 %v1046
    %v1738 = vunpack.c.h.b16 %v1046
    %v1739 = vunpack.c.l.b16 %v1047
    %v1740 = vunpack.c.h.b16 %v1047
    %v1741 = vunpack.c.l.b16 %v1048
    %v1742 = vunpack.c.h.b16 %v1048
    %v1743 = vunpack.c.l.b16 %v1049
    %v1744 = vunpack.c.h.b16 %v1049
    %v1745 = vunpack.c.l.b16 %v1050
    %v1746 = vunpack.c.h.b16 %v1050
    %v1747 = vunpack.c.l.b16 %v1051
    %v1748 = vunpack.c.h.b16 %v1051
    %v1749 = vunpack.c.l.b16 %v1052
    %v1750 = vunpack.c.h.b16 %v1052
    %v1751 = vunpack.c.l.b16 %v1053
    %v1752 = vunpack.c.h.b16 %v1053
    %v1753 = vunpack.c.l.b16 %v1054
    %v1754 = vunpack.c.h.b16 %v1054
    %v1755 = vunpack.c.l.b16 %v1055
    %v1756 = vunpack.c.h.b16 %v1055
    %v1757 = vunpack.c.l.b16 %v1056
    %v1758 = vunpack.c.h.b16 %v1056
    %v1759 = vunpack.c.l.b16 %v1057
    %v1760 = vunpack.c.h.b16 %v1057
    %v1761 = vunpack.c.l.b16 %v1058
    %v1762 = vunpack.c.h.b16 %v1058
    %v1763 = vunpack.c.l.b16 %v1059
    %v1764 = vunpack.c.h.b16 %v1059
    %v1765 = vunpack.c.l.b16 %v1060
    %v1766 = vunpack.c.h.b16 %v1060
    %v1767 = vunpack.c.l.b16 %v1061
    %v1768 = vunpack.c.h.b16 %v1061
    %v1769 = vunpack.c.l.b16 %v1062
    %v1770 = vunpack.c.h.b16 %v1062
    %v1771 = vunpack.c.l.b16 %v1063
    %v1772 = vunpack.c.h.b16 %v1063
    %v1773 = vunpack.c.l.b16 %v1064
    %v1774 = vunpack.c.h.b16 %v1064
    %v1775 = vunpack.c.l.b16 %v1065
    %v1776 = vunpack.c.h.b16 %v1065
    %v1777 = vunpack.c.l.b16 %v1066
    %v1778 = vunpack.c.h.b16 %v1066
    %v1779 = vunpack.c.l.b16 %v1067
    %v1780 = vunpack.c.h.b16 %v1067
    %v1781 = vunpack.c.l.b16 %v1068
    %v1782 = vunpack.c.h.b16 %v1068
    %v1783 = vunpack.c.l.b16 %v1069
    %v1784 = vunpack.c.h.b16 %v1069
    %v1785 = vunpack.c.l.b16 %v1070
    %v1786 = vunpack.c.h.b16 %v1070
    %v1787 = vunpack.c.l.b16 %v1071
    %v1788 = vunpack.c.h.b16 %v1071
    %v1789 = vunpack.c.l.b16 %v1072
    %v1790 = vunpack.c.h.b16 %v1072
    %v1791 = vunpack.c.l.b16 %v1073
    %v1792 = vunpack.c.h.b16 %v1073
    %v1793 = vunpack.c.l.b16 %v1074
    %v1794 = vunpack.c.h.b16 %v1074
    %v1795 = vunpack.c.l.b16 %v1075
    %v1796 = vunpack.c.h.b16 %v1075
    %v1797 = vunpack.c.l.b16 %v1076
    %v1798 = vunpack.c.h.b16 %v1076
    %v1799 = vunpack.c.l.b16 %v1077
    %v1800 = vunpack.c.h.b16 %v1077
    %v1801 = vunpack.c.l.b16 %v1078
    %v1802 = vunpack.c.h.b16 %v1078
    %v1803 = vunpack.c.l.b16 %v1079
    %v1804 = vunpack.c.h.b16 %v1079
    %v1805 = vunpack.c.l.b16 %v1080
    %v1806 = vunpack.c.h.b16 %v1080
    %v1807 = vunpack.c.l.b16 %v1081
    %v1808 = vunpack.c.h.b16 %v1081
    %v1809 = vunpack.c.l.b16 %v1082
    %v1810 = vunpack.c.h.b16 %v1082
    %v1811 = vunpack.c.l.b16 %v1083
    %v1812 = vunpack.c.h.b16 %v1083
    %v1813 = vunpack.c.l.b16 %v1084
    %v1814 = vunpack.c.h.b16 %v1084
    %v1815 = vunpack.c.l.b16 %v1085
    %v1816 = vunpack.c.h.b16 %v1085
    %v1817 = vunpack.c.l.b16 %v1086
    %v1818 = vunpack.c.h.b16 %v1086
    %v1819 = vunpack.c.l.b16 %v1087
    %v1820 = vunpack.c.h.b16 %v1087
    %v1821 = vunpack.c.l.b16 %v1088
    %v1822 = vunpack.c.h.b16 %v1088
    %v1823 = vunpack.c.l.b16 %v1089
    %v1824 = vunpack.c.h.b16 %v1089
    %v1825 = vunpack.c.l.b16 %v1090
    %v1826 = vunpack.c.h.b16 %v1090
    %v1827 = vunpack.c.l.b16 %v1091
    %v1828 = vunpack.c.h.b16 %v1091
    %v1829 = vunpack.c.l.b16 %v1092
    %v1830 = vunpack.c.h.b16 %v1092
    %v1831 = vunpack.c.l.b16 %v1093
    %v1832 = vunpack.c.h.b16 %v1093
    %v1833 = vunpack.c.l.b16 %v1094
    %v1834 = vunpack.c.h.b16 %v1094
    %v1835 = vunpack.c.l.b16 %v1095
    %v1836 = vunpack.c.h.b16 %v1095
    %v1837 = vunpack.c.l.b16 %v1096
    %v1838 = vunpack.c.h.b16 %v1096
    %v1839 = vunpack.c.l.b16 %v1097
    %v1840 = vunpack.c.h.b16 %v1097
    %v1841 = vunpack.c.l.b16 %v1098
    %v1842 = vunpack.c.h.b16 %v1098
    %v1843 = vunpack.c.l.b16 %v1099
    %v1844 = vunpack.c.h.b16 %v1099
    %v1845 = vunpack.c.l.b16 %v1100
    %v1846 = vunpack.c.h.b16 %v1100
    %v1847 = vunpack.c.l.b16 %v1101
    %v1848 = vunpack.c.h.b16 %v1101
    %v1849 = vunpack.c.l.b16 %v1102
    %v1850 = vunpack.c.h.b16 %v1102
    %v1851 = vunpack.c.l.b16 %v1103
    %v1852 = vunpack.c.h.b16 %v1103
    %v1853 = vunpack.c.l.b16 %v1104
    %v1854 = vunpack.c.h.b16 %v1104
    %v1855 = vunpack.c.l.b16 %v1105
    %v1856 = vunpack.c.h.b16 %v1105
    %v1857 = vunpack.c.l.b16 %v1106
    %v1858 = vunpack.c.h.b16 %v1106
    %v1859 = vunpack.c.l.b16 %v1107
    %v1860 = vunpack.c.h.b16 %v1107
    %v1861 = vunpack.c.l.b16 %v1108
    %v1862 = vunpack.c.h.b16 %v1108
    %v1863 = vunpack.c.l.b16 %v1109
    %v1864 = vunpack.c.h.b16 %v1109
    %v1865 = vunpack.c.l.b16 %v1110
    %v1866 = vunpack.c.h.b16 %v1110
    %v1867 = vunpack.c.l.b16 %v1111
    %v1868 = vunpack.c.h.b16 %v1111
    %v1869 = vunpack.c.l.b16 %v1112
    %v1870 = vunpack.c.h.b16 %v1112
    %v1871 = vunpack.c.l.b16 %v1113
    %v1872 = vunpack.c.h.b16 %v1113
    %v1873 = vunpack.c.l.b16 %v1114
    %v1874 = vunpack.c.h.b16 %v1114
    %v1875 = vunpack.c.l.b16 %v1115
    %v1876 = vunpack.c.h.b16 %v1115
    %v1877 = vunpack.c.l.b16 %v1116
    %v1878 = vunpack.c.h.b16 %v1116
    %v1879 = vunpack.c.l.b16 %v1117
    %v1880 = vunpack.c.h.b16 %v1117
    %v1881 = vunpack.c.l.b16 %v1118
    %v1882 = vunpack.c.h.b16 %v1118
    %v1883 = vunpack.c.l.b16 %v1119
    %v1884 = vunpack.c.h.b16 %v1119
    %v1885 = vunpack.c.l.b16 %v1120
    %v1886 = vunpack.c.h.b16 %v1120
    %v1887 = vunpack.c.l.b16 %v1121
    %v1888 = vunpack.c.h.b16 %v1121
    %v1889 = vunpack.c.l.b16 %v1122
    %v1890 = vunpack.c.h.b16 %v1122
    %v1891 = vpack.c.b16 %v1387, %v1379
    %v1892 = vpack.c.b16 %v1388, %v1380
    %v1893 = vpack.c.b16 %v1389, %v1381
    %v1894 = vpack.c.b16 %v1390, %v1382
    %v1895 = vpack.c.b16 %v1391, %v1383
    %v1896 = vpack.c.b16 %v1392, %v1384
    %v1897 = vpack.c.b16 %v1393, %v1385
    %v1898 = vpack.c.b16 %v1394, %v1386
    %v1899 = vpack.c.b16 %v1403, %v1395
    %v1900 = vpack.c.b16 %v1404, %v1396
    %v1901 = vpack.c.b16 %v1405, %v1397
    %v1902 = vpack.c.b16 %v1406, %v1398
    %v1903 = vpack.c.b16 %v1407, %v1399
    %v1904 = vpack.c.b16 %v1408, %v1400
    %v1905 = vpack.c.b16 %v1409, %v1401
    %v1906 = vpack.c.b16 %v1410, %v1402
    %v1907 = vpack.c.b16 %v1419, %v1411
    %v1908 = vpack.c.b16 %v1420, %v1412
    %v1909 = vpack.c.b16 %v1421, %v1413
    %v1910 = vpack.c.b16 %v1422, %v1414
    %v1911 = vpack.c.b16 %v1423, %v1415
    %v1912 = vpack.c.b16 %v1424, %v1416
    %v1913 = vpack.c.b16 %v1425, %v1417
    %v1914 = vpack.c.b16 %v1426, %v1418
    %v1915 = vpack.c.b16 %v1435, %v1427
    %v1916 = vpack.c.b16 %v1436, %v1428
    %v1917 = vpack.c.b16 %v1437, %v1429
    %v1918 = vpack.c.b16 %v1438, %v1430
    %v1919 = vpack.c.b16 %v1439, %v1431
    %v1920 = vpack.c.b16 %v1440, %v1432
    %v1921 = vpack.c.b16 %v1441, %v1433
    %v1922 = vpack.c.b16 %v1442, %v1434
    %v1923 = vpack.c.b16 %v1451, %v1443
    %v1924 = vpack.c.b16 %v1452, %v1444
    %v1925 = vpack.c.b16 %v1453, %v1445
    %v1926 = vpack.c.b16 %v1454, %v1446
    %v1927 = vpack.c.b16 %v1455, %v1447
    %v1928 = vpack.c.b16 %v1456, %v1448
    %v1929 = vpack.c.b16 %v1457, %v1449
    %v1930 = vpack.c.b16 %v1458, %v1450
    %v1931 = vpack.c.b16 %v1467, %v1459
    %v1932 = vpack.c.b16 %v1468, %v1460
    %v1933 = vpack.c.b16 %v1469, %v1461
    %v1934 = vpack.c.b16 %v1470, %v1462
    %v1935 = vpack.c.b16 %v1471, %v1463
    %v1936 = vpack.c.b16 %v1472, %v1464
    %v1937 = vpack.c.b16 %v1473, %v1465
    %v1938 = vpack.c.b16 %v1474, %v1466
    %v1939 = vpack.c.b16 %v1483, %v1475
    %v1940 = vpack.c.b16 %v1484, %v1476
    %v1941 = vpack.c.b16 %v1485, %v1477
    %v1942 = vpack.c.b16 %v1486, %v1478
    %v1943 = vpack.c.b16 %v1487, %v1479
    %v1944 = vpack.c.b16 %v1488, %v1480
    %v1945 = vpack.c.b16 %v1489, %v1481
    %v1946 = vpack.c.b16 %v1490, %v1482
    %v1947 = vpack.c.b16 %v1499, %v1491
    %v1948 = vpack.c.b16 %v1500, %v1492
    %v1949 = vpack.c.b16 %v1501, %v1493
    %v1950 = vpack.c.b16 %v1502, %v1494
    %v1951 = vpack.c.b16 %v1503, %v1495
    %v1952 = vpack.c.b16 %v1504, %v1496
    %v1953 = vpack.c.b16 %v1505, %v1497
    %v1954 = vpack.c.b16 %v1506, %v1498
    %v1955 = vpack.c.b16 %v1515, %v1507
    %v1956 = vpack.c.b16 %v1516, %v1508
    %v1957 = vpack.c.b16 %v1517, %v1509
    %v1958 = vpack.c.b16 %v1518, %v1510
    %v1959 = vpack.c.b16 %v1519, %v1511
    %v1960 = vpack.c.b16 %v1520, %v1512
    %v1961 = vpack.c.b16 %v1521, %v1513
    %v1962 = vpack.c.b16 %v1522, %v1514
    %v1963 = vpack.c.b16 %v1531, %v1523
    %v1964 = vpack.c.b16 %v1532, %v1524
    %v1965 = vpack.c.b16 %v1533, %v1525
    %v1966 = vpack.c.b16 %v1534, %v1526
    %v1967 = vpack.c.b16 %v1535, %v1527
    %v1968 = vpack.c.b16 %v1536, %v1528
    %v1969 = vpack.c.b16 %v1537, %v1529
    %v1970 = vpack.c.b16 %v1538, %v1530
    %v1971 = vpack.c.b16 %v1547, %v1539
    %v1972 = vpack.c.b16 %v1548, %v1540
    %v1973 = vpack.c.b16 %v1549, %v1541
    %v1974 = vpack.c.b16 %v1550, %v1542
    %v1975 = vpack.c.b16 %v1551, %v1543
    %v1976 = vpack.c.b16 %v1552, %v1544
    %v1977 = vpack.c.b16 %v1553, %v1545
    %v1978 = vpack.c.b16 %v1554, %v1546
    %v1979 = vpack.c.b16 %v1563, %v1555
    %v1980 = vpack.c.b16 %v1564, %v1556
    %v1981 = vpack.c.b16 %v1565, %v1557
    %v1982 = vpack.c.b16 %v1566, %v1558
    %v1983 = vpack.c.b16 %v1567, %v1559
    %v1984 = vpack.c.b16 %v1568, %v1560
    %v1985 = vpack.c.b16 %v1569, %v1561
    %v1986 = vpack.c.b16 %v1570, %v1562
    %v1987 = vpack.c.b16 %v1579, %v1571
    %v1988 = vpack.c.b16 %v1580, %v1572
    %v1989 = vpack.c.b16 %v1581, %v1573
    %v1990 = vpack.c.b16 %v1582, %v1574
    %v1991 = vpack.c.b16 %v1583, %v1575
    %v1992 = vpack.c.b16 %v1584, %v1576
    %v1993 = vpack.c.b16 %v1585, %v1577
    %v1994 = vpack.c.b16 %v1586, %v1578
    %v1995 = vpack.c.b16 %v1595, %v1587
    %v1996 = vpack.c.b16 %v1596, %v1588
    %v1997 = vpack.c.b16 %v1597, %v1589
    %v1998 = vpack.c.b16 %v1598, %v1590
    %v1999 = vpack.c.b16 %v1599, %v1591
    %v2000 = vpack.c.b16 %v1600, %v1592
    %v2001 = vpack.c.b16 %v1601, %v1593
    %v2002 = vpack.c.b16 %v1602, %v1594
    %v2003 = vpack.c.b16 %v1611, %v1603
    %v2004 = vpack.c.b16 %v1612, %v1604
    %v2005 = vpack.c.b16 %v1613, %v1605
    %v2006 = vpack.c.b16 %v1614, %v1606
    %v2007 = vpack.c.b16 %v1615, %v1607
    %v2008 = vpack.c.b16 %v1616, %v1608
    %v2009 = vpack.c.b16 %v1617, %v1609
    %v2010 = vpack.c.b16 %v1618, %v1610
    %v2011 = vpack.c.b16 %v1627, %v1619
    %v2012 = vpack.c.b16 %v1628, %v1620
    %v2013 = vpack.c.b16 %v1629, %v1621
    %v2014 = vpack.c.b16 %v1630, %v1622
    %v2015 = vpack.c.b16 %v1631, %v1623
    %v2016 = vpack.c.b16 %v1632, %v1624
    %v2017 = vpack.c.b16 %v1633, %v1625
    %v2018 = vpack.c.b16 %v1634, %v1626
    %v2019 = vpack.c.b16 %v1643, %v1635
    %v2020 = vpack.c.b16 %v1644, %v1636
    %v2021 = vpack.c.b16 %v1645, %v1637
    %v2022 = vpack.c.b16 %v1646, %v1638
    %v2023 = vpack.c.b16 %v1647, %v1639
    %v2024 = vpack.c.b16 %v1648, %v1640
    %v2025 = vpack.c.b16 %v1649, %v1641
    %v2026 = vpack.c.b16 %v1650, %v1642
    %v2027 = vpack.c.b16 %v1659, %v1651
    %v2028 = vpack.c.b16 %v1660, %v1652
    %v2029 = vpack.c.b16 %v1661, %v1653
    %v2030 = vpack.c.b16 %v1662, %v1654
    %v2031 = vpack.c.b16 %v1663, %v1655
    %v2032 = vpack.c.b16 %v1664, %v1656
    %v2033 = vpack.c.b16 %v1665, %v1657
    %v2034 = vpack.c.b16 %v1666, %v1658
    %v2035 = vpack.c.b16 %v1675, %v1667
    %v2036 = vpack.c.b16 %v1676, %v1668
    %v2037 = vpack.c.b16 %v1677, %v1669
    %v2038 = vpack.c.b16 %v1678, %v1670
    %v2039 = vpack.c.b16 %v1679, %v1671
    %v2040 = vpack.c.b16 %v1680, %v1672
    %v2041 = vpack.c.b16 %v1681, %v1673
    %v2042 = vpack.c.b16 %v1682, %v1674
    %v2043 = vpack.c.b16 %v1691, %v1683
    %v2044 = vpack.c.b16 %v1692, %v1684
    %v2045 = vpack.c.b16 %v1693, %v1685
    %v2046 = vpack.c.b16 %v1694, %v1686
    %v2047 = vpack.c.b16 %v1695, %v1687
    %v2048 = vpack.c.b16 %v1696, %v1688
    %v2049 = vpack.c.b16 %v1697, %v1689
    %v2050 = vpack.c.b16 %v1698, %v1690
    %v2051 = vpack.c.b16 %v1707, %v1699
    %v2052 = vpack.c.b16 %v1708, %v1700
    %v2053 = vpack.c.b16 %v1709, %v1701
    %v2054 = vpack.c.b16 %v1710, %v1702
    %v2055 = vpack.c.b16 %v1711, %v1703
    %v2056 = vpack.c.b16 %v1712, %v1704
    %v2057 = vpack.c.b16 %v1713, %v1705
    %v2058 = vpack.c.b16 %v1714, %v1706
    %v2059 = vpack.c.b16 %v1723, %v1715
    %v2060 = vpack.c.b16 %v1724, %v1716
    %v2061 = vpack.c.b16 %v1725, %v1717
    %v2062 = vpack.c.b16 %v1726, %v1718
    %v2063 = vpack.c.b16 %v1727, %v1719
    %v2064 = vpack.c.b16 %v1728, %v1720
    %v2065 = vpack.c.b16 %v1729, %v1721
    %v2066 = vpack.c.b16 %v1730, %v1722
    %v2067 = vpack.c.b16 %v1739, %v1731
    %v2068 = vpack.c.b16 %v1740, %v1732
    %v2069 = vpack.c.b16 %v1741, %v1733
    %v2070 = vpack.c.b16 %v1742, %v1734
    %v2071 = vpack.c.b16 %v1743, %v1735
    %v2072 = vpack.c.b16 %v1744, %v1736
    %v2073 = vpack.c.b16 %v1745, %v1737
    %v2074 = vpack.c.b16 %v1746, %v1738
    %v2075 = vpack.c.b16 %v1755, %v1747
    %v2076 = vpack.c.b16 %v1756, %v1748
    %v2077 = vpack.c.b16 %v1757, %v1749
    %v2078 = vpack.c.b16 %v1758, %v1750
    %v2079 = vpack.c.b16 %v1759, %v1751
    %v2080 = vpack.c.b16 %v1760, %v1752
    %v2081 = vpack.c.b16 %v1761, %v1753
    %v2082 = vpack.c.b16 %v1762, %v1754
    %v2083 = vpack.c.b16 %v1771, %v1763
    %v2084 = vpack.c.b16 %v1772, %v1764
    %v2085 = vpack.c.b16 %v1773, %v1765
    %v2086 = vpack.c.b16 %v1774, %v1766
    %v2087 = vpack.c.b16 %v1775, %v1767
    %v2088 = vpack.c.b16 %v1776, %v1768
    %v2089 = vpack.c.b16 %v1777, %v1769
    %v2090 = vpack.c.b16 %v1778, %v1770
    %v2091 = vpack.c.b16 %v1787, %v1779
    %v2092 = vpack.c.b16 %v1788, %v1780
    %v2093 = vpack.c.b16 %v1789, %v1781
    %v2094 = vpack.c.b16 %v1790, %v1782
    %v2095 = vpack.c.b16 %v1791, %v1783
    %v2096 = vpack.c.b16 %v1792, %v1784
    %v2097 = vpack.c.b16 %v1793, %v1785
    %v2098 = vpack.c.b16 %v1794, %v1786
    %v2099 = vpack.c.b16 %v1803, %v1795
    %v2100 = vpack.c.b16 %v1804, %v1796
    %v2101 = vpack.c.b16 %v1805, %v1797
    %v2102 = vpack.c.b16 %v1806, %v1798
    %v2103 = vpack.c.b16 %v1807, %v1799
    %v2104 = vpack.c.b16 %v1808, %v1800
    %v2105 = vpack.c.b16 %v1809, %v1801
    %v2106 = vpack.c.b16 %v1810, %v1802
    %v2107 = vpack.c.b16 %v1819, %v1811
    %v2108 = vpack.c.b16 %v1820, %v1812
    %v2109 = vpack.c.b16 %v1821, %v1813
    %v2110 = vpack.c.b16 %v1822, %v1814
    %v2111 = vpack.c.b16 %v1823, %v1815
    %v2112 = vpack.c.b16 %v1824, %v1816
    %v2113 = vpack.c.b16 %v1825, %v1817
    %v2114 = vpack.c.b16 %v1826, %v1818
    %v2115 = vpack.c.b16 %v1835, %v1827
    %v2116 = vpack.c.b16 %v1836, %v1828
    %v2117 = vpack.c.b16 %v1837, %v1829
    %v2118 = vpack.c.b16 %v1838, %v1830
    %v2119 = vpack.c.b16 %v1839, %v1831
    %v2120 = vpack.c.b16 %v1840, %v1832
    %v2121 = vpack.c.b16 %v1841, %v1833
    %v2122 = vpack.c.b16 %v1842, %v1834
    %v2123 = vpack.c.b16 %v1851, %v1843
    %v2124 = vpack.c.b16 %v1852, %v1844
    %v2125 = vpack.c.b16 %v1853, %v1845
    %v2126 = vpack.c.b16 %v1854, %v1846
    %v2127 = vpack.c.b16 %v1855, %v1847
    %v2128 = vpack.c.b16 %v1856, %v1848
    %v2129 = vpack.c.b16 %v1857, %v1849
    %v2130 = vpack.c.b16 %v1858, %v1850
    %v2131 = vpack.c.b16 %v1867, %v1859
    %v2132 = vpack.c.b16 %v1868, %v1860
    %v2133 = vpack.c.b16 %v1869, %v1861
    %v2134 = vpack.c.b16 %v1870, %v1862
    %v2135 = vpack.c.b16 %v1871, %v1863
    %v2136 = vpack.c.b16 %v1872, %v1864
    %v2137 = vpack.c.b16 %v1873, %v1865
    %v2138 = vpack.c.b16 %v1874, %v1866
    %v2139 = vpack.c.b16 %v1883, %v1875
    %v2140 = vpack.c.b16 %v1884, %v1876
    %v2141 = vpack.c.b16 %v1885, %v1877
    %v2142 = vpack.c.b16 %v1886, %v1878
    %v2143 = vpack.c.b16 %v1887, %v1879
    %v2144 = vpack.c.b16 %v1888, %v1880
    %v2145 = vpack.c.b16 %v1889, %v1881
    %v2146 = vpack.c.b16 %v1890, %v1882
    %2403 = vmatprep.subr.bf16.mxu0 %v1892
    %2404 = vmatpush1.bf16.msra.mxu0 %v1891
    %2405 = vmatprep.subr.bf16.mxu0 %v1900
    %2406 = vmatpush1.bf16.msra.mxu0 %v1899
    %2407 = vmatprep.subr.bf16.mxu0 %v1908
    %2408 = vmatpush1.bf16.msra.mxu0 %v1907
    %2409 = vmatprep.subr.bf16.mxu0 %v1916
    %2410 = vmatpush1.bf16.msra.mxu0 %v1915
    %2411 = vmatprep.subr.bf16.mxu0 %v1924
    %2412 = vmatpush1.bf16.msra.mxu0 %v1923
    %2413 = vmatprep.subr.bf16.mxu0 %v1932
    %2414 = vmatpush1.bf16.msra.mxu0 %v1931
    %2415 = vmatprep.subr.bf16.mxu0 %v1940
    %2416 = vmatpush1.bf16.msra.mxu0 %v1939
    %2417 = vmatprep.subr.bf16.mxu0 %v1948
    %2418 = vmatpush1.bf16.msra.mxu0 %v1947
    %2419 = vmatprep.subr.bf16.mxu0 %v1956
    %2420 = vmatpush1.bf16.msra.mxu0 %v1955
    %2421 = vmatprep.subr.bf16.mxu0 %v1964
    %2422 = vmatpush1.bf16.msra.mxu0 %v1963
    %2423 = vmatprep.subr.bf16.mxu0 %v1972
    %2424 = vmatpush1.bf16.msra.mxu0 %v1971
    %2425 = vmatprep.subr.bf16.mxu0 %v1980
    %2426 = vmatpush1.bf16.msra.mxu0 %v1979
    %2427 = vmatprep.subr.bf16.mxu0 %v1988
    %2428 = vmatpush1.bf16.msra.mxu0 %v1987
    %2429 = vmatprep.subr.bf16.mxu0 %v1996
    %2430 = vmatpush1.bf16.msra.mxu0 %v1995
    %2431 = vmatprep.subr.bf16.mxu0 %v2004
    %2432 = vmatpush1.bf16.msra.mxu0 %v2003
    %2433 = vmatprep.subr.bf16.mxu0 %v2012
    %2434 = vmatpush1.bf16.msra.mxu0 %v2011
    %2435 = vmatprep.mubr.bf16.mxu0 %v864
    %2436 = vmatmul.mubr.bf16.gmra.mrb[0].mxu0 %v863
    %v2437 = vpop.f32.mrb[0].mxu0
    %v2438 = vadd.f32 0.0, %v2437
    %v2439 = vpop.f32.mrb[0].mxu0
    %v2440 = vadd.f32 0.0, %v2439
    %v2441 = vpop.f32.mrb[0].mxu0
    %v2442 = vpop.f32.mrb[0].mxu0
    %2443 = vdwg.mxu0
    %2444 = vmatprep.subr.bf16.mxu0 %v2020
    %2445 = vmatpush1.bf16.msra.mxu0 %v2019
    %2446 = vmatprep.subr.bf16.mxu0 %v2028
    %2447 = vmatpush1.bf16.msra.mxu0 %v2027
    %2448 = vmatprep.subr.bf16.mxu0 %v2036
    %2449 = vmatpush1.bf16.msra.mxu0 %v2035
    %2450 = vmatprep.subr.bf16.mxu0 %v2044
    %2451 = vmatpush1.bf16.msra.mxu0 %v2043
    %2452 = vmatprep.subr.bf16.mxu0 %v2052
    %2453 = vmatpush1.bf16.msra.mxu0 %v2051
    %2454 = vmatprep.subr.bf16.mxu0 %v2060
    %2455 = vmatpush1.bf16.msra.mxu0 %v2059
    %2456 = vmatprep.subr.bf16.mxu0 %v2068
    %2457 = vmatpush1.bf16.msra.mxu0 %v2067
    %2458 = vmatprep.subr.bf16.mxu0 %v2076
    %2459 = vmatpush1.bf16.msra.mxu0 %v2075
    %2460 = vmatprep.subr.bf16.mxu0 %v2084
    %2461 = vmatpush1.bf16.msra.mxu0 %v2083
    %2462 = vmatprep.subr.bf16.mxu0 %v2092
    %2463 = vmatpush1.bf16.msra.mxu0 %v2091
    %2464 = vmatprep.subr.bf16.mxu0 %v2100
    %2465 = vmatpush1.bf16.msra.mxu0 %v2099
    %2466 = vmatprep.subr.bf16.mxu0 %v2108
    %2467 = vmatpush1.bf16.msra.mxu0 %v2107
    %2468 = vmatprep.subr.bf16.mxu0 %v2116
    %2469 = vmatpush1.bf16.msra.mxu0 %v2115
    %2470 = vmatprep.subr.bf16.mxu0 %v2124
    %2471 = vmatpush1.bf16.msra.mxu0 %v2123
    %2472 = vmatprep.subr.bf16.mxu0 %v2132
    %2473 = vmatpush1.bf16.msra.mxu0 %v2131
    %2474 = vmatprep.subr.bf16.mxu0 %v2140
    %2475 = vmatpush1.bf16.msra.mxu0 %v2139
    %2476 = vmatprep.mubr.bf16.mxu0 %v866
    %2477 = vmatmul.mubr.bf16.gmra.mrb[0].mxu0 %v865
    %v2478 = vpop.f32.mrb[0].mxu0
    %v2479 = vadd.f32 %v2438, %v2478
    %v2480 = vpop.f32.mrb[0].mxu0
    %v2481 = vadd.f32 %v2440, %v2480
    %v2482 = vpop.f32.mrb[0].mxu0
    %v2483 = vpop.f32.mrb[0].mxu0
    %2484 = vdwg.mxu0
    %2485 = vmatprep.subr.bf16.mxu0 %v1894
    %2486 = vmatpush1.bf16.msra.mxu0 %v1893
    %2487 = vmatprep.subr.bf16.mxu0 %v1902
    %2488 = vmatpush1.bf16.msra.mxu0 %v1901
    %2489 = vmatprep.subr.bf16.mxu0 %v1910
    %2490 = vmatpush1.bf16.msra.mxu0 %v1909
    %2491 = vmatprep.subr.bf16.mxu0 %v1918
    %2492 = vmatpush1.bf16.msra.mxu0 %v1917
    %2493 = vmatprep.subr.bf16.mxu0 %v1926
    %2494 = vmatpush1.bf16.msra.mxu0 %v1925
    %2495 = vmatprep.subr.bf16.mxu0 %v1934
    %2496 = vmatpush1.bf16.msra.mxu0 %v1933
    %2497 = vmatprep.subr.bf16.mxu0 %v1942
    %2498 = vmatpush1.bf16.msra.mxu0 %v1941
    %2499 = vmatprep.subr.bf16.mxu0 %v1950
    %2500 = vmatpush1.bf16.msra.mxu0 %v1949
    %2501 = vmatprep.subr.bf16.mxu0 %v1958
    %2502 = vmatpush1.bf16.msra.mxu0 %v1957
    %2503 = vmatprep.subr.bf16.mxu0 %v1966
    %2504 = vmatpush1.bf16.msra.mxu0 %v1965
    %2505 = vmatprep.subr.bf16.mxu0 %v1974
    %2506 = vmatpush1.bf16.msra.mxu0 %v1973
    %2507 = vmatprep.subr.bf16.mxu0 %v1982
    %2508 = vmatpush1.bf16.msra.mxu0 %v1981
    %2509 = vmatprep.subr.bf16.mxu0 %v1990
    %2510 = vmatpush1.bf16.msra.mxu0 %v1989
    %2511 = vmatprep.subr.bf16.mxu0 %v1998
    %2512 = vmatpush1.bf16.msra.mxu0 %v1997
    %2513 = vmatprep.subr.bf16.mxu0 %v2006
    %2514 = vmatpush1.bf16.msra.mxu0 %v2005
    %2515 = vmatprep.subr.bf16.mxu0 %v2014
    %2516 = vmatpush1.bf16.msra.mxu0 %v2013
    %2517 = vmatprep.mubr.bf16.mxu0 %v864
    %2518 = vmatmul.mubr.bf16.gmra.mrb[0].mxu0 %v863
    %v2519 = vpop.f32.mrb[0].mxu0
    %v2520 = vadd.f32 0.0, %v2519
    %v2521 = vpop.f32.mrb[0].mxu0
    %v2522 = vadd.f32 0.0, %v2521
    %v2523 = vpop.f32.mrb[0].mxu0
    %v2524 = vpop.f32.mrb[0].mxu0
    %2525 = vdwg.mxu0
    %2526 = vmatprep.subr.bf16.mxu0 %v2022
    %2527 = vmatpush1.bf16.msra.mxu0 %v2021
    %2528 = vmatprep.subr.bf16.mxu0 %v2030
    %2529 = vmatpush1.bf16.msra.mxu0 %v2029
    %2530 = vmatprep.subr.bf16.mxu0 %v2038
    %2531 = vmatpush1.bf16.msra.mxu0 %v2037
    %2532 = vmatprep.subr.bf16.mxu0 %v2046
    %2533 = vmatpush1.bf16.msra.mxu0 %v2045
    %2534 = vmatprep.subr.bf16.mxu0 %v2054
    %2535 = vmatpush1.bf16.msra.mxu0 %v2053
    %2536 = vmatprep.subr.bf16.mxu0 %v2062
    %2537 = vmatpush1.bf16.msra.mxu0 %v2061
    %2538 = vmatprep.subr.bf16.mxu0 %v2070
    %2539 = vmatpush1.bf16.msra.mxu0 %v2069
    %2540 = vmatprep.subr.bf16.mxu0 %v2078
    %2541 = vmatpush1.bf16.msra.mxu0 %v2077
    %2542 = vmatprep.subr.bf16.mxu0 %v2086
    %2543 = vmatpush1.bf16.msra.mxu0 %v2085
    %2544 = vmatprep.subr.bf16.mxu0 %v2094
    %2545 = vmatpush1.bf16.msra.mxu0 %v2093
    %2546 = vmatprep.subr.bf16.mxu0 %v2102
    %2547 = vmatpush1.bf16.msra.mxu0 %v2101
    %2548 = vmatprep.subr.bf16.mxu0 %v2110
    %2549 = vmatpush1.bf16.msra.mxu0 %v2109
    %2550 = vmatprep.subr.bf16.mxu0 %v2118
    %2551 = vmatpush1.bf16.msra.mxu0 %v2117
    %2552 = vmatprep.subr.bf16.mxu0 %v2126
    %2553 = vmatpush1.bf16.msra.mxu0 %v2125
    %2554 = vmatprep.subr.bf16.mxu0 %v2134
    %2555 = vmatpush1.bf16.msra.mxu0 %v2133
    %2556 = vmatprep.subr.bf16.mxu0 %v2142
    %2557 = vmatpush1.bf16.msra.mxu0 %v2141
    %2558 = vmatprep.mubr.bf16.mxu0 %v866
    %2559 = vmatmul.mubr.bf16.gmra.mrb[0].mxu0 %v865
    %v2560 = vpop.f32.mrb[0].mxu0
    %v2561 = vadd.f32 %v2520, %v2560
    %v2562 = vpop.f32.mrb[0].mxu0
    %v2563 = vadd.f32 %v2522, %v2562
    %v2564 = vpop.f32.mrb[0].mxu0
    %v2565 = vpop.f32.mrb[0].mxu0
    %2566 = vdwg.mxu0
    %2567 = vmatprep.subr.bf16.mxu0 %v1896
    %2568 = vmatpush1.bf16.msra.mxu0 %v1895
    %2569 = vmatprep.subr.bf16.mxu0 %v1904
    %2570 = vmatpush1.bf16.msra.mxu0 %v1903
    %2571 = vmatprep.subr.bf16.mxu0 %v1912
    %2572 = vmatpush1.bf16.msra.mxu0 %v1911
    %2573 = vmatprep.subr.bf16.mxu0 %v1920
    %2574 = vmatpush1.bf16.msra.mxu0 %v1919
    %2575 = vmatprep.subr.bf16.mxu0 %v1928
    %2576 = vmatpush1.bf16.msra.mxu0 %v1927
    %2577 = vmatprep.subr.bf16.mxu0 %v1936
    %2578 = vmatpush1.bf16.msra.mxu0 %v1935
    %2579 = vmatprep.subr.bf16.mxu0 %v1944
    %2580 = vmatpush1.bf16.msra.mxu0 %v1943
    %2581 = vmatprep.subr.bf16.mxu0 %v1952
    %2582 = vmatpush1.bf16.msra.mxu0 %v1951
    %2583 = vmatprep.subr.bf16.mxu0 %v1960
    %2584 = vmatpush1.bf16.msra.mxu0 %v1959
    %2585 = vmatprep.subr.bf16.mxu0 %v1968
    %2586 = vmatpush1.bf16.msra.mxu0 %v1967
    %2587 = vmatprep.subr.bf16.mxu0 %v1976
    %2588 = vmatpush1.bf16.msra.mxu0 %v1975
    %2589 = vmatprep.subr.bf16.mxu0 %v1984
    %2590 = vmatpush1.bf16.msra.mxu0 %v1983
    %2591 = vmatprep.subr.bf16.mxu0 %v1992
    %2592 = vmatpush1.bf16.msra.mxu0 %v1991
    %2593 = vmatprep.subr.bf16.mxu0 %v2000
    %2594 = vmatpush1.bf16.msra.mxu0 %v1999
    %2595 = vmatprep.subr.bf16.mxu0 %v2008
    %2596 = vmatpush1.bf16.msra.mxu0 %v2007
    %2597 = vmatprep.subr.bf16.mxu0 %v2016
    %2598 = vmatpush1.bf16.msra.mxu0 %v2015
    %2599 = vmatprep.mubr.bf16.mxu0 %v864
    %2600 = vmatmul.mubr.bf16.gmra.mrb[0].mxu0 %v863
    %v2601 = vpop.f32.mrb[0].mxu0
    %v2602 = vadd.f32 0.0, %v2601
    %v2603 = vpop.f32.mrb[0].mxu0
    %v2604 = vadd.f32 0.0, %v2603
    %v2605 = vpop.f32.mrb[0].mxu0
    %v2606 = vpop.f32.mrb[0].mxu0
    %2607 = vdwg.mxu0
    %2608 = vmatprep.subr.bf16.mxu0 %v2024
    %2609 = vmatpush1.bf16.msra.mxu0 %v2023
    %2610 = vmatprep.subr.bf16.mxu0 %v2032
    %2611 = vmatpush1.bf16.msra.mxu0 %v2031
    %2612 = vmatprep.subr.bf16.mxu0 %v2040
    %2613 = vmatpush1.bf16.msra.mxu0 %v2039
    %2614 = vmatprep.subr.bf16.mxu0 %v2048
    %2615 = vmatpush1.bf16.msra.mxu0 %v2047
    %2616 = vmatprep.subr.bf16.mxu0 %v2056
    %2617 = vmatpush1.bf16.msra.mxu0 %v2055
    %2618 = vmatprep.subr.bf16.mxu0 %v2064
    %2619 = vmatpush1.bf16.msra.mxu0 %v2063
    %2620 = vmatprep.subr.bf16.mxu0 %v2072
    %2621 = vmatpush1.bf16.msra.mxu0 %v2071
    %2622 = vmatprep.subr.bf16.mxu0 %v2080
    %2623 = vmatpush1.bf16.msra.mxu0 %v2079
    %2624 = vmatprep.subr.bf16.mxu0 %v2088
    %2625 = vmatpush1.bf16.msra.mxu0 %v2087
    %2626 = vmatprep.subr.bf16.mxu0 %v2096
    %2627 = vmatpush1.bf16.msra.mxu0 %v2095
    %2628 = vmatprep.subr.bf16.mxu0 %v2104
    %2629 = vmatpush1.bf16.msra.mxu0 %v2103
    %2630 = vmatprep.subr.bf16.mxu0 %v2112
    %2631 = vmatpush1.bf16.msra.mxu0 %v2111
    %2632 = vmatprep.subr.bf16.mxu0 %v2120
    %2633 = vmatpush1.bf16.msra.mxu0 %v2119
    %2634 = vmatprep.subr.bf16.mxu0 %v2128
    %2635 = vmatpush1.bf16.msra.mxu0 %v2127
    %2636 = vmatprep.subr.bf16.mxu0 %v2136
    %2637 = vmatpush1.bf16.msra.mxu0 %v2135
    %2638 = vmatprep.subr.bf16.mxu0 %v2144
    %2639 = vmatpush1.bf16.msra.mxu0 %v2143
    %2640 = vmatprep.mubr.bf16.mxu0 %v866
    %2641 = vmatmul.mubr.bf16.gmra.mrb[0].mxu0 %v865
    %v2642 = vpop.f32.mrb[0].mxu0
    %v2643 = vadd.f32 %v2602, %v2642
    %v2644 = vpop.f32.mrb[0].mxu0
    %v2645 = vadd.f32 %v2604, %v2644
    %v2646 = vpop.f32.mrb[0].mxu0
    %v2647 = vpop.f32.mrb[0].mxu0
    %2648 = vdwg.mxu0
    %2649 = vmatprep.subr.bf16.mxu0 %v1898
    %2650 = vmatpush1.bf16.msra.mxu0 %v1897
    %2651 = vmatprep.subr.bf16.mxu0 %v1906
    %2652 = vmatpush1.bf16.msra.mxu0 %v1905
    %2653 = vmatprep.subr.bf16.mxu0 %v1914
    %2654 = vmatpush1.bf16.msra.mxu0 %v1913
    %2655 = vmatprep.subr.bf16.mxu0 %v1922
    %2656 = vmatpush1.bf16.msra.mxu0 %v1921
    %2657 = vmatprep.subr.bf16.mxu0 %v1930
    %2658 = vmatpush1.bf16.msra.mxu0 %v1929
    %2659 = vmatprep.subr.bf16.mxu0 %v1938
    %2660 = vmatpush1.bf16.msra.mxu0 %v1937
    %2661 = vmatprep.subr.bf16.mxu0 %v1946
    %2662 = vmatpush1.bf16.msra.mxu0 %v1945
    %2663 = vmatprep.subr.bf16.mxu0 %v1954
    %2664 = vmatpush1.bf16.msra.mxu0 %v1953
    %2665 = vmatprep.subr.bf16.mxu0 %v1962
    %2666 = vmatpush1.bf16.msra.mxu0 %v1961
    %2667 = vmatprep.subr.bf16.mxu0 %v1970
    %2668 = vmatpush1.bf16.msra.mxu0 %v1969
    %2669 = vmatprep.subr.bf16.mxu0 %v1978
    %2670 = vmatpush1.bf16.msra.mxu0 %v1977
    %2671 = vmatprep.subr.bf16.mxu0 %v1986
    %2672 = vmatpush1.bf16.msra.mxu0 %v1985
    %2673 = vmatprep.subr.bf16.mxu0 %v1994
    %2674 = vmatpush1.bf16.msra.mxu0 %v1993
    %2675 = vmatprep.subr.bf16.mxu0 %v2002
    %2676 = vmatpush1.bf16.msra.mxu0 %v2001
    %2677 = vmatprep.subr.bf16.mxu0 %v2010
    %2678 = vmatpush1.bf16.msra.mxu0 %v2009
    %2679 = vmatprep.subr.bf16.mxu0 %v2018
    %2680 = vmatpush1.bf16.msra.mxu0 %v2017
    %2681 = vmatprep.mubr.bf16.mxu0 %v864
    %2682 = vmatmul.mubr.bf16.gmra.mrb[0].mxu0 %v863
    %v2683 = vpop.f32.mrb[0].mxu0
    %v2684 = vadd.f32 0.0, %v2683
    %v2685 = vpop.f32.mrb[0].mxu0
    %v2686 = vadd.f32 0.0, %v2685
    %v2687 = vpop.f32.mrb[0].mxu0
    %v2688 = vpop.f32.mrb[0].mxu0
    %2689 = vdwg.mxu0
    %2690 = vmatprep.subr.bf16.mxu0 %v2026
    %2691 = vmatpush1.bf16.msra.mxu0 %v2025
    %2692 = vmatprep.subr.bf16.mxu0 %v2034
    %2693 = vmatpush1.bf16.msra.mxu0 %v2033
    %2694 = vmatprep.subr.bf16.mxu0 %v2042
    %2695 = vmatpush1.bf16.msra.mxu0 %v2041
    %2696 = vmatprep.subr.bf16.mxu0 %v2050
    %2697 = vmatpush1.bf16.msra.mxu0 %v2049
    %2698 = vmatprep.subr.bf16.mxu0 %v2058
    %2699 = vmatpush1.bf16.msra.mxu0 %v2057
    %2700 = vmatprep.subr.bf16.mxu0 %v2066
    %2701 = vmatpush1.bf16.msra.mxu0 %v2065
    %2702 = vmatprep.subr.bf16.mxu0 %v2074
    %2703 = vmatpush1.bf16.msra.mxu0 %v2073
    %2704 = vmatprep.subr.bf16.mxu0 %v2082
    %2705 = vmatpush1.bf16.msra.mxu0 %v2081
    %2706 = vmatprep.subr.bf16.mxu0 %v2090
    %2707 = vmatpush1.bf16.msra.mxu0 %v2089
    %2708 = vmatprep.subr.bf16.mxu0 %v2098
    %2709 = vmatpush1.bf16.msra.mxu0 %v2097
    %2710 = vmatprep.subr.bf16.mxu0 %v2106
    %2711 = vmatpush1.bf16.msra.mxu0 %v2105
    %2712 = vmatprep.subr.bf16.mxu0 %v2114
    %2713 = vmatpush1.bf16.msra.mxu0 %v2113
    %2714 = vmatprep.subr.bf16.mxu0 %v2122
    %2715 = vmatpush1.bf16.msra.mxu0 %v2121
    %2716 = vmatprep.subr.bf16.mxu0 %v2130
    %2717 = vmatpush1.bf16.msra.mxu0 %v2129
    %2718 = vmatprep.subr.bf16.mxu0 %v2138
    %2719 = vmatpush1.bf16.msra.mxu0 %v2137
    %2720 = vmatprep.subr.bf16.mxu0 %v2146
    %2721 = vmatpush1.bf16.msra.mxu0 %v2145
    %2722 = vmatprep.mubr.bf16.mxu0 %v866
    %2723 = vmatmul.mubr.bf16.gmra.mrb[0].mxu0 %v865
    %v2724 = vpop.f32.mrb[0].mxu0
    %v2725 = vadd.f32 %v2684, %v2724
    %v2726 = vpop.f32.mrb[0].mxu0
    %v2727 = vadd.f32 %v2686, %v2726
    %v2728 = vpop.f32.mrb[0].mxu0
    %v2729 = vpop.f32.mrb[0].mxu0
    %2730 = vdwg.mxu0
    %v2731 = vld [vmem:[#allocation13] sm:$0xff]
    %v2732 = vpack.c.bf16 %v2479, %v2479
    %v2733 = vpack.c.bf16 %v2481, %v2481
    %v2734 = vpack.c.bf16 %v2561, %v2561
    %v2735 = vpack.c.bf16 %v2563, %v2563
    %v2736 = vpack.c.bf16 %v2643, %v2643
    %v2737 = vpack.c.bf16 %v2645, %v2645
    %v2738 = vpack.c.bf16 %v2725, %v2725
    %v2739 = vpack.c.bf16 %v2727, %v2727
    %v2741 = vcombine.high %v2731, %v2731
    %v2743 = vunpack.c.l.s4 1966171168
    %v2744 = vunpack.c.0.s8 %v2743
    %v2745 = vlaneseq
    %v2746 = vshrl.u32 %v2745, 7
    %v2747 = vsub.s32 %v2744, %v2746
    %v2748 = vrot.slane %v2731, %v2747
    %v2750 = vunpack.c.l.s4 1966171168
    %v2751 = vunpack.c.0.s8 %v2750
    %v2752 = vlaneseq
    %v2753 = vshrl.u32 %v2752, 7
    %v2754 = vsub.s32 %v2751, %v2753
    %v2755 = vrot.slane %v2741, %v2754
    %v2756 = vcombine.high %v2748, %v2748
    %v2757 = vcombine.high %v2755, %v2755
    %v2759 = vunpack.c.l.s4 1966171168
    %v2760 = vunpack.c.0.s8 %v2759
    %v2761 = vlaneseq
    %v2762 = vshrl.u32 %v2761, 7
    %v2763 = vsub.s32 %v2760, %v2762
    %v2764 = vrot.slane %v2748, %v2763
    %v2766 = vunpack.c.l.s4 1966171168
    %v2767 = vunpack.c.0.s8 %v2766
    %v2768 = vlaneseq
    %v2769 = vshrl.u32 %v2768, 7
    %v2770 = vsub.s32 %v2767, %v2769
    %v2771 = vrot.slane %v2755, %v2770
    %v2773 = vunpack.c.l.s4 1966171168
    %v2774 = vunpack.c.0.s8 %v2773
    %v2775 = vlaneseq
    %v2776 = vshrl.u32 %v2775, 7
    %v2777 = vsub.s32 %v2774, %v2776
    %v2778 = vrot.slane %v2756, %v2777
    %v2780 = vunpack.c.l.s4 1966171168
    %v2781 = vunpack.c.0.s8 %v2780
    %v2782 = vlaneseq
    %v2783 = vshrl.u32 %v2782, 7
    %v2784 = vsub.s32 %v2781, %v2783
    %v2785 = vrot.slane %v2757, %v2784
    %v2786 = vcombine.high %v2764, %v2764
    %v2787 = vcombine.high %v2771, %v2771
    %v2788 = vcombine.high %v2778, %v2778
    %v2789 = vcombine.high %v2785, %v2785
    %v2791 = vpack.i.b16 %v2764, %v2764
    %v2793 = vlaneseq
    %v2794 = vshrl.u32 %v2793, 7
    %v2795 = vsub.s32 0, %v2794
    %v2796 = vrot.slane %v2791, %v2795
    %v2798 = vpack.i.b16 %v2778, %v2778
    %v2800 = vlaneseq
    %v2801 = vshrl.u32 %v2800, 7
    %v2802 = vsub.s32 0, %v2801
    %v2803 = vrot.slane %v2798, %v2802
    %v2805 = vpack.i.b16 %v2786, %v2786
    %v2807 = vlaneseq
    %v2808 = vshrl.u32 %v2807, 7
    %v2809 = vsub.s32 0, %v2808
    %v2810 = vrot.slane %v2805, %v2809
    %v2812 = vpack.i.b16 %v2788, %v2788
    %v2814 = vlaneseq
    %v2815 = vshrl.u32 %v2814, 7
    %v2816 = vsub.s32 0, %v2815
    %v2817 = vrot.slane %v2812, %v2816
    %v2819 = vpack.i.b16 %v2771, %v2771
    %v2821 = vlaneseq
    %v2822 = vshrl.u32 %v2821, 7
    %v2823 = vsub.s32 0, %v2822
    %v2824 = vrot.slane %v2819, %v2823
    %v2826 = vpack.i.b16 %v2785, %v2785
    %v2828 = vlaneseq
    %v2829 = vshrl.u32 %v2828, 7
    %v2830 = vsub.s32 0, %v2829
    %v2831 = vrot.slane %v2826, %v2830
    %v2833 = vpack.i.b16 %v2787, %v2787
    %v2835 = vlaneseq
    %v2836 = vshrl.u32 %v2835, 7
    %v2837 = vsub.s32 0, %v2836
    %v2838 = vrot.slane %v2833, %v2837
    %v2840 = vpack.i.b16 %v2789, %v2789
    %v2842 = vlaneseq
    %v2843 = vshrl.u32 %v2842, 7
    %v2844 = vsub.s32 0, %v2843
    %v2845 = vrot.slane %v2840, %v2844
    %v2846 = vadd.bf16 %v2732, %v2796
    %v2847 = vadd.bf16 %v2733, %v2803
    %v2848 = vadd.bf16 %v2734, %v2810
    %v2849 = vadd.bf16 %v2735, %v2817
    %v2850 = vadd.bf16 %v2736, %v2824
    %v2851 = vadd.bf16 %v2737, %v2831
    %v2852 = vadd.bf16 %v2738, %v2838
    %v2853 = vadd.bf16 %v2739, %v2845
    %v2854 = vmul.bf16 %v2846, 1045249613
    %v2855 = vmul.bf16 %v2847, 1045249613
    %v2856 = vmul.bf16 %v2848, 1045249613
    %v2857 = vmul.bf16 %v2849, 1045249613
    %v2858 = vmul.bf16 %v2850, 1045249613
    %v2859 = vmul.bf16 %v2851, 1045249613
    %v2860 = vmul.bf16 %v2852, 1045249613
    %v2861 = vmul.bf16 %v2853, 1045249613
    %v2862 = vmax.bf16 %v2846, %v2854
    %v2863 = vmax.bf16 %v2847, %v2855
    %v2864 = vmax.bf16 %v2848, %v2856
    %v2865 = vmax.bf16 %v2849, %v2857
    %v2866 = vmax.bf16 %v2850, %v2858
    %v2867 = vmax.bf16 %v2851, %v2859
    %v2868 = vmax.bf16 %v2852, %v2860
    %v2869 = vmax.bf16 %v2853, %v2861
    %v2870 = vld [vmem:[#allocation14] sm:$0xff]
    %v2871 = vld [vmem:[#allocation14 + $0x8] sm:$0xff]
    %v2872 = vld [vmem:[#allocation14 + $0x10] sm:$0xff]
    %v2873 = vld [vmem:[#allocation14 + $0x18] sm:$0xf]
    %v2874 = vld [vmem:[#allocation14 + $0x1c] sm:$0xff]
    %v2875 = vld [vmem:[#allocation14 + $0x24] sm:$0xff]
    %v2876 = vld [vmem:[#allocation14 + $0x2c] sm:$0xff]
    %v2877 = vld [vmem:[#allocation14 + $0x34] sm:$0xf]
    %v2878 = vld [vmem:[#allocation14 + $0x38] sm:$0xff]
    %v2879 = vld [vmem:[#allocation14 + $0x40] sm:$0xff]
    %v2880 = vld [vmem:[#allocation14 + $0x48] sm:$0xff]
    %v2881 = vld [vmem:[#allocation14 + $0x50] sm:$0xf]
    %v2882 = vld [vmem:[#allocation14 + $0x54] sm:$0xff]
    %v2883 = vld [vmem:[#allocation14 + $0x5c] sm:$0xff]
    %v2884 = vld [vmem:[#allocation14 + $0x64] sm:$0xff]
    %v2885 = vld [vmem:[#allocation14 + $0x6c] sm:$0xf]
    %v2886 = vld [vmem:[#allocation14 + $0x70] sm:$0xff]
    %v2887 = vld [vmem:[#allocation14 + $0x78] sm:$0xff]
    %v2888 = vld [vmem:[#allocation14 + $0x80] sm:$0xff]
    %v2889 = vld [vmem:[#allocation14 + $0x88] sm:$0xf]
    %v2890 = vld [vmem:[#allocation14 + $0x8c] sm:$0xff]
    %v2891 = vld [vmem:[#allocation14 + $0x94] sm:$0xff]
    %v2892 = vld [vmem:[#allocation14 + $0x9c] sm:$0xff]
    %v2893 = vld [vmem:[#allocation14 + $0xa4] sm:$0xf]
    %v2894 = vld [vmem:[#allocation14 + $0xa8] sm:$0xff]
    %v2895 = vld [vmem:[#allocation14 + $0xb0] sm:$0xff]
    %v2896 = vld [vmem:[#allocation14 + $0xb8] sm:$0xff]
    %v2897 = vld [vmem:[#allocation14 + $0xc0] sm:$0xf]
    %v2898 = vld [vmem:[#allocation14 + $0xc4] sm:$0xff]
    %v2899 = vld [vmem:[#allocation14 + $0xcc] sm:$0xff]
    %v2900 = vld [vmem:[#allocation14 + $0xd4] sm:$0xff]
    %v2901 = vld [vmem:[#allocation14 + $0xdc] sm:$0xf]
    %v2902 = vld [vmem:[#allocation14 + $0xe0] sm:$0xff]
    %v2903 = vld [vmem:[#allocation14 + $0xe8] sm:$0xff]
    %v2904 = vld [vmem:[#allocation14 + $0xf0] sm:$0xff]
    %v2905 = vld [vmem:[#allocation14 + $0xf8] sm:$0xf]
    %v2906 = vld [vmem:[#allocation14 + $0xfc] sm:$0xff]
    %v2907 = vld [vmem:[#allocation14 + $0x104] sm:$0xff]
    %v2908 = vld [vmem:[#allocation14 + $0x10c] sm:$0xff]
    %v2909 = vld [vmem:[#allocation14 + $0x114] sm:$0xf]
    %v2910 = vld [vmem:[#allocation14 + $0x118] sm:$0xff]
    %v2911 = vld [vmem:[#allocation14 + $0x120] sm:$0xff]
    %v2912 = vld [vmem:[#allocation14 + $0x128] sm:$0xff]
    %v2913 = vld [vmem:[#allocation14 + $0x130] sm:$0xf]
    %v2914 = vld [vmem:[#allocation14 + $0x134] sm:$0xff]
    %v2915 = vld [vmem:[#allocation14 + $0x13c] sm:$0xff]
    %v2916 = vld [vmem:[#allocation14 + $0x144] sm:$0xff]
    %v2917 = vld [vmem:[#allocation14 + $0x14c] sm:$0xf]
    %v2918 = vld [vmem:[#allocation14 + $0x150] sm:$0xff]
    %v2919 = vld [vmem:[#allocation14 + $0x158] sm:$0xff]
    %v2920 = vld [vmem:[#allocation14 + $0x160] sm:$0xff]
    %v2921 = vld [vmem:[#allocation14 + $0x168] sm:$0xf]
    %v2922 = vld [vmem:[#allocation14 + $0x16c] sm:$0xff]
    %v2923 = vld [vmem:[#allocation14 + $0x174] sm:$0xff]
    %v2924 = vld [vmem:[#allocation14 + $0x17c] sm:$0xff]
    %v2925 = vld [vmem:[#allocation14 + $0x184] sm:$0xf]
    %v2926 = vld [vmem:[#allocation14 + $0x188] sm:$0xff]
    %v2927 = vld [vmem:[#allocation14 + $0x190] sm:$0xff]
    %v2928 = vld [vmem:[#allocation14 + $0x198] sm:$0xff]
    %v2929 = vld [vmem:[#allocation14 + $0x1a0] sm:$0xf]
    %v2930 = vld [vmem:[#allocation14 + $0x1a4] sm:$0xff]
    %v2931 = vld [vmem:[#allocation14 + $0x1ac] sm:$0xff]
    %v2932 = vld [vmem:[#allocation14 + $0x1b4] sm:$0xff]
    %v2933 = vld [vmem:[#allocation14 + $0x1bc] sm:$0xf]
    %v2934 = vld [vmem:[#allocation14 + $0x1c0] sm:$0xff]
    %v2935 = vld [vmem:[#allocation14 + $0x1c8] sm:$0xff]
    %v2936 = vld [vmem:[#allocation14 + $0x1d0] sm:$0xff]
    %v2937 = vld [vmem:[#allocation14 + $0x1d8] sm:$0xf]
    %v2938 = vld [vmem:[#allocation14 + $0x1dc] sm:$0xff]
    %v2939 = vld [vmem:[#allocation14 + $0x1e4] sm:$0xff]
    %v2940 = vld [vmem:[#allocation14 + $0x1ec] sm:$0xff]
    %v2941 = vld [vmem:[#allocation14 + $0x1f4] sm:$0xf]
    %v2942 = vld [vmem:[#allocation14 + $0x1f8] sm:$0xff]
    %v2943 = vld [vmem:[#allocation14 + $0x200] sm:$0xff]
    %v2944 = vld [vmem:[#allocation14 + $0x208] sm:$0xff]
    %v2945 = vld [vmem:[#allocation14 + $0x210] sm:$0xf]
    %v2946 = vld [vmem:[#allocation14 + $0x214] sm:$0xff]
    %v2947 = vld [vmem:[#allocation14 + $0x21c] sm:$0xff]
    %v2948 = vld [vmem:[#allocation14 + $0x224] sm:$0xff]
    %v2949 = vld [vmem:[#allocation14 + $0x22c] sm:$0xf]
    %v2950 = vld [vmem:[#allocation14 + $0x230] sm:$0xff]
    %v2951 = vld [vmem:[#allocation14 + $0x238] sm:$0xff]
    %v2952 = vld [vmem:[#allocation14 + $0x240] sm:$0xff]
    %v2953 = vld [vmem:[#allocation14 + $0x248] sm:$0xf]
    %v2954 = vld [vmem:[#allocation14 + $0x24c] sm:$0xff]
    %v2955 = vld [vmem:[#allocation14 + $0x254] sm:$0xff]
    %v2956 = vld [vmem:[#allocation14 + $0x25c] sm:$0xff]
    %v2957 = vld [vmem:[#allocation14 + $0x264] sm:$0xf]
    %v2958 = vld [vmem:[#allocation14 + $0x268] sm:$0xff]
    %v2959 = vld [vmem:[#allocation14 + $0x270] sm:$0xff]
    %v2960 = vld [vmem:[#allocation14 + $0x278] sm:$0xff]
    %v2961 = vld [vmem:[#allocation14 + $0x280] sm:$0xf]
    %v2962 = vld [vmem:[#allocation14 + $0x284] sm:$0xff]
    %v2963 = vld [vmem:[#allocation14 + $0x28c] sm:$0xff]
    %v2964 = vld [vmem:[#allocation14 + $0x294] sm:$0xff]
    %v2965 = vld [vmem:[#allocation14 + $0x29c] sm:$0xf]
    %v2966 = vld [vmem:[#allocation14 + $0x2a0] sm:$0xff]
    %v2967 = vld [vmem:[#allocation14 + $0x2a8] sm:$0xff]
    %v2968 = vld [vmem:[#allocation14 + $0x2b0] sm:$0xff]
    %v2969 = vld [vmem:[#allocation14 + $0x2b8] sm:$0xf]
    %v2970 = vld [vmem:[#allocation14 + $0x2bc] sm:$0xff]
    %v2971 = vld [vmem:[#allocation14 + $0x2c4] sm:$0xff]
    %v2972 = vld [vmem:[#allocation14 + $0x2cc] sm:$0xff]
    %v2973 = vld [vmem:[#allocation14 + $0x2d4] sm:$0xf]
    %v2974 = vld [vmem:[#allocation14 + $0x2d8] sm:$0xff]
    %v2975 = vld [vmem:[#allocation14 + $0x2e0] sm:$0xff]
    %v2976 = vld [vmem:[#allocation14 + $0x2e8] sm:$0xff]
    %v2977 = vld [vmem:[#allocation14 + $0x2f0] sm:$0xf]
    %v2978 = vld [vmem:[#allocation14 + $0x2f4] sm:$0xff]
    %v2979 = vld [vmem:[#allocation14 + $0x2fc] sm:$0xff]
    %v2980 = vld [vmem:[#allocation14 + $0x304] sm:$0xff]
    %v2981 = vld [vmem:[#allocation14 + $0x30c] sm:$0xf]
    %v2982 = vld [vmem:[#allocation14 + $0x310] sm:$0xff]
    %v2983 = vld [vmem:[#allocation14 + $0x318] sm:$0xff]
    %v2984 = vld [vmem:[#allocation14 + $0x320] sm:$0xff]
    %v2985 = vld [vmem:[#allocation14 + $0x328] sm:$0xf]
    %v2986 = vld [vmem:[#allocation14 + $0x32c] sm:$0xff]
    %v2987 = vld [vmem:[#allocation14 + $0x334] sm:$0xff]
    %v2988 = vld [vmem:[#allocation14 + $0x33c] sm:$0xff]
    %v2989 = vld [vmem:[#allocation14 + $0x344] sm:$0xf]
    %v2990 = vld [vmem:[#allocation14 + $0x348] sm:$0xff]
    %v2991 = vld [vmem:[#allocation14 + $0x350] sm:$0xff]
    %v2992 = vld [vmem:[#allocation14 + $0x358] sm:$0xff]
    %v2993 = vld [vmem:[#allocation14 + $0x360] sm:$0xf]
    %v2994 = vld [vmem:[#allocation14 + $0x364] sm:$0xff]
    %v2995 = vld [vmem:[#allocation14 + $0x36c] sm:$0xff]
    %v2996 = vld [vmem:[#allocation14 + $0x374] sm:$0xff]
    %v2997 = vld [vmem:[#allocation14 + $0x37c] sm:$0xf]
    %v2998 = vld [vmem:[#allocation14 + $0x380] sm:$0xff]
    %v2999 = vld [vmem:[#allocation14 + $0x388] sm:$0xff]
    %v3000 = vld [vmem:[#allocation14 + $0x390] sm:$0xff]
    %v3001 = vld [vmem:[#allocation14 + $0x398] sm:$0xf]
    %v3002 = vld [vmem:[#allocation14 + $0x39c] sm:$0xff]
    %v3003 = vld [vmem:[#allocation14 + $0x3a4] sm:$0xff]
    %v3004 = vld [vmem:[#allocation14 + $0x3ac] sm:$0xff]
    %v3005 = vld [vmem:[#allocation14 + $0x3b4] sm:$0xf]
    %v3006 = vld [vmem:[#allocation14 + $0x3b8] sm:$0xff]
    %v3007 = vld [vmem:[#allocation14 + $0x3c0] sm:$0xff]
    %v3008 = vld [vmem:[#allocation14 + $0x3c8] sm:$0xff]
    %v3009 = vld [vmem:[#allocation14 + $0x3d0] sm:$0xf]
    %v3010 = vld [vmem:[#allocation14 + $0x3d4] sm:$0xff]
    %v3011 = vld [vmem:[#allocation14 + $0x3dc] sm:$0xff]
    %v3012 = vld [vmem:[#allocation14 + $0x3e4] sm:$0xff]
    %v3013 = vld [vmem:[#allocation14 + $0x3ec] sm:$0xf]
    %v3014 = vld [vmem:[#allocation14 + $0x3f0] sm:$0xff]
    %v3015 = vld [vmem:[#allocation14 + $0x3f8] sm:$0xff]
    %v3016 = vld [vmem:[#allocation14 + $0x400] sm:$0xff]
    %v3017 = vld [vmem:[#allocation14 + $0x408] sm:$0xf]
    %v3018 = vld [vmem:[#allocation14 + $0x40c] sm:$0xff]
    %v3019 = vld [vmem:[#allocation14 + $0x414] sm:$0xff]
    %v3020 = vld [vmem:[#allocation14 + $0x41c] sm:$0xff]
    %v3021 = vld [vmem:[#allocation14 + $0x424] sm:$0xf]
    %v3022 = vld [vmem:[#allocation14 + $0x428] sm:$0xff]
    %v3023 = vld [vmem:[#allocation14 + $0x430] sm:$0xff]
    %v3024 = vld [vmem:[#allocation14 + $0x438] sm:$0xff]
    %v3025 = vld [vmem:[#allocation14 + $0x440] sm:$0xf]
    %v3026 = vld [vmem:[#allocation14 + $0x444] sm:$0xff]
    %v3027 = vld [vmem:[#allocation14 + $0x44c] sm:$0xff]
    %v3028 = vld [vmem:[#allocation14 + $0x454] sm:$0xff]
    %v3029 = vld [vmem:[#allocation14 + $0x45c] sm:$0xf]
    %v3030 = vld [vmem:[#allocation14 + $0x460] sm:$0xff]
    %v3031 = vld [vmem:[#allocation14 + $0x468] sm:$0xff]
    %v3032 = vld [vmem:[#allocation14 + $0x470] sm:$0xff]
    %v3033 = vld [vmem:[#allocation14 + $0x478] sm:$0xf]
    %v3034 = vld [vmem:[#allocation14 + $0x47c] sm:$0xff]
    %v3035 = vld [vmem:[#allocation14 + $0x484] sm:$0xff]
    %v3036 = vld [vmem:[#allocation14 + $0x48c] sm:$0xff]
    %v3037 = vld [vmem:[#allocation14 + $0x494] sm:$0xf]
    %v3038 = vld [vmem:[#allocation14 + $0x498] sm:$0xff]
    %v3039 = vld [vmem:[#allocation14 + $0x4a0] sm:$0xff]
    %v3040 = vld [vmem:[#allocation14 + $0x4a8] sm:$0xff]
    %v3041 = vld [vmem:[#allocation14 + $0x4b0] sm:$0xf]
    %v3042 = vld [vmem:[#allocation14 + $0x4b4] sm:$0xff]
    %v3043 = vld [vmem:[#allocation14 + $0x4bc] sm:$0xff]
    %v3044 = vld [vmem:[#allocation14 + $0x4c4] sm:$0xff]
    %v3045 = vld [vmem:[#allocation14 + $0x4cc] sm:$0xf]
    %v3046 = vld [vmem:[#allocation14 + $0x4d0] sm:$0xff]
    %v3047 = vld [vmem:[#allocation14 + $0x4d8] sm:$0xff]
    %v3048 = vld [vmem:[#allocation14 + $0x4e0] sm:$0xff]
    %v3049 = vld [vmem:[#allocation14 + $0x4e8] sm:$0xf]
    %v3050 = vld [vmem:[#allocation14 + $0x4ec] sm:$0xff]
    %v3051 = vld [vmem:[#allocation14 + $0x4f4] sm:$0xff]
    %v3052 = vld [vmem:[#allocation14 + $0x4fc] sm:$0xff]
    %v3053 = vld [vmem:[#allocation14 + $0x504] sm:$0xf]
    %v3054 = vld [vmem:[#allocation14 + $0x508] sm:$0xff]
    %v3055 = vld [vmem:[#allocation14 + $0x510] sm:$0xff]
    %v3056 = vld [vmem:[#allocation14 + $0x518] sm:$0xff]
    %v3057 = vld [vmem:[#allocation14 + $0x520] sm:$0xf]
    %v3058 = vld [vmem:[#allocation14 + $0x524] sm:$0xff]
    %v3059 = vld [vmem:[#allocation14 + $0x52c] sm:$0xff]
    %v3060 = vld [vmem:[#allocation14 + $0x534] sm:$0xff]
    %v3061 = vld [vmem:[#allocation14 + $0x53c] sm:$0xf]
    %v3062 = vld [vmem:[#allocation14 + $0x540] sm:$0xff]
    %v3063 = vld [vmem:[#allocation14 + $0x548] sm:$0xff]
    %v3064 = vld [vmem:[#allocation14 + $0x550] sm:$0xff]
    %v3065 = vld [vmem:[#allocation14 + $0x558] sm:$0xf]
    %v3066 = vld [vmem:[#allocation14 + $0x55c] sm:$0xff]
    %v3067 = vld [vmem:[#allocation14 + $0x564] sm:$0xff]
    %v3068 = vld [vmem:[#allocation14 + $0x56c] sm:$0xff]
    %v3069 = vld [vmem:[#allocation14 + $0x574] sm:$0xf]
    %v3070 = vld [vmem:[#allocation14 + $0x578] sm:$0xff]
    %v3071 = vld [vmem:[#allocation14 + $0x580] sm:$0xff]
    %v3072 = vld [vmem:[#allocation14 + $0x588] sm:$0xff]
    %v3073 = vld [vmem:[#allocation14 + $0x590] sm:$0xf]
    %v3074 = vld [vmem:[#allocation14 + $0x594] sm:$0xff]
    %v3075 = vld [vmem:[#allocation14 + $0x59c] sm:$0xff]
    %v3076 = vld [vmem:[#allocation14 + $0x5a4] sm:$0xff]
    %v3077 = vld [vmem:[#allocation14 + $0x5ac] sm:$0xf]
    %v3078 = vld [vmem:[#allocation14 + $0x5b0] sm:$0xff]
    %v3079 = vld [vmem:[#allocation14 + $0x5b8] sm:$0xff]
    %v3080 = vld [vmem:[#allocation14 + $0x5c0] sm:$0xff]
    %v3081 = vld [vmem:[#allocation14 + $0x5c8] sm:$0xf]
    %v3082 = vld [vmem:[#allocation14 + $0x5cc] sm:$0xff]
    %v3083 = vld [vmem:[#allocation14 + $0x5d4] sm:$0xff]
    %v3084 = vld [vmem:[#allocation14 + $0x5dc] sm:$0xff]
    %v3085 = vld [vmem:[#allocation14 + $0x5e4] sm:$0xf]
    %v3086 = vld [vmem:[#allocation14 + $0x5e8] sm:$0xff]
    %v3087 = vld [vmem:[#allocation14 + $0x5f0] sm:$0xff]
    %v3088 = vld [vmem:[#allocation14 + $0x5f8] sm:$0xff]
    %v3089 = vld [vmem:[#allocation14 + $0x600] sm:$0xf]
    %v3090 = vld [vmem:[#allocation14 + $0x604] sm:$0xff]
    %v3091 = vld [vmem:[#allocation14 + $0x60c] sm:$0xff]
    %v3092 = vld [vmem:[#allocation14 + $0x614] sm:$0xff]
    %v3093 = vld [vmem:[#allocation14 + $0x61c] sm:$0xf]
    %v3094 = vld [vmem:[#allocation14 + $0x620] sm:$0xff]
    %v3095 = vld [vmem:[#allocation14 + $0x628] sm:$0xff]
    %v3096 = vld [vmem:[#allocation14 + $0x630] sm:$0xff]
    %v3097 = vld [vmem:[#allocation14 + $0x638] sm:$0xf]
    %v3098 = vld [vmem:[#allocation14 + $0x63c] sm:$0xff]
    %v3099 = vld [vmem:[#allocation14 + $0x644] sm:$0xff]
    %v3100 = vld [vmem:[#allocation14 + $0x64c] sm:$0xff]
    %v3101 = vld [vmem:[#allocation14 + $0x654] sm:$0xf]
    %v3102 = vld [vmem:[#allocation14 + $0x658] sm:$0xff]
    %v3103 = vld [vmem:[#allocation14 + $0x660] sm:$0xff]
    %v3104 = vld [vmem:[#allocation14 + $0x668] sm:$0xff]
    %v3105 = vld [vmem:[#allocation14 + $0x670] sm:$0xf]
    %v3106 = vld [vmem:[#allocation14 + $0x674] sm:$0xff]
    %v3107 = vld [vmem:[#allocation14 + $0x67c] sm:$0xff]
    %v3108 = vld [vmem:[#allocation14 + $0x684] sm:$0xff]
    %v3109 = vld [vmem:[#allocation14 + $0x68c] sm:$0xf]
    %v3110 = vld [vmem:[#allocation14 + $0x690] sm:$0xff]
    %v3111 = vld [vmem:[#allocation14 + $0x698] sm:$0xff]
    %v3112 = vld [vmem:[#allocation14 + $0x6a0] sm:$0xff]
    %v3113 = vld [vmem:[#allocation14 + $0x6a8] sm:$0xf]
    %v3114 = vld [vmem:[#allocation14 + $0x6ac] sm:$0xff]
    %v3115 = vld [vmem:[#allocation14 + $0x6b4] sm:$0xff]
    %v3116 = vld [vmem:[#allocation14 + $0x6bc] sm:$0xff]
    %v3117 = vld [vmem:[#allocation14 + $0x6c4] sm:$0xf]
    %v3118 = vld [vmem:[#allocation14 + $0x6c8] sm:$0xff]
    %v3119 = vld [vmem:[#allocation14 + $0x6d0] sm:$0xff]
    %v3120 = vld [vmem:[#allocation14 + $0x6d8] sm:$0xff]
    %v3121 = vld [vmem:[#allocation14 + $0x6e0] sm:$0xf]
    %v3122 = vld [vmem:[#allocation14 + $0x6e4] sm:$0xff]
    %v3123 = vld [vmem:[#allocation14 + $0x6ec] sm:$0xff]
    %v3124 = vld [vmem:[#allocation14 + $0x6f4] sm:$0xff]
    %v3125 = vld [vmem:[#allocation14 + $0x6fc] sm:$0xf]
    %v3126 = vld [vmem:[#allocation14 + $0x700] sm:$0xff]
    %v3127 = vld [vmem:[#allocation14 + $0x708] sm:$0xff]
    %v3128 = vld [vmem:[#allocation14 + $0x710] sm:$0xff]
    %v3129 = vld [vmem:[#allocation14 + $0x718] sm:$0xf]
    %v3130 = vld [vmem:[#allocation14 + $0x71c] sm:$0xff]
    %v3131 = vld [vmem:[#allocation14 + $0x724] sm:$0xff]
    %v3132 = vld [vmem:[#allocation14 + $0x72c] sm:$0xff]
    %v3133 = vld [vmem:[#allocation14 + $0x734] sm:$0xf]
    %v3134 = vld [vmem:[#allocation14 + $0x738] sm:$0xff]
    %v3135 = vld [vmem:[#allocation14 + $0x740] sm:$0xff]
    %v3136 = vld [vmem:[#allocation14 + $0x748] sm:$0xff]
    %v3137 = vld [vmem:[#allocation14 + $0x750] sm:$0xf]
    %v3138 = vld [vmem:[#allocation14 + $0x754] sm:$0xff]
    %v3139 = vld [vmem:[#allocation14 + $0x75c] sm:$0xff]
    %v3140 = vld [vmem:[#allocation14 + $0x764] sm:$0xff]
    %v3141 = vld [vmem:[#allocation14 + $0x76c] sm:$0xf]
    %v3142 = vld [vmem:[#allocation14 + $0x770] sm:$0xff]
    %v3143 = vld [vmem:[#allocation14 + $0x778] sm:$0xff]
    %v3144 = vld [vmem:[#allocation14 + $0x780] sm:$0xff]
    %v3145 = vld [vmem:[#allocation14 + $0x788] sm:$0xf]
    %v3146 = vld [vmem:[#allocation14 + $0x78c] sm:$0xff]
    %v3147 = vld [vmem:[#allocation14 + $0x794] sm:$0xff]
    %v3148 = vld [vmem:[#allocation14 + $0x79c] sm:$0xff]
    %v3149 = vld [vmem:[#allocation14 + $0x7a4] sm:$0xf]
    %v3150 = vld [vmem:[#allocation14 + $0x7a8] sm:$0xff]
    %v3151 = vld [vmem:[#allocation14 + $0x7b0] sm:$0xff]
    %v3152 = vld [vmem:[#allocation14 + $0x7b8] sm:$0xff]
    %v3153 = vld [vmem:[#allocation14 + $0x7c0] sm:$0xf]
    %v3154 = vld [vmem:[#allocation14 + $0x7c4] sm:$0xff]
    %v3155 = vld [vmem:[#allocation14 + $0x7cc] sm:$0xff]
    %v3156 = vld [vmem:[#allocation14 + $0x7d4] sm:$0xff]
    %v3157 = vld [vmem:[#allocation14 + $0x7dc] sm:$0xf]
    %v3158 = vld [vmem:[#allocation14 + $0x7e0] sm:$0xff]
    %v3159 = vld [vmem:[#allocation14 + $0x7e8] sm:$0xff]
    %v3160 = vld [vmem:[#allocation14 + $0x7f0] sm:$0xff]
    %v3161 = vld [vmem:[#allocation14 + $0x7f8] sm:$0xf]
    %v3162 = vld [vmem:[#allocation14 + $0x7fc] sm:$0xff]
    %v3163 = vld [vmem:[#allocation14 + $0x804] sm:$0xff]
    %v3164 = vld [vmem:[#allocation14 + $0x80c] sm:$0xff]
    %v3165 = vld [vmem:[#allocation14 + $0x814] sm:$0xf]
    %v3166 = vld [vmem:[#allocation14 + $0x818] sm:$0xff]
    %v3167 = vld [vmem:[#allocation14 + $0x820] sm:$0xff]
    %v3168 = vld [vmem:[#allocation14 + $0x828] sm:$0xff]
    %v3169 = vld [vmem:[#allocation14 + $0x830] sm:$0xf]
    %v3170 = vld [vmem:[#allocation14 + $0x834] sm:$0xff]
    %v3171 = vld [vmem:[#allocation14 + $0x83c] sm:$0xff]
    %v3172 = vld [vmem:[#allocation14 + $0x844] sm:$0xff]
    %v3173 = vld [vmem:[#allocation14 + $0x84c] sm:$0xf]
    %v3174 = vld [vmem:[#allocation14 + $0x850] sm:$0xff]
    %v3175 = vld [vmem:[#allocation14 + $0x858] sm:$0xff]
    %v3176 = vld [vmem:[#allocation14 + $0x860] sm:$0xff]
    %v3177 = vld [vmem:[#allocation14 + $0x868] sm:$0xf]
    %v3178 = vld [vmem:[#allocation14 + $0x86c] sm:$0xff]
    %v3179 = vld [vmem:[#allocation14 + $0x874] sm:$0xff]
    %v3180 = vld [vmem:[#allocation14 + $0x87c] sm:$0xff]
    %v3181 = vld [vmem:[#allocation14 + $0x884] sm:$0xf]
    %v3182 = vld [vmem:[#allocation14 + $0x888] sm:$0xff]
    %v3183 = vld [vmem:[#allocation14 + $0x890] sm:$0xff]
    %v3184 = vld [vmem:[#allocation14 + $0x898] sm:$0xff]
    %v3185 = vld [vmem:[#allocation14 + $0x8a0] sm:$0xf]
    %v3186 = vld [vmem:[#allocation14 + $0x8a4] sm:$0xff]
    %v3187 = vld [vmem:[#allocation14 + $0x8ac] sm:$0xff]
    %v3188 = vld [vmem:[#allocation14 + $0x8b4] sm:$0xff]
    %v3189 = vld [vmem:[#allocation14 + $0x8bc] sm:$0xf]
    %v3190 = vld [vmem:[#allocation14 + $0x8c0] sm:$0xff]
    %v3191 = vld [vmem:[#allocation14 + $0x8c8] sm:$0xff]
    %v3192 = vld [vmem:[#allocation14 + $0x8d0] sm:$0xff]
    %v3193 = vld [vmem:[#allocation14 + $0x8d8] sm:$0xf]
    %v3194 = vld [vmem:[#allocation14 + $0x8dc] sm:$0xff]
    %v3195 = vld [vmem:[#allocation14 + $0x8e4] sm:$0xff]
    %v3196 = vld [vmem:[#allocation14 + $0x8ec] sm:$0xff]
    %v3197 = vld [vmem:[#allocation14 + $0x8f4] sm:$0xf]
    %v3198 = vld [vmem:[#allocation14 + $0x8f8] sm:$0xff]
    %v3199 = vld [vmem:[#allocation14 + $0x900] sm:$0xff]
    %v3200 = vld [vmem:[#allocation14 + $0x908] sm:$0xff]
    %v3201 = vld [vmem:[#allocation14 + $0x910] sm:$0xf]
    %v3202 = vld [vmem:[#allocation14 + $0x914] sm:$0xff]
    %v3203 = vld [vmem:[#allocation14 + $0x91c] sm:$0xff]
    %v3204 = vld [vmem:[#allocation14 + $0x924] sm:$0xff]
    %v3205 = vld [vmem:[#allocation14 + $0x92c] sm:$0xf]
    %v3206 = vld [vmem:[#allocation14 + $0x930] sm:$0xff]
    %v3207 = vld [vmem:[#allocation14 + $0x938] sm:$0xff]
    %v3208 = vld [vmem:[#allocation14 + $0x940] sm:$0xff]
    %v3209 = vld [vmem:[#allocation14 + $0x948] sm:$0xf]
    %v3210 = vld [vmem:[#allocation14 + $0x94c] sm:$0xff]
    %v3211 = vld [vmem:[#allocation14 + $0x954] sm:$0xff]
    %v3212 = vld [vmem:[#allocation14 + $0x95c] sm:$0xff]
    %v3213 = vld [vmem:[#allocation14 + $0x964] sm:$0xf]
    %v3214 = vld [vmem:[#allocation14 + $0x968] sm:$0xff]
    %v3215 = vld [vmem:[#allocation14 + $0x970] sm:$0xff]
    %v3216 = vld [vmem:[#allocation14 + $0x978] sm:$0xff]
    %v3217 = vld [vmem:[#allocation14 + $0x980] sm:$0xf]
    %v3218 = vld [vmem:[#allocation14 + $0x984] sm:$0xff]
    %v3219 = vld [vmem:[#allocation14 + $0x98c] sm:$0xff]
    %v3220 = vld [vmem:[#allocation14 + $0x994] sm:$0xff]
    %v3221 = vld [vmem:[#allocation14 + $0x99c] sm:$0xf]
    %v3222 = vld [vmem:[#allocation14 + $0x9a0] sm:$0xff]
    %v3223 = vld [vmem:[#allocation14 + $0x9a8] sm:$0xff]
    %v3224 = vld [vmem:[#allocation14 + $0x9b0] sm:$0xff]
    %v3225 = vld [vmem:[#allocation14 + $0x9b8] sm:$0xf]
    %v3226 = vld [vmem:[#allocation14 + $0x9bc] sm:$0xff]
    %v3227 = vld [vmem:[#allocation14 + $0x9c4] sm:$0xff]
    %v3228 = vld [vmem:[#allocation14 + $0x9cc] sm:$0xff]
    %v3229 = vld [vmem:[#allocation14 + $0x9d4] sm:$0xf]
    %v3230 = vld [vmem:[#allocation14 + $0x9d8] sm:$0xff]
    %v3231 = vld [vmem:[#allocation14 + $0x9e0] sm:$0xff]
    %v3232 = vld [vmem:[#allocation14 + $0x9e8] sm:$0xff]
    %v3233 = vld [vmem:[#allocation14 + $0x9f0] sm:$0xf]
    %v3234 = vld [vmem:[#allocation14 + $0x9f4] sm:$0xff]
    %v3235 = vld [vmem:[#allocation14 + $0x9fc] sm:$0xff]
    %v3236 = vld [vmem:[#allocation14 + $0xa04] sm:$0xff]
    %v3237 = vld [vmem:[#allocation14 + $0xa0c] sm:$0xf]
    %v3238 = vld [vmem:[#allocation14 + $0xa10] sm:$0xff]
    %v3239 = vld [vmem:[#allocation14 + $0xa18] sm:$0xff]
    %v3240 = vld [vmem:[#allocation14 + $0xa20] sm:$0xff]
    %v3241 = vld [vmem:[#allocation14 + $0xa28] sm:$0xf]
    %v3242 = vld [vmem:[#allocation14 + $0xa2c] sm:$0xff]
    %v3243 = vld [vmem:[#allocation14 + $0xa34] sm:$0xff]
    %v3244 = vld [vmem:[#allocation14 + $0xa3c] sm:$0xff]
    %v3245 = vld [vmem:[#allocation14 + $0xa44] sm:$0xf]
    %v3246 = vld [vmem:[#allocation14 + $0xa48] sm:$0xff]
    %v3247 = vld [vmem:[#allocation14 + $0xa50] sm:$0xff]
    %v3248 = vld [vmem:[#allocation14 + $0xa58] sm:$0xff]
    %v3249 = vld [vmem:[#allocation14 + $0xa60] sm:$0xf]
    %v3250 = vld [vmem:[#allocation14 + $0xa64] sm:$0xff]
    %v3251 = vld [vmem:[#allocation14 + $0xa6c] sm:$0xff]
    %v3252 = vld [vmem:[#allocation14 + $0xa74] sm:$0xff]
    %v3253 = vld [vmem:[#allocation14 + $0xa7c] sm:$0xf]
    %v3254 = vld [vmem:[#allocation14 + $0xa80] sm:$0xff]
    %v3255 = vld [vmem:[#allocation14 + $0xa88] sm:$0xff]
    %v3256 = vld [vmem:[#allocation14 + $0xa90] sm:$0xff]
    %v3257 = vld [vmem:[#allocation14 + $0xa98] sm:$0xf]
    %v3258 = vld [vmem:[#allocation14 + $0xa9c] sm:$0xff]
    %v3259 = vld [vmem:[#allocation14 + $0xaa4] sm:$0xff]
    %v3260 = vld [vmem:[#allocation14 + $0xaac] sm:$0xff]
    %v3261 = vld [vmem:[#allocation14 + $0xab4] sm:$0xf]
    %v3262 = vld [vmem:[#allocation14 + $0xab8] sm:$0xff]
    %v3263 = vld [vmem:[#allocation14 + $0xac0] sm:$0xff]
    %v3264 = vld [vmem:[#allocation14 + $0xac8] sm:$0xff]
    %v3265 = vld [vmem:[#allocation14 + $0xad0] sm:$0xf]
    %v3266 = vld [vmem:[#allocation14 + $0xad4] sm:$0xff]
    %v3267 = vld [vmem:[#allocation14 + $0xadc] sm:$0xff]
    %v3268 = vld [vmem:[#allocation14 + $0xae4] sm:$0xff]
    %v3269 = vld [vmem:[#allocation14 + $0xaec] sm:$0xf]
    %v3270 = vld [vmem:[#allocation14 + $0xaf0] sm:$0xff]
    %v3271 = vld [vmem:[#allocation14 + $0xaf8] sm:$0xff]
    %v3272 = vld [vmem:[#allocation14 + $0xb00] sm:$0xff]
    %v3273 = vld [vmem:[#allocation14 + $0xb08] sm:$0xf]
    %v3274 = vld [vmem:[#allocation14 + $0xb0c] sm:$0xff]
    %v3275 = vld [vmem:[#allocation14 + $0xb14] sm:$0xff]
    %v3276 = vld [vmem:[#allocation14 + $0xb1c] sm:$0xff]
    %v3277 = vld [vmem:[#allocation14 + $0xb24] sm:$0xf]
    %v3278 = vld [vmem:[#allocation14 + $0xb28] sm:$0xff]
    %v3279 = vld [vmem:[#allocation14 + $0xb30] sm:$0xff]
    %v3280 = vld [vmem:[#allocation14 + $0xb38] sm:$0xff]
    %v3281 = vld [vmem:[#allocation14 + $0xb40] sm:$0xf]
    %v3282 = vld [vmem:[#allocation14 + $0xb44] sm:$0xff]
    %v3283 = vld [vmem:[#allocation14 + $0xb4c] sm:$0xff]
    %v3284 = vld [vmem:[#allocation14 + $0xb54] sm:$0xff]
    %v3285 = vld [vmem:[#allocation14 + $0xb5c] sm:$0xf]
    %v3286 = vld [vmem:[#allocation14 + $0xb60] sm:$0xff]
    %v3287 = vld [vmem:[#allocation14 + $0xb68] sm:$0xff]
    %v3288 = vld [vmem:[#allocation14 + $0xb70] sm:$0xff]
    %v3289 = vld [vmem:[#allocation14 + $0xb78] sm:$0xf]
    %v3290 = vld [vmem:[#allocation14 + $0xb7c] sm:$0xff]
    %v3291 = vld [vmem:[#allocation14 + $0xb84] sm:$0xff]
    %v3292 = vld [vmem:[#allocation14 + $0xb8c] sm:$0xff]
    %v3293 = vld [vmem:[#allocation14 + $0xb94] sm:$0xf]
    %v3294 = vld [vmem:[#allocation14 + $0xb98] sm:$0xff]
    %v3295 = vld [vmem:[#allocation14 + $0xba0] sm:$0xff]
    %v3296 = vld [vmem:[#allocation14 + $0xba8] sm:$0xff]
    %v3297 = vld [vmem:[#allocation14 + $0xbb0] sm:$0xf]
    %v3298 = vld [vmem:[#allocation14 + $0xbb4] sm:$0xff]
    %v3299 = vld [vmem:[#allocation14 + $0xbbc] sm:$0xff]
    %v3300 = vld [vmem:[#allocation14 + $0xbc4] sm:$0xff]
    %v3301 = vld [vmem:[#allocation14 + $0xbcc] sm:$0xf]
    %v3302 = vld [vmem:[#allocation14 + $0xbd0] sm:$0xff]
    %v3303 = vld [vmem:[#allocation14 + $0xbd8] sm:$0xff]
    %v3304 = vld [vmem:[#allocation14 + $0xbe0] sm:$0xff]
    %v3305 = vld [vmem:[#allocation14 + $0xbe8] sm:$0xf]
    %v3306 = vld [vmem:[#allocation14 + $0xbec] sm:$0xff]
    %v3307 = vld [vmem:[#allocation14 + $0xbf4] sm:$0xff]
    %v3308 = vld [vmem:[#allocation14 + $0xbfc] sm:$0xff]
    %v3309 = vld [vmem:[#allocation14 + $0xc04] sm:$0xf]
    %v3310 = vld [vmem:[#allocation14 + $0xc08] sm:$0xff]
    %v3311 = vld [vmem:[#allocation14 + $0xc10] sm:$0xff]
    %v3312 = vld [vmem:[#allocation14 + $0xc18] sm:$0xff]
    %v3313 = vld [vmem:[#allocation14 + $0xc20] sm:$0xf]
    %v3314 = vld [vmem:[#allocation14 + $0xc24] sm:$0xff]
    %v3315 = vld [vmem:[#allocation14 + $0xc2c] sm:$0xff]
    %v3316 = vld [vmem:[#allocation14 + $0xc34] sm:$0xff]
    %v3317 = vld [vmem:[#allocation14 + $0xc3c] sm:$0xf]
    %v3318 = vld [vmem:[#allocation14 + $0xc40] sm:$0xff]
    %v3319 = vld [vmem:[#allocation14 + $0xc48] sm:$0xff]
    %v3320 = vld [vmem:[#allocation14 + $0xc50] sm:$0xff]
    %v3321 = vld [vmem:[#allocation14 + $0xc58] sm:$0xf]
    %v3322 = vld [vmem:[#allocation14 + $0xc5c] sm:$0xff]
    %v3323 = vld [vmem:[#allocation14 + $0xc64] sm:$0xff]
    %v3324 = vld [vmem:[#allocation14 + $0xc6c] sm:$0xff]
    %v3325 = vld [vmem:[#allocation14 + $0xc74] sm:$0xf]
    %v3326 = vld [vmem:[#allocation14 + $0xc78] sm:$0xff]
    %v3327 = vld [vmem:[#allocation14 + $0xc80] sm:$0xff]
    %v3328 = vld [vmem:[#allocation14 + $0xc88] sm:$0xff]
    %v3329 = vld [vmem:[#allocation14 + $0xc90] sm:$0xf]
    %v3330 = vld [vmem:[#allocation14 + $0xc94] sm:$0xff]
    %v3331 = vld [vmem:[#allocation14 + $0xc9c] sm:$0xff]
    %v3332 = vld [vmem:[#allocation14 + $0xca4] sm:$0xff]
    %v3333 = vld [vmem:[#allocation14 + $0xcac] sm:$0xf]
    %v3334 = vld [vmem:[#allocation14 + $0xcb0] sm:$0xff]
    %v3335 = vld [vmem:[#allocation14 + $0xcb8] sm:$0xff]
    %v3336 = vld [vmem:[#allocation14 + $0xcc0] sm:$0xff]
    %v3337 = vld [vmem:[#allocation14 + $0xcc8] sm:$0xf]
    %v3338 = vld [vmem:[#allocation14 + $0xccc] sm:$0xff]
    %v3339 = vld [vmem:[#allocation14 + $0xcd4] sm:$0xff]
    %v3340 = vld [vmem:[#allocation14 + $0xcdc] sm:$0xff]
    %v3341 = vld [vmem:[#allocation14 + $0xce4] sm:$0xf]
    %v3342 = vld [vmem:[#allocation14 + $0xce8] sm:$0xff]
    %v3343 = vld [vmem:[#allocation14 + $0xcf0] sm:$0xff]
    %v3344 = vld [vmem:[#allocation14 + $0xcf8] sm:$0xff]
    %v3345 = vld [vmem:[#allocation14 + $0xd00] sm:$0xf]
    %v3346 = vld [vmem:[#allocation14 + $0xd04] sm:$0xff]
    %v3347 = vld [vmem:[#allocation14 + $0xd0c] sm:$0xff]
    %v3348 = vld [vmem:[#allocation14 + $0xd14] sm:$0xff]
    %v3349 = vld [vmem:[#allocation14 + $0xd1c] sm:$0xf]
    %v3350 = vld [vmem:[#allocation14 + $0xd20] sm:$0xff]
    %v3351 = vld [vmem:[#allocation14 + $0xd28] sm:$0xff]
    %v3352 = vld [vmem:[#allocation14 + $0xd30] sm:$0xff]
    %v3353 = vld [vmem:[#allocation14 + $0xd38] sm:$0xf]
    %v3354 = vld [vmem:[#allocation14 + $0xd3c] sm:$0xff]
    %v3355 = vld [vmem:[#allocation14 + $0xd44] sm:$0xff]
    %v3356 = vld [vmem:[#allocation14 + $0xd4c] sm:$0xff]
    %v3357 = vld [vmem:[#allocation14 + $0xd54] sm:$0xf]
    %v3358 = vld [vmem:[#allocation14 + $0xd58] sm:$0xff]
    %v3359 = vld [vmem:[#allocation14 + $0xd60] sm:$0xff]
    %v3360 = vld [vmem:[#allocation14 + $0xd68] sm:$0xff]
    %v3361 = vld [vmem:[#allocation14 + $0xd70] sm:$0xf]
    %v3362 = vld [vmem:[#allocation14 + $0xd74] sm:$0xff]
    %v3363 = vld [vmem:[#allocation14 + $0xd7c] sm:$0xff]
    %v3364 = vld [vmem:[#allocation14 + $0xd84] sm:$0xff]
    %v3365 = vld [vmem:[#allocation14 + $0xd8c] sm:$0xf]
    %v3366 = vld [vmem:[#allocation14 + $0xd90] sm:$0xff]
    %v3367 = vld [vmem:[#allocation14 + $0xd98] sm:$0xff]
    %v3368 = vld [vmem:[#allocation14 + $0xda0] sm:$0xff]
    %v3369 = vld [vmem:[#allocation14 + $0xda8] sm:$0xf]
    %v3370 = vld [vmem:[#allocation14 + $0xdac] sm:$0xff]
    %v3371 = vld [vmem:[#allocation14 + $0xdb4] sm:$0xff]
    %v3372 = vld [vmem:[#allocation14 + $0xdbc] sm:$0xff]
    %v3373 = vld [vmem:[#allocation14 + $0xdc4] sm:$0xf]
    %v3374 = vld [vmem:[#allocation14 + $0xdc8] sm:$0xff]
    %v3375 = vld [vmem:[#allocation14 + $0xdd0] sm:$0xff]
    %v3376 = vld [vmem:[#allocation14 + $0xdd8] sm:$0xff]
    %v3377 = vld [vmem:[#allocation14 + $0xde0] sm:$0xf]
    %v3378 = vld [vmem:[#allocation14 + $0xde4] sm:$0xff]
    %v3379 = vld [vmem:[#allocation14 + $0xdec] sm:$0xff]
    %v3380 = vld [vmem:[#allocation14 + $0xdf4] sm:$0xff]
    %v3381 = vld [vmem:[#allocation14 + $0xdfc] sm:$0xf]
    %v3382 = vld [vmem:[#allocation16] sm:$0xff]
    %v3384 = vlaneseq
    %v3385 = vshrl.u32 %v3384, 7
    %v3386 = vsub.s32 0, %v3385
    %v3387 = vrot.slane %v3382, %v3386
    %v3388 = vlaneseq
    %v3389 = vshrl.u32 %v3388, 7
    %v3390 = vsub.s32 1, %v3389
    %v3391 = vrot.slane %v3382, %v3390
    %v3392 = vlaneseq
    %v3393 = vshrl.u32 %v3392, 7
    %v3394 = vsub.s32 2, %v3393
    %v3395 = vrot.slane %v3382, %v3394
    %v3396 = vlaneseq
    %v3397 = vshrl.u32 %v3396, 7
    %v3398 = vsub.s32 3, %v3397
    %v3399 = vrot.slane %v3382, %v3398
    %v3400 = vlaneseq
    %v3401 = vshrl.u32 %v3400, 7
    %v3402 = vsub.s32 4, %v3401
    %v3403 = vrot.slane %v3382, %v3402
    %v3404 = vlaneseq
    %v3405 = vshrl.u32 %v3404, 7
    %v3406 = vsub.s32 5, %v3405
    %v3407 = vrot.slane %v3382, %v3406
    %v3408 = vlaneseq
    %v3409 = vshrl.u32 %v3408, 7
    %v3410 = vsub.s32 6, %v3409
    %v3411 = vrot.slane %v3382, %v3410
    %v3931 = vunpack.c.l.b16 %v2870
    %v3932 = vunpack.c.h.b16 %v2870
    %v3933 = vunpack.c.l.b16 %v2871
    %v3934 = vunpack.c.h.b16 %v2871
    %v3935 = vunpack.c.l.b16 %v2872
    %v3936 = vunpack.c.h.b16 %v2872
    %v3937 = vunpack.c.l.b16 %v2873
    %v3938 = vunpack.c.l.b16 %v2874
    %v3939 = vunpack.c.h.b16 %v2874
    %v3940 = vunpack.c.l.b16 %v2875
    %v3941 = vunpack.c.h.b16 %v2875
    %v3942 = vunpack.c.l.b16 %v2876
    %v3943 = vunpack.c.h.b16 %v2876
    %v3944 = vunpack.c.l.b16 %v2877
    %v3945 = vunpack.c.l.b16 %v2878
    %v3946 = vunpack.c.h.b16 %v2878
    %v3947 = vunpack.c.l.b16 %v2879
    %v3948 = vunpack.c.h.b16 %v2879
    %v3949 = vunpack.c.l.b16 %v2880
    %v3950 = vunpack.c.h.b16 %v2880
    %v3951 = vunpack.c.l.b16 %v2881
    %v3952 = vunpack.c.l.b16 %v2882
    %v3953 = vunpack.c.h.b16 %v2882
    %v3954 = vunpack.c.l.b16 %v2883
    %v3955 = vunpack.c.h.b16 %v2883
    %v3956 = vunpack.c.l.b16 %v2884
    %v3957 = vunpack.c.h.b16 %v2884
    %v3958 = vunpack.c.l.b16 %v2885
    %v3959 = vunpack.c.l.b16 %v2886
    %v3960 = vunpack.c.h.b16 %v2886
    %v3961 = vunpack.c.l.b16 %v2887
    %v3962 = vunpack.c.h.b16 %v2887
    %v3963 = vunpack.c.l.b16 %v2888
    %v3964 = vunpack.c.h.b16 %v2888
    %v3965 = vunpack.c.l.b16 %v2889
    %v3966 = vunpack.c.l.b16 %v2890
    %v3967 = vunpack.c.h.b16 %v2890
    %v3968 = vunpack.c.l.b16 %v2891
    %v3969 = vunpack.c.h.b16 %v2891
    %v3970 = vunpack.c.l.b16 %v2892
    %v3971 = vunpack.c.h.b16 %v2892
    %v3972 = vunpack.c.l.b16 %v2893
    %v3973 = vunpack.c.l.b16 %v2894
    %v3974 = vunpack.c.h.b16 %v2894
    %v3975 = vunpack.c.l.b16 %v2895
    %v3976 = vunpack.c.h.b16 %v2895
    %v3977 = vunpack.c.l.b16 %v2896
    %v3978 = vunpack.c.h.b16 %v2896
    %v3979 = vunpack.c.l.b16 %v2897
    %v3980 = vunpack.c.l.b16 %v2898
    %v3981 = vunpack.c.h.b16 %v2898
    %v3982 = vunpack.c.l.b16 %v2899
    %v3983 = vunpack.c.h.b16 %v2899
    %v3984 = vunpack.c.l.b16 %v2900
    %v3985 = vunpack.c.h.b16 %v2900
    %v3986 = vunpack.c.l.b16 %v2901
    %v3987 = vunpack.c.l.b16 %v2902
    %v3988 = vunpack.c.h.b16 %v2902
    %v3989 = vunpack.c.l.b16 %v2903
    %v3990 = vunpack.c.h.b16 %v2903
    %v3991 = vunpack.c.l.b16 %v2904
    %v3992 = vunpack.c.h.b16 %v2904
    %v3993 = vunpack.c.l.b16 %v2905
    %v3994 = vunpack.c.l.b16 %v2906
    %v3995 = vunpack.c.h.b16 %v2906
    %v3996 = vunpack.c.l.b16 %v2907
    %v3997 = vunpack.c.h.b16 %v2907
    %v3998 = vunpack.c.l.b16 %v2908
    %v3999 = vunpack.c.h.b16 %v2908
    %v4000 = vunpack.c.l.b16 %v2909
    %v4001 = vunpack.c.l.b16 %v2910
    %v4002 = vunpack.c.h.b16 %v2910
    %v4003 = vunpack.c.l.b16 %v2911
    %v4004 = vunpack.c.h.b16 %v2911
    %v4005 = vunpack.c.l.b16 %v2912
    %v4006 = vunpack.c.h.b16 %v2912
    %v4007 = vunpack.c.l.b16 %v2913
    %v4008 = vunpack.c.l.b16 %v2914
    %v4009 = vunpack.c.h.b16 %v2914
    %v4010 = vunpack.c.l.b16 %v2915
    %v4011 = vunpack.c.h.b16 %v2915
    %v4012 = vunpack.c.l.b16 %v2916
    %v4013 = vunpack.c.h.b16 %v2916
    %v4014 = vunpack.c.l.b16 %v2917
    %v4015 = vunpack.c.l.b16 %v2918
    %v4016 = vunpack.c.h.b16 %v2918
    %v4017 = vunpack.c.l.b16 %v2919
    %v4018 = vunpack.c.h.b16 %v2919
    %v4019 = vunpack.c.l.b16 %v2920
    %v4020 = vunpack.c.h.b16 %v2920
    %v4021 = vunpack.c.l.b16 %v2921
    %v4022 = vunpack.c.l.b16 %v2922
    %v4023 = vunpack.c.h.b16 %v2922
    %v4024 = vunpack.c.l.b16 %v2923
    %v4025 = vunpack.c.h.b16 %v2923
    %v4026 = vunpack.c.l.b16 %v2924
    %v4027 = vunpack.c.h.b16 %v2924
    %v4028 = vunpack.c.l.b16 %v2925
    %v4029 = vunpack.c.l.b16 %v2926
    %v4030 = vunpack.c.h.b16 %v2926
    %v4031 = vunpack.c.l.b16 %v2927
    %v4032 = vunpack.c.h.b16 %v2927
    %v4033 = vunpack.c.l.b16 %v2928
    %v4034 = vunpack.c.h.b16 %v2928
    %v4035 = vunpack.c.l.b16 %v2929
    %v4036 = vunpack.c.l.b16 %v2930
    %v4037 = vunpack.c.h.b16 %v2930
    %v4038 = vunpack.c.l.b16 %v2931
    %v4039 = vunpack.c.h.b16 %v2931
    %v4040 = vunpack.c.l.b16 %v2932
    %v4041 = vunpack.c.h.b16 %v2932
    %v4042 = vunpack.c.l.b16 %v2933
    %v4043 = vunpack.c.l.b16 %v2934
    %v4044 = vunpack.c.h.b16 %v2934
    %v4045 = vunpack.c.l.b16 %v2935
    %v4046 = vunpack.c.h.b16 %v2935
    %v4047 = vunpack.c.l.b16 %v2936
    %v4048 = vunpack.c.h.b16 %v2936
    %v4049 = vunpack.c.l.b16 %v2937
    %v4050 = vunpack.c.l.b16 %v2938
    %v4051 = vunpack.c.h.b16 %v2938
    %v4052 = vunpack.c.l.b16 %v2939
    %v4053 = vunpack.c.h.b16 %v2939
    %v4054 = vunpack.c.l.b16 %v2940
    %v4055 = vunpack.c.h.b16 %v2940
    %v4056 = vunpack.c.l.b16 %v2941
    %v4057 = vunpack.c.l.b16 %v2942
    %v4058 = vunpack.c.h.b16 %v2942
    %v4059 = vunpack.c.l.b16 %v2943
    %v4060 = vunpack.c.h.b16 %v2943
    %v4061 = vunpack.c.l.b16 %v2944
    %v4062 = vunpack.c.h.b16 %v2944
    %v4063 = vunpack.c.l.b16 %v2945
    %v4064 = vunpack.c.l.b16 %v2946
    %v4065 = vunpack.c.h.b16 %v2946
    %v4066 = vunpack.c.l.b16 %v2947
    %v4067 = vunpack.c.h.b16 %v2947
    %v4068 = vunpack.c.l.b16 %v2948
    %v4069 = vunpack.c.h.b16 %v2948
    %v4070 = vunpack.c.l.b16 %v2949
    %v4071 = vunpack.c.l.b16 %v2950
    %v4072 = vunpack.c.h.b16 %v2950
    %v4073 = vunpack.c.l.b16 %v2951
    %v4074 = vunpack.c.h.b16 %v2951
    %v4075 = vunpack.c.l.b16 %v2952
    %v4076 = vunpack.c.h.b16 %v2952
    %v4077 = vunpack.c.l.b16 %v2953
    %v4078 = vunpack.c.l.b16 %v2954
    %v4079 = vunpack.c.h.b16 %v2954
    %v4080 = vunpack.c.l.b16 %v2955
    %v4081 = vunpack.c.h.b16 %v2955
    %v4082 = vunpack.c.l.b16 %v2956
    %v4083 = vunpack.c.h.b16 %v2956
    %v4084 = vunpack.c.l.b16 %v2957
    %v4085 = vunpack.c.l.b16 %v2958
    %v4086 = vunpack.c.h.b16 %v2958
    %v4087 = vunpack.c.l.b16 %v2959
    %v4088 = vunpack.c.h.b16 %v2959
    %v4089 = vunpack.c.l.b16 %v2960
    %v4090 = vunpack.c.h.b16 %v2960
    %v4091 = vunpack.c.l.b16 %v2961
    %v4092 = vunpack.c.l.b16 %v2962
    %v4093 = vunpack.c.h.b16 %v2962
    %v4094 = vunpack.c.l.b16 %v2963
    %v4095 = vunpack.c.h.b16 %v2963
    %v4096 = vunpack.c.l.b16 %v2964
    %v4097 = vunpack.c.h.b16 %v2964
    %v4098 = vunpack.c.l.b16 %v2965
    %v4099 = vunpack.c.l.b16 %v2966
    %v4100 = vunpack.c.h.b16 %v2966
    %v4101 = vunpack.c.l.b16 %v2967
    %v4102 = vunpack.c.h.b16 %v2967
    %v4103 = vunpack.c.l.b16 %v2968
    %v4104 = vunpack.c.h.b16 %v2968
    %v4105 = vunpack.c.l.b16 %v2969
    %v4106 = vunpack.c.l.b16 %v2970
    %v4107 = vunpack.c.h.b16 %v2970
    %v4108 = vunpack.c.l.b16 %v2971
    %v4109 = vunpack.c.h.b16 %v2971
    %v4110 = vunpack.c.l.b16 %v2972
    %v4111 = vunpack.c.h.b16 %v2972
    %v4112 = vunpack.c.l.b16 %v2973
    %v4113 = vunpack.c.l.b16 %v2974
    %v4114 = vunpack.c.h.b16 %v2974
    %v4115 = vunpack.c.l.b16 %v2975
    %v4116 = vunpack.c.h.b16 %v2975
    %v4117 = vunpack.c.l.b16 %v2976
    %v4118 = vunpack.c.h.b16 %v2976
    %v4119 = vunpack.c.l.b16 %v2977
    %v4120 = vunpack.c.l.b16 %v2978
    %v4121 = vunpack.c.h.b16 %v2978
    %v4122 = vunpack.c.l.b16 %v2979
    %v4123 = vunpack.c.h.b16 %v2979
    %v4124 = vunpack.c.l.b16 %v2980
    %v4125 = vunpack.c.h.b16 %v2980
    %v4126 = vunpack.c.l.b16 %v2981
    %v4127 = vunpack.c.l.b16 %v2982
    %v4128 = vunpack.c.h.b16 %v2982
    %v4129 = vunpack.c.l.b16 %v2983
    %v4130 = vunpack.c.h.b16 %v2983
    %v4131 = vunpack.c.l.b16 %v2984
    %v4132 = vunpack.c.h.b16 %v2984
    %v4133 = vunpack.c.l.b16 %v2985
    %v4134 = vunpack.c.l.b16 %v2986
    %v4135 = vunpack.c.h.b16 %v2986
    %v4136 = vunpack.c.l.b16 %v2987
    %v4137 = vunpack.c.h.b16 %v2987
    %v4138 = vunpack.c.l.b16 %v2988
    %v4139 = vunpack.c.h.b16 %v2988
    %v4140 = vunpack.c.l.b16 %v2989
    %v4141 = vunpack.c.l.b16 %v2990
    %v4142 = vunpack.c.h.b16 %v2990
    %v4143 = vunpack.c.l.b16 %v2991
    %v4144 = vunpack.c.h.b16 %v2991
    %v4145 = vunpack.c.l.b16 %v2992
    %v4146 = vunpack.c.h.b16 %v2992
    %v4147 = vunpack.c.l.b16 %v2993
    %v4148 = vunpack.c.l.b16 %v2994
    %v4149 = vunpack.c.h.b16 %v2994
    %v4150 = vunpack.c.l.b16 %v2995
    %v4151 = vunpack.c.h.b16 %v2995
    %v4152 = vunpack.c.l.b16 %v2996
    %v4153 = vunpack.c.h.b16 %v2996
    %v4154 = vunpack.c.l.b16 %v2997
    %v4155 = vunpack.c.l.b16 %v2998
    %v4156 = vunpack.c.h.b16 %v2998
    %v4157 = vunpack.c.l.b16 %v2999
    %v4158 = vunpack.c.h.b16 %v2999
    %v4159 = vunpack.c.l.b16 %v3000
    %v4160 = vunpack.c.h.b16 %v3000
    %v4161 = vunpack.c.l.b16 %v3001
    %v4162 = vunpack.c.l.b16 %v3002
    %v4163 = vunpack.c.h.b16 %v3002
    %v4164 = vunpack.c.l.b16 %v3003
    %v4165 = vunpack.c.h.b16 %v3003
    %v4166 = vunpack.c.l.b16 %v3004
    %v4167 = vunpack.c.h.b16 %v3004
    %v4168 = vunpack.c.l.b16 %v3005
    %v4169 = vunpack.c.l.b16 %v3006
    %v4170 = vunpack.c.h.b16 %v3006
    %v4171 = vunpack.c.l.b16 %v3007
    %v4172 = vunpack.c.h.b16 %v3007
    %v4173 = vunpack.c.l.b16 %v3008
    %v4174 = vunpack.c.h.b16 %v3008
    %v4175 = vunpack.c.l.b16 %v3009
    %v4176 = vunpack.c.l.b16 %v3010
    %v4177 = vunpack.c.h.b16 %v3010
    %v4178 = vunpack.c.l.b16 %v3011
    %v4179 = vunpack.c.h.b16 %v3011
    %v4180 = vunpack.c.l.b16 %v3012
    %v4181 = vunpack.c.h.b16 %v3012
    %v4182 = vunpack.c.l.b16 %v3013
    %v4183 = vunpack.c.l.b16 %v3014
    %v4184 = vunpack.c.h.b16 %v3014
    %v4185 = vunpack.c.l.b16 %v3015
    %v4186 = vunpack.c.h.b16 %v3015
    %v4187 = vunpack.c.l.b16 %v3016
    %v4188 = vunpack.c.h.b16 %v3016
    %v4189 = vunpack.c.l.b16 %v3017
    %v4190 = vunpack.c.l.b16 %v3018
    %v4191 = vunpack.c.h.b16 %v3018
    %v4192 = vunpack.c.l.b16 %v3019
    %v4193 = vunpack.c.h.b16 %v3019
    %v4194 = vunpack.c.l.b16 %v3020
    %v4195 = vunpack.c.h.b16 %v3020
    %v4196 = vunpack.c.l.b16 %v3021
    %v4197 = vunpack.c.l.b16 %v3022
    %v4198 = vunpack.c.h.b16 %v3022
    %v4199 = vunpack.c.l.b16 %v3023
    %v4200 = vunpack.c.h.b16 %v3023
    %v4201 = vunpack.c.l.b16 %v3024
    %v4202 = vunpack.c.h.b16 %v3024
    %v4203 = vunpack.c.l.b16 %v3025
    %v4204 = vunpack.c.l.b16 %v3026
    %v4205 = vunpack.c.h.b16 %v3026
    %v4206 = vunpack.c.l.b16 %v3027
    %v4207 = vunpack.c.h.b16 %v3027
    %v4208 = vunpack.c.l.b16 %v3028
    %v4209 = vunpack.c.h.b16 %v3028
    %v4210 = vunpack.c.l.b16 %v3029
    %v4211 = vunpack.c.l.b16 %v3030
    %v4212 = vunpack.c.h.b16 %v3030
    %v4213 = vunpack.c.l.b16 %v3031
    %v4214 = vunpack.c.h.b16 %v3031
    %v4215 = vunpack.c.l.b16 %v3032
    %v4216 = vunpack.c.h.b16 %v3032
    %v4217 = vunpack.c.l.b16 %v3033
    %v4218 = vunpack.c.l.b16 %v3034
    %v4219 = vunpack.c.h.b16 %v3034
    %v4220 = vunpack.c.l.b16 %v3035
    %v4221 = vunpack.c.h.b16 %v3035
    %v4222 = vunpack.c.l.b16 %v3036
    %v4223 = vunpack.c.h.b16 %v3036
    %v4224 = vunpack.c.l.b16 %v3037
    %v4225 = vunpack.c.l.b16 %v3038
    %v4226 = vunpack.c.h.b16 %v3038
    %v4227 = vunpack.c.l.b16 %v3039
    %v4228 = vunpack.c.h.b16 %v3039
    %v4229 = vunpack.c.l.b16 %v3040
    %v4230 = vunpack.c.h.b16 %v3040
    %v4231 = vunpack.c.l.b16 %v3041
    %v4232 = vunpack.c.l.b16 %v3042
    %v4233 = vunpack.c.h.b16 %v3042
    %v4234 = vunpack.c.l.b16 %v3043
    %v4235 = vunpack.c.h.b16 %v3043
    %v4236 = vunpack.c.l.b16 %v3044
    %v4237 = vunpack.c.h.b16 %v3044
    %v4238 = vunpack.c.l.b16 %v3045
    %v4239 = vunpack.c.l.b16 %v3046
    %v4240 = vunpack.c.h.b16 %v3046
    %v4241 = vunpack.c.l.b16 %v3047
    %v4242 = vunpack.c.h.b16 %v3047
    %v4243 = vunpack.c.l.b16 %v3048
    %v4244 = vunpack.c.h.b16 %v3048
    %v4245 = vunpack.c.l.b16 %v3049
    %v4246 = vunpack.c.l.b16 %v3050
    %v4247 = vunpack.c.h.b16 %v3050
    %v4248 = vunpack.c.l.b16 %v3051
    %v4249 = vunpack.c.h.b16 %v3051
    %v4250 = vunpack.c.l.b16 %v3052
    %v4251 = vunpack.c.h.b16 %v3052
    %v4252 = vunpack.c.l.b16 %v3053
    %v4253 = vunpack.c.l.b16 %v3054
    %v4254 = vunpack.c.h.b16 %v3054
    %v4255 = vunpack.c.l.b16 %v3055
    %v4256 = vunpack.c.h.b16 %v3055
    %v4257 = vunpack.c.l.b16 %v3056
    %v4258 = vunpack.c.h.b16 %v3056
    %v4259 = vunpack.c.l.b16 %v3057
    %v4260 = vunpack.c.l.b16 %v3058
    %v4261 = vunpack.c.h.b16 %v3058
    %v4262 = vunpack.c.l.b16 %v3059
    %v4263 = vunpack.c.h.b16 %v3059
    %v4264 = vunpack.c.l.b16 %v3060
    %v4265 = vunpack.c.h.b16 %v3060
    %v4266 = vunpack.c.l.b16 %v3061
    %v4267 = vunpack.c.l.b16 %v3062
    %v4268 = vunpack.c.h.b16 %v3062
    %v4269 = vunpack.c.l.b16 %v3063
    %v4270 = vunpack.c.h.b16 %v3063
    %v4271 = vunpack.c.l.b16 %v3064
    %v4272 = vunpack.c.h.b16 %v3064
    %v4273 = vunpack.c.l.b16 %v3065
    %v4274 = vunpack.c.l.b16 %v3066
    %v4275 = vunpack.c.h.b16 %v3066
    %v4276 = vunpack.c.l.b16 %v3067
    %v4277 = vunpack.c.h.b16 %v3067
    %v4278 = vunpack.c.l.b16 %v3068
    %v4279 = vunpack.c.h.b16 %v3068
    %v4280 = vunpack.c.l.b16 %v3069
    %v4281 = vunpack.c.l.b16 %v3070
    %v4282 = vunpack.c.h.b16 %v3070
    %v4283 = vunpack.c.l.b16 %v3071
    %v4284 = vunpack.c.h.b16 %v3071
    %v4285 = vunpack.c.l.b16 %v3072
    %v4286 = vunpack.c.h.b16 %v3072
    %v4287 = vunpack.c.l.b16 %v3073
    %v4288 = vunpack.c.l.b16 %v3074
    %v4289 = vunpack.c.h.b16 %v3074
    %v4290 = vunpack.c.l.b16 %v3075
    %v4291 = vunpack.c.h.b16 %v3075
    %v4292 = vunpack.c.l.b16 %v3076
    %v4293 = vunpack.c.h.b16 %v3076
    %v4294 = vunpack.c.l.b16 %v3077
    %v4295 = vunpack.c.l.b16 %v3078
    %v4296 = vunpack.c.h.b16 %v3078
    %v4297 = vunpack.c.l.b16 %v3079
    %v4298 = vunpack.c.h.b16 %v3079
    %v4299 = vunpack.c.l.b16 %v3080
    %v4300 = vunpack.c.h.b16 %v3080
    %v4301 = vunpack.c.l.b16 %v3081
    %v4302 = vunpack.c.l.b16 %v3082
    %v4303 = vunpack.c.h.b16 %v3082
    %v4304 = vunpack.c.l.b16 %v3083
    %v4305 = vunpack.c.h.b16 %v3083
    %v4306 = vunpack.c.l.b16 %v3084
    %v4307 = vunpack.c.h.b16 %v3084
    %v4308 = vunpack.c.l.b16 %v3085
    %v4309 = vunpack.c.l.b16 %v3086
    %v4310 = vunpack.c.h.b16 %v3086
    %v4311 = vunpack.c.l.b16 %v3087
    %v4312 = vunpack.c.h.b16 %v3087
    %v4313 = vunpack.c.l.b16 %v3088
    %v4314 = vunpack.c.h.b16 %v3088
    %v4315 = vunpack.c.l.b16 %v3089
    %v4316 = vunpack.c.l.b16 %v3090
    %v4317 = vunpack.c.h.b16 %v3090
    %v4318 = vunpack.c.l.b16 %v3091
    %v4319 = vunpack.c.h.b16 %v3091
    %v4320 = vunpack.c.l.b16 %v3092
    %v4321 = vunpack.c.h.b16 %v3092
    %v4322 = vunpack.c.l.b16 %v3093
    %v4323 = vunpack.c.l.b16 %v3094
    %v4324 = vunpack.c.h.b16 %v3094
    %v4325 = vunpack.c.l.b16 %v3095
    %v4326 = vunpack.c.h.b16 %v3095
    %v4327 = vunpack.c.l.b16 %v3096
    %v4328 = vunpack.c.h.b16 %v3096
    %v4329 = vunpack.c.l.b16 %v3097
    %v4330 = vunpack.c.l.b16 %v3098
    %v4331 = vunpack.c.h.b16 %v3098
    %v4332 = vunpack.c.l.b16 %v3099
    %v4333 = vunpack.c.h.b16 %v3099
    %v4334 = vunpack.c.l.b16 %v3100
    %v4335 = vunpack.c.h.b16 %v3100
    %v4336 = vunpack.c.l.b16 %v3101
    %v4337 = vunpack.c.l.b16 %v3102
    %v4338 = vunpack.c.h.b16 %v3102
    %v4339 = vunpack.c.l.b16 %v3103
    %v4340 = vunpack.c.h.b16 %v3103
    %v4341 = vunpack.c.l.b16 %v3104
    %v4342 = vunpack.c.h.b16 %v3104
    %v4343 = vunpack.c.l.b16 %v3105
    %v4344 = vunpack.c.l.b16 %v3106
    %v4345 = vunpack.c.h.b16 %v3106
    %v4346 = vunpack.c.l.b16 %v3107
    %v4347 = vunpack.c.h.b16 %v3107
    %v4348 = vunpack.c.l.b16 %v3108
    %v4349 = vunpack.c.h.b16 %v3108
    %v4350 = vunpack.c.l.b16 %v3109
    %v4351 = vunpack.c.l.b16 %v3110
    %v4352 = vunpack.c.h.b16 %v3110
    %v4353 = vunpack.c.l.b16 %v3111
    %v4354 = vunpack.c.h.b16 %v3111
    %v4355 = vunpack.c.l.b16 %v3112
    %v4356 = vunpack.c.h.b16 %v3112
    %v4357 = vunpack.c.l.b16 %v3113
    %v4358 = vunpack.c.l.b16 %v3114
    %v4359 = vunpack.c.h.b16 %v3114
    %v4360 = vunpack.c.l.b16 %v3115
    %v4361 = vunpack.c.h.b16 %v3115
    %v4362 = vunpack.c.l.b16 %v3116
    %v4363 = vunpack.c.h.b16 %v3116
    %v4364 = vunpack.c.l.b16 %v3117
    %v4365 = vunpack.c.l.b16 %v3118
    %v4366 = vunpack.c.h.b16 %v3118
    %v4367 = vunpack.c.l.b16 %v3119
    %v4368 = vunpack.c.h.b16 %v3119
    %v4369 = vunpack.c.l.b16 %v3120
    %v4370 = vunpack.c.h.b16 %v3120
    %v4371 = vunpack.c.l.b16 %v3121
    %v4372 = vunpack.c.l.b16 %v3122
    %v4373 = vunpack.c.h.b16 %v3122
    %v4374 = vunpack.c.l.b16 %v3123
    %v4375 = vunpack.c.h.b16 %v3123
    %v4376 = vunpack.c.l.b16 %v3124
    %v4377 = vunpack.c.h.b16 %v3124
    %v4378 = vunpack.c.l.b16 %v3125
    %v4379 = vunpack.c.l.b16 %v3126
    %v4380 = vunpack.c.h.b16 %v3126
    %v4381 = vunpack.c.l.b16 %v3127
    %v4382 = vunpack.c.h.b16 %v3127
    %v4383 = vunpack.c.l.b16 %v3128
    %v4384 = vunpack.c.h.b16 %v3128
    %v4385 = vunpack.c.l.b16 %v3129
    %v4386 = vunpack.c.l.b16 %v3130
    %v4387 = vunpack.c.h.b16 %v3130
    %v4388 = vunpack.c.l.b16 %v3131
    %v4389 = vunpack.c.h.b16 %v3131
    %v4390 = vunpack.c.l.b16 %v3132
    %v4391 = vunpack.c.h.b16 %v3132
    %v4392 = vunpack.c.l.b16 %v3133
    %v4393 = vunpack.c.l.b16 %v3134
    %v4394 = vunpack.c.h.b16 %v3134
    %v4395 = vunpack.c.l.b16 %v3135
    %v4396 = vunpack.c.h.b16 %v3135
    %v4397 = vunpack.c.l.b16 %v3136
    %v4398 = vunpack.c.h.b16 %v3136
    %v4399 = vunpack.c.l.b16 %v3137
    %v4400 = vunpack.c.l.b16 %v3138
    %v4401 = vunpack.c.h.b16 %v3138
    %v4402 = vunpack.c.l.b16 %v3139
    %v4403 = vunpack.c.h.b16 %v3139
    %v4404 = vunpack.c.l.b16 %v3140
    %v4405 = vunpack.c.h.b16 %v3140
    %v4406 = vunpack.c.l.b16 %v3141
    %v4407 = vunpack.c.l.b16 %v3142
    %v4408 = vunpack.c.h.b16 %v3142
    %v4409 = vunpack.c.l.b16 %v3143
    %v4410 = vunpack.c.h.b16 %v3143
    %v4411 = vunpack.c.l.b16 %v3144
    %v4412 = vunpack.c.h.b16 %v3144
    %v4413 = vunpack.c.l.b16 %v3145
    %v4414 = vunpack.c.l.b16 %v3146
    %v4415 = vunpack.c.h.b16 %v3146
    %v4416 = vunpack.c.l.b16 %v3147
    %v4417 = vunpack.c.h.b16 %v3147
    %v4418 = vunpack.c.l.b16 %v3148
    %v4419 = vunpack.c.h.b16 %v3148
    %v4420 = vunpack.c.l.b16 %v3149
    %v4421 = vunpack.c.l.b16 %v3150
    %v4422 = vunpack.c.h.b16 %v3150
    %v4423 = vunpack.c.l.b16 %v3151
    %v4424 = vunpack.c.h.b16 %v3151
    %v4425 = vunpack.c.l.b16 %v3152
    %v4426 = vunpack.c.h.b16 %v3152
    %v4427 = vunpack.c.l.b16 %v3153
    %v4428 = vunpack.c.l.b16 %v3154
    %v4429 = vunpack.c.h.b16 %v3154
    %v4430 = vunpack.c.l.b16 %v3155
    %v4431 = vunpack.c.h.b16 %v3155
    %v4432 = vunpack.c.l.b16 %v3156
    %v4433 = vunpack.c.h.b16 %v3156
    %v4434 = vunpack.c.l.b16 %v3157
    %v4435 = vunpack.c.l.b16 %v3158
    %v4436 = vunpack.c.h.b16 %v3158
    %v4437 = vunpack.c.l.b16 %v3159
    %v4438 = vunpack.c.h.b16 %v3159
    %v4439 = vunpack.c.l.b16 %v3160
    %v4440 = vunpack.c.h.b16 %v3160
    %v4441 = vunpack.c.l.b16 %v3161
    %v4442 = vunpack.c.l.b16 %v3162
    %v4443 = vunpack.c.h.b16 %v3162
    %v4444 = vunpack.c.l.b16 %v3163
    %v4445 = vunpack.c.h.b16 %v3163
    %v4446 = vunpack.c.l.b16 %v3164
    %v4447 = vunpack.c.h.b16 %v3164
    %v4448 = vunpack.c.l.b16 %v3165
    %v4449 = vunpack.c.l.b16 %v3166
    %v4450 = vunpack.c.h.b16 %v3166
    %v4451 = vunpack.c.l.b16 %v3167
    %v4452 = vunpack.c.h.b16 %v3167
    %v4453 = vunpack.c.l.b16 %v3168
    %v4454 = vunpack.c.h.b16 %v3168
    %v4455 = vunpack.c.l.b16 %v3169
    %v4456 = vunpack.c.l.b16 %v3170
    %v4457 = vunpack.c.h.b16 %v3170
    %v4458 = vunpack.c.l.b16 %v3171
    %v4459 = vunpack.c.h.b16 %v3171
    %v4460 = vunpack.c.l.b16 %v3172
    %v4461 = vunpack.c.h.b16 %v3172
    %v4462 = vunpack.c.l.b16 %v3173
    %v4463 = vunpack.c.l.b16 %v3174
    %v4464 = vunpack.c.h.b16 %v3174
    %v4465 = vunpack.c.l.b16 %v3175
    %v4466 = vunpack.c.h.b16 %v3175
    %v4467 = vunpack.c.l.b16 %v3176
    %v4468 = vunpack.c.h.b16 %v3176
    %v4469 = vunpack.c.l.b16 %v3177
    %v4470 = vunpack.c.l.b16 %v3178
    %v4471 = vunpack.c.h.b16 %v3178
    %v4472 = vunpack.c.l.b16 %v3179
    %v4473 = vunpack.c.h.b16 %v3179
    %v4474 = vunpack.c.l.b16 %v3180
    %v4475 = vunpack.c.h.b16 %v3180
    %v4476 = vunpack.c.l.b16 %v3181
    %v4477 = vunpack.c.l.b16 %v3182
    %v4478 = vunpack.c.h.b16 %v3182
    %v4479 = vunpack.c.l.b16 %v3183
    %v4480 = vunpack.c.h.b16 %v3183
    %v4481 = vunpack.c.l.b16 %v3184
    %v4482 = vunpack.c.h.b16 %v3184
    %v4483 = vunpack.c.l.b16 %v3185
    %v4484 = vunpack.c.l.b16 %v3186
    %v4485 = vunpack.c.h.b16 %v3186
    %v4486 = vunpack.c.l.b16 %v3187
    %v4487 = vunpack.c.h.b16 %v3187
    %v4488 = vunpack.c.l.b16 %v3188
    %v4489 = vunpack.c.h.b16 %v3188
    %v4490 = vunpack.c.l.b16 %v3189
    %v4491 = vunpack.c.l.b16 %v3190
    %v4492 = vunpack.c.h.b16 %v3190
    %v4493 = vunpack.c.l.b16 %v3191
    %v4494 = vunpack.c.h.b16 %v3191
    %v4495 = vunpack.c.l.b16 %v3192
    %v4496 = vunpack.c.h.b16 %v3192
    %v4497 = vunpack.c.l.b16 %v3193
    %v4498 = vunpack.c.l.b16 %v3194
    %v4499 = vunpack.c.h.b16 %v3194
    %v4500 = vunpack.c.l.b16 %v3195
    %v4501 = vunpack.c.h.b16 %v3195
    %v4502 = vunpack.c.l.b16 %v3196
    %v4503 = vunpack.c.h.b16 %v3196
    %v4504 = vunpack.c.l.b16 %v3197
    %v4505 = vunpack.c.l.b16 %v3198
    %v4506 = vunpack.c.h.b16 %v3198
    %v4507 = vunpack.c.l.b16 %v3199
    %v4508 = vunpack.c.h.b16 %v3199
    %v4509 = vunpack.c.l.b16 %v3200
    %v4510 = vunpack.c.h.b16 %v3200
    %v4511 = vunpack.c.l.b16 %v3201
    %v4512 = vunpack.c.l.b16 %v3202
    %v4513 = vunpack.c.h.b16 %v3202
    %v4514 = vunpack.c.l.b16 %v3203
    %v4515 = vunpack.c.h.b16 %v3203
    %v4516 = vunpack.c.l.b16 %v3204
    %v4517 = vunpack.c.h.b16 %v3204
    %v4518 = vunpack.c.l.b16 %v3205
    %v4519 = vunpack.c.l.b16 %v3206
    %v4520 = vunpack.c.h.b16 %v3206
    %v4521 = vunpack.c.l.b16 %v3207
    %v4522 = vunpack.c.h.b16 %v3207
    %v4523 = vunpack.c.l.b16 %v3208
    %v4524 = vunpack.c.h.b16 %v3208
    %v4525 = vunpack.c.l.b16 %v3209
    %v4526 = vunpack.c.l.b16 %v3210
    %v4527 = vunpack.c.h.b16 %v3210
    %v4528 = vunpack.c.l.b16 %v3211
    %v4529 = vunpack.c.h.b16 %v3211
    %v4530 = vunpack.c.l.b16 %v3212
    %v4531 = vunpack.c.h.b16 %v3212
    %v4532 = vunpack.c.l.b16 %v3213
    %v4533 = vunpack.c.l.b16 %v3214
    %v4534 = vunpack.c.h.b16 %v3214
    %v4535 = vunpack.c.l.b16 %v3215
    %v4536 = vunpack.c.h.b16 %v3215
    %v4537 = vunpack.c.l.b16 %v3216
    %v4538 = vunpack.c.h.b16 %v3216
    %v4539 = vunpack.c.l.b16 %v3217
    %v4540 = vunpack.c.l.b16 %v3218
    %v4541 = vunpack.c.h.b16 %v3218
    %v4542 = vunpack.c.l.b16 %v3219
    %v4543 = vunpack.c.h.b16 %v3219
    %v4544 = vunpack.c.l.b16 %v3220
    %v4545 = vunpack.c.h.b16 %v3220
    %v4546 = vunpack.c.l.b16 %v3221
    %v4547 = vunpack.c.l.b16 %v3222
    %v4548 = vunpack.c.h.b16 %v3222
    %v4549 = vunpack.c.l.b16 %v3223
    %v4550 = vunpack.c.h.b16 %v3223
    %v4551 = vunpack.c.l.b16 %v3224
    %v4552 = vunpack.c.h.b16 %v3224
    %v4553 = vunpack.c.l.b16 %v3225
    %v4554 = vunpack.c.l.b16 %v3226
    %v4555 = vunpack.c.h.b16 %v3226
    %v4556 = vunpack.c.l.b16 %v3227
    %v4557 = vunpack.c.h.b16 %v3227
    %v4558 = vunpack.c.l.b16 %v3228
    %v4559 = vunpack.c.h.b16 %v3228
    %v4560 = vunpack.c.l.b16 %v3229
    %v4561 = vunpack.c.l.b16 %v3230
    %v4562 = vunpack.c.h.b16 %v3230
    %v4563 = vunpack.c.l.b16 %v3231
    %v4564 = vunpack.c.h.b16 %v3231
    %v4565 = vunpack.c.l.b16 %v3232
    %v4566 = vunpack.c.h.b16 %v3232
    %v4567 = vunpack.c.l.b16 %v3233
    %v4568 = vunpack.c.l.b16 %v3234
    %v4569 = vunpack.c.h.b16 %v3234
    %v4570 = vunpack.c.l.b16 %v3235
    %v4571 = vunpack.c.h.b16 %v3235
    %v4572 = vunpack.c.l.b16 %v3236
    %v4573 = vunpack.c.h.b16 %v3236
    %v4574 = vunpack.c.l.b16 %v3237
    %v4575 = vunpack.c.l.b16 %v3238
    %v4576 = vunpack.c.h.b16 %v3238
    %v4577 = vunpack.c.l.b16 %v3239
    %v4578 = vunpack.c.h.b16 %v3239
    %v4579 = vunpack.c.l.b16 %v3240
    %v4580 = vunpack.c.h.b16 %v3240
    %v4581 = vunpack.c.l.b16 %v3241
    %v4582 = vunpack.c.l.b16 %v3242
    %v4583 = vunpack.c.h.b16 %v3242
    %v4584 = vunpack.c.l.b16 %v3243
    %v4585 = vunpack.c.h.b16 %v3243
    %v4586 = vunpack.c.l.b16 %v3244
    %v4587 = vunpack.c.h.b16 %v3244
    %v4588 = vunpack.c.l.b16 %v3245
    %v4589 = vunpack.c.l.b16 %v3246
    %v4590 = vunpack.c.h.b16 %v3246
    %v4591 = vunpack.c.l.b16 %v3247
    %v4592 = vunpack.c.h.b16 %v3247
    %v4593 = vunpack.c.l.b16 %v3248
    %v4594 = vunpack.c.h.b16 %v3248
    %v4595 = vunpack.c.l.b16 %v3249
    %v4596 = vunpack.c.l.b16 %v3250
    %v4597 = vunpack.c.h.b16 %v3250
    %v4598 = vunpack.c.l.b16 %v3251
    %v4599 = vunpack.c.h.b16 %v3251
    %v4600 = vunpack.c.l.b16 %v3252
    %v4601 = vunpack.c.h.b16 %v3252
    %v4602 = vunpack.c.l.b16 %v3253
    %v4603 = vunpack.c.l.b16 %v3254
    %v4604 = vunpack.c.h.b16 %v3254
    %v4605 = vunpack.c.l.b16 %v3255
    %v4606 = vunpack.c.h.b16 %v3255
    %v4607 = vunpack.c.l.b16 %v3256
    %v4608 = vunpack.c.h.b16 %v3256
    %v4609 = vunpack.c.l.b16 %v3257
    %v4610 = vunpack.c.l.b16 %v3258
    %v4611 = vunpack.c.h.b16 %v3258
    %v4612 = vunpack.c.l.b16 %v3259
    %v4613 = vunpack.c.h.b16 %v3259
    %v4614 = vunpack.c.l.b16 %v3260
    %v4615 = vunpack.c.h.b16 %v3260
    %v4616 = vunpack.c.l.b16 %v3261
    %v4617 = vunpack.c.l.b16 %v3262
    %v4618 = vunpack.c.h.b16 %v3262
    %v4619 = vunpack.c.l.b16 %v3263
    %v4620 = vunpack.c.h.b16 %v3263
    %v4621 = vunpack.c.l.b16 %v3264
    %v4622 = vunpack.c.h.b16 %v3264
    %v4623 = vunpack.c.l.b16 %v3265
    %v4624 = vunpack.c.l.b16 %v3266
    %v4625 = vunpack.c.h.b16 %v3266
    %v4626 = vunpack.c.l.b16 %v3267
    %v4627 = vunpack.c.h.b16 %v3267
    %v4628 = vunpack.c.l.b16 %v3268
    %v4629 = vunpack.c.h.b16 %v3268
    %v4630 = vunpack.c.l.b16 %v3269
    %v4631 = vunpack.c.l.b16 %v3270
    %v4632 = vunpack.c.h.b16 %v3270
    %v4633 = vunpack.c.l.b16 %v3271
    %v4634 = vunpack.c.h.b16 %v3271
    %v4635 = vunpack.c.l.b16 %v3272
    %v4636 = vunpack.c.h.b16 %v3272
    %v4637 = vunpack.c.l.b16 %v3273
    %v4638 = vunpack.c.l.b16 %v3274
    %v4639 = vunpack.c.h.b16 %v3274
    %v4640 = vunpack.c.l.b16 %v3275
    %v4641 = vunpack.c.h.b16 %v3275
    %v4642 = vunpack.c.l.b16 %v3276
    %v4643 = vunpack.c.h.b16 %v3276
    %v4644 = vunpack.c.l.b16 %v3277
    %v4645 = vunpack.c.l.b16 %v3278
    %v4646 = vunpack.c.h.b16 %v3278
    %v4647 = vunpack.c.l.b16 %v3279
    %v4648 = vunpack.c.h.b16 %v3279
    %v4649 = vunpack.c.l.b16 %v3280
    %v4650 = vunpack.c.h.b16 %v3280
    %v4651 = vunpack.c.l.b16 %v3281
    %v4652 = vunpack.c.l.b16 %v3282
    %v4653 = vunpack.c.h.b16 %v3282
    %v4654 = vunpack.c.l.b16 %v3283
    %v4655 = vunpack.c.h.b16 %v3283
    %v4656 = vunpack.c.l.b16 %v3284
    %v4657 = vunpack.c.h.b16 %v3284
    %v4658 = vunpack.c.l.b16 %v3285
    %v4659 = vunpack.c.l.b16 %v3286
    %v4660 = vunpack.c.h.b16 %v3286
    %v4661 = vunpack.c.l.b16 %v3287
    %v4662 = vunpack.c.h.b16 %v3287
    %v4663 = vunpack.c.l.b16 %v3288
    %v4664 = vunpack.c.h.b16 %v3288
    %v4665 = vunpack.c.l.b16 %v3289
    %v4666 = vunpack.c.l.b16 %v3290
    %v4667 = vunpack.c.h.b16 %v3290
    %v4668 = vunpack.c.l.b16 %v3291
    %v4669 = vunpack.c.h.b16 %v3291
    %v4670 = vunpack.c.l.b16 %v3292
    %v4671 = vunpack.c.h.b16 %v3292
    %v4672 = vunpack.c.l.b16 %v3293
    %v4673 = vunpack.c.l.b16 %v3294
    %v4674 = vunpack.c.h.b16 %v3294
    %v4675 = vunpack.c.l.b16 %v3295
    %v4676 = vunpack.c.h.b16 %v3295
    %v4677 = vunpack.c.l.b16 %v3296
    %v4678 = vunpack.c.h.b16 %v3296
    %v4679 = vunpack.c.l.b16 %v3297
    %v4680 = vunpack.c.l.b16 %v3298
    %v4681 = vunpack.c.h.b16 %v3298
    %v4682 = vunpack.c.l.b16 %v3299
    %v4683 = vunpack.c.h.b16 %v3299
    %v4684 = vunpack.c.l.b16 %v3300
    %v4685 = vunpack.c.h.b16 %v3300
    %v4686 = vunpack.c.l.b16 %v3301
    %v4687 = vunpack.c.l.b16 %v3302
    %v4688 = vunpack.c.h.b16 %v3302
    %v4689 = vunpack.c.l.b16 %v3303
    %v4690 = vunpack.c.h.b16 %v3303
    %v4691 = vunpack.c.l.b16 %v3304
    %v4692 = vunpack.c.h.b16 %v3304
    %v4693 = vunpack.c.l.b16 %v3305
    %v4694 = vunpack.c.l.b16 %v3306
    %v4695 = vunpack.c.h.b16 %v3306
    %v4696 = vunpack.c.l.b16 %v3307
    %v4697 = vunpack.c.h.b16 %v3307
    %v4698 = vunpack.c.l.b16 %v3308
    %v4699 = vunpack.c.h.b16 %v3308
    %v4700 = vunpack.c.l.b16 %v3309
    %v4701 = vunpack.c.l.b16 %v3310
    %v4702 = vunpack.c.h.b16 %v3310
    %v4703 = vunpack.c.l.b16 %v3311
    %v4704 = vunpack.c.h.b16 %v3311
    %v4705 = vunpack.c.l.b16 %v3312
    %v4706 = vunpack.c.h.b16 %v3312
    %v4707 = vunpack.c.l.b16 %v3313
    %v4708 = vunpack.c.l.b16 %v3314
    %v4709 = vunpack.c.h.b16 %v3314
    %v4710 = vunpack.c.l.b16 %v3315
    %v4711 = vunpack.c.h.b16 %v3315
    %v4712 = vunpack.c.l.b16 %v3316
    %v4713 = vunpack.c.h.b16 %v3316
    %v4714 = vunpack.c.l.b16 %v3317
    %v4715 = vunpack.c.l.b16 %v3318
    %v4716 = vunpack.c.h.b16 %v3318
    %v4717 = vunpack.c.l.b16 %v3319
    %v4718 = vunpack.c.h.b16 %v3319
    %v4719 = vunpack.c.l.b16 %v3320
    %v4720 = vunpack.c.h.b16 %v3320
    %v4721 = vunpack.c.l.b16 %v3321
    %v4722 = vunpack.c.l.b16 %v3322
    %v4723 = vunpack.c.h.b16 %v3322
    %v4724 = vunpack.c.l.b16 %v3323
    %v4725 = vunpack.c.h.b16 %v3323
    %v4726 = vunpack.c.l.b16 %v3324
    %v4727 = vunpack.c.h.b16 %v3324
    %v4728 = vunpack.c.l.b16 %v3325
    %v4729 = vunpack.c.l.b16 %v3326
    %v4730 = vunpack.c.h.b16 %v3326
    %v4731 = vunpack.c.l.b16 %v3327
    %v4732 = vunpack.c.h.b16 %v3327
    %v4733 = vunpack.c.l.b16 %v3328
    %v4734 = vunpack.c.h.b16 %v3328
    %v4735 = vunpack.c.l.b16 %v3329
    %v4736 = vunpack.c.l.b16 %v3330
    %v4737 = vunpack.c.h.b16 %v3330
    %v4738 = vunpack.c.l.b16 %v3331
    %v4739 = vunpack.c.h.b16 %v3331
    %v4740 = vunpack.c.l.b16 %v3332
    %v4741 = vunpack.c.h.b16 %v3332
    %v4742 = vunpack.c.l.b16 %v3333
    %v4743 = vunpack.c.l.b16 %v3334
    %v4744 = vunpack.c.h.b16 %v3334
    %v4745 = vunpack.c.l.b16 %v3335
    %v4746 = vunpack.c.h.b16 %v3335
    %v4747 = vunpack.c.l.b16 %v3336
    %v4748 = vunpack.c.h.b16 %v3336
    %v4749 = vunpack.c.l.b16 %v3337
    %v4750 = vunpack.c.l.b16 %v3338
    %v4751 = vunpack.c.h.b16 %v3338
    %v4752 = vunpack.c.l.b16 %v3339
    %v4753 = vunpack.c.h.b16 %v3339
    %v4754 = vunpack.c.l.b16 %v3340
    %v4755 = vunpack.c.h.b16 %v3340
    %v4756 = vunpack.c.l.b16 %v3341
    %v4757 = vunpack.c.l.b16 %v3342
    %v4758 = vunpack.c.h.b16 %v3342
    %v4759 = vunpack.c.l.b16 %v3343
    %v4760 = vunpack.c.h.b16 %v3343
    %v4761 = vunpack.c.l.b16 %v3344
    %v4762 = vunpack.c.h.b16 %v3344
    %v4763 = vunpack.c.l.b16 %v3345
    %v4764 = vunpack.c.l.b16 %v3346
    %v4765 = vunpack.c.h.b16 %v3346
    %v4766 = vunpack.c.l.b16 %v3347
    %v4767 = vunpack.c.h.b16 %v3347
    %v4768 = vunpack.c.l.b16 %v3348
    %v4769 = vunpack.c.h.b16 %v3348
    %v4770 = vunpack.c.l.b16 %v3349
    %v4771 = vunpack.c.l.b16 %v3350
    %v4772 = vunpack.c.h.b16 %v3350
    %v4773 = vunpack.c.l.b16 %v3351
    %v4774 = vunpack.c.h.b16 %v3351
    %v4775 = vunpack.c.l.b16 %v3352
    %v4776 = vunpack.c.h.b16 %v3352
    %v4777 = vunpack.c.l.b16 %v3353
    %v4778 = vunpack.c.l.b16 %v3354
    %v4779 = vunpack.c.h.b16 %v3354
    %v4780 = vunpack.c.l.b16 %v3355
    %v4781 = vunpack.c.h.b16 %v3355
    %v4782 = vunpack.c.l.b16 %v3356
    %v4783 = vunpack.c.h.b16 %v3356
    %v4784 = vunpack.c.l.b16 %v3357
    %v4785 = vunpack.c.l.b16 %v3358
    %v4786 = vunpack.c.h.b16 %v3358
    %v4787 = vunpack.c.l.b16 %v3359
    %v4788 = vunpack.c.h.b16 %v3359
    %v4789 = vunpack.c.l.b16 %v3360
    %v4790 = vunpack.c.h.b16 %v3360
    %v4791 = vunpack.c.l.b16 %v3361
    %v4792 = vunpack.c.l.b16 %v3362
    %v4793 = vunpack.c.h.b16 %v3362
    %v4794 = vunpack.c.l.b16 %v3363
    %v4795 = vunpack.c.h.b16 %v3363
    %v4796 = vunpack.c.l.b16 %v3364
    %v4797 = vunpack.c.h.b16 %v3364
    %v4798 = vunpack.c.l.b16 %v3365
    %v4799 = vunpack.c.l.b16 %v3366
    %v4800 = vunpack.c.h.b16 %v3366
    %v4801 = vunpack.c.l.b16 %v3367
    %v4802 = vunpack.c.h.b16 %v3367
    %v4803 = vunpack.c.l.b16 %v3368
    %v4804 = vunpack.c.h.b16 %v3368
    %v4805 = vunpack.c.l.b16 %v3369
    %v4806 = vunpack.c.l.b16 %v3370
    %v4807 = vunpack.c.h.b16 %v3370
    %v4808 = vunpack.c.l.b16 %v3371
    %v4809 = vunpack.c.h.b16 %v3371
    %v4810 = vunpack.c.l.b16 %v3372
    %v4811 = vunpack.c.h.b16 %v3372
    %v4812 = vunpack.c.l.b16 %v3373
    %v4813 = vunpack.c.l.b16 %v3374
    %v4814 = vunpack.c.h.b16 %v3374
    %v4815 = vunpack.c.l.b16 %v3375
    %v4816 = vunpack.c.h.b16 %v3375
    %v4817 = vunpack.c.l.b16 %v3376
    %v4818 = vunpack.c.h.b16 %v3376
    %v4819 = vunpack.c.l.b16 %v3377
    %v4820 = vunpack.c.l.b16 %v3378
    %v4821 = vunpack.c.h.b16 %v3378
    %v4822 = vunpack.c.l.b16 %v3379
    %v4823 = vunpack.c.h.b16 %v3379
    %v4824 = vunpack.c.l.b16 %v3380
    %v4825 = vunpack.c.h.b16 %v3380
    %v4826 = vunpack.c.l.b16 %v3381
    %v4827 = vpack.c.b16 %v3938, %v3931
    %v4828 = vpack.c.b16 %v3939, %v3932
    %v4829 = vpack.c.b16 %v3940, %v3933
    %v4830 = vpack.c.b16 %v3941, %v3934
    %v4831 = vpack.c.b16 %v3942, %v3935
    %v4832 = vpack.c.b16 %v3943, %v3936
    %v4833 = vpack.c.b16 %v3944, %v3937
    %v4834 = vpack.c.b16 %v3952, %v3945
    %v4835 = vpack.c.b16 %v3953, %v3946
    %v4836 = vpack.c.b16 %v3954, %v3947
    %v4837 = vpack.c.b16 %v3955, %v3948
    %v4838 = vpack.c.b16 %v3956, %v3949
    %v4839 = vpack.c.b16 %v3957, %v3950
    %v4840 = vpack.c.b16 %v3958, %v3951
    %v4841 = vpack.c.b16 %v3966, %v3959
    %v4842 = vpack.c.b16 %v3967, %v3960
    %v4843 = vpack.c.b16 %v3968, %v3961
    %v4844 = vpack.c.b16 %v3969, %v3962
    %v4845 = vpack.c.b16 %v3970, %v3963
    %v4846 = vpack.c.b16 %v3971, %v3964
    %v4847 = vpack.c.b16 %v3972, %v3965
    %v4848 = vpack.c.b16 %v3980, %v3973
    %v4849 = vpack.c.b16 %v3981, %v3974
    %v4850 = vpack.c.b16 %v3982, %v3975
    %v4851 = vpack.c.b16 %v3983, %v3976
    %v4852 = vpack.c.b16 %v3984, %v3977
    %v4853 = vpack.c.b16 %v3985, %v3978
    %v4854 = vpack.c.b16 %v3986, %v3979
    %v4855 = vpack.c.b16 %v3994, %v3987
    %v4856 = vpack.c.b16 %v3995, %v3988
    %v4857 = vpack.c.b16 %v3996, %v3989
    %v4858 = vpack.c.b16 %v3997, %v3990
    %v4859 = vpack.c.b16 %v3998, %v3991
    %v4860 = vpack.c.b16 %v3999, %v3992
    %v4861 = vpack.c.b16 %v4000, %v3993
    %v4862 = vpack.c.b16 %v4008, %v4001
    %v4863 = vpack.c.b16 %v4009, %v4002
    %v4864 = vpack.c.b16 %v4010, %v4003
    %v4865 = vpack.c.b16 %v4011, %v4004
    %v4866 = vpack.c.b16 %v4012, %v4005
    %v4867 = vpack.c.b16 %v4013, %v4006
    %v4868 = vpack.c.b16 %v4014, %v4007
    %v4869 = vpack.c.b16 %v4022, %v4015
    %v4870 = vpack.c.b16 %v4023, %v4016
    %v4871 = vpack.c.b16 %v4024, %v4017
    %v4872 = vpack.c.b16 %v4025, %v4018
    %v4873 = vpack.c.b16 %v4026, %v4019
    %v4874 = vpack.c.b16 %v4027, %v4020
    %v4875 = vpack.c.b16 %v4028, %v4021
    %v4876 = vpack.c.b16 %v4036, %v4029
    %v4877 = vpack.c.b16 %v4037, %v4030
    %v4878 = vpack.c.b16 %v4038, %v4031
    %v4879 = vpack.c.b16 %v4039, %v4032
    %v4880 = vpack.c.b16 %v4040, %v4033
    %v4881 = vpack.c.b16 %v4041, %v4034
    %v4882 = vpack.c.b16 %v4042, %v4035
    %v4883 = vpack.c.b16 %v4050, %v4043
    %v4884 = vpack.c.b16 %v4051, %v4044
    %v4885 = vpack.c.b16 %v4052, %v4045
    %v4886 = vpack.c.b16 %v4053, %v4046
    %v4887 = vpack.c.b16 %v4054, %v4047
    %v4888 = vpack.c.b16 %v4055, %v4048
    %v4889 = vpack.c.b16 %v4056, %v4049
    %v4890 = vpack.c.b16 %v4064, %v4057
    %v4891 = vpack.c.b16 %v4065, %v4058
    %v4892 = vpack.c.b16 %v4066, %v4059
    %v4893 = vpack.c.b16 %v4067, %v4060
    %v4894 = vpack.c.b16 %v4068, %v4061
    %v4895 = vpack.c.b16 %v4069, %v4062
    %v4896 = vpack.c.b16 %v4070, %v4063
    %v4897 = vpack.c.b16 %v4078, %v4071
    %v4898 = vpack.c.b16 %v4079, %v4072
    %v4899 = vpack.c.b16 %v4080, %v4073
    %v4900 = vpack.c.b16 %v4081, %v4074
    %v4901 = vpack.c.b16 %v4082, %v4075
    %v4902 = vpack.c.b16 %v4083, %v4076
    %v4903 = vpack.c.b16 %v4084, %v4077
    %v4904 = vpack.c.b16 %v4092, %v4085
    %v4905 = vpack.c.b16 %v4093, %v4086
    %v4906 = vpack.c.b16 %v4094, %v4087
    %v4907 = vpack.c.b16 %v4095, %v4088
    %v4908 = vpack.c.b16 %v4096, %v4089
    %v4909 = vpack.c.b16 %v4097, %v4090
    %v4910 = vpack.c.b16 %v4098, %v4091
    %v4911 = vpack.c.b16 %v4106, %v4099
    %v4912 = vpack.c.b16 %v4107, %v4100
    %v4913 = vpack.c.b16 %v4108, %v4101
    %v4914 = vpack.c.b16 %v4109, %v4102
    %v4915 = vpack.c.b16 %v4110, %v4103
    %v4916 = vpack.c.b16 %v4111, %v4104
    %v4917 = vpack.c.b16 %v4112, %v4105
    %v4918 = vpack.c.b16 %v4120, %v4113
    %v4919 = vpack.c.b16 %v4121, %v4114
    %v4920 = vpack.c.b16 %v4122, %v4115
    %v4921 = vpack.c.b16 %v4123, %v4116
    %v4922 = vpack.c.b16 %v4124, %v4117
    %v4923 = vpack.c.b16 %v4125, %v4118
    %v4924 = vpack.c.b16 %v4126, %v4119
    %v4925 = vpack.c.b16 %v4134, %v4127
    %v4926 = vpack.c.b16 %v4135, %v4128
    %v4927 = vpack.c.b16 %v4136, %v4129
    %v4928 = vpack.c.b16 %v4137, %v4130
    %v4929 = vpack.c.b16 %v4138, %v4131
    %v4930 = vpack.c.b16 %v4139, %v4132
    %v4931 = vpack.c.b16 %v4140, %v4133
    %v4932 = vpack.c.b16 %v4148, %v4141
    %v4933 = vpack.c.b16 %v4149, %v4142
    %v4934 = vpack.c.b16 %v4150, %v4143
    %v4935 = vpack.c.b16 %v4151, %v4144
    %v4936 = vpack.c.b16 %v4152, %v4145
    %v4937 = vpack.c.b16 %v4153, %v4146
    %v4938 = vpack.c.b16 %v4154, %v4147
    %v4939 = vpack.c.b16 %v4162, %v4155
    %v4940 = vpack.c.b16 %v4163, %v4156
    %v4941 = vpack.c.b16 %v4164, %v4157
    %v4942 = vpack.c.b16 %v4165, %v4158
    %v4943 = vpack.c.b16 %v4166, %v4159
    %v4944 = vpack.c.b16 %v4167, %v4160
    %v4945 = vpack.c.b16 %v4168, %v4161
    %v4946 = vpack.c.b16 %v4176, %v4169
    %v4947 = vpack.c.b16 %v4177, %v4170
    %v4948 = vpack.c.b16 %v4178, %v4171
    %v4949 = vpack.c.b16 %v4179, %v4172
    %v4950 = vpack.c.b16 %v4180, %v4173
    %v4951 = vpack.c.b16 %v4181, %v4174
    %v4952 = vpack.c.b16 %v4182, %v4175
    %v4953 = vpack.c.b16 %v4190, %v4183
    %v4954 = vpack.c.b16 %v4191, %v4184
    %v4955 = vpack.c.b16 %v4192, %v4185
    %v4956 = vpack.c.b16 %v4193, %v4186
    %v4957 = vpack.c.b16 %v4194, %v4187
    %v4958 = vpack.c.b16 %v4195, %v4188
    %v4959 = vpack.c.b16 %v4196, %v4189
    %v4960 = vpack.c.b16 %v4204, %v4197
    %v4961 = vpack.c.b16 %v4205, %v4198
    %v4962 = vpack.c.b16 %v4206, %v4199
    %v4963 = vpack.c.b16 %v4207, %v4200
    %v4964 = vpack.c.b16 %v4208, %v4201
    %v4965 = vpack.c.b16 %v4209, %v4202
    %v4966 = vpack.c.b16 %v4210, %v4203
    %v4967 = vpack.c.b16 %v4218, %v4211
    %v4968 = vpack.c.b16 %v4219, %v4212
    %v4969 = vpack.c.b16 %v4220, %v4213
    %v4970 = vpack.c.b16 %v4221, %v4214
    %v4971 = vpack.c.b16 %v4222, %v4215
    %v4972 = vpack.c.b16 %v4223, %v4216
    %v4973 = vpack.c.b16 %v4224, %v4217
    %v4974 = vpack.c.b16 %v4232, %v4225
    %v4975 = vpack.c.b16 %v4233, %v4226
    %v4976 = vpack.c.b16 %v4234, %v4227
    %v4977 = vpack.c.b16 %v4235, %v4228
    %v4978 = vpack.c.b16 %v4236, %v4229
    %v4979 = vpack.c.b16 %v4237, %v4230
    %v4980 = vpack.c.b16 %v4238, %v4231
    %v4981 = vpack.c.b16 %v4246, %v4239
    %v4982 = vpack.c.b16 %v4247, %v4240
    %v4983 = vpack.c.b16 %v4248, %v4241
    %v4984 = vpack.c.b16 %v4249, %v4242
    %v4985 = vpack.c.b16 %v4250, %v4243
    %v4986 = vpack.c.b16 %v4251, %v4244
    %v4987 = vpack.c.b16 %v4252, %v4245
    %v4988 = vpack.c.b16 %v4260, %v4253
    %v4989 = vpack.c.b16 %v4261, %v4254
    %v4990 = vpack.c.b16 %v4262, %v4255
    %v4991 = vpack.c.b16 %v4263, %v4256
    %v4992 = vpack.c.b16 %v4264, %v4257
    %v4993 = vpack.c.b16 %v4265, %v4258
    %v4994 = vpack.c.b16 %v4266, %v4259
    %v4995 = vpack.c.b16 %v4274, %v4267
    %v4996 = vpack.c.b16 %v4275, %v4268
    %v4997 = vpack.c.b16 %v4276, %v4269
    %v4998 = vpack.c.b16 %v4277, %v4270
    %v4999 = vpack.c.b16 %v4278, %v4271
    %v5000 = vpack.c.b16 %v4279, %v4272
    %v5001 = vpack.c.b16 %v4280, %v4273
    %v5002 = vpack.c.b16 %v4288, %v4281
    %v5003 = vpack.c.b16 %v4289, %v4282
    %v5004 = vpack.c.b16 %v4290, %v4283
    %v5005 = vpack.c.b16 %v4291, %v4284
    %v5006 = vpack.c.b16 %v4292, %v4285
    %v5007 = vpack.c.b16 %v4293, %v4286
    %v5008 = vpack.c.b16 %v4294, %v4287
    %v5009 = vpack.c.b16 %v4302, %v4295
    %v5010 = vpack.c.b16 %v4303, %v4296
    %v5011 = vpack.c.b16 %v4304, %v4297
    %v5012 = vpack.c.b16 %v4305, %v4298
    %v5013 = vpack.c.b16 %v4306, %v4299
    %v5014 = vpack.c.b16 %v4307, %v4300
    %v5015 = vpack.c.b16 %v4308, %v4301
    %v5016 = vpack.c.b16 %v4316, %v4309
    %v5017 = vpack.c.b16 %v4317, %v4310
    %v5018 = vpack.c.b16 %v4318, %v4311
    %v5019 = vpack.c.b16 %v4319, %v4312
    %v5020 = vpack.c.b16 %v4320, %v4313
    %v5021 = vpack.c.b16 %v4321, %v4314
    %v5022 = vpack.c.b16 %v4322, %v4315
    %v5023 = vpack.c.b16 %v4330, %v4323
    %v5024 = vpack.c.b16 %v4331, %v4324
    %v5025 = vpack.c.b16 %v4332, %v4325
    %v5026 = vpack.c.b16 %v4333, %v4326
    %v5027 = vpack.c.b16 %v4334, %v4327
    %v5028 = vpack.c.b16 %v4335, %v4328
    %v5029 = vpack.c.b16 %v4336, %v4329
    %v5030 = vpack.c.b16 %v4344, %v4337
    %v5031 = vpack.c.b16 %v4345, %v4338
    %v5032 = vpack.c.b16 %v4346, %v4339
    %v5033 = vpack.c.b16 %v4347, %v4340
    %v5034 = vpack.c.b16 %v4348, %v4341
    %v5035 = vpack.c.b16 %v4349, %v4342
    %v5036 = vpack.c.b16 %v4350, %v4343
    %v5037 = vpack.c.b16 %v4358, %v4351
    %v5038 = vpack.c.b16 %v4359, %v4352
    %v5039 = vpack.c.b16 %v4360, %v4353
    %v5040 = vpack.c.b16 %v4361, %v4354
    %v5041 = vpack.c.b16 %v4362, %v4355
    %v5042 = vpack.c.b16 %v4363, %v4356
    %v5043 = vpack.c.b16 %v4364, %v4357
    %v5044 = vpack.c.b16 %v4372, %v4365
    %v5045 = vpack.c.b16 %v4373, %v4366
    %v5046 = vpack.c.b16 %v4374, %v4367
    %v5047 = vpack.c.b16 %v4375, %v4368
    %v5048 = vpack.c.b16 %v4376, %v4369
    %v5049 = vpack.c.b16 %v4377, %v4370
    %v5050 = vpack.c.b16 %v4378, %v4371
    %v5051 = vpack.c.b16 %v4386, %v4379
    %v5052 = vpack.c.b16 %v4387, %v4380
    %v5053 = vpack.c.b16 %v4388, %v4381
    %v5054 = vpack.c.b16 %v4389, %v4382
    %v5055 = vpack.c.b16 %v4390, %v4383
    %v5056 = vpack.c.b16 %v4391, %v4384
    %v5057 = vpack.c.b16 %v4392, %v4385
    %v5058 = vpack.c.b16 %v4400, %v4393
    %v5059 = vpack.c.b16 %v4401, %v4394
    %v5060 = vpack.c.b16 %v4402, %v4395
    %v5061 = vpack.c.b16 %v4403, %v4396
    %v5062 = vpack.c.b16 %v4404, %v4397
    %v5063 = vpack.c.b16 %v4405, %v4398
    %v5064 = vpack.c.b16 %v4406, %v4399
    %v5065 = vpack.c.b16 %v4414, %v4407
    %v5066 = vpack.c.b16 %v4415, %v4408
    %v5067 = vpack.c.b16 %v4416, %v4409
    %v5068 = vpack.c.b16 %v4417, %v4410
    %v5069 = vpack.c.b16 %v4418, %v4411
    %v5070 = vpack.c.b16 %v4419, %v4412
    %v5071 = vpack.c.b16 %v4420, %v4413
    %v5072 = vpack.c.b16 %v4428, %v4421
    %v5073 = vpack.c.b16 %v4429, %v4422
    %v5074 = vpack.c.b16 %v4430, %v4423
    %v5075 = vpack.c.b16 %v4431, %v4424
    %v5076 = vpack.c.b16 %v4432, %v4425
    %v5077 = vpack.c.b16 %v4433, %v4426
    %v5078 = vpack.c.b16 %v4434, %v4427
    %v5079 = vpack.c.b16 %v4442, %v4435
    %v5080 = vpack.c.b16 %v4443, %v4436
    %v5081 = vpack.c.b16 %v4444, %v4437
    %v5082 = vpack.c.b16 %v4445, %v4438
    %v5083 = vpack.c.b16 %v4446, %v4439
    %v5084 = vpack.c.b16 %v4447, %v4440
    %v5085 = vpack.c.b16 %v4448, %v4441
    %v5086 = vpack.c.b16 %v4456, %v4449
    %v5087 = vpack.c.b16 %v4457, %v4450
    %v5088 = vpack.c.b16 %v4458, %v4451
    %v5089 = vpack.c.b16 %v4459, %v4452
    %v5090 = vpack.c.b16 %v4460, %v4453
    %v5091 = vpack.c.b16 %v4461, %v4454
    %v5092 = vpack.c.b16 %v4462, %v4455
    %v5093 = vpack.c.b16 %v4470, %v4463
    %v5094 = vpack.c.b16 %v4471, %v4464
    %v5095 = vpack.c.b16 %v4472, %v4465
    %v5096 = vpack.c.b16 %v4473, %v4466
    %v5097 = vpack.c.b16 %v4474, %v4467
    %v5098 = vpack.c.b16 %v4475, %v4468
    %v5099 = vpack.c.b16 %v4476, %v4469
    %v5100 = vpack.c.b16 %v4484, %v4477
    %v5101 = vpack.c.b16 %v4485, %v4478
    %v5102 = vpack.c.b16 %v4486, %v4479
    %v5103 = vpack.c.b16 %v4487, %v4480
    %v5104 = vpack.c.b16 %v4488, %v4481
    %v5105 = vpack.c.b16 %v4489, %v4482
    %v5106 = vpack.c.b16 %v4490, %v4483
    %v5107 = vpack.c.b16 %v4498, %v4491
    %v5108 = vpack.c.b16 %v4499, %v4492
    %v5109 = vpack.c.b16 %v4500, %v4493
    %v5110 = vpack.c.b16 %v4501, %v4494
    %v5111 = vpack.c.b16 %v4502, %v4495
    %v5112 = vpack.c.b16 %v4503, %v4496
    %v5113 = vpack.c.b16 %v4504, %v4497
    %v5114 = vpack.c.b16 %v4512, %v4505
    %v5115 = vpack.c.b16 %v4513, %v4506
    %v5116 = vpack.c.b16 %v4514, %v4507
    %v5117 = vpack.c.b16 %v4515, %v4508
    %v5118 = vpack.c.b16 %v4516, %v4509
    %v5119 = vpack.c.b16 %v4517, %v4510
    %v5120 = vpack.c.b16 %v4518, %v4511
    %v5121 = vpack.c.b16 %v4526, %v4519
    %v5122 = vpack.c.b16 %v4527, %v4520
    %v5123 = vpack.c.b16 %v4528, %v4521
    %v5124 = vpack.c.b16 %v4529, %v4522
    %v5125 = vpack.c.b16 %v4530, %v4523
    %v5126 = vpack.c.b16 %v4531, %v4524
    %v5127 = vpack.c.b16 %v4532, %v4525
    %v5128 = vpack.c.b16 %v4540, %v4533
    %v5129 = vpack.c.b16 %v4541, %v4534
    %v5130 = vpack.c.b16 %v4542, %v4535
    %v5131 = vpack.c.b16 %v4543, %v4536
    %v5132 = vpack.c.b16 %v4544, %v4537
    %v5133 = vpack.c.b16 %v4545, %v4538
    %v5134 = vpack.c.b16 %v4546, %v4539
    %v5135 = vpack.c.b16 %v4554, %v4547
    %v5136 = vpack.c.b16 %v4555, %v4548
    %v5137 = vpack.c.b16 %v4556, %v4549
    %v5138 = vpack.c.b16 %v4557, %v4550
    %v5139 = vpack.c.b16 %v4558, %v4551
    %v5140 = vpack.c.b16 %v4559, %v4552
    %v5141 = vpack.c.b16 %v4560, %v4553
    %v5142 = vpack.c.b16 %v4568, %v4561
    %v5143 = vpack.c.b16 %v4569, %v4562
    %v5144 = vpack.c.b16 %v4570, %v4563
    %v5145 = vpack.c.b16 %v4571, %v4564
    %v5146 = vpack.c.b16 %v4572, %v4565
    %v5147 = vpack.c.b16 %v4573, %v4566
    %v5148 = vpack.c.b16 %v4574, %v4567
    %v5149 = vpack.c.b16 %v4582, %v4575
    %v5150 = vpack.c.b16 %v4583, %v4576
    %v5151 = vpack.c.b16 %v4584, %v4577
    %v5152 = vpack.c.b16 %v4585, %v4578
    %v5153 = vpack.c.b16 %v4586, %v4579
    %v5154 = vpack.c.b16 %v4587, %v4580
    %v5155 = vpack.c.b16 %v4588, %v4581
    %v5156 = vpack.c.b16 %v4596, %v4589
    %v5157 = vpack.c.b16 %v4597, %v4590
    %v5158 = vpack.c.b16 %v4598, %v4591
    %v5159 = vpack.c.b16 %v4599, %v4592
    %v5160 = vpack.c.b16 %v4600, %v4593
    %v5161 = vpack.c.b16 %v4601, %v4594
    %v5162 = vpack.c.b16 %v4602, %v4595
    %v5163 = vpack.c.b16 %v4610, %v4603
    %v5164 = vpack.c.b16 %v4611, %v4604
    %v5165 = vpack.c.b16 %v4612, %v4605
    %v5166 = vpack.c.b16 %v4613, %v4606
    %v5167 = vpack.c.b16 %v4614, %v4607
    %v5168 = vpack.c.b16 %v4615, %v4608
    %v5169 = vpack.c.b16 %v4616, %v4609
    %v5170 = vpack.c.b16 %v4624, %v4617
    %v5171 = vpack.c.b16 %v4625, %v4618
    %v5172 = vpack.c.b16 %v4626, %v4619
    %v5173 = vpack.c.b16 %v4627, %v4620
    %v5174 = vpack.c.b16 %v4628, %v4621
    %v5175 = vpack.c.b16 %v4629, %v4622
    %v5176 = vpack.c.b16 %v4630, %v4623
    %v5177 = vpack.c.b16 %v4638, %v4631
    %v5178 = vpack.c.b16 %v4639, %v4632
    %v5179 = vpack.c.b16 %v4640, %v4633
    %v5180 = vpack.c.b16 %v4641, %v4634
    %v5181 = vpack.c.b16 %v4642, %v4635
    %v5182 = vpack.c.b16 %v4643, %v4636
    %v5183 = vpack.c.b16 %v4644, %v4637
    %v5184 = vpack.c.b16 %v4652, %v4645
    %v5185 = vpack.c.b16 %v4653, %v4646
    %v5186 = vpack.c.b16 %v4654, %v4647
    %v5187 = vpack.c.b16 %v4655, %v4648
    %v5188 = vpack.c.b16 %v4656, %v4649
    %v5189 = vpack.c.b16 %v4657, %v4650
    %v5190 = vpack.c.b16 %v4658, %v4651
    %v5191 = vpack.c.b16 %v4666, %v4659
    %v5192 = vpack.c.b16 %v4667, %v4660
    %v5193 = vpack.c.b16 %v4668, %v4661
    %v5194 = vpack.c.b16 %v4669, %v4662
    %v5195 = vpack.c.b16 %v4670, %v4663
    %v5196 = vpack.c.b16 %v4671, %v4664
    %v5197 = vpack.c.b16 %v4672, %v4665
    %v5198 = vpack.c.b16 %v4680, %v4673
    %v5199 = vpack.c.b16 %v4681, %v4674
    %v5200 = vpack.c.b16 %v4682, %v4675
    %v5201 = vpack.c.b16 %v4683, %v4676
    %v5202 = vpack.c.b16 %v4684, %v4677
    %v5203 = vpack.c.b16 %v4685, %v4678
    %v5204 = vpack.c.b16 %v4686, %v4679
    %v5205 = vpack.c.b16 %v4694, %v4687
    %v5206 = vpack.c.b16 %v4695, %v4688
    %v5207 = vpack.c.b16 %v4696, %v4689
    %v5208 = vpack.c.b16 %v4697, %v4690
    %v5209 = vpack.c.b16 %v4698, %v4691
    %v5210 = vpack.c.b16 %v4699, %v4692
    %v5211 = vpack.c.b16 %v4700, %v4693
    %v5212 = vpack.c.b16 %v4708, %v4701
    %v5213 = vpack.c.b16 %v4709, %v4702
    %v5214 = vpack.c.b16 %v4710, %v4703
    %v5215 = vpack.c.b16 %v4711, %v4704
    %v5216 = vpack.c.b16 %v4712, %v4705
    %v5217 = vpack.c.b16 %v4713, %v4706
    %v5218 = vpack.c.b16 %v4714, %v4707
    %v5219 = vpack.c.b16 %v4722, %v4715
    %v5220 = vpack.c.b16 %v4723, %v4716
    %v5221 = vpack.c.b16 %v4724, %v4717
    %v5222 = vpack.c.b16 %v4725, %v4718
    %v5223 = vpack.c.b16 %v4726, %v4719
    %v5224 = vpack.c.b16 %v4727, %v4720
    %v5225 = vpack.c.b16 %v4728, %v4721
    %v5226 = vpack.c.b16 %v4736, %v4729
    %v5227 = vpack.c.b16 %v4737, %v4730
    %v5228 = vpack.c.b16 %v4738, %v4731
    %v5229 = vpack.c.b16 %v4739, %v4732
    %v5230 = vpack.c.b16 %v4740, %v4733
    %v5231 = vpack.c.b16 %v4741, %v4734
    %v5232 = vpack.c.b16 %v4742, %v4735
    %v5233 = vpack.c.b16 %v4750, %v4743
    %v5234 = vpack.c.b16 %v4751, %v4744
    %v5235 = vpack.c.b16 %v4752, %v4745
    %v5236 = vpack.c.b16 %v4753, %v4746
    %v5237 = vpack.c.b16 %v4754, %v4747
    %v5238 = vpack.c.b16 %v4755, %v4748
    %v5239 = vpack.c.b16 %v4756, %v4749
    %v5240 = vpack.c.b16 %v4764, %v4757
    %v5241 = vpack.c.b16 %v4765, %v4758
    %v5242 = vpack.c.b16 %v4766, %v4759
    %v5243 = vpack.c.b16 %v4767, %v4760
    %v5244 = vpack.c.b16 %v4768, %v4761
    %v5245 = vpack.c.b16 %v4769, %v4762
    %v5246 = vpack.c.b16 %v4770, %v4763
    %v5247 = vpack.c.b16 %v4778, %v4771
    %v5248 = vpack.c.b16 %v4779, %v4772
    %v5249 = vpack.c.b16 %v4780, %v4773
    %v5250 = vpack.c.b16 %v4781, %v4774
    %v5251 = vpack.c.b16 %v4782, %v4775
    %v5252 = vpack.c.b16 %v4783, %v4776
    %v5253 = vpack.c.b16 %v4784, %v4777
    %v5254 = vpack.c.b16 %v4792, %v4785
    %v5255 = vpack.c.b16 %v4793, %v4786
    %v5256 = vpack.c.b16 %v4794, %v4787
    %v5257 = vpack.c.b16 %v4795, %v4788
    %v5258 = vpack.c.b16 %v4796, %v4789
    %v5259 = vpack.c.b16 %v4797, %v4790
    %v5260 = vpack.c.b16 %v4798, %v4791
    %v5261 = vpack.c.b16 %v4806, %v4799
    %v5262 = vpack.c.b16 %v4807, %v4800
    %v5263 = vpack.c.b16 %v4808, %v4801
    %v5264 = vpack.c.b16 %v4809, %v4802
    %v5265 = vpack.c.b16 %v4810, %v4803
    %v5266 = vpack.c.b16 %v4811, %v4804
    %v5267 = vpack.c.b16 %v4812, %v4805
    %v5268 = vpack.c.b16 %v4820, %v4813
    %v5269 = vpack.c.b16 %v4821, %v4814
    %v5270 = vpack.c.b16 %v4822, %v4815
    %v5271 = vpack.c.b16 %v4823, %v4816
    %v5272 = vpack.c.b16 %v4824, %v4817
    %v5273 = vpack.c.b16 %v4825, %v4818
    %v5274 = vpack.c.b16 %v4826, %v4819
    %5723 = vmatprep.subr.bf16.mxu0 %v4828
    %5724 = vmatpush1.bf16.msra.mxu0 %v4827
    %5725 = vmatprep.subr.bf16.mxu0 %v4835
    %5726 = vmatpush1.bf16.msra.mxu0 %v4834
    %5727 = vmatprep.subr.bf16.mxu0 %v4842
    %5728 = vmatpush1.bf16.msra.mxu0 %v4841
    %5729 = vmatprep.subr.bf16.mxu0 %v4849
    %5730 = vmatpush1.bf16.msra.mxu0 %v4848
    %5731 = vmatprep.subr.bf16.mxu0 %v4856
    %5732 = vmatpush1.bf16.msra.mxu0 %v4855
    %5733 = vmatprep.subr.bf16.mxu0 %v4863
    %5734 = vmatpush1.bf16.msra.mxu0 %v4862
    %5735 = vmatprep.subr.bf16.mxu0 %v4870
    %5736 = vmatpush1.bf16.msra.mxu0 %v4869
    %5737 = vmatprep.subr.bf16.mxu0 %v4877
    %5738 = vmatpush1.bf16.msra.mxu0 %v4876
    %5739 = vmatprep.subr.bf16.mxu0 %v4884
    %5740 = vmatpush1.bf16.msra.mxu0 %v4883
    %5741 = vmatprep.subr.bf16.mxu0 %v4891
    %5742 = vmatpush1.bf16.msra.mxu0 %v4890
    %5743 = vmatprep.subr.bf16.mxu0 %v4898
    %5744 = vmatpush1.bf16.msra.mxu0 %v4897
    %5745 = vmatprep.subr.bf16.mxu0 %v4905
    %5746 = vmatpush1.bf16.msra.mxu0 %v4904
    %5747 = vmatprep.subr.bf16.mxu0 %v4912
    %5748 = vmatpush1.bf16.msra.mxu0 %v4911
    %5749 = vmatprep.subr.bf16.mxu0 %v4919
    %5750 = vmatpush1.bf16.msra.mxu0 %v4918
    %5751 = vmatprep.subr.bf16.mxu0 %v4926
    %5752 = vmatpush1.bf16.msra.mxu0 %v4925
    %5753 = vmatprep.subr.bf16.mxu0 %v4933
    %5754 = vmatpush1.bf16.msra.mxu0 %v4932
    %5755 = vmatprep.mubr.bf16.mxu0 %v2863
    %5756 = vmatmul.mubr.bf16.gmra.mrb[0].mxu0 %v2862
    %v5757 = vpop.f32.mrb[0].mxu0
    %v5758 = vadd.f32 %v3387, %v5757
    %v5759 = vpop.f32.mrb[0].mxu0
    %v5760 = vadd.f32 %v3391, %v5759
    %v5761 = vpop.f32.mrb[0].mxu0
    %v5762 = vpop.f32.mrb[0].mxu0
    %5763 = vdwg.mxu0
    %5764 = vmatprep.subr.bf16.mxu0 %v4940
    %5765 = vmatpush1.bf16.msra.mxu0 %v4939
    %5766 = vmatprep.subr.bf16.mxu0 %v4947
    %5767 = vmatpush1.bf16.msra.mxu0 %v4946
    %5768 = vmatprep.subr.bf16.mxu0 %v4954
    %5769 = vmatpush1.bf16.msra.mxu0 %v4953
    %5770 = vmatprep.subr.bf16.mxu0 %v4961
    %5771 = vmatpush1.bf16.msra.mxu0 %v4960
    %5772 = vmatprep.subr.bf16.mxu0 %v4968
    %5773 = vmatpush1.bf16.msra.mxu0 %v4967
    %5774 = vmatprep.subr.bf16.mxu0 %v4975
    %5775 = vmatpush1.bf16.msra.mxu0 %v4974
    %5776 = vmatprep.subr.bf16.mxu0 %v4982
    %5777 = vmatpush1.bf16.msra.mxu0 %v4981
    %5778 = vmatprep.subr.bf16.mxu0 %v4989
    %5779 = vmatpush1.bf16.msra.mxu0 %v4988
    %5780 = vmatprep.subr.bf16.mxu0 %v4996
    %5781 = vmatpush1.bf16.msra.mxu0 %v4995
    %5782 = vmatprep.subr.bf16.mxu0 %v5003
    %5783 = vmatpush1.bf16.msra.mxu0 %v5002
    %5784 = vmatprep.subr.bf16.mxu0 %v5010
    %5785 = vmatpush1.bf16.msra.mxu0 %v5009
    %5786 = vmatprep.subr.bf16.mxu0 %v5017
    %5787 = vmatpush1.bf16.msra.mxu0 %v5016
    %5788 = vmatprep.subr.bf16.mxu0 %v5024
    %5789 = vmatpush1.bf16.msra.mxu0 %v5023
    %5790 = vmatprep.subr.bf16.mxu0 %v5031
    %5791 = vmatpush1.bf16.msra.mxu0 %v5030
    %5792 = vmatprep.subr.bf16.mxu0 %v5038
    %5793 = vmatpush1.bf16.msra.mxu0 %v5037
    %5794 = vmatprep.subr.bf16.mxu0 %v5045
    %5795 = vmatpush1.bf16.msra.mxu0 %v5044
    %5796 = vmatprep.mubr.bf16.mxu0 %v2865
    %5797 = vmatmul.mubr.bf16.gmra.mrb[0].mxu0 %v2864
    %v5798 = vpop.f32.mrb[0].mxu0
    %v5799 = vadd.f32 %v5758, %v5798
    %v5800 = vpop.f32.mrb[0].mxu0
    %v5801 = vadd.f32 %v5760, %v5800
    %v5802 = vpop.f32.mrb[0].mxu0
    %v5803 = vpop.f32.mrb[0].mxu0
    %5804 = vdwg.mxu0
    %5805 = vmatprep.subr.bf16.mxu0 %v5052
    %5806 = vmatpush1.bf16.msra.mxu0 %v5051
    %5807 = vmatprep.subr.bf16.mxu0 %v5059
    %5808 = vmatpush1.bf16.msra.mxu0 %v5058
    %5809 = vmatprep.subr.bf16.mxu0 %v5066
    %5810 = vmatpush1.bf16.msra.mxu0 %v5065
    %5811 = vmatprep.subr.bf16.mxu0 %v5073
    %5812 = vmatpush1.bf16.msra.mxu0 %v5072
    %5813 = vmatprep.subr.bf16.mxu0 %v5080
    %5814 = vmatpush1.bf16.msra.mxu0 %v5079
    %5815 = vmatprep.subr.bf16.mxu0 %v5087
    %5816 = vmatpush1.bf16.msra.mxu0 %v5086
    %5817 = vmatprep.subr.bf16.mxu0 %v5094
    %5818 = vmatpush1.bf16.msra.mxu0 %v5093
    %5819 = vmatprep.subr.bf16.mxu0 %v5101
    %5820 = vmatpush1.bf16.msra.mxu0 %v5100
    %5821 = vmatprep.subr.bf16.mxu0 %v5108
    %5822 = vmatpush1.bf16.msra.mxu0 %v5107
    %5823 = vmatprep.subr.bf16.mxu0 %v5115
    %5824 = vmatpush1.bf16.msra.mxu0 %v5114
    %5825 = vmatprep.subr.bf16.mxu0 %v5122
    %5826 = vmatpush1.bf16.msra.mxu0 %v5121
    %5827 = vmatprep.subr.bf16.mxu0 %v5129
    %5828 = vmatpush1.bf16.msra.mxu0 %v5128
    %5829 = vmatprep.subr.bf16.mxu0 %v5136
    %5830 = vmatpush1.bf16.msra.mxu0 %v5135
    %5831 = vmatprep.subr.bf16.mxu0 %v5143
    %5832 = vmatpush1.bf16.msra.mxu0 %v5142
    %5833 = vmatprep.subr.bf16.mxu0 %v5150
    %5834 = vmatpush1.bf16.msra.mxu0 %v5149
    %5835 = vmatprep.subr.bf16.mxu0 %v5157
    %5836 = vmatpush1.bf16.msra.mxu0 %v5156
    %5837 = vmatprep.mubr.bf16.mxu0 %v2867
    %5838 = vmatmul.mubr.bf16.gmra.mrb[0].mxu0 %v2866
    %v5839 = vpop.f32.mrb[0].mxu0
    %v5840 = vadd.f32 %v5799, %v5839
    %v5841 = vpop.f32.mrb[0].mxu0
    %v5842 = vadd.f32 %v5801, %v5841
    %v5843 = vpop.f32.mrb[0].mxu0
    %v5844 = vpop.f32.mrb[0].mxu0
    %5845 = vdwg.mxu0
    %5846 = vmatprep.subr.bf16.mxu0 %v5164
    %5847 = vmatpush1.bf16.msra.mxu0 %v5163
    %5848 = vmatprep.subr.bf16.mxu0 %v5171
    %5849 = vmatpush1.bf16.msra.mxu0 %v5170
    %5850 = vmatprep.subr.bf16.mxu0 %v5178
    %5851 = vmatpush1.bf16.msra.mxu0 %v5177
    %5852 = vmatprep.subr.bf16.mxu0 %v5185
    %5853 = vmatpush1.bf16.msra.mxu0 %v5184
    %5854 = vmatprep.subr.bf16.mxu0 %v5192
    %5855 = vmatpush1.bf16.msra.mxu0 %v5191
    %5856 = vmatprep.subr.bf16.mxu0 %v5199
    %5857 = vmatpush1.bf16.msra.mxu0 %v5198
    %5858 = vmatprep.subr.bf16.mxu0 %v5206
    %5859 = vmatpush1.bf16.msra.mxu0 %v5205
    %5860 = vmatprep.subr.bf16.mxu0 %v5213
    %5861 = vmatpush1.bf16.msra.mxu0 %v5212
    %5862 = vmatprep.subr.bf16.mxu0 %v5220
    %5863 = vmatpush1.bf16.msra.mxu0 %v5219
    %5864 = vmatprep.subr.bf16.mxu0 %v5227
    %5865 = vmatpush1.bf16.msra.mxu0 %v5226
    %5866 = vmatprep.subr.bf16.mxu0 %v5234
    %5867 = vmatpush1.bf16.msra.mxu0 %v5233
    %5868 = vmatprep.subr.bf16.mxu0 %v5241
    %5869 = vmatpush1.bf16.msra.mxu0 %v5240
    %5870 = vmatprep.subr.bf16.mxu0 %v5248
    %5871 = vmatpush1.bf16.msra.mxu0 %v5247
    %5872 = vmatprep.subr.bf16.mxu0 %v5255
    %5873 = vmatpush1.bf16.msra.mxu0 %v5254
    %5874 = vmatprep.subr.bf16.mxu0 %v5262
    %5875 = vmatpush1.bf16.msra.mxu0 %v5261
    %5876 = vmatprep.subr.bf16.mxu0 %v5269
    %5877 = vmatpush1.bf16.msra.mxu0 %v5268
    %5878 = vmatprep.mubr.bf16.mxu0 %v2869
    %5879 = vmatmul.mubr.bf16.gmra.mrb[0].mxu0 %v2868
    %v5880 = vpop.f32.mrb[0].mxu0
    %v5881 = vadd.f32 %v5840, %v5880
    %v5882 = vpop.f32.mrb[0].mxu0
    %v5883 = vadd.f32 %v5842, %v5882
    %v5884 = vpop.f32.mrb[0].mxu0
    %v5885 = vpop.f32.mrb[0].mxu0
    %5886 = vdwg.mxu0
    %5887 = vmatprep.subr.bf16.mxu0 %v4830
    %5888 = vmatpush1.bf16.msra.mxu0 %v4829
    %5889 = vmatprep.subr.bf16.mxu0 %v4837
    %5890 = vmatpush1.bf16.msra.mxu0 %v4836
    %5891 = vmatprep.subr.bf16.mxu0 %v4844
    %5892 = vmatpush1.bf16.msra.mxu0 %v4843
    %5893 = vmatprep.subr.bf16.mxu0 %v4851
    %5894 = vmatpush1.bf16.msra.mxu0 %v4850
    %5895 = vmatprep.subr.bf16.mxu0 %v4858
    %5896 = vmatpush1.bf16.msra.mxu0 %v4857
    %5897 = vmatprep.subr.bf16.mxu0 %v4865
    %5898 = vmatpush1.bf16.msra.mxu0 %v4864
    %5899 = vmatprep.subr.bf16.mxu0 %v4872
    %5900 = vmatpush1.bf16.msra.mxu0 %v4871
    %5901 = vmatprep.subr.bf16.mxu0 %v4879
    %5902 = vmatpush1.bf16.msra.mxu0 %v4878
    %5903 = vmatprep.subr.bf16.mxu0 %v4886
    %5904 = vmatpush1.bf16.msra.mxu0 %v4885
    %5905 = vmatprep.subr.bf16.mxu0 %v4893
    %5906 = vmatpush1.bf16.msra.mxu0 %v4892
    %5907 = vmatprep.subr.bf16.mxu0 %v4900
    %5908 = vmatpush1.bf16.msra.mxu0 %v4899
    %5909 = vmatprep.subr.bf16.mxu0 %v4907
    %5910 = vmatpush1.bf16.msra.mxu0 %v4906
    %5911 = vmatprep.subr.bf16.mxu0 %v4914
    %5912 = vmatpush1.bf16.msra.mxu0 %v4913
    %5913 = vmatprep.subr.bf16.mxu0 %v4921
    %5914 = vmatpush1.bf16.msra.mxu0 %v4920
    %5915 = vmatprep.subr.bf16.mxu0 %v4928
    %5916 = vmatpush1.bf16.msra.mxu0 %v4927
    %5917 = vmatprep.subr.bf16.mxu0 %v4935
    %5918 = vmatpush1.bf16.msra.mxu0 %v4934
    %5919 = vmatprep.mubr.bf16.mxu0 %v2863
    %5920 = vmatmul.mubr.bf16.gmra.mrb[0].mxu0 %v2862
    %v5921 = vpop.f32.mrb[0].mxu0
    %v5922 = vadd.f32 %v3395, %v5921
    %v5923 = vpop.f32.mrb[0].mxu0
    %v5924 = vadd.f32 %v3399, %v5923
    %v5925 = vpop.f32.mrb[0].mxu0
    %v5926 = vpop.f32.mrb[0].mxu0
    %5927 = vdwg.mxu0
    %5928 = vmatprep.subr.bf16.mxu0 %v4942
    %5929 = vmatpush1.bf16.msra.mxu0 %v4941
    %5930 = vmatprep.subr.bf16.mxu0 %v4949
    %5931 = vmatpush1.bf16.msra.mxu0 %v4948
    %5932 = vmatprep.subr.bf16.mxu0 %v4956
    %5933 = vmatpush1.bf16.msra.mxu0 %v4955
    %5934 = vmatprep.subr.bf16.mxu0 %v4963
    %5935 = vmatpush1.bf16.msra.mxu0 %v4962
    %5936 = vmatprep.subr.bf16.mxu0 %v4970
    %5937 = vmatpush1.bf16.msra.mxu0 %v4969
    %5938 = vmatprep.subr.bf16.mxu0 %v4977
    %5939 = vmatpush1.bf16.msra.mxu0 %v4976
    %5940 = vmatprep.subr.bf16.mxu0 %v4984
    %5941 = vmatpush1.bf16.msra.mxu0 %v4983
    %5942 = vmatprep.subr.bf16.mxu0 %v4991
    %5943 = vmatpush1.bf16.msra.mxu0 %v4990
    %5944 = vmatprep.subr.bf16.mxu0 %v4998
    %5945 = vmatpush1.bf16.msra.mxu0 %v4997
    %5946 = vmatprep.subr.bf16.mxu0 %v5005
    %5947 = vmatpush1.bf16.msra.mxu0 %v5004
    %5948 = vmatprep.subr.bf16.mxu0 %v5012
    %5949 = vmatpush1.bf16.msra.mxu0 %v5011
    %5950 = vmatprep.subr.bf16.mxu0 %v5019
    %5951 = vmatpush1.bf16.msra.mxu0 %v5018
    %5952 = vmatprep.subr.bf16.mxu0 %v5026
    %5953 = vmatpush1.bf16.msra.mxu0 %v5025
    %5954 = vmatprep.subr.bf16.mxu0 %v5033
    %5955 = vmatpush1.bf16.msra.mxu0 %v5032
    %5956 = vmatprep.subr.bf16.mxu0 %v5040
    %5957 = vmatpush1.bf16.msra.mxu0 %v5039
    %5958 = vmatprep.subr.bf16.mxu0 %v5047
    %5959 = vmatpush1.bf16.msra.mxu0 %v5046
    %5960 = vmatprep.mubr.bf16.mxu0 %v2865
    %5961 = vmatmul.mubr.bf16.gmra.mrb[0].mxu0 %v2864
    %v5962 = vpop.f32.mrb[0].mxu0
    %v5963 = vadd.f32 %v5922, %v5962
    %v5964 = vpop.f32.mrb[0].mxu0
    %v5965 = vadd.f32 %v5924, %v5964
    %v5966 = vpop.f32.mrb[0].mxu0
    %v5967 = vpop.f32.mrb[0].mxu0
    %5968 = vdwg.mxu0
    %5969 = vmatprep.subr.bf16.mxu0 %v5054
    %5970 = vmatpush1.bf16.msra.mxu0 %v5053
    %5971 = vmatprep.subr.bf16.mxu0 %v5061
    %5972 = vmatpush1.bf16.msra.mxu0 %v5060
    %5973 = vmatprep.subr.bf16.mxu0 %v5068
    %5974 = vmatpush1.bf16.msra.mxu0 %v5067
    %5975 = vmatprep.subr.bf16.mxu0 %v5075
    %5976 = vmatpush1.bf16.msra.mxu0 %v5074
    %5977 = vmatprep.subr.bf16.mxu0 %v5082
    %5978 = vmatpush1.bf16.msra.mxu0 %v5081
    %5979 = vmatprep.subr.bf16.mxu0 %v5089
    %5980 = vmatpush1.bf16.msra.mxu0 %v5088
    %5981 = vmatprep.subr.bf16.mxu0 %v5096
    %5982 = vmatpush1.bf16.msra.mxu0 %v5095
    %5983 = vmatprep.subr.bf16.mxu0 %v5103
    %5984 = vmatpush1.bf16.msra.mxu0 %v5102
    %5985 = vmatprep.subr.bf16.mxu0 %v5110
    %5986 = vmatpush1.bf16.msra.mxu0 %v5109
    %5987 = vmatprep.subr.bf16.mxu0 %v5117
    %5988 = vmatpush1.bf16.msra.mxu0 %v5116
    %5989 = vmatprep.subr.bf16.mxu0 %v5124
    %5990 = vmatpush1.bf16.msra.mxu0 %v5123
    %5991 = vmatprep.subr.bf16.mxu0 %v5131
    %5992 = vmatpush1.bf16.msra.mxu0 %v5130
    %5993 = vmatprep.subr.bf16.mxu0 %v5138
    %5994 = vmatpush1.bf16.msra.mxu0 %v5137
    %5995 = vmatprep.subr.bf16.mxu0 %v5145
    %5996 = vmatpush1.bf16.msra.mxu0 %v5144
    %5997 = vmatprep.subr.bf16.mxu0 %v5152
    %5998 = vmatpush1.bf16.msra.mxu0 %v5151
    %5999 = vmatprep.subr.bf16.mxu0 %v5159
    %6000 = vmatpush1.bf16.msra.mxu0 %v5158
    %6001 = vmatprep.mubr.bf16.mxu0 %v2867
    %6002 = vmatmul.mubr.bf16.gmra.mrb[0].mxu0 %v2866
    %v6003 = vpop.f32.mrb[0].mxu0
    %v6004 = vadd.f32 %v5963, %v6003
    %v6005 = vpop.f32.mrb[0].mxu0
    %v6006 = vadd.f32 %v5965, %v6005
    %v6007 = vpop.f32.mrb[0].mxu0
    %v6008 = vpop.f32.mrb[0].mxu0
    %6009 = vdwg.mxu0
    %6010 = vmatprep.subr.bf16.mxu0 %v5166
    %6011 = vmatpush1.bf16.msra.mxu0 %v5165
    %6012 = vmatprep.subr.bf16.mxu0 %v5173
    %6013 = vmatpush1.bf16.msra.mxu0 %v5172
    %6014 = vmatprep.subr.bf16.mxu0 %v5180
    %6015 = vmatpush1.bf16.msra.mxu0 %v5179
    %6016 = vmatprep.subr.bf16.mxu0 %v5187
    %6017 = vmatpush1.bf16.msra.mxu0 %v5186
    %6018 = vmatprep.subr.bf16.mxu0 %v5194
    %6019 = vmatpush1.bf16.msra.mxu0 %v5193
    %6020 = vmatprep.subr.bf16.mxu0 %v5201
    %6021 = vmatpush1.bf16.msra.mxu0 %v5200
    %6022 = vmatprep.subr.bf16.mxu0 %v5208
    %6023 = vmatpush1.bf16.msra.mxu0 %v5207
    %6024 = vmatprep.subr.bf16.mxu0 %v5215
    %6025 = vmatpush1.bf16.msra.mxu0 %v5214
    %6026 = vmatprep.subr.bf16.mxu0 %v5222
    %6027 = vmatpush1.bf16.msra.mxu0 %v5221
    %6028 = vmatprep.subr.bf16.mxu0 %v5229
    %6029 = vmatpush1.bf16.msra.mxu0 %v5228
    %6030 = vmatprep.subr.bf16.mxu0 %v5236
    %6031 = vmatpush1.bf16.msra.mxu0 %v5235
    %6032 = vmatprep.subr.bf16.mxu0 %v5243
    %6033 = vmatpush1.bf16.msra.mxu0 %v5242
    %6034 = vmatprep.subr.bf16.mxu0 %v5250
    %6035 = vmatpush1.bf16.msra.mxu0 %v5249
    %6036 = vmatprep.subr.bf16.mxu0 %v5257
    %6037 = vmatpush1.bf16.msra.mxu0 %v5256
    %6038 = vmatprep.subr.bf16.mxu0 %v5264
    %6039 = vmatpush1.bf16.msra.mxu0 %v5263
    %6040 = vmatprep.subr.bf16.mxu0 %v5271
    %6041 = vmatpush1.bf16.msra.mxu0 %v5270
    %6042 = vmatprep.mubr.bf16.mxu0 %v2869
    %6043 = vmatmul.mubr.bf16.gmra.mrb[0].mxu0 %v2868
    %v6044 = vpop.f32.mrb[0].mxu0
    %v6045 = vadd.f32 %v6004, %v6044
    %v6046 = vpop.f32.mrb[0].mxu0
    %v6047 = vadd.f32 %v6006, %v6046
    %v6048 = vpop.f32.mrb[0].mxu0
    %v6049 = vpop.f32.mrb[0].mxu0
    %6050 = vdwg.mxu0
    %6051 = vmatprep.subr.bf16.mxu0 %v4832
    %6052 = vmatpush1.bf16.msra.mxu0 %v4831
    %6053 = vmatprep.subr.bf16.mxu0 %v4839
    %6054 = vmatpush1.bf16.msra.mxu0 %v4838
    %6055 = vmatprep.subr.bf16.mxu0 %v4846
    %6056 = vmatpush1.bf16.msra.mxu0 %v4845
    %6057 = vmatprep.subr.bf16.mxu0 %v4853
    %6058 = vmatpush1.bf16.msra.mxu0 %v4852
    %6059 = vmatprep.subr.bf16.mxu0 %v4860
    %6060 = vmatpush1.bf16.msra.mxu0 %v4859
    %6061 = vmatprep.subr.bf16.mxu0 %v4867
    %6062 = vmatpush1.bf16.msra.mxu0 %v4866
    %6063 = vmatprep.subr.bf16.mxu0 %v4874
    %6064 = vmatpush1.bf16.msra.mxu0 %v4873
    %6065 = vmatprep.subr.bf16.mxu0 %v4881
    %6066 = vmatpush1.bf16.msra.mxu0 %v4880
    %6067 = vmatprep.subr.bf16.mxu0 %v4888
    %6068 = vmatpush1.bf16.msra.mxu0 %v4887
    %6069 = vmatprep.subr.bf16.mxu0 %v4895
    %6070 = vmatpush1.bf16.msra.mxu0 %v4894
    %6071 = vmatprep.subr.bf16.mxu0 %v4902
    %6072 = vmatpush1.bf16.msra.mxu0 %v4901
    %6073 = vmatprep.subr.bf16.mxu0 %v4909
    %6074 = vmatpush1.bf16.msra.mxu0 %v4908
    %6075 = vmatprep.subr.bf16.mxu0 %v4916
    %6076 = vmatpush1.bf16.msra.mxu0 %v4915
    %6077 = vmatprep.subr.bf16.mxu0 %v4923
    %6078 = vmatpush1.bf16.msra.mxu0 %v4922
    %6079 = vmatprep.subr.bf16.mxu0 %v4930
    %6080 = vmatpush1.bf16.msra.mxu0 %v4929
    %6081 = vmatprep.subr.bf16.mxu0 %v4937
    %6082 = vmatpush1.bf16.msra.mxu0 %v4936
    %6083 = vmatprep.mubr.bf16.mxu0 %v2863
    %6084 = vmatmul.mubr.bf16.gmra.mrb[0].mxu0 %v2862
    %v6085 = vpop.f32.mrb[0].mxu0
    %v6086 = vadd.f32 %v3403, %v6085
    %v6087 = vpop.f32.mrb[0].mxu0
    %v6088 = vadd.f32 %v3407, %v6087
    %v6089 = vpop.f32.mrb[0].mxu0
    %v6090 = vpop.f32.mrb[0].mxu0
    %6091 = vdwg.mxu0
    %6092 = vmatprep.subr.bf16.mxu0 %v4944
    %6093 = vmatpush1.bf16.msra.mxu0 %v4943
    %6094 = vmatprep.subr.bf16.mxu0 %v4951
    %6095 = vmatpush1.bf16.msra.mxu0 %v4950
    %6096 = vmatprep.subr.bf16.mxu0 %v4958
    %6097 = vmatpush1.bf16.msra.mxu0 %v4957
    %6098 = vmatprep.subr.bf16.mxu0 %v4965
    %6099 = vmatpush1.bf16.msra.mxu0 %v4964
    %6100 = vmatprep.subr.bf16.mxu0 %v4972
    %6101 = vmatpush1.bf16.msra.mxu0 %v4971
    %6102 = vmatprep.subr.bf16.mxu0 %v4979
    %6103 = vmatpush1.bf16.msra.mxu0 %v4978
    %6104 = vmatprep.subr.bf16.mxu0 %v4986
    %6105 = vmatpush1.bf16.msra.mxu0 %v4985
    %6106 = vmatprep.subr.bf16.mxu0 %v4993
    %6107 = vmatpush1.bf16.msra.mxu0 %v4992
    %6108 = vmatprep.subr.bf16.mxu0 %v5000
    %6109 = vmatpush1.bf16.msra.mxu0 %v4999
    %6110 = vmatprep.subr.bf16.mxu0 %v5007
    %6111 = vmatpush1.bf16.msra.mxu0 %v5006
    %6112 = vmatprep.subr.bf16.mxu0 %v5014
    %6113 = vmatpush1.bf16.msra.mxu0 %v5013
    %6114 = vmatprep.subr.bf16.mxu0 %v5021
    %6115 = vmatpush1.bf16.msra.mxu0 %v5020
    %6116 = vmatprep.subr.bf16.mxu0 %v5028
    %6117 = vmatpush1.bf16.msra.mxu0 %v5027
    %6118 = vmatprep.subr.bf16.mxu0 %v5035
    %6119 = vmatpush1.bf16.msra.mxu0 %v5034
    %6120 = vmatprep.subr.bf16.mxu0 %v5042
    %6121 = vmatpush1.bf16.msra.mxu0 %v5041
    %6122 = vmatprep.subr.bf16.mxu0 %v5049
    %6123 = vmatpush1.bf16.msra.mxu0 %v5048
    %6124 = vmatprep.mubr.bf16.mxu0 %v2865
    %6125 = vmatmul.mubr.bf16.gmra.mrb[0].mxu0 %v2864
    %v6126 = vpop.f32.mrb[0].mxu0
    %v6127 = vadd.f32 %v6086, %v6126
    %v6128 = vpop.f32.mrb[0].mxu0
    %v6129 = vadd.f32 %v6088, %v6128
    %v6130 = vpop.f32.mrb[0].mxu0
    %v6131 = vpop.f32.mrb[0].mxu0
    %6132 = vdwg.mxu0
    %6133 = vmatprep.subr.bf16.mxu0 %v5056
    %6134 = vmatpush1.bf16.msra.mxu0 %v5055
    %6135 = vmatprep.subr.bf16.mxu0 %v5063
    %6136 = vmatpush1.bf16.msra.mxu0 %v5062
    %6137 = vmatprep.subr.bf16.mxu0 %v5070
    %6138 = vmatpush1.bf16.msra.mxu0 %v5069
    %6139 = vmatprep.subr.bf16.mxu0 %v5077
    %6140 = vmatpush1.bf16.msra.mxu0 %v5076
    %6141 = vmatprep.subr.bf16.mxu0 %v5084
    %6142 = vmatpush1.bf16.msra.mxu0 %v5083
    %6143 = vmatprep.subr.bf16.mxu0 %v5091
    %6144 = vmatpush1.bf16.msra.mxu0 %v5090
    %6145 = vmatprep.subr.bf16.mxu0 %v5098
    %6146 = vmatpush1.bf16.msra.mxu0 %v5097
    %6147 = vmatprep.subr.bf16.mxu0 %v5105
    %6148 = vmatpush1.bf16.msra.mxu0 %v5104
    %6149 = vmatprep.subr.bf16.mxu0 %v5112
    %6150 = vmatpush1.bf16.msra.mxu0 %v5111
    %6151 = vmatprep.subr.bf16.mxu0 %v5119
    %6152 = vmatpush1.bf16.msra.mxu0 %v5118
    %6153 = vmatprep.subr.bf16.mxu0 %v5126
    %6154 = vmatpush1.bf16.msra.mxu0 %v5125
    %6155 = vmatprep.subr.bf16.mxu0 %v5133
    %6156 = vmatpush1.bf16.msra.mxu0 %v5132
    %6157 = vmatprep.subr.bf16.mxu0 %v5140
    %6158 = vmatpush1.bf16.msra.mxu0 %v5139
    %6159 = vmatprep.subr.bf16.mxu0 %v5147
    %6160 = vmatpush1.bf16.msra.mxu0 %v5146
    %6161 = vmatprep.subr.bf16.mxu0 %v5154
    %6162 = vmatpush1.bf16.msra.mxu0 %v5153
    %6163 = vmatprep.subr.bf16.mxu0 %v5161
    %6164 = vmatpush1.bf16.msra.mxu0 %v5160
    %6165 = vmatprep.mubr.bf16.mxu0 %v2867
    %6166 = vmatmul.mubr.bf16.gmra.mrb[0].mxu0 %v2866
    %v6167 = vpop.f32.mrb[0].mxu0
    %v6168 = vadd.f32 %v6127, %v6167
    %v6169 = vpop.f32.mrb[0].mxu0
    %v6170 = vadd.f32 %v6129, %v6169
    %v6171 = vpop.f32.mrb[0].mxu0
    %v6172 = vpop.f32.mrb[0].mxu0
    %6173 = vdwg.mxu0
    %6174 = vmatprep.subr.bf16.mxu0 %v5168
    %6175 = vmatpush1.bf16.msra.mxu0 %v5167
    %6176 = vmatprep.subr.bf16.mxu0 %v5175
    %6177 = vmatpush1.bf16.msra.mxu0 %v5174
    %6178 = vmatprep.subr.bf16.mxu0 %v5182
    %6179 = vmatpush1.bf16.msra.mxu0 %v5181
    %6180 = vmatprep.subr.bf16.mxu0 %v5189
    %6181 = vmatpush1.bf16.msra.mxu0 %v5188
    %6182 = vmatprep.subr.bf16.mxu0 %v5196
    %6183 = vmatpush1.bf16.msra.mxu0 %v5195
    %6184 = vmatprep.subr.bf16.mxu0 %v5203
    %6185 = vmatpush1.bf16.msra.mxu0 %v5202
    %6186 = vmatprep.subr.bf16.mxu0 %v5210
    %6187 = vmatpush1.bf16.msra.mxu0 %v5209
    %6188 = vmatprep.subr.bf16.mxu0 %v5217
    %6189 = vmatpush1.bf16.msra.mxu0 %v5216
    %6190 = vmatprep.subr.bf16.mxu0 %v5224
    %6191 = vmatpush1.bf16.msra.mxu0 %v5223
    %6192 = vmatprep.subr.bf16.mxu0 %v5231
    %6193 = vmatpush1.bf16.msra.mxu0 %v5230
    %6194 = vmatprep.subr.bf16.mxu0 %v5238
    %6195 = vmatpush1.bf16.msra.mxu0 %v5237
    %6196 = vmatprep.subr.bf16.mxu0 %v5245
    %6197 = vmatpush1.bf16.msra.mxu0 %v5244
    %6198 = vmatprep.subr.bf16.mxu0 %v5252
    %6199 = vmatpush1.bf16.msra.mxu0 %v5251
    %6200 = vmatprep.subr.bf16.mxu0 %v5259
    %6201 = vmatpush1.bf16.msra.mxu0 %v5258
    %6202 = vmatprep.subr.bf16.mxu0 %v5266
    %6203 = vmatpush1.bf16.msra.mxu0 %v5265
    %6204 = vmatprep.subr.bf16.mxu0 %v5273
    %6205 = vmatpush1.bf16.msra.mxu0 %v5272
    %6206 = vmatprep.mubr.bf16.mxu0 %v2869
    %6207 = vmatmul.mubr.bf16.gmra.mrb[0].mxu0 %v2868
    %v6208 = vpop.f32.mrb[0].mxu0
    %v6209 = vadd.f32 %v6168, %v6208
    %v6210 = vpop.f32.mrb[0].mxu0
    %v6211 = vadd.f32 %v6170, %v6210
    %v6212 = vpop.f32.mrb[0].mxu0
    %v6213 = vpop.f32.mrb[0].mxu0
    %6214 = vdwg.mxu0
    %6215 = vmatprep.subr.bf16.mxu0 0
    %6216 = vmatpush1.bf16.msra.mxu0 %v4833
    %6217 = vmatprep.subr.bf16.mxu0 0
    %6218 = vmatpush1.bf16.msra.mxu0 %v4840
    %6219 = vmatprep.subr.bf16.mxu0 0
    %6220 = vmatpush1.bf16.msra.mxu0 %v4847
    %6221 = vmatprep.subr.bf16.mxu0 0
    %6222 = vmatpush1.bf16.msra.mxu0 %v4854
    %6223 = vmatprep.subr.bf16.mxu0 0
    %6224 = vmatpush1.bf16.msra.mxu0 %v4861
    %6225 = vmatprep.subr.bf16.mxu0 0
    %6226 = vmatpush1.bf16.msra.mxu0 %v4868
    %6227 = vmatprep.subr.bf16.mxu0 0
    %6228 = vmatpush1.bf16.msra.mxu0 %v4875
    %6229 = vmatprep.subr.bf16.mxu0 0
    %6230 = vmatpush1.bf16.msra.mxu0 %v4882
    %6231 = vmatprep.subr.bf16.mxu0 0
    %6232 = vmatpush1.bf16.msra.mxu0 %v4889
    %6233 = vmatprep.subr.bf16.mxu0 0
    %6234 = vmatpush1.bf16.msra.mxu0 %v4896
    %6235 = vmatprep.subr.bf16.mxu0 0
    %6236 = vmatpush1.bf16.msra.mxu0 %v4903
    %6237 = vmatprep.subr.bf16.mxu0 0
    %6238 = vmatpush1.bf16.msra.mxu0 %v4910
    %6239 = vmatprep.subr.bf16.mxu0 0
    %6240 = vmatpush1.bf16.msra.mxu0 %v4917
    %6241 = vmatprep.subr.bf16.mxu0 0
    %6242 = vmatpush1.bf16.msra.mxu0 %v4924
    %6243 = vmatprep.subr.bf16.mxu0 0
    %6244 = vmatpush1.bf16.msra.mxu0 %v4931
    %6245 = vmatprep.subr.bf16.mxu0 0
    %6246 = vmatpush1.bf16.msra.mxu0 %v4938
    %6247 = vmatprep.mubr.bf16.mxu0 %v2863
    %6248 = vmatmul.mubr.bf16.gmra.mrb[0].mxu0 %v2862
    %v6249 = vpop.f32.mrb[0].mxu0
    %v6250 = vadd.f32 %v3411, %v6249
    %v6251 = vpop.f32.mrb[0].mxu0
    %v6252 = vpop.f32.mrb[0].mxu0
    %v6253 = vpop.f32.mrb[0].mxu0
    %6254 = vdwg.mxu0
    %6255 = vmatprep.subr.bf16.mxu0 0
    %6256 = vmatpush1.bf16.msra.mxu0 %v4945
    %6257 = vmatprep.subr.bf16.mxu0 0
    %6258 = vmatpush1.bf16.msra.mxu0 %v4952
    %6259 = vmatprep.subr.bf16.mxu0 0
    %6260 = vmatpush1.bf16.msra.mxu0 %v4959
    %6261 = vmatprep.subr.bf16.mxu0 0
    %6262 = vmatpush1.bf16.msra.mxu0 %v4966
    %6263 = vmatprep.subr.bf16.mxu0 0
    %6264 = vmatpush1.bf16.msra.mxu0 %v4973
    %6265 = vmatprep.subr.bf16.mxu0 0
    %6266 = vmatpush1.bf16.msra.mxu0 %v4980
    %6267 = vmatprep.subr.bf16.mxu0 0
    %6268 = vmatpush1.bf16.msra.mxu0 %v4987
    %6269 = vmatprep.subr.bf16.mxu0 0
    %6270 = vmatpush1.bf16.msra.mxu0 %v4994
    %6271 = vmatprep.subr.bf16.mxu0 0
    %6272 = vmatpush1.bf16.msra.mxu0 %v5001
    %6273 = vmatprep.subr.bf16.mxu0 0
    %6274 = vmatpush1.bf16.msra.mxu0 %v5008
    %6275 = vmatprep.subr.bf16.mxu0 0
    %6276 = vmatpush1.bf16.msra.mxu0 %v5015
    %6277 = vmatprep.subr.bf16.mxu0 0
    %6278 = vmatpush1.bf16.msra.mxu0 %v5022
    %6279 = vmatprep.subr.bf16.mxu0 0
    %6280 = vmatpush1.bf16.msra.mxu0 %v5029
    %6281 = vmatprep.subr.bf16.mxu0 0
    %6282 = vmatpush1.bf16.msra.mxu0 %v5036
    %6283 = vmatprep.subr.bf16.mxu0 0
    %6284 = vmatpush1.bf16.msra.mxu0 %v5043
    %6285 = vmatprep.subr.bf16.mxu0 0
    %6286 = vmatpush1.bf16.msra.mxu0 %v5050
    %6287 = vmatprep.mubr.bf16.mxu0 %v2865
    %6288 = vmatmul.mubr.bf16.gmra.mrb[0].mxu0 %v2864
    %v6289 = vpop.f32.mrb[0].mxu0
    %v6290 = vadd.f32 %v6250, %v6289
    %v6291 = vpop.f32.mrb[0].mxu0
    %v6292 = vpop.f32.mrb[0].mxu0
    %v6293 = vpop.f32.mrb[0].mxu0
    %6294 = vdwg.mxu0
    %6295 = vmatprep.subr.bf16.mxu0 0
    %6296 = vmatpush1.bf16.msra.mxu0 %v5057
    %6297 = vmatprep.subr.bf16.mxu0 0
    %6298 = vmatpush1.bf16.msra.mxu0 %v5064
    %6299 = vmatprep.subr.bf16.mxu0 0
    %6300 = vmatpush1.bf16.msra.mxu0 %v5071
    %6301 = vmatprep.subr.bf16.mxu0 0
    %6302 = vmatpush1.bf16.msra.mxu0 %v5078
    %6303 = vmatprep.subr.bf16.mxu0 0
    %6304 = vmatpush1.bf16.msra.mxu0 %v5085
    %6305 = vmatprep.subr.bf16.mxu0 0
    %6306 = vmatpush1.bf16.msra.mxu0 %v5092
    %6307 = vmatprep.subr.bf16.mxu0 0
    %6308 = vmatpush1.bf16.msra.mxu0 %v5099
    %6309 = vmatprep.subr.bf16.mxu0 0
    %6310 = vmatpush1.bf16.msra.mxu0 %v5106
    %6311 = vmatprep.subr.bf16.mxu0 0
    %6312 = vmatpush1.bf16.msra.mxu0 %v5113
    %6313 = vmatprep.subr.bf16.mxu0 0
    %6314 = vmatpush1.bf16.msra.mxu0 %v5120
    %6315 = vmatprep.subr.bf16.mxu0 0
    %6316 = vmatpush1.bf16.msra.mxu0 %v5127
    %6317 = vmatprep.subr.bf16.mxu0 0
    %6318 = vmatpush1.bf16.msra.mxu0 %v5134
    %6319 = vmatprep.subr.bf16.mxu0 0
    %6320 = vmatpush1.bf16.msra.mxu0 %v5141
    %6321 = vmatprep.subr.bf16.mxu0 0
    %6322 = vmatpush1.bf16.msra.mxu0 %v5148
    %6323 = vmatprep.subr.bf16.mxu0 0
    %6324 = vmatpush1.bf16.msra.mxu0 %v5155
    %6325 = vmatprep.subr.bf16.mxu0 0
    %6326 = vmatpush1.bf16.msra.mxu0 %v5162
    %6327 = vmatprep.mubr.bf16.mxu0 %v2867
    %6328 = vmatmul.mubr.bf16.gmra.mrb[0].mxu0 %v2866
    %v6329 = vpop.f32.mrb[0].mxu0
    %v6330 = vadd.f32 %v6290, %v6329
    %v6331 = vpop.f32.mrb[0].mxu0
    %v6332 = vpop.f32.mrb[0].mxu0
    %v6333 = vpop.f32.mrb[0].mxu0
    %6334 = vdwg.mxu0
    %6335 = vmatprep.subr.bf16.mxu0 0
    %6336 = vmatpush1.bf16.msra.mxu0 %v5169
    %6337 = vmatprep.subr.bf16.mxu0 0
    %6338 = vmatpush1.bf16.msra.mxu0 %v5176
    %6339 = vmatprep.subr.bf16.mxu0 0
    %6340 = vmatpush1.bf16.msra.mxu0 %v5183
    %6341 = vmatprep.subr.bf16.mxu0 0
    %6342 = vmatpush1.bf16.msra.mxu0 %v5190
    %6343 = vmatprep.subr.bf16.mxu0 0
    %6344 = vmatpush1.bf16.msra.mxu0 %v5197
    %6345 = vmatprep.subr.bf16.mxu0 0
    %6346 = vmatpush1.bf16.msra.mxu0 %v5204
    %6347 = vmatprep.subr.bf16.mxu0 0
    %6348 = vmatpush1.bf16.msra.mxu0 %v5211
    %6349 = vmatprep.subr.bf16.mxu0 0
    %6350 = vmatpush1.bf16.msra.mxu0 %v5218
    %6351 = vmatprep.subr.bf16.mxu0 0
    %6352 = vmatpush1.bf16.msra.mxu0 %v5225
    %6353 = vmatprep.subr.bf16.mxu0 0
    %6354 = vmatpush1.bf16.msra.mxu0 %v5232
    %6355 = vmatprep.subr.bf16.mxu0 0
    %6356 = vmatpush1.bf16.msra.mxu0 %v5239
    %6357 = vmatprep.subr.bf16.mxu0 0
    %6358 = vmatpush1.bf16.msra.mxu0 %v5246
    %6359 = vmatprep.subr.bf16.mxu0 0
    %6360 = vmatpush1.bf16.msra.mxu0 %v5253
    %6361 = vmatprep.subr.bf16.mxu0 0
    %6362 = vmatpush1.bf16.msra.mxu0 %v5260
    %6363 = vmatprep.subr.bf16.mxu0 0
    %6364 = vmatpush1.bf16.msra.mxu0 %v5267
    %6365 = vmatprep.subr.bf16.mxu0 0
    %6366 = vmatpush1.bf16.msra.mxu0 %v5274
    %6367 = vmatprep.mubr.bf16.mxu0 %v2869
    %6368 = vmatmul.mubr.bf16.gmra.mrb[0].mxu0 %v2868
    %v6369 = vpop.f32.mrb[0].mxu0
    %v6370 = vadd.f32 %v6330, %v6369
    %v6371 = vpop.f32.mrb[0].mxu0
    %v6372 = vpop.f32.mrb[0].mxu0
    %v6373 = vpop.f32.mrb[0].mxu0
    %6374 = vdwg.mxu0
    %v6375 = vtanh.pop %v5881
    %v6376 = vtanh.pop %v5883
    %v6377 = vtanh.pop %v6045
    %v6378 = vtanh.pop %v6047
    %v6379 = vtanh.pop %v6209
    %v6380 = vtanh.pop %v6211
    %v6381 = vtanh.pop %v6370
    %6382 = vst [vmem:[#allocation17] sm:$0xff] %v6375
    %6383 = vst [vmem:[#allocation17 + $0x8] sm:$0xff] %v6376
    %6384 = vst [vmem:[#allocation17 + $0x10] sm:$0xff] %v6377
    %6385 = vst [vmem:[#allocation17 + $0x18] sm:$0xff] %v6378
    %6386 = vst [vmem:[#allocation17 + $0x20] sm:$0xff] %v6379
    %6387 = vst [vmem:[#allocation17 + $0x28] sm:$0xff] %v6380
    %6388 = vst [vmem:[#allocation17 + $0x30] sm:$0xff] %v6381
    // Predicated region
    $region74: #{tpu_custom_call.1} parent=1 // pred_check
      _
    $region75: #{tpu_custom_call.1} parent=1 // pred_check_branch
      %6390 = sbr.rel (0) target = $region77
    $region76: #{tpu_custom_call.1} parent=1 // pred_region
      %s6392 = ssub.s32 896, 896
      %6393 = vsyncadd [#allocation4], %s6392
      %s6395 = sshll.u32 [#allocation17], 4
      %s6396 = int_to_ptr.vmem [resolvable:$true] %s6395
      %6398 = dma.vmem_to_hbm [thread:$0]  %s6396, 896, %s9, [#allocation4]
    $region77: #{tpu_custom_call.1} parent=1 // pred_fallthru
      _
    // Predicated region
    $region78: #{tpu_custom_call.1} parent=1 // pred_check
      _
    $region79: #{tpu_custom_call.1} parent=1 // pred_check_branch
      %6400 = sbr.rel (0) target = $region81
    $region80: #{tpu_custom_call.1} parent=1 // pred_region
      %6401 = dma.done [#allocation4], 896
    $region81: #{tpu_custom_call.1} parent=1 // pred_fallthru
      _
    %6402 = vsyncpa [#allocation3], 1
    %6403 = vsyncpa [#allocation6], 1
    %6404 = vsyncpa [#allocation9], 1
    %6405 = vsyncpa [#allocation12], 1
    %6406 = vsyncpa [#allocation15], 1
    %6407 = vsyncpa [#allocation4], 1

// kernel: tpu_custom_call.1
$region0: #{tpu_custom_call.1}
  #allocation0 [shape = 'u32[]', space=smem, size = 0x4, offset = 0x4, fixed_abs, tag = 'smem constant byte address 0x4 - core index']
  #allocation1 [shape = 'u32[144,128]{1,0:T(1,128)}', space=vmem, size = 0x12000, scoped, tag = 'internal scratch']
  %s0 = inlined_call_operand.hbm [shape: bf16[8,128], index: 0, kind: input, shape index: {}]
  %s1 = inlined_call_operand.hbm [shape: bf16[128,256], index: 1, kind: input, shape index: {}]
  %s2 = inlined_call_operand.hbm [shape: bf16[1,256], index: 2, kind: input, shape index: {}]
  %s3 = inlined_call_operand.hbm [shape: bf16[256,512], index: 3, kind: input, shape index: {}]
  %s4 = inlined_call_operand.hbm [shape: bf16[1,512], index: 4, kind: input, shape index: {}]
  %s5 = inlined_call_operand.hbm [shape: bf16[512,1024], index: 5, kind: input, shape index: {}]
  %s6 = inlined_call_operand.hbm [shape: bf16[1,1024], index: 6, kind: input, shape index: {}]
  %s7 = inlined_call_operand.hbm [shape: bf16[1024,896], index: 7, kind: input, shape index: {}]
  %s8 = inlined_call_operand.hbm [shape: f32[1,896], index: 8, kind: input, shape index: {}]
  %s9 = inlined_call_operand.hbm [shape: f32[8,896], index: 9, kind: output, shape index: {}]
  %s10 = sld [smem:[#allocation0]]
  $region82: #{tpu_custom_call.1} parent=0
    _
  %s12 = ssub.s32 1, %s10
  %s13 = scalar_select 0, %s12, %s10
  $region1: #{tpu_custom_call.1} parent=0
    #allocation2 [shape = 'u8[2048]{0}', space=vmem, size = 0x800, scoped, tag = 'input window, operand 0, single buffered']
    #allocation3 [shape = 's32[1]{0}', space=sflag, size = 0x4, scoped, tag = 'scoped memory for tpu_custom_call.1']
    #allocation4 [shape = 's32[1]{0}', space=sflag, size = 0x4, scoped, tag = 'scoped memory for tpu_custom_call.1']
    #allocation5 [shape = 'u8[65536]{0}', space=vmem, size = 0x10000, scoped, tag = 'input window, operand 1, single buffered']
    #allocation6 [shape = 's32[1]{0}', space=sflag, size = 0x4, scoped, tag = 'scoped memory for tpu_custom_call.1']
    #allocation7 [shape = 'u8[1024]{0}', space=vmem, size = 0x400, scoped, tag = 'input window, operand 2, single buffered']
    #allocation8 [shape = 'u8[262144]{0}', space=vmem, size = 0x40000, scoped, tag = 'input window, operand 3, single buffered']
    #allocation9 [shape = 's32[1]{0}', space=sflag, size = 0x4, scoped, tag = 'scoped memory for tpu_custom_call.1']
    #allocation10 [shape = 'u8[2048]{0}', space=vmem, size = 0x800, scoped, tag = 'input window, operand 4, single buffered']
    #allocation11 [shape = 'u8[1048576]{0}', space=vmem, size = 0x100000, scoped, tag = 'input window, operand 5, single buffered']
    #allocation12 [shape = 's32[1]{0}', space=sflag, size = 0x4, scoped, tag = 'scoped memory for tpu_custom_call.1']
    #allocation13 [shape = 'u8[4096]{0}', space=vmem, size = 0x1000, scoped, tag = 'input window, operand 6, single buffered']
    #allocation14 [shape = 'u8[1835008]{0}', space=vmem, size = 0x1c0000, scoped, tag = 'input window, operand 7, single buffered']
    #allocation15 [shape = 's32[1]{0}', space=sflag, size = 0x4, scoped, tag = 'scoped memory for tpu_custom_call.1']
    #allocation16 [shape = 'u8[3584]{0}', space=vmem, size = 0x1000, scoped, tag = 'input window, operand 8, single buffered']
    #allocation17 [shape = 'u8[28672]{0}', space=vmem, size = 0x7000, scoped, tag = 'output window, operand 0, single buffered']
    %14 = vsyncpa [#allocation3], 0
    %15 = vsyncpa [#allocation6], 0
    %16 = vsyncpa [#allocation9], 0
    %17 = vsyncpa [#allocation12], 0
    %18 = vsyncpa [#allocation15], 0
    %19 = vsyncpa [#allocation4], 0
    // Predicated region
    $region2: #{tpu_custom_call.1} parent=1 // pred_check
      _
    $region3: #{tpu_custom_call.1} parent=1 // pred_check_branch
      %21 = sbr.rel (0) target = $region5
    $region4: #{tpu_custom_call.1} parent=1 // pred_region
      %s23 = ssub.s32 64, 64
      %24 = vsyncadd [#allocation3], %s23
      %s26 = sshll.u32 [#allocation2], 4
      %s27 = int_to_ptr.vmem [resolvable:$true] %s26
      %29 = dma.hbm_to_vmem [thread:$0]  %s0, 64, %s27, [#allocation3]
    $region5: #{tpu_custom_call.1} parent=1 // pred_fallthru
      _
    // Predicated region
    $region6: #{tpu_custom_call.1} parent=1 // pred_check
      _
    $region7: #{tpu_custom_call.1} parent=1 // pred_check_branch
      %31 = sbr.rel (0) target = $region9
    $region8: #{tpu_custom_call.1} parent=1 // pred_region
      %s33 = ssub.s32 2048, 2048
      %34 = vsyncadd [#allocation6], %s33
      %s35 = sshll.u32 [#allocation5], 4
      %s36 = int_to_ptr.vmem [resolvable:$true] %s35
      %41 = dma.hbm_to_vmem [thread:$0]  %s1, 2048, %s36, [#allocation6], 128, 128, 8
    $region9: #{tpu_custom_call.1} parent=1 // pred_fallthru
      _
    // Predicated region
    $region10: #{tpu_custom_call.1} parent=1 // pred_check
      _
    $region11: #{tpu_custom_call.1} parent=1 // pred_check_branch
      %43 = sbr.rel (0) target = $region13
    $region12: #{tpu_custom_call.1} parent=1 // pred_region
      %s45 = ssub.s32 32, 32
      %46 = vsyncadd [#allocation6], %s45
      %s48 = sshll.u32 [#allocation7], 4
      %s49 = int_to_ptr.vmem [resolvable:$true] %s48
      %51 = dma.hbm_to_vmem [thread:$0]  %s2, 32, %s49, [#allocation6]
    $region13: #{tpu_custom_call.1} parent=1 // pred_fallthru
      _
    // Predicated region
    $region14: #{tpu_custom_call.1} parent=1 // pred_check
      _
    $region15: #{tpu_custom_call.1} parent=1 // pred_check_branch
      %53 = sbr.rel (0) target = $region17
    $region16: #{tpu_custom_call.1} parent=1 // pred_region
      %s55 = ssub.s32 8192, 8192
      %56 = vsyncadd [#allocation9], %s55
      %s57 = sshll.u32 [#allocation8], 4
      %s58 = int_to_ptr.vmem [resolvable:$true] %s57
      %63 = dma.hbm_to_vmem [thread:$0]  %s3, 8192, %s58, [#allocation9], 256, 256, 16
    $region17: #{tpu_custom_call.1} parent=1 // pred_fallthru
      _
    // Predicated region
    $region18: #{tpu_custom_call.1} parent=1 // pred_check
      _
    $region19: #{tpu_custom_call.1} parent=1 // pred_check_branch
      %65 = sbr.rel (0) target = $region21
    $region20: #{tpu_custom_call.1} parent=1 // pred_region
      %s67 = ssub.s32 64, 64
      %68 = vsyncadd [#allocation9], %s67
      %s70 = sshll.u32 [#allocation10], 4
      %s71 = int_to_ptr.vmem [resolvable:$true] %s70
      %73 = dma.hbm_to_vmem [thread:$0]  %s4, 64, %s71, [#allocation9]
    $region21: #{tpu_custom_call.1} parent=1 // pred_fallthru
      _
    // Predicated region
    $region22: #{tpu_custom_call.1} parent=1 // pred_check
      _
    $region23: #{tpu_custom_call.1} parent=1 // pred_check_branch
      %75 = sbr.rel (0) target = $region25
    $region24: #{tpu_custom_call.1} parent=1 // pred_region
      %s77 = ssub.s32 32768, 32768
      %78 = vsyncadd [#allocation12], %s77
      %s79 = sshll.u32 [#allocation11], 4
      %s80 = int_to_ptr.vmem [resolvable:$true] %s79
      %85 = dma.hbm_to_vmem [thread:$0]  %s5, 32768, %s80, [#allocation12], 512, 512, 32
    $region25: #{tpu_custom_call.1} parent=1 // pred_fallthru
      _
    // Predicated region
    $region26: #{tpu_custom_call.1} parent=1 // pred_check
      _
    $region27: #{tpu_custom_call.1} parent=1 // pred_check_branch
      %87 = sbr.rel (0) target = $region29
    $region28: #{tpu_custom_call.1} parent=1 // pred_region
      %s89 = ssub.s32 128, 128
      %90 = vsyncadd [#allocation12], %s89
      %s92 = sshll.u32 [#allocation13], 4
      %s93 = int_to_ptr.vmem [resolvable:$true] %s92
      %95 = dma.hbm_to_vmem [thread:$0]  %s6, 128, %s93, [#allocation12]
    $region29: #{tpu_custom_call.1} parent=1 // pred_fallthru
      _
    // Predicated region
    $region30: #{tpu_custom_call.1} parent=1 // pred_check
      _
    $region31: #{tpu_custom_call.1} parent=1 // pred_check_branch
      %97 = sbr.rel (0) target = $region33
    $region32: #{tpu_custom_call.1} parent=1 // pred_region
      %s99 = ssub.s32 57344, 57344
      %100 = vsyncadd [#allocation15], %s99
      %s101 = sshll.u32 [#allocation14], 4
      %s102 = int_to_ptr.vmem [resolvable:$true] %s101
      %107 = dma.hbm_to_vmem [thread:$0]  %s7, 57344, %s102, [#allocation15], 448, 448, 28
    $region33: #{tpu_custom_call.1} parent=1 // pred_fallthru
      _
    // Predicated region
    $region34: #{tpu_custom_call.1} parent=1 // pred_check
      _
    $region35: #{tpu_custom_call.1} parent=1 // pred_check_branch
      %109 = sbr.rel (0) target = $region37
    $region36: #{tpu_custom_call.1} parent=1 // pred_region
      %s111 = ssub.s32 112, 112
      %112 = vsyncadd [#allocation15], %s111
      %s114 = sshll.u32 [#allocation16], 4
      %s115 = int_to_ptr.vmem [resolvable:$true] %s114
      %117 = dma.hbm_to_vmem [thread:$0]  %s8, 112, %s115, [#allocation15]
    $region37: #{tpu_custom_call.1} parent=1 // pred_fallthru
      _
    // Predicated region
    $region38: #{tpu_custom_call.1} parent=1 // pred_check
      _
    $region39: #{tpu_custom_call.1} parent=1 // pred_check_branch
      %119 = sbr.rel (0) target = $region41
    $region40: #{tpu_custom_call.1} parent=1 // pred_region
      %120 = dma.done [#allocation3], 64
    $region41: #{tpu_custom_call.1} parent=1 // pred_fallthru
      _
    // Predicated region
    $region42: #{tpu_custom_call.1} parent=1 // pred_check
      _
    $region43: #{tpu_custom_call.1} parent=1 // pred_check_branch
      %122 = sbr.rel (0) target = $region45
    $region44: #{tpu_custom_call.1} parent=1 // pred_region
      %123 = dma.done [#allocation6], 2048
    $region45: #{tpu_custom_call.1} parent=1 // pred_fallthru
      _
    // Predicated region
    $region46: #{tpu_custom_call.1} parent=1 // pred_check
      _
    $region47: #{tpu_custom_call.1} parent=1 // pred_check_branch
      %125 = sbr.rel (0) target = $region49
    $region48: #{tpu_custom_call.1} parent=1 // pred_region
      %126 = dma.done [#allocation6], 32
    $region49: #{tpu_custom_call.1} parent=1 // pred_fallthru
      _
    // Predicated region
    $region50: #{tpu_custom_call.1} parent=1 // pred_check
      _
    $region51: #{tpu_custom_call.1} parent=1 // pred_check_branch
      %128 = sbr.rel (0) target = $region53
    $region52: #{tpu_custom_call.1} parent=1 // pred_region
      %129 = dma.done [#allocation9], 8192
    $region53: #{tpu_custom_call.1} parent=1 // pred_fallthru
      _
    // Predicated region
    $region54: #{tpu_custom_call.1} parent=1 // pred_check
      _
    $region55: #{tpu_custom_call.1} parent=1 // pred_check_branch
      %131 = sbr.rel (0) target = $region57
    $region56: #{tpu_custom_call.1} parent=1 // pred_region
      %132 = dma.done [#allocation9], 64
    $region57: #{tpu_custom_call.1} parent=1 // pred_fallthru
      _
    // Predicated region
    $region58: #{tpu_custom_call.1} parent=1 // pred_check
      _
    $region59: #{tpu_custom_call.1} parent=1 // pred_check_branch
      %134 = sbr.rel (0) target = $region61
    $region60: #{tpu_custom_call.1} parent=1 // pred_region
      %135 = dma.done [#allocation12], 32768
    $region61: #{tpu_custom_call.1} parent=1 // pred_fallthru
      _
    // Predicated region
    $region62: #{tpu_custom_call.1} parent=1 // pred_check
      _
    $region63: #{tpu_custom_call.1} parent=1 // pred_check_branch
      %137 = sbr.rel (0) target = $region65
    $region64: #{tpu_custom_call.1} parent=1 // pred_region
      %138 = dma.done [#allocation12], 128
    $region65: #{tpu_custom_call.1} parent=1 // pred_fallthru
      _
    // Predicated region
    $region66: #{tpu_custom_call.1} parent=1 // pred_check
      _
    $region67: #{tpu_custom_call.1} parent=1 // pred_check_branch
      %140 = sbr.rel (0) target = $region69
    $region68: #{tpu_custom_call.1} parent=1 // pred_region
      %141 = dma.done [#allocation15], 57344
    $region69: #{tpu_custom_call.1} parent=1 // pred_fallthru
      _
    // Predicated region
    $region70: #{tpu_custom_call.1} parent=1 // pred_check
      _
    $region71: #{tpu_custom_call.1} parent=1 // pred_check_branch
      %143 = sbr.rel (0) target = $region73
    $region72: #{tpu_custom_call.1} parent=1 // pred_region
      %144 = dma.done [#allocation15], 112
    $region73: #{tpu_custom_call.1} parent=1 // pred_fallthru
      _
    %v147 = vld [vmem:[#allocation2] sm:$0xf]
    %v148 = vld [vmem:[#allocation5] sm:$0xff]
    %v149 = vld [vmem:[#allocation5 + $0x8] sm:$0xff]
    %v150 = vld [vmem:[#allocation5 + $0x10] sm:$0xff]
    %v151 = vld [vmem:[#allocation5 + $0x18] sm:$0xff]
    %v152 = vld [vmem:[#allocation5 + $0x20] sm:$0xff]
    %v153 = vld [vmem:[#allocation5 + $0x28] sm:$0xff]
    %v154 = vld [vmem:[#allocation5 + $0x30] sm:$0xff]
    %v155 = vld [vmem:[#allocation5 + $0x38] sm:$0xff]
    %v156 = vld [vmem:[#allocation5 + $0x40] sm:$0xff]
    %v157 = vld [vmem:[#allocation5 + $0x48] sm:$0xff]
    %v158 = vld [vmem:[#allocation5 + $0x50] sm:$0xff]
    %v159 = vld [vmem:[#allocation5 + $0x58] sm:$0xff]
    %v160 = vld [vmem:[#allocation5 + $0x60] sm:$0xff]
    %v161 = vld [vmem:[#allocation5 + $0x68] sm:$0xff]
    %v162 = vld [vmem:[#allocation5 + $0x70] sm:$0xff]
    %v163 = vld [vmem:[#allocation5 + $0x78] sm:$0xff]
    %v180 = vunpack.c.l.b16 %v148
    %v181 = vunpack.c.h.b16 %v148
    %v182 = vunpack.c.l.b16 %v149
    %v183 = vunpack.c.h.b16 %v149
    %v184 = vunpack.c.l.b16 %v150
    %v185 = vunpack.c.h.b16 %v150
    %v186 = vunpack.c.l.b16 %v151
    %v187 = vunpack.c.h.b16 %v151
    %v188 = vunpack.c.l.b16 %v152
    %v189 = vunpack.c.h.b16 %v152
    %v190 = vunpack.c.l.b16 %v153
    %v191 = vunpack.c.h.b16 %v153
    %v192 = vunpack.c.l.b16 %v154
    %v193 = vunpack.c.h.b16 %v154
    %v194 = vunpack.c.l.b16 %v155
    %v195 = vunpack.c.h.b16 %v155
    %v196 = vunpack.c.l.b16 %v156
    %v197 = vunpack.c.h.b16 %v156
    %v198 = vunpack.c.l.b16 %v157
    %v199 = vunpack.c.h.b16 %v157
    %v200 = vunpack.c.l.b16 %v158
    %v201 = vunpack.c.h.b16 %v158
    %v202 = vunpack.c.l.b16 %v159
    %v203 = vunpack.c.h.b16 %v159
    %v204 = vunpack.c.l.b16 %v160
    %v205 = vunpack.c.h.b16 %v160
    %v206 = vunpack.c.l.b16 %v161
    %v207 = vunpack.c.h.b16 %v161
    %v208 = vunpack.c.l.b16 %v162
    %v209 = vunpack.c.h.b16 %v162
    %v210 = vunpack.c.l.b16 %v163
    %v211 = vunpack.c.h.b16 %v163
    %v212 = vpack.c.b16 %v182, %v180
    %v213 = vpack.c.b16 %v183, %v181
    %v214 = vpack.c.b16 %v186, %v184
    %v215 = vpack.c.b16 %v187, %v185
    %v216 = vpack.c.b16 %v190, %v188
    %v217 = vpack.c.b16 %v191, %v189
    %v218 = vpack.c.b16 %v194, %v192
    %v219 = vpack.c.b16 %v195, %v193
    %v220 = vpack.c.b16 %v198, %v196
    %v221 = vpack.c.b16 %v199, %v197
    %v222 = vpack.c.b16 %v202, %v200
    %v223 = vpack.c.b16 %v203, %v201
    %v224 = vpack.c.b16 %v206, %v204
    %v225 = vpack.c.b16 %v207, %v205
    %v226 = vpack.c.b16 %v210, %v208
    %v227 = vpack.c.b16 %v211, %v209
    %244 = vmatprep.subr.bf16.mxu0 %v213
    %245 = vmatpush1.bf16.msra.mxu0 %v212
    %246 = vmatprep.subr.bf16.mxu0 %v215
    %247 = vmatpush1.bf16.msra.mxu0 %v214
    %248 = vmatprep.subr.bf16.mxu0 %v217
    %249 = vmatpush1.bf16.msra.mxu0 %v216
    %250 = vmatprep.subr.bf16.mxu0 %v219
    %251 = vmatpush1.bf16.msra.mxu0 %v218
    %252 = vmatprep.subr.bf16.mxu0 %v221
    %253 = vmatpush1.bf16.msra.mxu0 %v220
    %254 = vmatprep.subr.bf16.mxu0 %v223
    %255 = vmatpush1.bf16.msra.mxu0 %v222
    %256 = vmatprep.subr.bf16.mxu0 %v225
    %257 = vmatpush1.bf16.msra.mxu0 %v224
    %258 = vmatprep.subr.bf16.mxu0 %v227
    %259 = vmatpush1.bf16.msra.mxu0 %v226
    %260 = vmatprep.subr.bf16.mxu0 0
    %261 = vmatpush1.bf16.msra.mxu0 0
    %262 = vmatprep.subr.bf16.mxu0 0
    %263 = vmatpush1.bf16.msra.mxu0 0
    %264 = vmatprep.subr.bf16.mxu0 0
    %265 = vmatpush1.bf16.msra.mxu0 0
    %266 = vmatprep.subr.bf16.mxu0 0
    %267 = vmatpush1.bf16.msra.mxu0 0
    %268 = vmatprep.subr.bf16.mxu0 0
    %269 = vmatpush1.bf16.msra.mxu0 0
    %270 = vmatprep.subr.bf16.mxu0 0
    %271 = vmatpush1.bf16.msra.mxu0 0
    %272 = vmatprep.subr.bf16.mxu0 0
    %273 = vmatpush1.bf16.msra.mxu0 0
    %274 = vmatprep.subr.bf16.mxu0 0
    %275 = vmatpush1.bf16.msra.mxu0 0
    %276 = vmatprep.mubr.bf16.mxu0 0
    %277 = vmatmul.mubr.bf16.gmra.mrb[0].mxu0 %v147
    %v278 = vpop.f32.mrb[0].mxu0
    %v279 = vadd.f32 0.0, %v278
    %v280 = vpop.f32.mrb[0].mxu0
    %v281 = vadd.f32 0.0, %v280
    %v282 = vpop.f32.mrb[0].mxu0
    %v283 = vpop.f32.mrb[0].mxu0
    %284 = vdwg.mxu0
    %v285 = vld [vmem:[#allocation7] sm:$0x3]
    %v286 = vpack.c.bf16 %v279, %v279
    %v287 = vpack.c.bf16 %v281, %v281
    %v290 = vunpack.c.l.s4 1966171168
    %v291 = vunpack.c.0.s8 %v290
    %v292 = vlaneseq
    %v293 = vshrl.u32 %v292, 7
    %v294 = vsub.s32 %v291, %v293
    %v295 = vrot.slane %v285, %v294
    %v296 = vcombine.high %v295, %v295
    %v298 = vunpack.c.l.s4 1966171168
    %v299 = vunpack.c.0.s8 %v298
    %v300 = vlaneseq
    %v301 = vshrl.u32 %v300, 7
    %v302 = vsub.s32 %v299, %v301
    %v303 = vrot.slane %v295, %v302
    %v305 = vunpack.c.l.s4 1966171168
    %v306 = vunpack.c.0.s8 %v305
    %v307 = vlaneseq
    %v308 = vshrl.u32 %v307, 7
    %v309 = vsub.s32 %v306, %v308
    %v310 = vrot.slane %v296, %v309
    %v312 = vpack.i.b16 %v303, %v303
    %v314 = vlaneseq
    %v315 = vshrl.u32 %v314, 7
    %v316 = vsub.s32 0, %v315
    %v317 = vrot.slane %v312, %v316
    %v319 = vpack.i.b16 %v310, %v310
    %v321 = vlaneseq
    %v322 = vshrl.u32 %v321, 7
    %v323 = vsub.s32 0, %v322
    %v324 = vrot.slane %v319, %v323
    %v325 = vadd.bf16 %v286, %v317
    %v326 = vadd.bf16 %v287, %v324
    %v327 = vmul.bf16 %v325, 1045249613
    %v328 = vmul.bf16 %v326, 1045249613
    %v329 = vmax.bf16 %v325, %v327
    %v330 = vmax.bf16 %v326, %v328
    %v331 = vld [vmem:[#allocation8] sm:$0xff]
    %v332 = vld [vmem:[#allocation8 + $0x8] sm:$0xff]
    %v333 = vld [vmem:[#allocation8 + $0x10] sm:$0xff]
    %v334 = vld [vmem:[#allocation8 + $0x18] sm:$0xff]
    %v335 = vld [vmem:[#allocation8 + $0x20] sm:$0xff]
    %v336 = vld [vmem:[#allocation8 + $0x28] sm:$0xff]
    %v337 = vld [vmem:[#allocation8 + $0x30] sm:$0xff]
    %v338 = vld [vmem:[#allocation8 + $0x38] sm:$0xff]
    %v339 = vld [vmem:[#allocation8 + $0x40] sm:$0xff]
    %v340 = vld [vmem:[#allocation8 + $0x48] sm:$0xff]
    %v341 = vld [vmem:[#allocation8 + $0x50] sm:$0xff]
    %v342 = vld [vmem:[#allocation8 + $0x58] sm:$0xff]
    %v343 = vld [vmem:[#allocation8 + $0x60] sm:$0xff]
    %v344 = vld [vmem:[#allocation8 + $0x68] sm:$0xff]
    %v345 = vld [vmem:[#allocation8 + $0x70] sm:$0xff]
    %v346 = vld [vmem:[#allocation8 + $0x78] sm:$0xff]
    %v347 = vld [vmem:[#allocation8 + $0x80] sm:$0xff]
    %v348 = vld [vmem:[#allocation8 + $0x88] sm:$0xff]
    %v349 = vld [vmem:[#allocation8 + $0x90] sm:$0xff]
    %v350 = vld [vmem:[#allocation8 + $0x98] sm:$0xff]
    %v351 = vld [vmem:[#allocation8 + $0xa0] sm:$0xff]
    %v352 = vld [vmem:[#allocation8 + $0xa8] sm:$0xff]
    %v353 = vld [vmem:[#allocation8 + $0xb0] sm:$0xff]
    %v354 = vld [vmem:[#allocation8 + $0xb8] sm:$0xff]
    %v355 = vld [vmem:[#allocation8 + $0xc0] sm:$0xff]
    %v356 = vld [vmem:[#allocation8 + $0xc8] sm:$0xff]
    %v357 = vld [vmem:[#allocation8 + $0xd0] sm:$0xff]
    %v358 = vld [vmem:[#allocation8 + $0xd8] sm:$0xff]
    %v359 = vld [vmem:[#allocation8 + $0xe0] sm:$0xff]
    %v360 = vld [vmem:[#allocation8 + $0xe8] sm:$0xff]
    %v361 = vld [vmem:[#allocation8 + $0xf0] sm:$0xff]
    %v362 = vld [vmem:[#allocation8 + $0xf8] sm:$0xff]
    %v363 = vld [vmem:[#allocation8 + $0x100] sm:$0xff]
    %v364 = vld [vmem:[#allocation8 + $0x108] sm:$0xff]
    %v365 = vld [vmem:[#allocation8 + $0x110] sm:$0xff]
    %v366 = vld [vmem:[#allocation8 + $0x118] sm:$0xff]
    %v367 = vld [vmem:[#allocation8 + $0x120] sm:$0xff]
    %v368 = vld [vmem:[#allocation8 + $0x128] sm:$0xff]
    %v369 = vld [vmem:[#allocation8 + $0x130] sm:$0xff]
    %v370 = vld [vmem:[#allocation8 + $0x138] sm:$0xff]
    %v371 = vld [vmem:[#allocation8 + $0x140] sm:$0xff]
    %v372 = vld [vmem:[#allocation8 + $0x148] sm:$0xff]
    %v373 = vld [vmem:[#allocation8 + $0x150] sm:$0xff]
    %v374 = vld [vmem:[#allocation8 + $0x158] sm:$0xff]
    %v375 = vld [vmem:[#allocation8 + $0x160] sm:$0xff]
    %v376 = vld [vmem:[#allocation8 + $0x168] sm:$0xff]
    %v377 = vld [vmem:[#allocation8 + $0x170] sm:$0xff]
    %v378 = vld [vmem:[#allocation8 + $0x178] sm:$0xff]
    %v379 = vld [vmem:[#allocation8 + $0x180] sm:$0xff]
    %v380 = vld [vmem:[#allocation8 + $0x188] sm:$0xff]
    %v381 = vld [vmem:[#allocation8 + $0x190] sm:$0xff]
    %v382 = vld [vmem:[#allocation8 + $0x198] sm:$0xff]
    %v383 = vld [vmem:[#allocation8 + $0x1a0] sm:$0xff]
    %v384 = vld [vmem:[#allocation8 + $0x1a8] sm:$0xff]
    %v385 = vld [vmem:[#allocation8 + $0x1b0] sm:$0xff]
    %v386 = vld [vmem:[#allocation8 + $0x1b8] sm:$0xff]
    %v387 = vld [vmem:[#allocation8 + $0x1c0] sm:$0xff]
    %v388 = vld [vmem:[#allocation8 + $0x1c8] sm:$0xff]
    %v389 = vld [vmem:[#allocation8 + $0x1d0] sm:$0xff]
    %v390 = vld [vmem:[#allocation8 + $0x1d8] sm:$0xff]
    %v391 = vld [vmem:[#allocation8 + $0x1e0] sm:$0xff]
    %v392 = vld [vmem:[#allocation8 + $0x1e8] sm:$0xff]
    %v393 = vld [vmem:[#allocation8 + $0x1f0] sm:$0xff]
    %v394 = vld [vmem:[#allocation8 + $0x1f8] sm:$0xff]
    %v459 = vunpack.c.l.b16 %v331
    %v460 = vunpack.c.h.b16 %v331
    %v461 = vunpack.c.l.b16 %v332
    %v462 = vunpack.c.h.b16 %v332
    %v463 = vunpack.c.l.b16 %v333
    %v464 = vunpack.c.h.b16 %v333
    %v465 = vunpack.c.l.b16 %v334
    %v466 = vunpack.c.h.b16 %v334
    %v467 = vunpack.c.l.b16 %v335
    %v468 = vunpack.c.h.b16 %v335
    %v469 = vunpack.c.l.b16 %v336
    %v470 = vunpack.c.h.b16 %v336
    %v471 = vunpack.c.l.b16 %v337
    %v472 = vunpack.c.h.b16 %v337
    %v473 = vunpack.c.l.b16 %v338
    %v474 = vunpack.c.h.b16 %v338
    %v475 = vunpack.c.l.b16 %v339
    %v476 = vunpack.c.h.b16 %v339
    %v477 = vunpack.c.l.b16 %v340
    %v478 = vunpack.c.h.b16 %v340
    %v479 = vunpack.c.l.b16 %v341
    %v480 = vunpack.c.h.b16 %v341
    %v481 = vunpack.c.l.b16 %v342
    %v482 = vunpack.c.h.b16 %v342
    %v483 = vunpack.c.l.b16 %v343
    %v484 = vunpack.c.h.b16 %v343
    %v485 = vunpack.c.l.b16 %v344
    %v486 = vunpack.c.h.b16 %v344
    %v487 = vunpack.c.l.b16 %v345
    %v488 = vunpack.c.h.b16 %v345
    %v489 = vunpack.c.l.b16 %v346
    %v490 = vunpack.c.h.b16 %v346
    %v491 = vunpack.c.l.b16 %v347
    %v492 = vunpack.c.h.b16 %v347
    %v493 = vunpack.c.l.b16 %v348
    %v494 = vunpack.c.h.b16 %v348
    %v495 = vunpack.c.l.b16 %v349
    %v496 = vunpack.c.h.b16 %v349
    %v497 = vunpack.c.l.b16 %v350
    %v498 = vunpack.c.h.b16 %v350
    %v499 = vunpack.c.l.b16 %v351
    %v500 = vunpack.c.h.b16 %v351
    %v501 = vunpack.c.l.b16 %v352
    %v502 = vunpack.c.h.b16 %v352
    %v503 = vunpack.c.l.b16 %v353
    %v504 = vunpack.c.h.b16 %v353
    %v505 = vunpack.c.l.b16 %v354
    %v506 = vunpack.c.h.b16 %v354
    %v507 = vunpack.c.l.b16 %v355
    %v508 = vunpack.c.h.b16 %v355
    %v509 = vunpack.c.l.b16 %v356
    %v510 = vunpack.c.h.b16 %v356
    %v511 = vunpack.c.l.b16 %v357
    %v512 = vunpack.c.h.b16 %v357
    %v513 = vunpack.c.l.b16 %v358
    %v514 = vunpack.c.h.b16 %v358
    %v515 = vunpack.c.l.b16 %v359
    %v516 = vunpack.c.h.b16 %v359
    %v517 = vunpack.c.l.b16 %v360
    %v518 = vunpack.c.h.b16 %v360
    %v519 = vunpack.c.l.b16 %v361
    %v520 = vunpack.c.h.b16 %v361
    %v521 = vunpack.c.l.b16 %v362
    %v522 = vunpack.c.h.b16 %v362
    %v523 = vunpack.c.l.b16 %v363
    %v524 = vunpack.c.h.b16 %v363
    %v525 = vunpack.c.l.b16 %v364
    %v526 = vunpack.c.h.b16 %v364
    %v527 = vunpack.c.l.b16 %v365
    %v528 = vunpack.c.h.b16 %v365
    %v529 = vunpack.c.l.b16 %v366
    %v530 = vunpack.c.h.b16 %v366
    %v531 = vunpack.c.l.b16 %v367
    %v532 = vunpack.c.h.b16 %v367
    %v533 = vunpack.c.l.b16 %v368
    %v534 = vunpack.c.h.b16 %v368
    %v535 = vunpack.c.l.b16 %v369
    %v536 = vunpack.c.h.b16 %v369
    %v537 = vunpack.c.l.b16 %v370
    %v538 = vunpack.c.h.b16 %v370
    %v539 = vunpack.c.l.b16 %v371
    %v540 = vunpack.c.h.b16 %v371
    %v541 = vunpack.c.l.b16 %v372
    %v542 = vunpack.c.h.b16 %v372
    %v543 = vunpack.c.l.b16 %v373
    %v544 = vunpack.c.h.b16 %v373
    %v545 = vunpack.c.l.b16 %v374
    %v546 = vunpack.c.h.b16 %v374
    %v547 = vunpack.c.l.b16 %v375
    %v548 = vunpack.c.h.b16 %v375
    %v549 = vunpack.c.l.b16 %v376
    %v550 = vunpack.c.h.b16 %v376
    %v551 = vunpack.c.l.b16 %v377
    %v552 = vunpack.c.h.b16 %v377
    %v553 = vunpack.c.l.b16 %v378
    %v554 = vunpack.c.h.b16 %v378
    %v555 = vunpack.c.l.b16 %v379
    %v556 = vunpack.c.h.b16 %v379
    %v557 = vunpack.c.l.b16 %v380
    %v558 = vunpack.c.h.b16 %v380
    %v559 = vunpack.c.l.b16 %v381
    %v560 = vunpack.c.h.b16 %v381
    %v561 = vunpack.c.l.b16 %v382
    %v562 = vunpack.c.h.b16 %v382
    %v563 = vunpack.c.l.b16 %v383
    %v564 = vunpack.c.h.b16 %v383
    %v565 = vunpack.c.l.b16 %v384
    %v566 = vunpack.c.h.b16 %v384
    %v567 = vunpack.c.l.b16 %v385
    %v568 = vunpack.c.h.b16 %v385
    %v569 = vunpack.c.l.b16 %v386
    %v570 = vunpack.c.h.b16 %v386
    %v571 = vunpack.c.l.b16 %v387
    %v572 = vunpack.c.h.b16 %v387
    %v573 = vunpack.c.l.b16 %v388
    %v574 = vunpack.c.h.b16 %v388
    %v575 = vunpack.c.l.b16 %v389
    %v576 = vunpack.c.h.b16 %v389
    %v577 = vunpack.c.l.b16 %v390
    %v578 = vunpack.c.h.b16 %v390
    %v579 = vunpack.c.l.b16 %v391
    %v580 = vunpack.c.h.b16 %v391
    %v581 = vunpack.c.l.b16 %v392
    %v582 = vunpack.c.h.b16 %v392
    %v583 = vunpack.c.l.b16 %v393
    %v584 = vunpack.c.h.b16 %v393
    %v585 = vunpack.c.l.b16 %v394
    %v586 = vunpack.c.h.b16 %v394
    %v587 = vpack.c.b16 %v463, %v459
    %v588 = vpack.c.b16 %v464, %v460
    %v589 = vpack.c.b16 %v465, %v461
    %v590 = vpack.c.b16 %v466, %v462
    %v591 = vpack.c.b16 %v471, %v467
    %v592 = vpack.c.b16 %v472, %v468
    %v593 = vpack.c.b16 %v473, %v469
    %v594 = vpack.c.b16 %v474, %v470
    %v595 = vpack.c.b16 %v479, %v475
    %v596 = vpack.c.b16 %v480, %v476
    %v597 = vpack.c.b16 %v481, %v477
    %v598 = vpack.c.b16 %v482, %v478
    %v599 = vpack.c.b16 %v487, %v483
    %v600 = vpack.c.b16 %v488, %v484
    %v601 = vpack.c.b16 %v489, %v485
    %v602 = vpack.c.b16 %v490, %v486
    %v603 = vpack.c.b16 %v495, %v491
    %v604 = vpack.c.b16 %v496, %v492
    %v605 = vpack.c.b16 %v497, %v493
    %v606 = vpack.c.b16 %v498, %v494
    %v607 = vpack.c.b16 %v503, %v499
    %v608 = vpack.c.b16 %v504, %v500
    %v609 = vpack.c.b16 %v505, %v501
    %v610 = vpack.c.b16 %v506, %v502
    %v611 = vpack.c.b16 %v511, %v507
    %v612 = vpack.c.b16 %v512, %v508
    %v613 = vpack.c.b16 %v513, %v509
    %v614 = vpack.c.b16 %v514, %v510
    %v615 = vpack.c.b16 %v519, %v515
    %v616 = vpack.c.b16 %v520, %v516
    %v617 = vpack.c.b16 %v521, %v517
    %v618 = vpack.c.b16 %v522, %v518
    %v619 = vpack.c.b16 %v527, %v523
    %v620 = vpack.c.b16 %v528, %v524
    %v621 = vpack.c.b16 %v529, %v525
    %v622 = vpack.c.b16 %v530, %v526
    %v623 = vpack.c.b16 %v535, %v531
    %v624 = vpack.c.b16 %v536, %v532
    %v625 = vpack.c.b16 %v537, %v533
    %v626 = vpack.c.b16 %v538, %v534
    %v627 = vpack.c.b16 %v543, %v539
    %v628 = vpack.c.b16 %v544, %v540
    %v629 = vpack.c.b16 %v545, %v541
    %v630 = vpack.c.b16 %v546, %v542
    %v631 = vpack.c.b16 %v551, %v547
    %v632 = vpack.c.b16 %v552, %v548
    %v633 = vpack.c.b16 %v553, %v549
    %v634 = vpack.c.b16 %v554, %v550
    %v635 = vpack.c.b16 %v559, %v555
    %v636 = vpack.c.b16 %v560, %v556
    %v637 = vpack.c.b16 %v561, %v557
    %v638 = vpack.c.b16 %v562, %v558
    %v639 = vpack.c.b16 %v567, %v563
    %v640 = vpack.c.b16 %v568, %v564
    %v641 = vpack.c.b16 %v569, %v565
    %v642 = vpack.c.b16 %v570, %v566
    %v643 = vpack.c.b16 %v575, %v571
    %v644 = vpack.c.b16 %v576, %v572
    %v645 = vpack.c.b16 %v577, %v573
    %v646 = vpack.c.b16 %v578, %v574
    %v647 = vpack.c.b16 %v583, %v579
    %v648 = vpack.c.b16 %v584, %v580
    %v649 = vpack.c.b16 %v585, %v581
    %v650 = vpack.c.b16 %v586, %v582
    %715 = vmatprep.subr.bf16.mxu0 %v588
    %716 = vmatpush1.bf16.msra.mxu0 %v587
    %717 = vmatprep.subr.bf16.mxu0 %v592
    %718 = vmatpush1.bf16.msra.mxu0 %v591
    %719 = vmatprep.subr.bf16.mxu0 %v596
    %720 = vmatpush1.bf16.msra.mxu0 %v595
    %721 = vmatprep.subr.bf16.mxu0 %v600
    %722 = vmatpush1.bf16.msra.mxu0 %v599
    %723 = vmatprep.subr.bf16.mxu0 %v604
    %724 = vmatpush1.bf16.msra.mxu0 %v603
    %725 = vmatprep.subr.bf16.mxu0 %v608
    %726 = vmatpush1.bf16.msra.mxu0 %v607
    %727 = vmatprep.subr.bf16.mxu0 %v612
    %728 = vmatpush1.bf16.msra.mxu0 %v611
    %729 = vmatprep.subr.bf16.mxu0 %v616
    %730 = vmatpush1.bf16.msra.mxu0 %v615
    %731 = vmatprep.subr.bf16.mxu0 %v620
    %732 = vmatpush1.bf16.msra.mxu0 %v619
    %733 = vmatprep.subr.bf16.mxu0 %v624
    %734 = vmatpush1.bf16.msra.mxu0 %v623
    %735 = vmatprep.subr.bf16.mxu0 %v628
    %736 = vmatpush1.bf16.msra.mxu0 %v627
    %737 = vmatprep.subr.bf16.mxu0 %v632
    %738 = vmatpush1.bf16.msra.mxu0 %v631
    %739 = vmatprep.subr.bf16.mxu0 %v636
    %740 = vmatpush1.bf16.msra.mxu0 %v635
    %741 = vmatprep.subr.bf16.mxu0 %v640
    %742 = vmatpush1.bf16.msra.mxu0 %v639
    %743 = vmatprep.subr.bf16.mxu0 %v644
    %744 = vmatpush1.bf16.msra.mxu0 %v643
    %745 = vmatprep.subr.bf16.mxu0 %v648
    %746 = vmatpush1.bf16.msra.mxu0 %v647
    %747 = vmatprep.mubr.bf16.mxu0 %v330
    %748 = vmatmul.mubr.bf16.gmra.mrb[0].mxu0 %v329
    %v749 = vpop.f32.mrb[0].mxu0
    %v750 = vadd.f32 0.0, %v749
    %v751 = vpop.f32.mrb[0].mxu0
    %v752 = vadd.f32 0.0, %v751
    %v753 = vpop.f32.mrb[0].mxu0
    %v754 = vpop.f32.mrb[0].mxu0
    %755 = vdwg.mxu0
    %756 = vmatprep.subr.bf16.mxu0 %v590
    %757 = vmatpush1.bf16.msra.mxu0 %v589
    %758 = vmatprep.subr.bf16.mxu0 %v594
    %759 = vmatpush1.bf16.msra.mxu0 %v593
    %760 = vmatprep.subr.bf16.mxu0 %v598
    %761 = vmatpush1.bf16.msra.mxu0 %v597
    %762 = vmatprep.subr.bf16.mxu0 %v602
    %763 = vmatpush1.bf16.msra.mxu0 %v601
    %764 = vmatprep.subr.bf16.mxu0 %v606
    %765 = vmatpush1.bf16.msra.mxu0 %v605
    %766 = vmatprep.subr.bf16.mxu0 %v610
    %767 = vmatpush1.bf16.msra.mxu0 %v609
    %768 = vmatprep.subr.bf16.mxu0 %v614
    %769 = vmatpush1.bf16.msra.mxu0 %v613
    %770 = vmatprep.subr.bf16.mxu0 %v618
    %771 = vmatpush1.bf16.msra.mxu0 %v617
    %772 = vmatprep.subr.bf16.mxu0 %v622
    %773 = vmatpush1.bf16.msra.mxu0 %v621
    %774 = vmatprep.subr.bf16.mxu0 %v626
    %775 = vmatpush1.bf16.msra.mxu0 %v625
    %776 = vmatprep.subr.bf16.mxu0 %v630
    %777 = vmatpush1.bf16.msra.mxu0 %v629
    %778 = vmatprep.subr.bf16.mxu0 %v634
    %779 = vmatpush1.bf16.msra.mxu0 %v633
    %780 = vmatprep.subr.bf16.mxu0 %v638
    %781 = vmatpush1.bf16.msra.mxu0 %v637
    %782 = vmatprep.subr.bf16.mxu0 %v642
    %783 = vmatpush1.bf16.msra.mxu0 %v641
    %784 = vmatprep.subr.bf16.mxu0 %v646
    %785 = vmatpush1.bf16.msra.mxu0 %v645
    %786 = vmatprep.subr.bf16.mxu0 %v650
    %787 = vmatpush1.bf16.msra.mxu0 %v649
    %788 = vmatprep.mubr.bf16.mxu0 %v330
    %789 = vmatmul.mubr.bf16.gmra.mrb[0].mxu0 %v329
    %v790 = vpop.f32.mrb[0].mxu0
    %v791 = vadd.f32 0.0, %v790
    %v792 = vpop.f32.mrb[0].mxu0
    %v793 = vadd.f32 0.0, %v792
    %v794 = vpop.f32.mrb[0].mxu0
    %v795 = vpop.f32.mrb[0].mxu0
    %796 = vdwg.mxu0
    %v797 = vld [vmem:[#allocation10] sm:$0xf]
    %v798 = vpack.c.bf16 %v750, %v750
    %v799 = vpack.c.bf16 %v752, %v752
    %v800 = vpack.c.bf16 %v791, %v791
    %v801 = vpack.c.bf16 %v793, %v793
    %v804 = vunpack.c.l.s4 1966171168
    %v805 = vunpack.c.0.s8 %v804
    %v806 = vlaneseq
    %v807 = vshrl.u32 %v806, 7
    %v808 = vsub.s32 %v805, %v807
    %v809 = vrot.slane %v797, %v808
    %v810 = vcombine.high %v809, %v809
    %v812 = vunpack.c.l.s4 1966171168
    %v813 = vunpack.c.0.s8 %v812
    %v814 = vlaneseq
    %v815 = vshrl.u32 %v814, 7
    %v816 = vsub.s32 %v813, %v815
    %v817 = vrot.slane %v809, %v816
    %v819 = vunpack.c.l.s4 1966171168
    %v820 = vunpack.c.0.s8 %v819
    %v821 = vlaneseq
    %v822 = vshrl.u32 %v821, 7
    %v823 = vsub.s32 %v820, %v822
    %v824 = vrot.slane %v810, %v823
    %v825 = vcombine.high %v817, %v817
    %v826 = vcombine.high %v824, %v824
    %v828 = vpack.i.b16 %v817, %v817
    %v830 = vlaneseq
    %v831 = vshrl.u32 %v830, 7
    %v832 = vsub.s32 0, %v831
    %v833 = vrot.slane %v828, %v832
    %v835 = vpack.i.b16 %v824, %v824
    %v837 = vlaneseq
    %v838 = vshrl.u32 %v837, 7
    %v839 = vsub.s32 0, %v838
    %v840 = vrot.slane %v835, %v839
    %v842 = vpack.i.b16 %v825, %v825
    %v844 = vlaneseq
    %v845 = vshrl.u32 %v844, 7
    %v846 = vsub.s32 0, %v845
    %v847 = vrot.slane %v842, %v846
    %v849 = vpack.i.b16 %v826, %v826
    %v851 = vlaneseq
    %v852 = vshrl.u32 %v851, 7
    %v853 = vsub.s32 0, %v852
    %v854 = vrot.slane %v849, %v853
    %v855 = vadd.bf16 %v798, %v833
    %v856 = vadd.bf16 %v799, %v840
    %v857 = vadd.bf16 %v800, %v847
    %v858 = vadd.bf16 %v801, %v854
    %v859 = vmul.bf16 %v855, 1045249613
    %v860 = vmul.bf16 %v856, 1045249613
    %v861 = vmul.bf16 %v857, 1045249613
    %v862 = vmul.bf16 %v858, 1045249613
    %v863 = vmax.bf16 %v855, %v859
    %v864 = vmax.bf16 %v856, %v860
    %v865 = vmax.bf16 %v857, %v861
    %v866 = vmax.bf16 %v858, %v862
    %v867 = vld [vmem:[#allocation11] sm:$0xff]
    %v868 = vld [vmem:[#allocation11 + $0x8] sm:$0xff]
    %v869 = vld [vmem:[#allocation11 + $0x10] sm:$0xff]
    %v870 = vld [vmem:[#allocation11 + $0x18] sm:$0xff]
    %v871 = vld [vmem:[#allocation11 + $0x20] sm:$0xff]
    %v872 = vld [vmem:[#allocation11 + $0x28] sm:$0xff]
    %v873 = vld [vmem:[#allocation11 + $0x30] sm:$0xff]
    %v874 = vld [vmem:[#allocation11 + $0x38] sm:$0xff]
    %v875 = vld [vmem:[#allocation11 + $0x40] sm:$0xff]
    %v876 = vld [vmem:[#allocation11 + $0x48] sm:$0xff]
    %v877 = vld [vmem:[#allocation11 + $0x50] sm:$0xff]
    %v878 = vld [vmem:[#allocation11 + $0x58] sm:$0xff]
    %v879 = vld [vmem:[#allocation11 + $0x60] sm:$0xff]
    %v880 = vld [vmem:[#allocation11 + $0x68] sm:$0xff]
    %v881 = vld [vmem:[#allocation11 + $0x70] sm:$0xff]
    %v882 = vld [vmem:[#allocation11 + $0x78] sm:$0xff]
    %v883 = vld [vmem:[#allocation11 + $0x80] sm:$0xff]
    %v884 = vld [vmem:[#allocation11 + $0x88] sm:$0xff]
    %v885 = vld [vmem:[#allocation11 + $0x90] sm:$0xff]
    %v886 = vld [vmem:[#allocation11 + $0x98] sm:$0xff]
    %v887 = vld [vmem:[#allocation11 + $0xa0] sm:$0xff]
    %v888 = vld [vmem:[#allocation11 + $0xa8] sm:$0xff]
    %v889 = vld [vmem:[#allocation11 + $0xb0] sm:$0xff]
    %v890 = vld [vmem:[#allocation11 + $0xb8] sm:$0xff]
    %v891 = vld [vmem:[#allocation11 + $0xc0] sm:$0xff]
    %v892 = vld [vmem:[#allocation11 + $0xc8] sm:$0xff]
    %v893 = vld [vmem:[#allocation11 + $0xd0] sm:$0xff]
    %v894 = vld [vmem:[#allocation11 + $0xd8] sm:$0xff]
    %v895 = vld [vmem:[#allocation11 + $0xe0] sm:$0xff]
    %v896 = vld [vmem:[#allocation11 + $0xe8] sm:$0xff]
    %v897 = vld [vmem:[#allocation11 + $0xf0] sm:$0xff]
    %v898 = vld [vmem:[#allocation11 + $0xf8] sm:$0xff]
    %v899 = vld [vmem:[#allocation11 + $0x100] sm:$0xff]
    %v900 = vld [vmem:[#allocation11 + $0x108] sm:$0xff]
    %v901 = vld [vmem:[#allocation11 + $0x110] sm:$0xff]
    %v902 = vld [vmem:[#allocation11 + $0x118] sm:$0xff]
    %v903 = vld [vmem:[#allocation11 + $0x120] sm:$0xff]
    %v904 = vld [vmem:[#allocation11 + $0x128] sm:$0xff]
    %v905 = vld [vmem:[#allocation11 + $0x130] sm:$0xff]
    %v906 = vld [vmem:[#allocation11 + $0x138] sm:$0xff]
    %v907 = vld [vmem:[#allocation11 + $0x140] sm:$0xff]
    %v908 = vld [vmem:[#allocation11 + $0x148] sm:$0xff]
    %v909 = vld [vmem:[#allocation11 + $0x150] sm:$0xff]
    %v910 = vld [vmem:[#allocation11 + $0x158] sm:$0xff]
    %v911 = vld [vmem:[#allocation11 + $0x160] sm:$0xff]
    %v912 = vld [vmem:[#allocation11 + $0x168] sm:$0xff]
    %v913 = vld [vmem:[#allocation11 + $0x170] sm:$0xff]
    %v914 = vld [vmem:[#allocation11 + $0x178] sm:$0xff]
    %v915 = vld [vmem:[#allocation11 + $0x180] sm:$0xff]
    %v916 = vld [vmem:[#allocation11 + $0x188] sm:$0xff]
    %v917 = vld [vmem:[#allocation11 + $0x190] sm:$0xff]
    %v918 = vld [vmem:[#allocation11 + $0x198] sm:$0xff]
    %v919 = vld [vmem:[#allocation11 + $0x1a0] sm:$0xff]
    %v920 = vld [vmem:[#allocation11 + $0x1a8] sm:$0xff]
    %v921 = vld [vmem:[#allocation11 + $0x1b0] sm:$0xff]
    %v922 = vld [vmem:[#allocation11 + $0x1b8] sm:$0xff]
    %v923 = vld [vmem:[#allocation11 + $0x1c0] sm:$0xff]
    %v924 = vld [vmem:[#allocation11 + $0x1c8] sm:$0xff]
    %v925 = vld [vmem:[#allocation11 + $0x1d0] sm:$0xff]
    %v926 = vld [vmem:[#allocation11 + $0x1d8] sm:$0xff]
    %v927 = vld [vmem:[#allocation11 + $0x1e0] sm:$0xff]
    %v928 = vld [vmem:[#allocation11 + $0x1e8] sm:$0xff]
    %v929 = vld [vmem:[#allocation11 + $0x1f0] sm:$0xff]
    %v930 = vld [vmem:[#allocation11 + $0x1f8] sm:$0xff]
    %v931 = vld [vmem:[#allocation11 + $0x200] sm:$0xff]
    %v932 = vld [vmem:[#allocation11 + $0x208] sm:$0xff]
    %v933 = vld [vmem:[#allocation11 + $0x210] sm:$0xff]
    %v934 = vld [vmem:[#allocation11 + $0x218] sm:$0xff]
    %v935 = vld [vmem:[#allocation11 + $0x220] sm:$0xff]
    %v936 = vld [vmem:[#allocation11 + $0x228] sm:$0xff]
    %v937 = vld [vmem:[#allocation11 + $0x230] sm:$0xff]
    %v938 = vld [vmem:[#allocation11 + $0x238] sm:$0xff]
    %v939 = vld [vmem:[#allocation11 + $0x240] sm:$0xff]
    %v940 = vld [vmem:[#allocation11 + $0x248] sm:$0xff]
    %v941 = vld [vmem:[#allocation11 + $0x250] sm:$0xff]
    %v942 = vld [vmem:[#allocation11 + $0x258] sm:$0xff]
    %v943 = vld [vmem:[#allocation11 + $0x260] sm:$0xff]
    %v944 = vld [vmem:[#allocation11 + $0x268] sm:$0xff]
    %v945 = vld [vmem:[#allocation11 + $0x270] sm:$0xff]
    %v946 = vld [vmem:[#allocation11 + $0x278] sm:$0xff]
    %v947 = vld [vmem:[#allocation11 + $0x280] sm:$0xff]
    %v948 = vld [vmem:[#allocation11 + $0x288] sm:$0xff]
    %v949 = vld [vmem:[#allocation11 + $0x290] sm:$0xff]
    %v950 = vld [vmem:[#allocation11 + $0x298] sm:$0xff]
    %v951 = vld [vmem:[#allocation11 + $0x2a0] sm:$0xff]
    %v952 = vld [vmem:[#allocation11 + $0x2a8] sm:$0xff]
    %v953 = vld [vmem:[#allocation11 + $0x2b0] sm:$0xff]
    %v954 = vld [vmem:[#allocation11 + $0x2b8] sm:$0xff]
    %v955 = vld [vmem:[#allocation11 + $0x2c0] sm:$0xff]
    %v956 = vld [vmem:[#allocation11 + $0x2c8] sm:$0xff]
    %v957 = vld [vmem:[#allocation11 + $0x2d0] sm:$0xff]
    %v958 = vld [vmem:[#allocation11 + $0x2d8] sm:$0xff]
    %v959 = vld [vmem:[#allocation11 + $0x2e0] sm:$0xff]
    %v960 = vld [vmem:[#allocation11 + $0x2e8] sm:$0xff]
    %v961 = vld [vmem:[#allocation11 + $0x2f0] sm:$0xff]
    %v962 = vld [vmem:[#allocation11 + $0x2f8] sm:$0xff]
    %v963 = vld [vmem:[#allocation11 + $0x300] sm:$0xff]
    %v964 = vld [vmem:[#allocation11 + $0x308] sm:$0xff]
    %v965 = vld [vmem:[#allocation11 + $0x310] sm:$0xff]
    %v966 = vld [vmem:[#allocation11 + $0x318] sm:$0xff]
    %v967 = vld [vmem:[#allocation11 + $0x320] sm:$0xff]
    %v968 = vld [vmem:[#allocation11 + $0x328] sm:$0xff]
    %v969 = vld [vmem:[#allocation11 + $0x330] sm:$0xff]
    %v970 = vld [vmem:[#allocation11 + $0x338] sm:$0xff]
    %v971 = vld [vmem:[#allocation11 + $0x340] sm:$0xff]
    %v972 = vld [vmem:[#allocation11 + $0x348] sm:$0xff]
    %v973 = vld [vmem:[#allocation11 + $0x350] sm:$0xff]
    %v974 = vld [vmem:[#allocation11 + $0x358] sm:$0xff]
    %v975 = vld [vmem:[#allocation11 + $0x360] sm:$0xff]
    %v976 = vld [vmem:[#allocation11 + $0x368] sm:$0xff]
    %v977 = vld [vmem:[#allocation11 + $0x370] sm:$0xff]
    %v978 = vld [vmem:[#allocation11 + $0x378] sm:$0xff]
    %v979 = vld [vmem:[#allocation11 + $0x380] sm:$0xff]
    %v980 = vld [vmem:[#allocation11 + $0x388] sm:$0xff]
    %v981 = vld [vmem:[#allocation11 + $0x390] sm:$0xff]
    %v982 = vld [vmem:[#allocation11 + $0x398] sm:$0xff]
    %v983 = vld [vmem:[#allocation11 + $0x3a0] sm:$0xff]
    %v984 = vld [vmem:[#allocation11 + $0x3a8] sm:$0xff]
    %v985 = vld [vmem:[#allocation11 + $0x3b0] sm:$0xff]
    %v986 = vld [vmem:[#allocation11 + $0x3b8] sm:$0xff]
    %v987 = vld [vmem:[#allocation11 + $0x3c0] sm:$0xff]
    %v988 = vld [vmem:[#allocation11 + $0x3c8] sm:$0xff]
    %v989 = vld [vmem:[#allocation11 + $0x3d0] sm:$0xff]
    %v990 = vld [vmem:[#allocation11 + $0x3d8] sm:$0xff]
    %v991 = vld [vmem:[#allocation11 + $0x3e0] sm:$0xff]
    %v992 = vld [vmem:[#allocation11 + $0x3e8] sm:$0xff]
    %v993 = vld [vmem:[#allocation11 + $0x3f0] sm:$0xff]
    %v994 = vld [vmem:[#allocation11 + $0x3f8] sm:$0xff]
    %v995 = vld [vmem:[#allocation11 + $0x400] sm:$0xff]
    %v996 = vld [vmem:[#allocation11 + $0x408] sm:$0xff]
    %v997 = vld [vmem:[#allocation11 + $0x410] sm:$0xff]
    %v998 = vld [vmem:[#allocation11 + $0x418] sm:$0xff]
    %v999 = vld [vmem:[#allocation11 + $0x420] sm:$0xff]
    %v1000 = vld [vmem:[#allocation11 + $0x428] sm:$0xff]
    %v1001 = vld [vmem:[#allocation11 + $0x430] sm:$0xff]
    %v1002 = vld [vmem:[#allocation11 + $0x438] sm:$0xff]
    %v1003 = vld [vmem:[#allocation11 + $0x440] sm:$0xff]
    %v1004 = vld [vmem:[#allocation11 + $0x448] sm:$0xff]
    %v1005 = vld [vmem:[#allocation11 + $0x450] sm:$0xff]
    %v1006 = vld [vmem:[#allocation11 + $0x458] sm:$0xff]
    %v1007 = vld [vmem:[#allocation11 + $0x460] sm:$0xff]
    %v1008 = vld [vmem:[#allocation11 + $0x468] sm:$0xff]
    %v1009 = vld [vmem:[#allocation11 + $0x470] sm:$0xff]
    %v1010 = vld [vmem:[#allocation11 + $0x478] sm:$0xff]
    %v1011 = vld [vmem:[#allocation11 + $0x480] sm:$0xff]
    %v1012 = vld [vmem:[#allocation11 + $0x488] sm:$0xff]
    %v1013 = vld [vmem:[#allocation11 + $0x490] sm:$0xff]
    %v1014 = vld [vmem:[#allocation11 + $0x498] sm:$0xff]
    %v1015 = vld [vmem:[#allocation11 + $0x4a0] sm:$0xff]
    %v1016 = vld [vmem:[#allocation11 + $0x4a8] sm:$0xff]
    %v1017 = vld [vmem:[#allocation11 + $0x4b0] sm:$0xff]
    %v1018 = vld [vmem:[#allocation11 + $0x4b8] sm:$0xff]
    %v1019 = vld [vmem:[#allocation11 + $0x4c0] sm:$0xff]
    %v1020 = vld [vmem:[#allocation11 + $0x4c8] sm:$0xff]
    %v1021 = vld [vmem:[#allocation11 + $0x4d0] sm:$0xff]
    %v1022 = vld [vmem:[#allocation11 + $0x4d8] sm:$0xff]
    %v1023 = vld [vmem:[#allocation11 + $0x4e0] sm:$0xff]
    %v1024 = vld [vmem:[#allocation11 + $0x4e8] sm:$0xff]
    %v1025 = vld [vmem:[#allocation11 + $0x4f0] sm:$0xff]
    %v1026 = vld [vmem:[#allocation11 + $0x4f8] sm:$0xff]
    %v1027 = vld [vmem:[#allocation11 + $0x500] sm:$0xff]
    %v1028 = vld [vmem:[#allocation11 + $0x508] sm:$0xff]
    %v1029 = vld [vmem:[#allocation11 + $0x510] sm:$0xff]
    %v1030 = vld [vmem:[#allocation11 + $0x518] sm:$0xff]
    %v1031 = vld [vmem:[#allocation11 + $0x520] sm:$0xff]
    %v1032 = vld [vmem:[#allocation11 + $0x528] sm:$0xff]
    %v1033 = vld [vmem:[#allocation11 + $0x530] sm:$0xff]
    %v1034 = vld [vmem:[#allocation11 + $0x538] sm:$0xff]
    %v1035 = vld [vmem:[#allocation11 + $0x540] sm:$0xff]
    %v1036 = vld [vmem:[#allocation11 + $0x548] sm:$0xff]
    %v1037 = vld [vmem:[#allocation11 + $0x550] sm:$0xff]
    %v1038 = vld [vmem:[#allocation11 + $0x558] sm:$0xff]
    %v1039 = vld [vmem:[#allocation11 + $0x560] sm:$0xff]
    %v1040 = vld [vmem:[#allocation11 + $0x568] sm:$0xff]
    %v1041 = vld [vmem:[#allocation11 + $0x570] sm:$0xff]
    %v1042 = vld [vmem:[#allocation11 + $0x578] sm:$0xff]
    %v1043 = vld [vmem:[#allocation11 + $0x580] sm:$0xff]
    %v1044 = vld [vmem:[#allocation11 + $0x588] sm:$0xff]
    %v1045 = vld [vmem:[#allocation11 + $0x590] sm:$0xff]
    %v1046 = vld [vmem:[#allocation11 + $0x598] sm:$0xff]
    %v1047 = vld [vmem:[#allocation11 + $0x5a0] sm:$0xff]
    %v1048 = vld [vmem:[#allocation11 + $0x5a8] sm:$0xff]
    %v1049 = vld [vmem:[#allocation11 + $0x5b0] sm:$0xff]
    %v1050 = vld [vmem:[#allocation11 + $0x5b8] sm:$0xff]
    %v1051 = vld [vmem:[#allocation11 + $0x5c0] sm:$0xff]
    %v1052 = vld [vmem:[#allocation11 + $0x5c8] sm:$0xff]
    %v1053 = vld [vmem:[#allocation11 + $0x5d0] sm:$0xff]
    %v1054 = vld [vmem:[#allocation11 + $0x5d8] sm:$0xff]
    %v1055 = vld [vmem:[#allocation11 + $0x5e0] sm:$0xff]
    %v1056 = vld [vmem:[#allocation11 + $0x5e8] sm:$0xff]
    %v1057 = vld [vmem:[#allocation11 + $0x5f0] sm:$0xff]
    %v1058 = vld [vmem:[#allocation11 + $0x5f8] sm:$0xff]
    %v1059 = vld [vmem:[#allocation11 + $0x600] sm:$0xff]
    %v1060 = vld [vmem:[#allocation11 + $0x608] sm:$0xff]
    %v1061 = vld [vmem:[#allocation11 + $0x610] sm:$0xff]
    %v1062 = vld [vmem:[#allocation11 + $0x618] sm:$0xff]
    %v1063 = vld [vmem:[#allocation11 + $0x620] sm:$0xff]
    %v1064 = vld [vmem:[#allocation11 + $0x628] sm:$0xff]
    %v1065 = vld [vmem:[#allocation11 + $0x630] sm:$0xff]
    %v1066 = vld [vmem:[#allocation11 + $0x638] sm:$0xff]
    %v1067 = vld [vmem:[#allocation11 + $0x640] sm:$0xff]
    %v1068 = vld [vmem:[#allocation11 + $0x648] sm:$0xff]
    %v1069 = vld [vmem:[#allocation11 + $0x650] sm:$0xff]
    %v1070 = vld [vmem:[#allocation11 + $0x658] sm:$0xff]
    %v1071 = vld [vmem:[#allocation11 + $0x660] sm:$0xff]
    %v1072 = vld [vmem:[#allocation11 + $0x668] sm:$0xff]
    %v1073 = vld [vmem:[#allocation11 + $0x670] sm:$0xff]
    %v1074 = vld [vmem:[#allocation11 + $0x678] sm:$0xff]
    %v1075 = vld [vmem:[#allocation11 + $0x680] sm:$0xff]
    %v1076 = vld [vmem:[#allocation11 + $0x688] sm:$0xff]
    %v1077 = vld [vmem:[#allocation11 + $0x690] sm:$0xff]
    %v1078 = vld [vmem:[#allocation11 + $0x698] sm:$0xff]
    %v1079 = vld [vmem:[#allocation11 + $0x6a0] sm:$0xff]
    %v1080 = vld [vmem:[#allocation11 + $0x6a8] sm:$0xff]
    %v1081 = vld [vmem:[#allocation11 + $0x6b0] sm:$0xff]
    %v1082 = vld [vmem:[#allocation11 + $0x6b8] sm:$0xff]
    %v1083 = vld [vmem:[#allocation11 + $0x6c0] sm:$0xff]
    %v1084 = vld [vmem:[#allocation11 + $0x6c8] sm:$0xff]
    %v1085 = vld [vmem:[#allocation11 + $0x6d0] sm:$0xff]
    %v1086 = vld [vmem:[#allocation11 + $0x6d8] sm:$0xff]
    %v1087 = vld [vmem:[#allocation11 + $0x6e0] sm:$0xff]
    %v1088 = vld [vmem:[#allocation11 + $0x6e8] sm:$0xff]
    %v1089 = vld [vmem:[#allocation11 + $0x6f0] sm:$0xff]
    %v1090 = vld [vmem:[#allocation11 + $0x6f8] sm:$0xff]
    %v1091 = vld [vmem:[#allocation11 + $0x700] sm:$0xff]
    %v1092 = vld [vmem:[#allocation11 + $0x708] sm:$0xff]
    %v1093 = vld [vmem:[#allocation11 + $0x710] sm:$0xff]
    %v1094 = vld [vmem:[#allocation11 + $0x718] sm:$0xff]
    %v1095 = vld [vmem:[#allocation11 + $0x720] sm:$0xff]
    %v1096 = vld [vmem:[#allocation11 + $0x728] sm:$0xff]
    %v1097 = vld [vmem:[#allocation11 + $0x730] sm:$0xff]
    %v1098 = vld [vmem:[#allocation11 + $0x738] sm:$0xff]
    %v1099 = vld [vmem:[#allocation11 + $0x740] sm:$0xff]
    %v1100 = vld [vmem:[#allocation11 + $0x748] sm:$0xff]
    %v1101 = vld [vmem:[#allocation11 + $0x750] sm:$0xff]
    %v1102 = vld [vmem:[#allocation11 + $0x758] sm:$0xff]
    %v1103 = vld [vmem:[#allocation11 + $0x760] sm:$0xff]
    %v1104 = vld [vmem:[#allocation11 + $0x768] sm:$0xff]
    %v1105 = vld [vmem:[#allocation11 + $0x770] sm:$0xff]
    %v1106 = vld [vmem:[#allocation11 + $0x778] sm:$0xff]
    %v1107 = vld [vmem:[#allocation11 + $0x780] sm:$0xff]
    %v1108 = vld [vmem:[#allocation11 + $0x788] sm:$0xff]
    %v1109 = vld [vmem:[#allocation11 + $0x790] sm:$0xff]
    %v1110 = vld [vmem:[#allocation11 + $0x798] sm:$0xff]
    %v1111 = vld [vmem:[#allocation11 + $0x7a0] sm:$0xff]
    %v1112 = vld [vmem:[#allocation11 + $0x7a8] sm:$0xff]
    %v1113 = vld [vmem:[#allocation11 + $0x7b0] sm:$0xff]
    %v1114 = vld [vmem:[#allocation11 + $0x7b8] sm:$0xff]
    %v1115 = vld [vmem:[#allocation11 + $0x7c0] sm:$0xff]
    %v1116 = vld [vmem:[#allocation11 + $0x7c8] sm:$0xff]
    %v1117 = vld [vmem:[#allocation11 + $0x7d0] sm:$0xff]
    %v1118 = vld [vmem:[#allocation11 + $0x7d8] sm:$0xff]
    %v1119 = vld [vmem:[#allocation11 + $0x7e0] sm:$0xff]
    %v1120 = vld [vmem:[#allocation11 + $0x7e8] sm:$0xff]
    %v1121 = vld [vmem:[#allocation11 + $0x7f0] sm:$0xff]
    %v1122 = vld [vmem:[#allocation11 + $0x7f8] sm:$0xff]
    %v1379 = vunpack.c.l.b16 %v867
    %v1380 = vunpack.c.h.b16 %v867
    %v1381 = vunpack.c.l.b16 %v868
    %v1382 = vunpack.c.h.b16 %v868
    %v1383 = vunpack.c.l.b16 %v869
    %v1384 = vunpack.c.h.b16 %v869
    %v1385 = vunpack.c.l.b16 %v870
    %v1386 = vunpack.c.h.b16 %v870
    %v1387 = vunpack.c.l.b16 %v871
    %v1388 = vunpack.c.h.b16 %v871
    %v1389 = vunpack.c.l.b16 %v872
    %v1390 = vunpack.c.h.b16 %v872
    %v1391 = vunpack.c.l.b16 %v873
    %v1392 = vunpack.c.h.b16 %v873
    %v1393 = vunpack.c.l.b16 %v874
    %v1394 = vunpack.c.h.b16 %v874
    %v1395 = vunpack.c.l.b16 %v875
    %v1396 = vunpack.c.h.b16 %v875
    %v1397 = vunpack.c.l.b16 %v876
    %v1398 = vunpack.c.h.b16 %v876
    %v1399 = vunpack.c.l.b16 %v877
    %v1400 = vunpack.c.h.b16 %v877
    %v1401 = vunpack.c.l.b16 %v878
    %v1402 = vunpack.c.h.b16 %v878
    %v1403 = vunpack.c.l.b16 %v879
    %v1404 = vunpack.c.h.b16 %v879
    %v1405 = vunpack.c.l.b16 %v880
    %v1406 = vunpack.c.h.b16 %v880
    %v1407 = vunpack.c.l.b16 %v881
    %v1408 = vunpack.c.h.b16 %v881
    %v1409 = vunpack.c.l.b16 %v882
    %v1410 = vunpack.c.h.b16 %v882
    %v1411 = vunpack.c.l.b16 %v883
    %v1412 = vunpack.c.h.b16 %v883
    %v1413 = vunpack.c.l.b16 %v884
    %v1414 = vunpack.c.h.b16 %v884
    %v1415 = vunpack.c.l.b16 %v885
    %v1416 = vunpack.c.h.b16 %v885
    %v1417 = vunpack.c.l.b16 %v886
    %v1418 = vunpack.c.h.b16 %v886
    %v1419 = vunpack.c.l.b16 %v887
    %v1420 = vunpack.c.h.b16 %v887
    %v1421 = vunpack.c.l.b16 %v888
    %v1422 = vunpack.c.h.b16 %v888
    %v1423 = vunpack.c.l.b16 %v889
    %v1424 = vunpack.c.h.b16 %v889
    %v1425 = vunpack.c.l.b16 %v890
    %v1426 = vunpack.c.h.b16 %v890
    %v1427 = vunpack.c.l.b16 %v891
    %v1428 = vunpack.c.h.b16 %v891
    %v1429 = vunpack.c.l.b16 %v892
    %v1430 = vunpack.c.h.b16 %v892
    %v1431 = vunpack.c.l.b16 %v893
    %v1432 = vunpack.c.h.b16 %v893
    %v1433 = vunpack.c.l.b16 %v894
    %v1434 = vunpack.c.h.b16 %v894
    %v1435 = vunpack.c.l.b16 %v895
    %v1436 = vunpack.c.h.b16 %v895
    %v1437 = vunpack.c.l.b16 %v896
    %v1438 = vunpack.c.h.b16 %v896
    %v1439 = vunpack.c.l.b16 %v897
    %v1440 = vunpack.c.h.b16 %v897
    %v1441 = vunpack.c.l.b16 %v898
    %v1442 = vunpack.c.h.b16 %v898
    %v1443 = vunpack.c.l.b16 %v899
    %v1444 = vunpack.c.h.b16 %v899
    %v1445 = vunpack.c.l.b16 %v900
    %v1446 = vunpack.c.h.b16 %v900
    %v1447 = vunpack.c.l.b16 %v901
    %v1448 = vunpack.c.h.b16 %v901
    %v1449 = vunpack.c.l.b16 %v902
    %v1450 = vunpack.c.h.b16 %v902
    %v1451 = vunpack.c.l.b16 %v903
    %v1452 = vunpack.c.h.b16 %v903
    %v1453 = vunpack.c.l.b16 %v904
    %v1454 = vunpack.c.h.b16 %v904
    %v1455 = vunpack.c.l.b16 %v905
    %v1456 = vunpack.c.h.b16 %v905
    %v1457 = vunpack.c.l.b16 %v906
    %v1458 = vunpack.c.h.b16 %v906
    %v1459 = vunpack.c.l.b16 %v907
    %v1460 = vunpack.c.h.b16 %v907
    %v1461 = vunpack.c.l.b16 %v908
    %v1462 = vunpack.c.h.b16 %v908
    %v1463 = vunpack.c.l.b16 %v909
    %v1464 = vunpack.c.h.b16 %v909
    %v1465 = vunpack.c.l.b16 %v910
    %v1466 = vunpack.c.h.b16 %v910
    %v1467 = vunpack.c.l.b16 %v911
    %v1468 = vunpack.c.h.b16 %v911
    %v1469 = vunpack.c.l.b16 %v912
    %v1470 = vunpack.c.h.b16 %v912
    %v1471 = vunpack.c.l.b16 %v913
    %v1472 = vunpack.c.h.b16 %v913
    %v1473 = vunpack.c.l.b16 %v914
    %v1474 = vunpack.c.h.b16 %v914
    %v1475 = vunpack.c.l.b16 %v915
    %v1476 = vunpack.c.h.b16 %v915
    %v1477 = vunpack.c.l.b16 %v916
    %v1478 = vunpack.c.h.b16 %v916
    %v1479 = vunpack.c.l.b16 %v917
    %v1480 = vunpack.c.h.b16 %v917
    %v1481 = vunpack.c.l.b16 %v918
    %v1482 = vunpack.c.h.b16 %v918
    %v1483 = vunpack.c.l.b16 %v919
    %v1484 = vunpack.c.h.b16 %v919
    %v1485 = vunpack.c.l.b16 %v920
    %v1486 = vunpack.c.h.b16 %v920
    %v1487 = vunpack.c.l.b16 %v921
    %v1488 = vunpack.c.h.b16 %v921
    %v1489 = vunpack.c.l.b16 %v922
    %v1490 = vunpack.c.h.b16 %v922
    %v1491 = vunpack.c.l.b16 %v923
    %v1492 = vunpack.c.h.b16 %v923
    %v1493 = vunpack.c.l.b16 %v924
    %v1494 = vunpack.c.h.b16 %v924
    %v1495 = vunpack.c.l.b16 %v925
    %v1496 = vunpack.c.h.b16 %v925
    %v1497 = vunpack.c.l.b16 %v926
    %v1498 = vunpack.c.h.b16 %v926
    %v1499 = vunpack.c.l.b16 %v927
    %v1500 = vunpack.c.h.b16 %v927
    %v1501 = vunpack.c.l.b16 %v928
    %v1502 = vunpack.c.h.b16 %v928
    %v1503 = vunpack.c.l.b16 %v929
    %v1504 = vunpack.c.h.b16 %v929
    %v1505 = vunpack.c.l.b16 %v930
    %v1506 = vunpack.c.h.b16 %v930
    %v1507 = vunpack.c.l.b16 %v931
    %v1508 = vunpack.c.h.b16 %v931
    %v1509 = vunpack.c.l.b16 %v932
    %v1510 = vunpack.c.h.b16 %v932
    %v1511 = vunpack.c.l.b16 %v933
    %v1512 = vunpack.c.h.b16 %v933
    %v1513 = vunpack.c.l.b16 %v934
    %v1514 = vunpack.c.h.b16 %v934
    %v1515 = vunpack.c.l.b16 %v935
    %v1516 = vunpack.c.h.b16 %v935
    %v1517 = vunpack.c.l.b16 %v936
    %v1518 = vunpack.c.h.b16 %v936
    %v1519 = vunpack.c.l.b16 %v937
    %v1520 = vunpack.c.h.b16 %v937
    %v1521 = vunpack.c.l.b16 %v938
    %v1522 = vunpack.c.h.b16 %v938
    %v1523 = vunpack.c.l.b16 %v939
    %v1524 = vunpack.c.h.b16 %v939
    %v1525 = vunpack.c.l.b16 %v940
    %v1526 = vunpack.c.h.b16 %v940
    %v1527 = vunpack.c.l.b16 %v941
    %v1528 = vunpack.c.h.b16 %v941
    %v1529 = vunpack.c.l.b16 %v942
    %v1530 = vunpack.c.h.b16 %v942
    %v1531 = vunpack.c.l.b16 %v943
    %v1532 = vunpack.c.h.b16 %v943
    %v1533 = vunpack.c.l.b16 %v944
    %v1534 = vunpack.c.h.b16 %v944
    %v1535 = vunpack.c.l.b16 %v945
    %v1536 = vunpack.c.h.b16 %v945
    %v1537 = vunpack.c.l.b16 %v946
    %v1538 = vunpack.c.h.b16 %v946
    %v1539 = vunpack.c.l.b16 %v947
    %v1540 = vunpack.c.h.b16 %v947
    %v1541 = vunpack.c.l.b16 %v948
    %v1542 = vunpack.c.h.b16 %v948
    %v1543 = vunpack.c.l.b16 %v949
    %v1544 = vunpack.c.h.b16 %v949
    %v1545 = vunpack.c.l.b16 %v950
    %v1546 = vunpack.c.h.b16 %v950
    %v1547 = vunpack.c.l.b16 %v951
    %v1548 = vunpack.c.h.b16 %v951
    %v1549 = vunpack.c.l.b16 %v952
    %v1550 = vunpack.c.h.b16 %v952
    %v1551 = vunpack.c.l.b16 %v953
    %v1552 = vunpack.c.h.b16 %v953
    %v1553 = vunpack.c.l.b16 %v954
    %v1554 = vunpack.c.h.b16 %v954
    %v1555 = vunpack.c.l.b16 %v955
    %v1556 = vunpack.c.h.b16 %v955
    %v1557 = vunpack.c.l.b16 %v956
    %v1558 = vunpack.c.h.b16 %v956
    %v1559 = vunpack.c.l.b16 %v957
    %v1560 = vunpack.c.h.b16 %v957
    %v1561 = vunpack.c.l.b16 %v958
    %v1562 = vunpack.c.h.b16 %v958
    %v1563 = vunpack.c.l.b16 %v959
    %v1564 = vunpack.c.h.b16 %v959
    %v1565 = vunpack.c.l.b16 %v960
    %v1566 = vunpack.c.h.b16 %v960
    %v1567 = vunpack.c.l.b16 %v961
    %v1568 = vunpack.c.h.b16 %v961
    %v1569 = vunpack.c.l.b16 %v962
    %v1570 = vunpack.c.h.b16 %v962
    %v1571 = vunpack.c.l.b16 %v963
    %v1572 = vunpack.c.h.b16 %v963
    %v1573 = vunpack.c.l.b16 %v964
    %v1574 = vunpack.c.h.b16 %v964
    %v1575 = vunpack.c.l.b16 %v965
    %v1576 = vunpack.c.h.b16 %v965
    %v1577 = vunpack.c.l.b16 %v966
    %v1578 = vunpack.c.h.b16 %v966
    %v1579 = vunpack.c.l.b16 %v967
    %v1580 = vunpack.c.h.b16 %v967
    %v1581 = vunpack.c.l.b16 %v968
    %v1582 = vunpack.c.h.b16 %v968
    %v1583 = vunpack.c.l.b16 %v969
    %v1584 = vunpack.c.h.b16 %v969
    %v1585 = vunpack.c.l.b16 %v970
    %v1586 = vunpack.c.h.b16 %v970
    %v1587 = vunpack.c.l.b16 %v971
    %v1588 = vunpack.c.h.b16 %v971
    %v1589 = vunpack.c.l.b16 %v972
    %v1590 = vunpack.c.h.b16 %v972
    %v1591 = vunpack.c.l.b16 %v973
    %v1592 = vunpack.c.h.b16 %v973
    %v1593 = vunpack.c.l.b16 %v974
    %v1594 = vunpack.c.h.b16 %v974
    %v1595 = vunpack.c.l.b16 %v975
    %v1596 = vunpack.c.h.b16 %v975
    %v1597 = vunpack.c.l.b16 %v976
    %v1598 = vunpack.c.h.b16 %v976
    %v1599 = vunpack.c.l.b16 %v977
    %v1600 = vunpack.c.h.b16 %v977
    %v1601 = vunpack.c.l.b16 %v978
    %v1602 = vunpack.c.h.b16 %v978
    %v1603 = vunpack.c.l.b16 %v979
    %v1604 = vunpack.c.h.b16 %v979
    %v1605 = vunpack.c.l.b16 %v980
    %v1606 = vunpack.c.h.b16 %v980
    %v1607 = vunpack.c.l.b16 %v981
    %v1608 = vunpack.c.h.b16 %v981
    %v1609 = vunpack.c.l.b16 %v982
    %v1610 = vunpack.c.h.b16 %v982
    %v1611 = vunpack.c.l.b16 %v983
    %v1612 = vunpack.c.h.b16 %v983
    %v1613 = vunpack.c.l.b16 %v984
    %v1614 = vunpack.c.h.b16 %v984
    %v1615 = vunpack.c.l.b16 %v985
    %v1616 = vunpack.c.h.b16 %v985
    %v1617 = vunpack.c.l.b16 %v986
    %v1618 = vunpack.c.h.b16 %v986
    %v1619 = vunpack.c.l.b16 %v987
    %v1620 = vunpack.c.h.b16 %v987
    %v1621 = vunpack.c.l.b16 %v988
    %v1622 = vunpack.c.h.b16 %v988
    %v1623 = vunpack.c.l.b16 %v989
    %v1624 = vunpack.c.h.b16 %v989
    %v1625 = vunpack.c.l.b16 %v990
    %v1626 = vunpack.c.h.b16 %v990
    %v1627 = vunpack.c.l.b16 %v991
    %v1628 = vunpack.c.h.b16 %v991
    %v1629 = vunpack.c.l.b16 %v992
    %v1630 = vunpack.c.h.b16 %v992
    %v1631 = vunpack.c.l.b16 %v993
    %v1632 = vunpack.c.h.b16 %v993
    %v1633 = vunpack.c.l.b16 %v994
    %v1634 = vunpack.c.h.b16 %v994
    %v1635 = vunpack.c.l.b16 %v995
    %v1636 = vunpack.c.h.b16 %v995
    %v1637 = vunpack.c.l.b16 %v996
    %v1638 = vunpack.c.h.b16 %v996
    %v1639 = vunpack.c.l.b16 %v997
    %v1640 = vunpack.c.h.b16 %v997
    %v1641 = vunpack.c.l.b16 %v998
    %v1642 = vunpack.c.h.b16 %v998
    %v1643 = vunpack.c.l.b16 %v999
    %v1644 = vunpack.c.h.b16 %v999
    %v1645 = vunpack.c.l.b16 %v1000
    %v1646 = vunpack.c.h.b16 %v1000
    %v1647 = vunpack.c.l.b16 %v1001
    %v1648 = vunpack.c.h.b16 %v1001
    %v1649 = vunpack.c.l.b16 %v1002
    %v1650 = vunpack.c.h.b16 %v1002
    %v1651 = vunpack.c.l.b16 %v1003
    %v1652 = vunpack.c.h.b16 %v1003
    %v1653 = vunpack.c.l.b16 %v1004
    %v1654 = vunpack.c.h.b16 %v1004
    %v1655 = vunpack.c.l.b16 %v1005
    %v1656 = vunpack.c.h.b16 %v1005
    %v1657 = vunpack.c.l.b16 %v1006
    %v1658 = vunpack.c.h.b16 %v1006
    %v1659 = vunpack.c.l.b16 %v1007
    %v1660 = vunpack.c.h.b16 %v1007
    %v1661 = vunpack.c.l.b16 %v1008
    %v1662 = vunpack.c.h.b16 %v1008
    %v1663 = vunpack.c.l.b16 %v1009
    %v1664 = vunpack.c.h.b16 %v1009
    %v1665 = vunpack.c.l.b16 %v1010
    %v1666 = vunpack.c.h.b16 %v1010
    %v1667 = vunpack.c.l.b16 %v1011
    %v1668 = vunpack.c.h.b16 %v1011
    %v1669 = vunpack.c.l.b16 %v1012
    %v1670 = vunpack.c.h.b16 %v1012
    %v1671 = vunpack.c.l.b16 %v1013
    %v1672 = vunpack.c.h.b16 %v1013
    %v1673 = vunpack.c.l.b16 %v1014
    %v1674 = vunpack.c.h.b16 %v1014
    %v1675 = vunpack.c.l.b16 %v1015
    %v1676 = vunpack.c.h.b16 %v1015
    %v1677 = vunpack.c.l.b16 %v1016
    %v1678 = vunpack.c.h.b16 %v1016
    %v1679 = vunpack.c.l.b16 %v1017
    %v1680 = vunpack.c.h.b16 %v1017
    %v1681 = vunpack.c.l.b16 %v1018
    %v1682 = vunpack.c.h.b16 %v1018
    %v1683 = vunpack.c.l.b16 %v1019
    %v1684 = vunpack.c.h.b16 %v1019
    %v1685 = vunpack.c.l.b16 %v1020
    %v1686 = vunpack.c.h.b16 %v1020
    %v1687 = vunpack.c.l.b16 %v1021
    %v1688 = vunpack.c.h.b16 %v1021
    %v1689 = vunpack.c.l.b16 %v1022
    %v1690 = vunpack.c.h.b16 %v1022
    %v1691 = vunpack.c.l.b16 %v1023
    %v1692 = vunpack.c.h.b16 %v1023
    %v1693 = vunpack.c.l.b16 %v1024
    %v1694 = vunpack.c.h.b16 %v1024
    %v1695 = vunpack.c.l.b16 %v1025
    %v1696 = vunpack.c.h.b16 %v1025
    %v1697 = vunpack.c.l.b16 %v1026
    %v1698 = vunpack.c.h.b16 %v1026
    %v1699 = vunpack.c.l.b16 %v1027
    %v1700 = vunpack.c.h.b16 %v1027
    %v1701 = vunpack.c.l.b16 %v1028
    %v1702 = vunpack.c.h.b16 %v1028
    %v1703 = vunpack.c.l.b16 %v1029
    %v1704 = vunpack.c.h.b16 %v1029
    %v1705 = vunpack.c.l.b16 %v1030
    %v1706 = vunpack.c.h.b16 %v1030
    %v1707 = vunpack.c.l.b16 %v1031
    %v1708 = vunpack.c.h.b16 %v1031
    %v1709 = vunpack.c.l.b16 %v1032
    %v1710 = vunpack.c.h.b16 %v1032
    %v1711 = vunpack.c.l.b16 %v1033
    %v1712 = vunpack.c.h.b16 %v1033
    %v1713 = vunpack.c.l.b16 %v1034
    %v1714 = vunpack.c.h.b16 %v1034
    %v1715 = vunpack.c.l.b16 %v1035
    %v1716 = vunpack.c.h.b16 %v1035
    %v1717 = vunpack.c.l.b16 %v1036
    %v1718 = vunpack.c.h.b16 %v1036
    %v1719 = vunpack.c.l.b16 %v1037
    %v1720 = vunpack.c.h.b16 %v1037
    %v1721 = vunpack.c.l.b16 %v1038
    %v1722 = vunpack.c.h.b16 %v1038
    %v1723 = vunpack.c.l.b16 %v1039
    %v1724 = vunpack.c.h.b16 %v1039
    %v1725 = vunpack.c.l.b16 %v1040
    %v1726 = vunpack.c.h.b16 %v1040
    %v1727 = vunpack.c.l.b16 %v1041
    %v1728 = vunpack.c.h.b16 %v1041
    %v1729 = vunpack.c.l.b16 %v1042
    %v1730 = vunpack.c.h.b16 %v1042
    %v1731 = vunpack.c.l.b16 %v1043
    %v1732 = vunpack.c.h.b16 %v1043
    %v1733 = vunpack.c.l.b16 %v1044
    %v1734 = vunpack.c.h.b16 %v1044
    %v1735 = vunpack.c.l.b16 %v1045
    %v1736 = vunpack.c.h.b16 %v1045
    %v1737 = vunpack.c.l.b16 %v1046
    %v1738 = vunpack.c.h.b16 %v1046
    %v1739 = vunpack.c.l.b16 %v1047
    %v1740 = vunpack.c.h.b16 %v1047
    %v1741 = vunpack.c.l.b16 %v1048
    %v1742 = vunpack.c.h.b16 %v1048
    %v1743 = vunpack.c.l.b16 %v1049
    %v1744 = vunpack.c.h.b16 %v1049
    %v1745 = vunpack.c.l.b16 %v1050
    %v1746 = vunpack.c.h.b16 %v1050
    %v1747 = vunpack.c.l.b16 %v1051
    %v1748 = vunpack.c.h.b16 %v1051
    %v1749 = vunpack.c.l.b16 %v1052
    %v1750 = vunpack.c.h.b16 %v1052
    %v1751 = vunpack.c.l.b16 %v1053
    %v1752 = vunpack.c.h.b16 %v1053
    %v1753 = vunpack.c.l.b16 %v1054
    %v1754 = vunpack.c.h.b16 %v1054
    %v1755 = vunpack.c.l.b16 %v1055
    %v1756 = vunpack.c.h.b16 %v1055
    %v1757 = vunpack.c.l.b16 %v1056
    %v1758 = vunpack.c.h.b16 %v1056
    %v1759 = vunpack.c.l.b16 %v1057
    %v1760 = vunpack.c.h.b16 %v1057
    %v1761 = vunpack.c.l.b16 %v1058
    %v1762 = vunpack.c.h.b16 %v1058
    %v1763 = vunpack.c.l.b16 %v1059
    %v1764 = vunpack.c.h.b16 %v1059
    %v1765 = vunpack.c.l.b16 %v1060
    %v1766 = vunpack.c.h.b16 %v1060
    %v1767 = vunpack.c.l.b16 %v1061
    %v1768 = vunpack.c.h.b16 %v1061
    %v1769 = vunpack.c.l.b16 %v1062
    %v1770 = vunpack.c.h.b16 %v1062
    %v1771 = vunpack.c.l.b16 %v1063
    %v1772 = vunpack.c.h.b16 %v1063
    %v1773 = vunpack.c.l.b16 %v1064
    %v1774 = vunpack.c.h.b16 %v1064
    %v1775 = vunpack.c.l.b16 %v1065
    %v1776 = vunpack.c.h.b16 %v1065
    %v1777 = vunpack.c.l.b16 %v1066
    %v1778 = vunpack.c.h.b16 %v1066
    %v1779 = vunpack.c.l.b16 %v1067
    %v1780 = vunpack.c.h.b16 %v1067
    %v1781 = vunpack.c.l.b16 %v1068
    %v1782 = vunpack.c.h.b16 %v1068
    %v1783 = vunpack.c.l.b16 %v1069
    %v1784 = vunpack.c.h.b16 %v1069
    %v1785 = vunpack.c.l.b16 %v1070
    %v1786 = vunpack.c.h.b16 %v1070
    %v1787 = vunpack.c.l.b16 %v1071
    %v1788 = vunpack.c.h.b16 %v1071
    %v1789 = vunpack.c.l.b16 %v1072
    %v1790 = vunpack.c.h.b16 %v1072
    %v1791 = vunpack.c.l.b16 %v1073
    %v1792 = vunpack.c.h.b16 %v1073
    %v1793 = vunpack.c.l.b16 %v1074
    %v1794 = vunpack.c.h.b16 %v1074
    %v1795 = vunpack.c.l.b16 %v1075
    %v1796 = vunpack.c.h.b16 %v1075
    %v1797 = vunpack.c.l.b16 %v1076
    %v1798 = vunpack.c.h.b16 %v1076
    %v1799 = vunpack.c.l.b16 %v1077
    %v1800 = vunpack.c.h.b16 %v1077
    %v1801 = vunpack.c.l.b16 %v1078
    %v1802 = vunpack.c.h.b16 %v1078
    %v1803 = vunpack.c.l.b16 %v1079
    %v1804 = vunpack.c.h.b16 %v1079
    %v1805 = vunpack.c.l.b16 %v1080
    %v1806 = vunpack.c.h.b16 %v1080
    %v1807 = vunpack.c.l.b16 %v1081
    %v1808 = vunpack.c.h.b16 %v1081
    %v1809 = vunpack.c.l.b16 %v1082
    %v1810 = vunpack.c.h.b16 %v1082
    %v1811 = vunpack.c.l.b16 %v1083
    %v1812 = vunpack.c.h.b16 %v1083
    %v1813 = vunpack.c.l.b16 %v1084
    %v1814 = vunpack.c.h.b16 %v1084
    %v1815 = vunpack.c.l.b16 %v1085
    %v1816 = vunpack.c.h.b16 %v1085
    %v1817 = vunpack.c.l.b16 %v1086
    %v1818 = vunpack.c.h.b16 %v1086
    %v1819 = vunpack.c.l.b16 %v1087
    %v1820 = vunpack.c.h.b16 %v1087
    %v1821 = vunpack.c.l.b16 %v1088
    %v1822 = vunpack.c.h.b16 %v1088
    %v1823 = vunpack.c.l.b16 %v1089
    %v1824 = vunpack.c.h.b16 %v1089
    %v1825 = vunpack.c.l.b16 %v1090
    %v1826 = vunpack.c.h.b16 %v1090
    %v1827 = vunpack.c.l.b16 %v1091
    %v1828 = vunpack.c.h.b16 %v1091
    %v1829 = vunpack.c.l.b16 %v1092
    %v1830 = vunpack.c.h.b16 %v1092
    %v1831 = vunpack.c.l.b16 %v1093
    %v1832 = vunpack.c.h.b16 %v1093
    %v1833 = vunpack.c.l.b16 %v1094
    %v1834 = vunpack.c.h.b16 %v1094
    %v1835 = vunpack.c.l.b16 %v1095
    %v1836 = vunpack.c.h.b16 %v1095
    %v1837 = vunpack.c.l.b16 %v1096
    %v1838 = vunpack.c.h.b16 %v1096
    %v1839 = vunpack.c.l.b16 %v1097
    %v1840 = vunpack.c.h.b16 %v1097
    %v1841 = vunpack.c.l.b16 %v1098
    %v1842 = vunpack.c.h.b16 %v1098
    %v1843 = vunpack.c.l.b16 %v1099
    %v1844 = vunpack.c.h.b16 %v1099
    %v1845 = vunpack.c.l.b16 %v1100
    %v1846 = vunpack.c.h.b16 %v1100
    %v1847 = vunpack.c.l.b16 %v1101
    %v1848 = vunpack.c.h.b16 %v1101
    %v1849 = vunpack.c.l.b16 %v1102
    %v1850 = vunpack.c.h.b16 %v1102
    %v1851 = vunpack.c.l.b16 %v1103
    %v1852 = vunpack.c.h.b16 %v1103
    %v1853 = vunpack.c.l.b16 %v1104
    %v1854 = vunpack.c.h.b16 %v1104
    %v1855 = vunpack.c.l.b16 %v1105
    %v1856 = vunpack.c.h.b16 %v1105
    %v1857 = vunpack.c.l.b16 %v1106
    %v1858 = vunpack.c.h.b16 %v1106
    %v1859 = vunpack.c.l.b16 %v1107
    %v1860 = vunpack.c.h.b16 %v1107
    %v1861 = vunpack.c.l.b16 %v1108
    %v1862 = vunpack.c.h.b16 %v1108
    %v1863 = vunpack.c.l.b16 %v1109
    %v1864 = vunpack.c.h.b16 %v1109
    %v1865 = vunpack.c.l.b16 %v1110
    %v1866 = vunpack.c.h.b16 %v1110
    %v1867 = vunpack.c.l.b16 %v1111
    %v1868 = vunpack.c.h.b16 %v1111
    %v1869 = vunpack.c.l.b16 %v1112
    %v1870 = vunpack.c.h.b16 %v1112
    %v1871 = vunpack.c.l.b16 %v1113
    %v1872 = vunpack.c.h.b16 %v1113
    %v1873 = vunpack.c.l.b16 %v1114
    %v1874 = vunpack.c.h.b16 %v1114
    %v1875 = vunpack.c.l.b16 %v1115
    %v1876 = vunpack.c.h.b16 %v1115
    %v1877 = vunpack.c.l.b16 %v1116
    %v1878 = vunpack.c.h.b16 %v1116
    %v1879 = vunpack.c.l.b16 %v1117
    %v1880 = vunpack.c.h.b16 %v1117
    %v1881 = vunpack.c.l.b16 %v1118
    %v1882 = vunpack.c.h.b16 %v1118
    %v1883 = vunpack.c.l.b16 %v1119
    %v1884 = vunpack.c.h.b16 %v1119
    %v1885 = vunpack.c.l.b16 %v1120
    %v1886 = vunpack.c.h.b16 %v1120
    %v1887 = vunpack.c.l.b16 %v1121
    %v1888 = vunpack.c.h.b16 %v1121
    %v1889 = vunpack.c.l.b16 %v1122
    %v1890 = vunpack.c.h.b16 %v1122
    %v1891 = vpack.c.b16 %v1387, %v1379
    %v1892 = vpack.c.b16 %v1388, %v1380
    %v1893 = vpack.c.b16 %v1389, %v1381
    %v1894 = vpack.c.b16 %v1390, %v1382
    %v1895 = vpack.c.b16 %v1391, %v1383
    %v1896 = vpack.c.b16 %v1392, %v1384
    %v1897 = vpack.c.b16 %v1393, %v1385
    %v1898 = vpack.c.b16 %v1394, %v1386
    %v1899 = vpack.c.b16 %v1403, %v1395
    %v1900 = vpack.c.b16 %v1404, %v1396
    %v1901 = vpack.c.b16 %v1405, %v1397
    %v1902 = vpack.c.b16 %v1406, %v1398
    %v1903 = vpack.c.b16 %v1407, %v1399
    %v1904 = vpack.c.b16 %v1408, %v1400
    %v1905 = vpack.c.b16 %v1409, %v1401
    %v1906 = vpack.c.b16 %v1410, %v1402
    %v1907 = vpack.c.b16 %v1419, %v1411
    %v1908 = vpack.c.b16 %v1420, %v1412
    %v1909 = vpack.c.b16 %v1421, %v1413
    %v1910 = vpack.c.b16 %v1422, %v1414
    %v1911 = vpack.c.b16 %v1423, %v1415
    %v1912 = vpack.c.b16 %v1424, %v1416
    %v1913 = vpack.c.b16 %v1425, %v1417
    %v1914 = vpack.c.b16 %v1426, %v1418
    %v1915 = vpack.c.b16 %v1435, %v1427
    %v1916 = vpack.c.b16 %v1436, %v1428
    %v1917 = vpack.c.b16 %v1437, %v1429
    %v1918 = vpack.c.b16 %v1438, %v1430
    %v1919 = vpack.c.b16 %v1439, %v1431
    %v1920 = vpack.c.b16 %v1440, %v1432
    %v1921 = vpack.c.b16 %v1441, %v1433
    %v1922 = vpack.c.b16 %v1442, %v1434
    %v1923 = vpack.c.b16 %v1451, %v1443
    %v1924 = vpack.c.b16 %v1452, %v1444
    %v1925 = vpack.c.b16 %v1453, %v1445
    %v1926 = vpack.c.b16 %v1454, %v1446
    %v1927 = vpack.c.b16 %v1455, %v1447
    %v1928 = vpack.c.b16 %v1456, %v1448
    %v1929 = vpack.c.b16 %v1457, %v1449
    %v1930 = vpack.c.b16 %v1458, %v1450
    %v1931 = vpack.c.b16 %v1467, %v1459
    %v1932 = vpack.c.b16 %v1468, %v1460
    %v1933 = vpack.c.b16 %v1469, %v1461
    %v1934 = vpack.c.b16 %v1470, %v1462
    %v1935 = vpack.c.b16 %v1471, %v1463
    %v1936 = vpack.c.b16 %v1472, %v1464
    %v1937 = vpack.c.b16 %v1473, %v1465
    %v1938 = vpack.c.b16 %v1474, %v1466
    %v1939 = vpack.c.b16 %v1483, %v1475
    %v1940 = vpack.c.b16 %v1484, %v1476
    %v1941 = vpack.c.b16 %v1485, %v1477
    %v1942 = vpack.c.b16 %v1486, %v1478
    %v1943 = vpack.c.b16 %v1487, %v1479
    %v1944 = vpack.c.b16 %v1488, %v1480
    %v1945 = vpack.c.b16 %v1489, %v1481
    %v1946 = vpack.c.b16 %v1490, %v1482
    %v1947 = vpack.c.b16 %v1499, %v1491
    %v1948 = vpack.c.b16 %v1500, %v1492
    %v1949 = vpack.c.b16 %v1501, %v1493
    %v1950 = vpack.c.b16 %v1502, %v1494
    %v1951 = vpack.c.b16 %v1503, %v1495
    %v1952 = vpack.c.b16 %v1504, %v1496
    %v1953 = vpack.c.b16 %v1505, %v1497
    %v1954 = vpack.c.b16 %v1506, %v1498
    %v1955 = vpack.c.b16 %v1515, %v1507
    %v1956 = vpack.c.b16 %v1516, %v1508
    %v1957 = vpack.c.b16 %v1517, %v1509
    %v1958 = vpack.c.b16 %v1518, %v1510
    %v1959 = vpack.c.b16 %v1519, %v1511
    %v1960 = vpack.c.b16 %v1520, %v1512
    %v1961 = vpack.c.b16 %v1521, %v1513
    %v1962 = vpack.c.b16 %v1522, %v1514
    %v1963 = vpack.c.b16 %v1531, %v1523
    %v1964 = vpack.c.b16 %v1532, %v1524
    %v1965 = vpack.c.b16 %v1533, %v1525
    %v1966 = vpack.c.b16 %v1534, %v1526
    %v1967 = vpack.c.b16 %v1535, %v1527
    %v1968 = vpack.c.b16 %v1536, %v1528
    %v1969 = vpack.c.b16 %v1537, %v1529
    %v1970 = vpack.c.b16 %v1538, %v1530
    %v1971 = vpack.c.b16 %v1547, %v1539
    %v1972 = vpack.c.b16 %v1548, %v1540
    %v1973 = vpack.c.b16 %v1549, %v1541
    %v1974 = vpack.c.b16 %v1550, %v1542
    %v1975 = vpack.c.b16 %v1551, %v1543
    %v1976 = vpack.c.b16 %v1552, %v1544
    %v1977 = vpack.c.b16 %v1553, %v1545
    %v1978 = vpack.c.b16 %v1554, %v1546
    %v1979 = vpack.c.b16 %v1563, %v1555
    %v1980 = vpack.c.b16 %v1564, %v1556
    %v1981 = vpack.c.b16 %v1565, %v1557
    %v1982 = vpack.c.b16 %v1566, %v1558
    %v1983 = vpack.c.b16 %v1567, %v1559
    %v1984 = vpack.c.b16 %v1568, %v1560
    %v1985 = vpack.c.b16 %v1569, %v1561
    %v1986 = vpack.c.b16 %v1570, %v1562
    %v1987 = vpack.c.b16 %v1579, %v1571
    %v1988 = vpack.c.b16 %v1580, %v1572
    %v1989 = vpack.c.b16 %v1581, %v1573
    %v1990 = vpack.c.b16 %v1582, %v1574
    %v1991 = vpack.c.b16 %v1583, %v1575
    %v1992 = vpack.c.b16 %v1584, %v1576
    %v1993 = vpack.c.b16 %v1585, %v1577
    %v1994 = vpack.c.b16 %v1586, %v1578
    %v1995 = vpack.c.b16 %v1595, %v1587
    %v1996 = vpack.c.b16 %v1596, %v1588
    %v1997 = vpack.c.b16 %v1597, %v1589
    %v1998 = vpack.c.b16 %v1598, %v1590
    %v1999 = vpack.c.b16 %v1599, %v1591
    %v2000 = vpack.c.b16 %v1600, %v1592
    %v2001 = vpack.c.b16 %v1601, %v1593
    %v2002 = vpack.c.b16 %v1602, %v1594
    %v2003 = vpack.c.b16 %v1611, %v1603
    %v2004 = vpack.c.b16 %v1612, %v1604
    %v2005 = vpack.c.b16 %v1613, %v1605
    %v2006 = vpack.c.b16 %v1614, %v1606
    %v2007 = vpack.c.b16 %v1615, %v1607
    %v2008 = vpack.c.b16 %v1616, %v1608
    %v2009 = vpack.c.b16 %v1617, %v1609
    %v2010 = vpack.c.b16 %v1618, %v1610
    %v2011 = vpack.c.b16 %v1627, %v1619
    %v2012 = vpack.c.b16 %v1628, %v1620
    %v2013 = vpack.c.b16 %v1629, %v1621
    %v2014 = vpack.c.b16 %v1630, %v1622
    %v2015 = vpack.c.b16 %v1631, %v1623
    %v2016 = vpack.c.b16 %v1632, %v1624
    %v2017 = vpack.c.b16 %v1633, %v1625
    %v2018 = vpack.c.b16 %v1634, %v1626
    %v2019 = vpack.c.b16 %v1643, %v1635
    %v2020 = vpack.c.b16 %v1644, %v1636
    %v2021 = vpack.c.b16 %v1645, %v1637
    %v2022 = vpack.c.b16 %v1646, %v1638
    %v2023 = vpack.c.b16 %v1647, %v1639
    %v2024 = vpack.c.b16 %v1648, %v1640
    %v2025 = vpack.c.b16 %v1649, %v1641
    %v2026 = vpack.c.b16 %v1650, %v1642
    %v2027 = vpack.c.b16 %v1659, %v1651
    %v2028 = vpack.c.b16 %v1660, %v1652
    %v2029 = vpack.c.b16 %v1661, %v1653
    %v2030 = vpack.c.b16 %v1662, %v1654
    %v2031 = vpack.c.b16 %v1663, %v1655
    %v2032 = vpack.c.b16 %v1664, %v1656
    %v2033 = vpack.c.b16 %v1665, %v1657
    %v2034 = vpack.c.b16 %v1666, %v1658
    %v2035 = vpack.c.b16 %v1675, %v1667
    %v2036 = vpack.c.b16 %v1676, %v1668
    %v2037 = vpack.c.b16 %v1677, %v1669
    %v2038 = vpack.c.b16 %v1678, %v1670
    %v2039 = vpack.c.b16 %v1679, %v1671
    %v2040 = vpack.c.b16 %v1680, %v1672
    %v2041 = vpack.c.b16 %v1681, %v1673
    %v2042 = vpack.c.b16 %v1682, %v1674
    %v2043 = vpack.c.b16 %v1691, %v1683
    %v2044 = vpack.c.b16 %v1692, %v1684
    %v2045 = vpack.c.b16 %v1693, %v1685
    %v2046 = vpack.c.b16 %v1694, %v1686
    %v2047 = vpack.c.b16 %v1695, %v1687
    %v2048 = vpack.c.b16 %v1696, %v1688
    %v2049 = vpack.c.b16 %v1697, %v1689
    %v2050 = vpack.c.b16 %v1698, %v1690
    %v2051 = vpack.c.b16 %v1707, %v1699
    %v2052 = vpack.c.b16 %v1708, %v1700
    %v2053 = vpack.c.b16 %v1709, %v1701
    %v2054 = vpack.c.b16 %v1710, %v1702
    %v2055 = vpack.c.b16 %v1711, %v1703
    %v2056 = vpack.c.b16 %v1712, %v1704
    %v2057 = vpack.c.b16 %v1713, %v1705
    %v2058 = vpack.c.b16 %v1714, %v1706
    %v2059 = vpack.c.b16 %v1723, %v1715
    %v2060 = vpack.c.b16 %v1724, %v1716
    %v2061 = vpack.c.b16 %v1725, %v1717
    %v2062 = vpack.c.b16 %v1726, %v1718
    %v2063 = vpack.c.b16 %v1727, %v1719
    %v2064 = vpack.c.b16 %v1728, %v1720
    %v2065 = vpack.c.b16 %v1729, %v1721
    %v2066 = vpack.c.b16 %v1730, %v1722
    %v2067 = vpack.c.b16 %v1739, %v1731
    %v2068 = vpack.c.b16 %v1740, %v1732
    %v2069 = vpack.c.b16 %v1741, %v1733
    %v2070 = vpack.c.b16 %v1742, %v1734
    %v2071 = vpack.c.b16 %v1743, %v1735
    %v2072 = vpack.c.b16 %v1744, %v1736
    %v2073 = vpack.c.b16 %v1745, %v1737
    %v2074 = vpack.c.b16 %v1746, %v1738
    %v2075 = vpack.c.b16 %v1755, %v1747
    %v2076 = vpack.c.b16 %v1756, %v1748
    %v2077 = vpack.c.b16 %v1757, %v1749
    %v2078 = vpack.c.b16 %v1758, %v1750
    %v2079 = vpack.c.b16 %v1759, %v1751
    %v2080 = vpack.c.b16 %v1760, %v1752
    %v2081 = vpack.c.b16 %v1761, %v1753
    %v2082 = vpack.c.b16 %v1762, %v1754
    %v2083 = vpack.c.b16 %v1771, %v1763
    %v2084 = vpack.c.b16 %v1772, %v1764
    %v2085 = vpack.c.b16 %v1773, %v1765
    %v2086 = vpack.c.b16 %v1774, %v1766
    %v2087 = vpack.c.b16 %v1775, %v1767
    %v2088 = vpack.c.b16 %v1776, %v1768
    %v2089 = vpack.c.b16 %v1777, %v1769
    %v2090 = vpack.c.b16 %v1778, %v1770
    %v2091 = vpack.c.b16 %v1787, %v1779
    %v2092 = vpack.c.b16 %v1788, %v1780
    %v2093 = vpack.c.b16 %v1789, %v1781
    %v2094 = vpack.c.b16 %v1790, %v1782
    %v2095 = vpack.c.b16 %v1791, %v1783
    %v2096 = vpack.c.b16 %v1792, %v1784
    %v2097 = vpack.c.b16 %v1793, %v1785
    %v2098 = vpack.c.b16 %v1794, %v1786
    %v2099 = vpack.c.b16 %v1803, %v1795
    %v2100 = vpack.c.b16 %v1804, %v1796
    %v2101 = vpack.c.b16 %v1805, %v1797
    %v2102 = vpack.c.b16 %v1806, %v1798
    %v2103 = vpack.c.b16 %v1807, %v1799
    %v2104 = vpack.c.b16 %v1808, %v1800
    %v2105 = vpack.c.b16 %v1809, %v1801
    %v2106 = vpack.c.b16 %v1810, %v1802
    %v2107 = vpack.c.b16 %v1819, %v1811
    %v2108 = vpack.c.b16 %v1820, %v1812
    %v2109 = vpack.c.b16 %v1821, %v1813
    %v2110 = vpack.c.b16 %v1822, %v1814
    %v2111 = vpack.c.b16 %v1823, %v1815
    %v2112 = vpack.c.b16 %v1824, %v1816
    %v2113 = vpack.c.b16 %v1825, %v1817
    %v2114 = vpack.c.b16 %v1826, %v1818
    %v2115 = vpack.c.b16 %v1835, %v1827
    %v2116 = vpack.c.b16 %v1836, %v1828
    %v2117 = vpack.c.b16 %v1837, %v1829
    %v2118 = vpack.c.b16 %v1838, %v1830
    %v2119 = vpack.c.b16 %v1839, %v1831
    %v2120 = vpack.c.b16 %v1840, %v1832
    %v2121 = vpack.c.b16 %v1841, %v1833
    %v2122 = vpack.c.b16 %v1842, %v1834
    %v2123 = vpack.c.b16 %v1851, %v1843
    %v2124 = vpack.c.b16 %v1852, %v1844
    %v2125 = vpack.c.b16 %v1853, %v1845
    %v2126 = vpack.c.b16 %v1854, %v1846
    %v2127 = vpack.c.b16 %v1855, %v1847
    %v2128 = vpack.c.b16 %v1856, %v1848
    %v2129 = vpack.c.b16 %v1857, %v1849
    %v2130 = vpack.c.b16 %v1858, %v1850
    %v2131 = vpack.c.b16 %v1867, %v1859
    %v2132 = vpack.c.b16 %v1868, %v1860
    %v2133 = vpack.c.b16 %v1869, %v1861
    %v2134 = vpack.c.b16 %v1870, %v1862
    %v2135 = vpack.c.b16 %v1871, %v1863
    %v2136 = vpack.c.b16 %v1872, %v1864
    %v2137 = vpack.c.b16 %v1873, %v1865
    %v2138 = vpack.c.b16 %v1874, %v1866
    %v2139 = vpack.c.b16 %v1883, %v1875
    %v2140 = vpack.c.b16 %v1884, %v1876
    %v2141 = vpack.c.b16 %v1885, %v1877
    %v2142 = vpack.c.b16 %v1886, %v1878
    %v2143 = vpack.c.b16 %v1887, %v1879
    %v2144 = vpack.c.b16 %v1888, %v1880
    %v2145 = vpack.c.b16 %v1889, %v1881
    %v2146 = vpack.c.b16 %v1890, %v1882
    %2403 = vmatprep.subr.bf16.mxu0 %v1892
    %2404 = vmatpush1.bf16.msra.mxu0 %v1891
    %2405 = vmatprep.subr.bf16.mxu0 %v1900
    %2406 = vmatpush1.bf16.msra.mxu0 %v1899
    %2407 = vmatprep.subr.bf16.mxu0 %v1908
    %2408 = vmatpush1.bf16.msra.mxu0 %v1907
    %2409 = vmatprep.subr.bf16.mxu0 %v1916
    %2410 = vmatpush1.bf16.msra.mxu0 %v1915
    %2411 = vmatprep.subr.bf16.mxu0 %v1924
    %2412 = vmatpush1.bf16.msra.mxu0 %v1923
    %2413 = vmatprep.subr.bf16.mxu0 %v1932
    %2414 = vmatpush1.bf16.msra.mxu0 %v1931
    %2415 = vmatprep.subr.bf16.mxu0 %v1940
    %2416 = vmatpush1.bf16.msra.mxu0 %v1939
    %2417 = vmatprep.subr.bf16.mxu0 %v1948
    %2418 = vmatpush1.bf16.msra.mxu0 %v1947
    %2419 = vmatprep.subr.bf16.mxu0 %v1956
    %2420 = vmatpush1.bf16.msra.mxu0 %v1955
    %2421 = vmatprep.subr.bf16.mxu0 %v1964
    %2422 = vmatpush1.bf16.msra.mxu0 %v1963
    %2423 = vmatprep.subr.bf16.mxu0 %v1972
    %2424 = vmatpush1.bf16.msra.mxu0 %v1971
    %2425 = vmatprep.subr.bf16.mxu0 %v1980
    %2426 = vmatpush1.bf16.msra.mxu0 %v1979
    %2427 = vmatprep.subr.bf16.mxu0 %v1988
    %2428 = vmatpush1.bf16.msra.mxu0 %v1987
    %2429 = vmatprep.subr.bf16.mxu0 %v1996
    %2430 = vmatpush1.bf16.msra.mxu0 %v1995
    %2431 = vmatprep.subr.bf16.mxu0 %v2004
    %2432 = vmatpush1.bf16.msra.mxu0 %v2003
    %2433 = vmatprep.subr.bf16.mxu0 %v2012
    %2434 = vmatpush1.bf16.msra.mxu0 %v2011
    %2435 = vmatprep.mubr.bf16.mxu0 %v864
    %2436 = vmatmul.mubr.bf16.gmra.mrb[0].mxu0 %v863
    %v2437 = vpop.f32.mrb[0].mxu0
    %v2438 = vadd.f32 0.0, %v2437
    %v2439 = vpop.f32.mrb[0].mxu0
    %v2440 = vadd.f32 0.0, %v2439
    %v2441 = vpop.f32.mrb[0].mxu0
    %v2442 = vpop.f32.mrb[0].mxu0
    %2443 = vdwg.mxu0
    %2444 = vmatprep.subr.bf16.mxu0 %v2020
    %2445 = vmatpush1.bf16.msra.mxu0 %v2019
    %2446 = vmatprep.subr.bf16.mxu0 %v2028
    %2447 = vmatpush1.bf16.msra.mxu0 %v2027
    %2448 = vmatprep.subr.bf16.mxu0 %v2036
    %2449 = vmatpush1.bf16.msra.mxu0 %v2035
    %2450 = vmatprep.subr.bf16.mxu0 %v2044
    %2451 = vmatpush1.bf16.msra.mxu0 %v2043
    %2452 = vmatprep.subr.bf16.mxu0 %v2052
    %2453 = vmatpush1.bf16.msra.mxu0 %v2051
    %2454 = vmatprep.subr.bf16.mxu0 %v2060
    %2455 = vmatpush1.bf16.msra.mxu0 %v2059
    %2456 = vmatprep.subr.bf16.mxu0 %v2068
    %2457 = vmatpush1.bf16.msra.mxu0 %v2067
    %2458 = vmatprep.subr.bf16.mxu0 %v2076
    %2459 = vmatpush1.bf16.msra.mxu0 %v2075
    %2460 = vmatprep.subr.bf16.mxu0 %v2084
    %2461 = vmatpush1.bf16.msra.mxu0 %v2083
    %2462 = vmatprep.subr.bf16.mxu0 %v2092
    %2463 = vmatpush1.bf16.msra.mxu0 %v2091
    %2464 = vmatprep.subr.bf16.mxu0 %v2100
    %2465 = vmatpush1.bf16.msra.mxu0 %v2099
    %2466 = vmatprep.subr.bf16.mxu0 %v2108
    %2467 = vmatpush1.bf16.msra.mxu0 %v2107
    %2468 = vmatprep.subr.bf16.mxu0 %v2116
    %2469 = vmatpush1.bf16.msra.mxu0 %v2115
    %2470 = vmatprep.subr.bf16.mxu0 %v2124
    %2471 = vmatpush1.bf16.msra.mxu0 %v2123
    %2472 = vmatprep.subr.bf16.mxu0 %v2132
    %2473 = vmatpush1.bf16.msra.mxu0 %v2131
    %2474 = vmatprep.subr.bf16.mxu0 %v2140
    %2475 = vmatpush1.bf16.msra.mxu0 %v2139
    %2476 = vmatprep.mubr.bf16.mxu0 %v866
    %2477 = vmatmul.mubr.bf16.gmra.mrb[0].mxu0 %v865
    %v2478 = vpop.f32.mrb[0].mxu0
    %v2479 = vadd.f32 %v2438, %v2478
    %v2480 = vpop.f32.mrb[0].mxu0
    %v2481 = vadd.f32 %v2440, %v2480
    %v2482 = vpop.f32.mrb[0].mxu0
    %v2483 = vpop.f32.mrb[0].mxu0
    %2484 = vdwg.mxu0
    %2485 = vmatprep.subr.bf16.mxu0 %v1894
    %2486 = vmatpush1.bf16.msra.mxu0 %v1893
    %2487 = vmatprep.subr.bf16.mxu0 %v1902
    %2488 = vmatpush1.bf16.msra.mxu0 %v1901
    %2489 = vmatprep.subr.bf16.mxu0 %v1910
    %2490 = vmatpush1.bf16.msra.mxu0 %v1909
    %2491 = vmatprep.subr.bf16.mxu0 %v1918
    %2492 = vmatpush1.bf16.msra.mxu0 %v1917
    %2493 = vmatprep.subr.bf16.mxu0 %v1926
    %2494 = vmatpush1.bf16.msra.mxu0 %v1925
    %2495 = vmatprep.subr.bf16.mxu0 %v1934
    %2496 = vmatpush1.bf16.msra.mxu0 %v1933
    %2497 = vmatprep.subr.bf16.mxu0 %v1942
    %2498 = vmatpush1.bf16.msra.mxu0 %v1941
    %2499 = vmatprep.subr.bf16.mxu0 %v1950
    %2500 = vmatpush1.bf16.msra.mxu0 %v1949
    %2501 = vmatprep.subr.bf16.mxu0 %v1958
    %2502 = vmatpush1.bf16.msra.mxu0 %v1957
    %2503 = vmatprep.subr.bf16.mxu0 %v1966
    %2504 = vmatpush1.bf16.msra.mxu0 %v1965
    %2505 = vmatprep.subr.bf16.mxu0 %v1974
    %2506 = vmatpush1.bf16.msra.mxu0 %v1973
    %2507 = vmatprep.subr.bf16.mxu0 %v1982
    %2508 = vmatpush1.bf16.msra.mxu0 %v1981
    %2509 = vmatprep.subr.bf16.mxu0 %v1990
    %2510 = vmatpush1.bf16.msra.mxu0 %v1989
    %2511 = vmatprep.subr.bf16.mxu0 %v1998
    %2512 = vmatpush1.bf16.msra.mxu0 %v1997
    %2513 = vmatprep.subr.bf16.mxu0 %v2006
    %2514 = vmatpush1.bf16.msra.mxu0 %v2005
    %2515 = vmatprep.subr.bf16.mxu0 %v2014
    %2516 = vmatpush1.bf16.msra.mxu0 %v2013
    %2517 = vmatprep.mubr.bf16.mxu0 %v864
    %2518 = vmatmul.mubr.bf16.gmra.mrb[0].mxu0 %v863
    %v2519 = vpop.f32.mrb[0].mxu0
    %v2520 = vadd.f32 0.0, %v2519
    %v2521 = vpop.f32.mrb[0].mxu0
    %v2522 = vadd.f32 0.0, %v2521
    %v2523 = vpop.f32.mrb[0].mxu0
    %v2524 = vpop.f32.mrb[0].mxu0
    %2525 = vdwg.mxu0
    %2526 = vmatprep.subr.bf16.mxu0 %v2022
    %2527 = vmatpush1.bf16.msra.mxu0 %v2021
    %2528 = vmatprep.subr.bf16.mxu0 %v2030
    %2529 = vmatpush1.bf16.msra.mxu0 %v2029
    %2530 = vmatprep.subr.bf16.mxu0 %v2038
    %2531 = vmatpush1.bf16.msra.mxu0 %v2037
    %2532 = vmatprep.subr.bf16.mxu0 %v2046
    %2533 = vmatpush1.bf16.msra.mxu0 %v2045
    %2534 = vmatprep.subr.bf16.mxu0 %v2054
    %2535 = vmatpush1.bf16.msra.mxu0 %v2053
    %2536 = vmatprep.subr.bf16.mxu0 %v2062
    %2537 = vmatpush1.bf16.msra.mxu0 %v2061
    %2538 = vmatprep.subr.bf16.mxu0 %v2070
    %2539 = vmatpush1.bf16.msra.mxu0 %v2069
    %2540 = vmatprep.subr.bf16.mxu0 %v2078
    %2541 = vmatpush1.bf16.msra.mxu0 %v2077
    %2542 = vmatprep.subr.bf16.mxu0 %v2086
    %2543 = vmatpush1.bf16.msra.mxu0 %v2085
    %2544 = vmatprep.subr.bf16.mxu0 %v2094
    %2545 = vmatpush1.bf16.msra.mxu0 %v2093
    %2546 = vmatprep.subr.bf16.mxu0 %v2102
    %2547 = vmatpush1.bf16.msra.mxu0 %v2101
    %2548 = vmatprep.subr.bf16.mxu0 %v2110
    %2549 = vmatpush1.bf16.msra.mxu0 %v2109
    %2550 = vmatprep.subr.bf16.mxu0 %v2118
    %2551 = vmatpush1.bf16.msra.mxu0 %v2117
    %2552 = vmatprep.subr.bf16.mxu0 %v2126
    %2553 = vmatpush1.bf16.msra.mxu0 %v2125
    %2554 = vmatprep.subr.bf16.mxu0 %v2134
    %2555 = vmatpush1.bf16.msra.mxu0 %v2133
    %2556 = vmatprep.subr.bf16.mxu0 %v2142
    %2557 = vmatpush1.bf16.msra.mxu0 %v2141
    %2558 = vmatprep.mubr.bf16.mxu0 %v866
    %2559 = vmatmul.mubr.bf16.gmra.mrb[0].mxu0 %v865
    %v2560 = vpop.f32.mrb[0].mxu0
    %v2561 = vadd.f32 %v2520, %v2560
    %v2562 = vpop.f32.mrb[0].mxu0
    %v2563 = vadd.f32 %v2522, %v2562
    %v2564 = vpop.f32.mrb[0].mxu0
    %v2565 = vpop.f32.mrb[0].mxu0
    %2566 = vdwg.mxu0
    %2567 = vmatprep.subr.bf16.mxu0 %v1896
    %2568 = vmatpush1.bf16.msra.mxu0 %v1895
    %2569 = vmatprep.subr.bf16.mxu0 %v1904
    %2570 = vmatpush1.bf16.msra.mxu0 %v1903
    %2571 = vmatprep.subr.bf16.mxu0 %v1912
    %2572 = vmatpush1.bf16.msra.mxu0 %v1911
    %2573 = vmatprep.subr.bf16.mxu0 %v1920
    %2574 = vmatpush1.bf16.msra.mxu0 %v1919
    %2575 = vmatprep.subr.bf16.mxu0 %v1928
    %2576 = vmatpush1.bf16.msra.mxu0 %v1927
    %2577 = vmatprep.subr.bf16.mxu0 %v1936
    %2578 = vmatpush1.bf16.msra.mxu0 %v1935
    %2579 = vmatprep.subr.bf16.mxu0 %v1944
    %2580 = vmatpush1.bf16.msra.mxu0 %v1943
    %2581 = vmatprep.subr.bf16.mxu0 %v1952
    %2582 = vmatpush1.bf16.msra.mxu0 %v1951
    %2583 = vmatprep.subr.bf16.mxu0 %v1960
    %2584 = vmatpush1.bf16.msra.mxu0 %v1959
    %2585 = vmatprep.subr.bf16.mxu0 %v1968
    %2586 = vmatpush1.bf16.msra.mxu0 %v1967
    %2587 = vmatprep.subr.bf16.mxu0 %v1976
    %2588 = vmatpush1.bf16.msra.mxu0 %v1975
    %2589 = vmatprep.subr.bf16.mxu0 %v1984
    %2590 = vmatpush1.bf16.msra.mxu0 %v1983
    %2591 = vmatprep.subr.bf16.mxu0 %v1992
    %2592 = vmatpush1.bf16.msra.mxu0 %v1991
    %2593 = vmatprep.subr.bf16.mxu0 %v2000
    %2594 = vmatpush1.bf16.msra.mxu0 %v1999
    %2595 = vmatprep.subr.bf16.mxu0 %v2008
    %2596 = vmatpush1.bf16.msra.mxu0 %v2007
    %2597 = vmatprep.subr.bf16.mxu0 %v2016
    %2598 = vmatpush1.bf16.msra.mxu0 %v2015
    %2599 = vmatprep.mubr.bf16.mxu0 %v864
    %2600 = vmatmul.mubr.bf16.gmra.mrb[0].mxu0 %v863
    %v2601 = vpop.f32.mrb[0].mxu0
    %v2602 = vadd.f32 0.0, %v2601
    %v2603 = vpop.f32.mrb[0].mxu0
    %v2604 = vadd.f32 0.0, %v2603
    %v2605 = vpop.f32.mrb[0].mxu0
    %v2606 = vpop.f32.mrb[0].mxu0
    %2607 = vdwg.mxu0
    %2608 = vmatprep.subr.bf16.mxu0 %v2024
    %2609 = vmatpush1.bf16.msra.mxu0 %v2023
    %2610 = vmatprep.subr.bf16.mxu0 %v2032
    %2611 = vmatpush1.bf16.msra.mxu0 %v2031
    %2612 = vmatprep.subr.bf16.mxu0 %v2040
    %2613 = vmatpush1.bf16.msra.mxu0 %v2039
    %2614 = vmatprep.subr.bf16.mxu0 %v2048
    %2615 = vmatpush1.bf16.msra.mxu0 %v2047
    %2616 = vmatprep.subr.bf16.mxu0 %v2056
    %2617 = vmatpush1.bf16.msra.mxu0 %v2055
    %2618 = vmatprep.subr.bf16.mxu0 %v2064
    %2619 = vmatpush1.bf16.msra.mxu0 %v2063
    %2620 = vmatprep.subr.bf16.mxu0 %v2072
    %2621 = vmatpush1.bf16.msra.mxu0 %v2071
    %2622 = vmatprep.subr.bf16.mxu0 %v2080
    %2623 = vmatpush1.bf16.msra.mxu0 %v2079
    %2624 = vmatprep.subr.bf16.mxu0 %v2088
    %2625 = vmatpush1.bf16.msra.mxu0 %v2087
    %2626 = vmatprep.subr.bf16.mxu0 %v2096
    %2627 = vmatpush1.bf16.msra.mxu0 %v2095
    %2628 = vmatprep.subr.bf16.mxu0 %v2104
    %2629 = vmatpush1.bf16.msra.mxu0 %v2103
    %2630 = vmatprep.subr.bf16.mxu0 %v2112
    %2631 = vmatpush1.bf16.msra.mxu0 %v2111
    %2632 = vmatprep.subr.bf16.mxu0 %v2120
    %2633 = vmatpush1.bf16.msra.mxu0 %v2119
    %2634 = vmatprep.subr.bf16.mxu0 %v2128
    %2635 = vmatpush1.bf16.msra.mxu0 %v2127
    %2636 = vmatprep.subr.bf16.mxu0 %v2136
    %2637 = vmatpush1.bf16.msra.mxu0 %v2135
    %2638 = vmatprep.subr.bf16.mxu0 %v2144
    %2639 = vmatpush1.bf16.msra.mxu0 %v2143
    %2640 = vmatprep.mubr.bf16.mxu0 %v866
    %2641 = vmatmul.mubr.bf16.gmra.mrb[0].mxu0 %v865
    %v2642 = vpop.f32.mrb[0].mxu0
    %v2643 = vadd.f32 %v2602, %v2642
    %v2644 = vpop.f32.mrb[0].mxu0
    %v2645 = vadd.f32 %v2604, %v2644
    %v2646 = vpop.f32.mrb[0].mxu0
    %v2647 = vpop.f32.mrb[0].mxu0
    %2648 = vdwg.mxu0
    %2649 = vmatprep.subr.bf16.mxu0 %v1898
    %2650 = vmatpush1.bf16.msra.mxu0 %v1897
    %2651 = vmatprep.subr.bf16.mxu0 %v1906
    %2652 = vmatpush1.bf16.msra.mxu0 %v1905
    %2653 = vmatprep.subr.bf16.mxu0 %v1914
    %2654 = vmatpush1.bf16.msra.mxu0 %v1913
    %2655 = vmatprep.subr.bf16.mxu0 %v1922
    %2656 = vmatpush1.bf16.msra.mxu0 %v1921
    %2657 = vmatprep.subr.bf16.mxu0 %v1930
    %2658 = vmatpush1.bf16.msra.mxu0 %v1929
    %2659 = vmatprep.subr.bf16.mxu0 %v1938
    %2660 = vmatpush1.bf16.msra.mxu0 %v1937
    %2661 = vmatprep.subr.bf16.mxu0 %v1946
    %2662 = vmatpush1.bf16.msra.mxu0 %v1945
    %2663 = vmatprep.subr.bf16.mxu0 %v1954
    %2664 = vmatpush1.bf16.msra.mxu0 %v1953
    %2665 = vmatprep.subr.bf16.mxu0 %v1962
    %2666 = vmatpush1.bf16.msra.mxu0 %v1961
    %2667 = vmatprep.subr.bf16.mxu0 %v1970
    %2668 = vmatpush1.bf16.msra.mxu0 %v1969
    %2669 = vmatprep.subr.bf16.mxu0 %v1978
    %2670 = vmatpush1.bf16.msra.mxu0 %v1977
    %2671 = vmatprep.subr.bf16.mxu0 %v1986
    %2672 = vmatpush1.bf16.msra.mxu0 %v1985
    %2673 = vmatprep.subr.bf16.mxu0 %v1994
    %2674 = vmatpush1.bf16.msra.mxu0 %v1993
    %2675 = vmatprep.subr.bf16.mxu0 %v2002
    %2676 = vmatpush1.bf16.msra.mxu0 %v2001
    %2677 = vmatprep.subr.bf16.mxu0 %v2010
    %2678 = vmatpush1.bf16.msra.mxu0 %v2009
    %2679 = vmatprep.subr.bf16.mxu0 %v2018
    %2680 = vmatpush1.bf16.msra.mxu0 %v2017
    %2681 = vmatprep.mubr.bf16.mxu0 %v864
    %2682 = vmatmul.mubr.bf16.gmra.mrb[0].mxu0 %v863
    %v2683 = vpop.f32.mrb[0].mxu0
    %v2684 = vadd.f32 0.0, %v2683
    %v2685 = vpop.f32.mrb[0].mxu0
    %v2686 = vadd.f32 0.0, %v2685
    %v2687 = vpop.f32.mrb[0].mxu0
    %v2688 = vpop.f32.mrb[0].mxu0
    %2689 = vdwg.mxu0
    %2690 = vmatprep.subr.bf16.mxu0 %v2026
    %2691 = vmatpush1.bf16.msra.mxu0 %v2025
    %2692 = vmatprep.subr.bf16.mxu0 %v2034
    %2693 = vmatpush1.bf16.msra.mxu0 %v2033
    %2694 = vmatprep.subr.bf16.mxu0 %v2042
    %2695 = vmatpush1.bf16.msra.mxu0 %v2041
    %2696 = vmatprep.subr.bf16.mxu0 %v2050
    %2697 = vmatpush1.bf16.msra.mxu0 %v2049
    %2698 = vmatprep.subr.bf16.mxu0 %v2058
    %2699 = vmatpush1.bf16.msra.mxu0 %v2057
    %2700 = vmatprep.subr.bf16.mxu0 %v2066
    %2701 = vmatpush1.bf16.msra.mxu0 %v2065
    %2702 = vmatprep.subr.bf16.mxu0 %v2074
    %2703 = vmatpush1.bf16.msra.mxu0 %v2073
    %2704 = vmatprep.subr.bf16.mxu0 %v2082
    %2705 = vmatpush1.bf16.msra.mxu0 %v2081
    %2706 = vmatprep.subr.bf16.mxu0 %v2090
    %2707 = vmatpush1.bf16.msra.mxu0 %v2089
    %2708 = vmatprep.subr.bf16.mxu0 %v2098
    %2709 = vmatpush1.bf16.msra.mxu0 %v2097
    %2710 = vmatprep.subr.bf16.mxu0 %v2106
    %2711 = vmatpush1.bf16.msra.mxu0 %v2105
    %2712 = vmatprep.subr.bf16.mxu0 %v2114
    %2713 = vmatpush1.bf16.msra.mxu0 %v2113
    %2714 = vmatprep.subr.bf16.mxu0 %v2122
    %2715 = vmatpush1.bf16.msra.mxu0 %v2121
    %2716 = vmatprep.subr.bf16.mxu0 %v2130
    %2717 = vmatpush1.bf16.msra.mxu0 %v2129
    %2718 = vmatprep.subr.bf16.mxu0 %v2138
    %2719 = vmatpush1.bf16.msra.mxu0 %v2137
    %2720 = vmatprep.subr.bf16.mxu0 %v2146
    %2721 = vmatpush1.bf16.msra.mxu0 %v2145
    %2722 = vmatprep.mubr.bf16.mxu0 %v866
    %2723 = vmatmul.mubr.bf16.gmra.mrb[0].mxu0 %v865
    %v2724 = vpop.f32.mrb[0].mxu0
    %v2725 = vadd.f32 %v2684, %v2724
    %v2726 = vpop.f32.mrb[0].mxu0
    %v2727 = vadd.f32 %v2686, %v2726
    %v2728 = vpop.f32.mrb[0].mxu0
    %v2729 = vpop.f32.mrb[0].mxu0
    %2730 = vdwg.mxu0
    %v2731 = vld [vmem:[#allocation13] sm:$0xff]
    %v2732 = vpack.c.bf16 %v2479, %v2479
    %v2733 = vpack.c.bf16 %v2481, %v2481
    %v2734 = vpack.c.bf16 %v2561, %v2561
    %v2735 = vpack.c.bf16 %v2563, %v2563
    %v2736 = vpack.c.bf16 %v2643, %v2643
    %v2737 = vpack.c.bf16 %v2645, %v2645
    %v2738 = vpack.c.bf16 %v2725, %v2725
    %v2739 = vpack.c.bf16 %v2727, %v2727
    %v2741 = vcombine.high %v2731, %v2731
    %v2743 = vunpack.c.l.s4 1966171168
    %v2744 = vunpack.c.0.s8 %v2743
    %v2745 = vlaneseq
    %v2746 = vshrl.u32 %v2745, 7
    %v2747 = vsub.s32 %v2744, %v2746
    %v2748 = vrot.slane %v2731, %v2747
    %v2750 = vunpack.c.l.s4 1966171168
    %v2751 = vunpack.c.0.s8 %v2750
    %v2752 = vlaneseq
    %v2753 = vshrl.u32 %v2752, 7
    %v2754 = vsub.s32 %v2751, %v2753
    %v2755 = vrot.slane %v2741, %v2754
    %v2756 = vcombine.high %v2748, %v2748
    %v2757 = vcombine.high %v2755, %v2755
    %v2759 = vunpack.c.l.s4 1966171168
    %v2760 = vunpack.c.0.s8 %v2759
    %v2761 = vlaneseq
    %v2762 = vshrl.u32 %v2761, 7
    %v2763 = vsub.s32 %v2760, %v2762
    %v2764 = vrot.slane %v2748, %v2763
    %v2766 = vunpack.c.l.s4 1966171168
    %v2767 = vunpack.c.0.s8 %v2766
    %v2768 = vlaneseq
    %v2769 = vshrl.u32 %v2768, 7
    %v2770 = vsub.s32 %v2767, %v2769
    %v2771 = vrot.slane %v2755, %v2770
    %v2773 = vunpack.c.l.s4 1966171168
    %v2774 = vunpack.c.0.s8 %v2773
    %v2775 = vlaneseq
    %v2776 = vshrl.u32 %v2775, 7
    %v2777 = vsub.s32 %v2774, %v2776
    %v2778 = vrot.slane %v2756, %v2777
    %v2780 = vunpack.c.l.s4 1966171168
    %v2781 = vunpack.c.0.s8 %v2780
    %v2782 = vlaneseq
    %v2783 = vshrl.u32 %v2782, 7
    %v2784 = vsub.s32 %v2781, %v2783
    %v2785 = vrot.slane %v2757, %v2784
    %v2786 = vcombine.high %v2764, %v2764
    %v2787 = vcombine.high %v2771, %v2771
    %v2788 = vcombine.high %v2778, %v2778
    %v2789 = vcombine.high %v2785, %v2785
    %v2791 = vpack.i.b16 %v2764, %v2764
    %v2793 = vlaneseq
    %v2794 = vshrl.u32 %v2793, 7
    %v2795 = vsub.s32 0, %v2794
    %v2796 = vrot.slane %v2791, %v2795
    %v2798 = vpack.i.b16 %v2778, %v2778
    %v2800 = vlaneseq
    %v2801 = vshrl.u32 %v2800, 7
    %v2802 = vsub.s32 0, %v2801
    %v2803 = vrot.slane %v2798, %v2802
    %v2805 = vpack.i.b16 %v2786, %v2786
    %v2807 = vlaneseq
    %v2808 = vshrl.u32 %v2807, 7
    %v2809 = vsub.s32 0, %v2808
    %v2810 = vrot.slane %v2805, %v2809
    %v2812 = vpack.i.b16 %v2788, %v2788
    %v2814 = vlaneseq
    %v2815 = vshrl.u32 %v2814, 7
    %v2816 = vsub.s32 0, %v2815
    %v2817 = vrot.slane %v2812, %v2816
    %v2819 = vpack.i.b16 %v2771, %v2771
    %v2821 = vlaneseq
    %v2822 = vshrl.u32 %v2821, 7
    %v2823 = vsub.s32 0, %v2822
    %v2824 = vrot.slane %v2819, %v2823
    %v2826 = vpack.i.b16 %v2785, %v2785
    %v2828 = vlaneseq
    %v2829 = vshrl.u32 %v2828, 7
    %v2830 = vsub.s32 0, %v2829
    %v2831 = vrot.slane %v2826, %v2830
    %v2833 = vpack.i.b16 %v2787, %v2787
    %v2835 = vlaneseq
    %v2836 = vshrl.u32 %v2835, 7
    %v2837 = vsub.s32 0, %v2836
    %v2838 = vrot.slane %v2833, %v2837
    %v2840 = vpack.i.b16 %v2789, %v2789
    %v2842 = vlaneseq
    %v2843 = vshrl.u32 %v2842, 7
    %v2844 = vsub.s32 0, %v2843
    %v2845 = vrot.slane %v2840, %v2844
    %v2846 = vadd.bf16 %v2732, %v2796
    %v2847 = vadd.bf16 %v2733, %v2803
    %v2848 = vadd.bf16 %v2734, %v2810
    %v2849 = vadd.bf16 %v2735, %v2817
    %v2850 = vadd.bf16 %v2736, %v2824
    %v2851 = vadd.bf16 %v2737, %v2831
    %v2852 = vadd.bf16 %v2738, %v2838
    %v2853 = vadd.bf16 %v2739, %v2845
    %v2854 = vmul.bf16 %v2846, 1045249613
    %v2855 = vmul.bf16 %v2847, 1045249613
    %v2856 = vmul.bf16 %v2848, 1045249613
    %v2857 = vmul.bf16 %v2849, 1045249613
    %v2858 = vmul.bf16 %v2850, 1045249613
    %v2859 = vmul.bf16 %v2851, 1045249613
    %v2860 = vmul.bf16 %v2852, 1045249613
    %v2861 = vmul.bf16 %v2853, 1045249613
    %v2862 = vmax.bf16 %v2846, %v2854
    %v2863 = vmax.bf16 %v2847, %v2855
    %v2864 = vmax.bf16 %v2848, %v2856
    %v2865 = vmax.bf16 %v2849, %v2857
    %v2866 = vmax.bf16 %v2850, %v2858
    %v2867 = vmax.bf16 %v2851, %v2859
    %v2868 = vmax.bf16 %v2852, %v2860
    %v2869 = vmax.bf16 %v2853, %v2861
    %v2870 = vld [vmem:[#allocation14] sm:$0xff]
    %v2871 = vld [vmem:[#allocation14 + $0x8] sm:$0xff]
    %v2872 = vld [vmem:[#allocation14 + $0x10] sm:$0xff]
    %v2873 = vld [vmem:[#allocation14 + $0x18] sm:$0xf]
    %v2874 = vld [vmem:[#allocation14 + $0x1c] sm:$0xff]
    %v2875 = vld [vmem:[#allocation14 + $0x24] sm:$0xff]
    %v2876 = vld [vmem:[#allocation14 + $0x2c] sm:$0xff]
    %v2877 = vld [vmem:[#allocation14 + $0x34] sm:$0xf]
    %v2878 = vld [vmem:[#allocation14 + $0x38] sm:$0xff]
    %v2879 = vld [vmem:[#allocation14 + $0x40] sm:$0xff]
    %v2880 = vld [vmem:[#allocation14 + $0x48] sm:$0xff]
    %v2881 = vld [vmem:[#allocation14 + $0x50] sm:$0xf]
    %v2882 = vld [vmem:[#allocation14 + $0x54] sm:$0xff]
    %v2883 = vld [vmem:[#allocation14 + $0x5c] sm:$0xff]
    %v2884 = vld [vmem:[#allocation14 + $0x64] sm:$0xff]
    %v2885 = vld [vmem:[#allocation14 + $0x6c] sm:$0xf]
    %v2886 = vld [vmem:[#allocation14 + $0x70] sm:$0xff]
    %v2887 = vld [vmem:[#allocation14 + $0x78] sm:$0xff]
    %v2888 = vld [vmem:[#allocation14 + $0x80] sm:$0xff]
    %v2889 = vld [vmem:[#allocation14 + $0x88] sm:$0xf]
    %v2890 = vld [vmem:[#allocation14 + $0x8c] sm:$0xff]
    %v2891 = vld [vmem:[#allocation14 + $0x94] sm:$0xff]
    %v2892 = vld [vmem:[#allocation14 + $0x9c] sm:$0xff]
    %v2893 = vld [vmem:[#allocation14 + $0xa4] sm:$0xf]
    %v2894 = vld [vmem:[#allocation14 + $0xa8] sm:$0xff]
    %v2895 = vld [vmem:[#allocation14 + $0xb0] sm:$0xff]
    %v2896 = vld [vmem:[#allocation14 + $0xb8] sm:$0xff]
    %v2897 = vld [vmem:[#allocation14 + $0xc0] sm:$0xf]
    %v2898 = vld [vmem:[#allocation14 + $0xc4] sm:$0xff]
    %v2899 = vld [vmem:[#allocation14 + $0xcc] sm:$0xff]
    %v2900 = vld [vmem:[#allocation14 + $0xd4] sm:$0xff]
    %v2901 = vld [vmem:[#allocation14 + $0xdc] sm:$0xf]
    %v2902 = vld [vmem:[#allocation14 + $0xe0] sm:$0xff]
    %v2903 = vld [vmem:[#allocation14 + $0xe8] sm:$0xff]
    %v2904 = vld [vmem:[#allocation14 + $0xf0] sm:$0xff]
    %v2905 = vld [vmem:[#allocation14 + $0xf8] sm:$0xf]
    %v2906 = vld [vmem:[#allocation14 + $0xfc] sm:$0xff]
    %v2907 = vld [vmem:[#allocation14 + $0x104] sm:$0xff]
    %v2908 = vld [vmem:[#allocation14 + $0x10c] sm:$0xff]
    %v2909 = vld [vmem:[#allocation14 + $0x114] sm:$0xf]
    %v2910 = vld [vmem:[#allocation14 + $0x118] sm:$0xff]
    %v2911 = vld [vmem:[#allocation14 + $0x120] sm:$0xff]
    %v2912 = vld [vmem:[#allocation14 + $0x128] sm:$0xff]
    %v2913 = vld [vmem:[#allocation14 + $0x130] sm:$0xf]
    %v2914 = vld [vmem:[#allocation14 + $0x134] sm:$0xff]
    %v2915 = vld [vmem:[#allocation14 + $0x13c] sm:$0xff]
    %v2916 = vld [vmem:[#allocation14 + $0x144] sm:$0xff]
    %v2917 = vld [vmem:[#allocation14 + $0x14c] sm:$0xf]
    %v2918 = vld [vmem:[#allocation14 + $0x150] sm:$0xff]
    %v2919 = vld [vmem:[#allocation14 + $0x158] sm:$0xff]
    %v2920 = vld [vmem:[#allocation14 + $0x160] sm:$0xff]
    %v2921 = vld [vmem:[#allocation14 + $0x168] sm:$0xf]
    %v2922 = vld [vmem:[#allocation14 + $0x16c] sm:$0xff]
    %v2923 = vld [vmem:[#allocation14 + $0x174] sm:$0xff]
    %v2924 = vld [vmem:[#allocation14 + $0x17c] sm:$0xff]
    %v2925 = vld [vmem:[#allocation14 + $0x184] sm:$0xf]
    %v2926 = vld [vmem:[#allocation14 + $0x188] sm:$0xff]
    %v2927 = vld [vmem:[#allocation14 + $0x190] sm:$0xff]
    %v2928 = vld [vmem:[#allocation14 + $0x198] sm:$0xff]
    %v2929 = vld [vmem:[#allocation14 + $0x1a0] sm:$0xf]
    %v2930 = vld [vmem:[#allocation14 + $0x1a4] sm:$0xff]
    %v2931 = vld [vmem:[#allocation14 + $0x1ac] sm:$0xff]
    %v2932 = vld [vmem:[#allocation14 + $0x1b4] sm:$0xff]
    %v2933 = vld [vmem:[#allocation14 + $0x1bc] sm:$0xf]
    %v2934 = vld [vmem:[#allocation14 + $0x1c0] sm:$0xff]
    %v2935 = vld [vmem:[#allocation14 + $0x1c8] sm:$0xff]
    %v2936 = vld [vmem:[#allocation14 + $0x1d0] sm:$0xff]
    %v2937 = vld [vmem:[#allocation14 + $0x1d8] sm:$0xf]
    %v2938 = vld [vmem:[#allocation14 + $0x1dc] sm:$0xff]
    %v2939 = vld [vmem:[#allocation14 + $0x1e4] sm:$0xff]
    %v2940 = vld [vmem:[#allocation14 + $0x1ec] sm:$0xff]
    %v2941 = vld [vmem:[#allocation14 + $0x1f4] sm:$0xf]
    %v2942 = vld [vmem:[#allocation14 + $0x1f8] sm:$0xff]
    %v2943 = vld [vmem:[#allocation14 + $0x200] sm:$0xff]
    %v2944 = vld [vmem:[#allocation14 + $0x208] sm:$0xff]
    %v2945 = vld [vmem:[#allocation14 + $0x210] sm:$0xf]
    %v2946 = vld [vmem:[#allocation14 + $0x214] sm:$0xff]
    %v2947 = vld [vmem:[#allocation14 + $0x21c] sm:$0xff]
    %v2948 = vld [vmem:[#allocation14 + $0x224] sm:$0xff]
    %v2949 = vld [vmem:[#allocation14 + $0x22c] sm:$0xf]
    %v2950 = vld [vmem:[#allocation14 + $0x230] sm:$0xff]
    %v2951 = vld [vmem:[#allocation14 + $0x238] sm:$0xff]
    %v2952 = vld [vmem:[#allocation14 + $0x240] sm:$0xff]
    %v2953 = vld [vmem:[#allocation14 + $0x248] sm:$0xf]
    %v2954 = vld [vmem:[#allocation14 + $0x24c] sm:$0xff]
    %v2955 = vld [vmem:[#allocation14 + $0x254] sm:$0xff]
    %v2956 = vld [vmem:[#allocation14 + $0x25c] sm:$0xff]
    %v2957 = vld [vmem:[#allocation14 + $0x264] sm:$0xf]
    %v2958 = vld [vmem:[#allocation14 + $0x268] sm:$0xff]
    %v2959 = vld [vmem:[#allocation14 + $0x270] sm:$0xff]
    %v2960 = vld [vmem:[#allocation14 + $0x278] sm:$0xff]
    %v2961 = vld [vmem:[#allocation14 + $0x280] sm:$0xf]
    %v2962 = vld [vmem:[#allocation14 + $0x284] sm:$0xff]
    %v2963 = vld [vmem:[#allocation14 + $0x28c] sm:$0xff]
    %v2964 = vld [vmem:[#allocation14 + $0x294] sm:$0xff]
    %v2965 = vld [vmem:[#allocation14 + $0x29c] sm:$0xf]
    %v2966 = vld [vmem:[#allocation14 + $0x2a0] sm:$0xff]
    %v2967 = vld [vmem:[#allocation14 + $0x2a8] sm:$0xff]
    %v2968 = vld [vmem:[#allocation14 + $0x2b0] sm:$0xff]
    %v2969 = vld [vmem:[#allocation14 + $0x2b8] sm:$0xf]
    %v2970 = vld [vmem:[#allocation14 + $0x2bc] sm:$0xff]
    %v2971 = vld [vmem:[#allocation14 + $0x2c4] sm:$0xff]
    %v2972 = vld [vmem:[#allocation14 + $0x2cc] sm:$0xff]
    %v2973 = vld [vmem:[#allocation14 + $0x2d4] sm:$0xf]
    %v2974 = vld [vmem:[#allocation14 + $0x2d8] sm:$0xff]
    %v2975 = vld [vmem:[#allocation14 + $0x2e0] sm:$0xff]
    %v2976 = vld [vmem:[#allocation14 + $0x2e8] sm:$0xff]
    %v2977 = vld [vmem:[#allocation14 + $0x2f0] sm:$0xf]
    %v2978 = vld [vmem:[#allocation14 + $0x2f4] sm:$0xff]
    %v2979 = vld [vmem:[#allocation14 + $0x2fc] sm:$0xff]
    %v2980 = vld [vmem:[#allocation14 + $0x304] sm:$0xff]
    %v2981 = vld [vmem:[#allocation14 + $0x30c] sm:$0xf]
    %v2982 = vld [vmem:[#allocation14 + $0x310] sm:$0xff]
    %v2983 = vld [vmem:[#allocation14 + $0x318] sm:$0xff]
    %v2984 = vld [vmem:[#allocation14 + $0x320] sm:$0xff]
    %v2985 = vld [vmem:[#allocation14 + $0x328] sm:$0xf]
    %v2986 = vld [vmem:[#allocation14 + $0x32c] sm:$0xff]
    %v2987 = vld [vmem:[#allocation14 + $0x334] sm:$0xff]
    %v2988 = vld [vmem:[#allocation14 + $0x33c] sm:$0xff]
    %v2989 = vld [vmem:[#allocation14 + $0x344] sm:$0xf]
    %v2990 = vld [vmem:[#allocation14 + $0x348] sm:$0xff]
    %v2991 = vld [vmem:[#allocation14 + $0x350] sm:$0xff]
    %v2992 = vld [vmem:[#allocation14 + $0x358] sm:$0xff]
    %v2993 = vld [vmem:[#allocation14 + $0x360] sm:$0xf]
    %v2994 = vld [vmem:[#allocation14 + $0x364] sm:$0xff]
    %v2995 = vld [vmem:[#allocation14 + $0x36c] sm:$0xff]
    %v2996 = vld [vmem:[#allocation14 + $0x374] sm:$0xff]
    %v2997 = vld [vmem:[#allocation14 + $0x37c] sm:$0xf]
    %v2998 = vld [vmem:[#allocation14 + $0x380] sm:$0xff]
    %v2999 = vld [vmem:[#allocation14 + $0x388] sm:$0xff]
    %v3000 = vld [vmem:[#allocation14 + $0x390] sm:$0xff]
    %v3001 = vld [vmem:[#allocation14 + $0x398] sm:$0xf]
    %v3002 = vld [vmem:[#allocation14 + $0x39c] sm:$0xff]
    %v3003 = vld [vmem:[#allocation14 + $0x3a4] sm:$0xff]
    %v3004 = vld [vmem:[#allocation14 + $0x3ac] sm:$0xff]
    %v3005 = vld [vmem:[#allocation14 + $0x3b4] sm:$0xf]
    %v3006 = vld [vmem:[#allocation14 + $0x3b8] sm:$0xff]
    %v3007 = vld [vmem:[#allocation14 + $0x3c0] sm:$0xff]
    %v3008 = vld [vmem:[#allocation14 + $0x3c8] sm:$0xff]
    %v3009 = vld [vmem:[#allocation14 + $0x3d0] sm:$0xf]
    %v3010 = vld [vmem:[#allocation14 + $0x3d4] sm:$0xff]
    %v3011 = vld [vmem:[#allocation14 + $0x3dc] sm:$0xff]
    %v3012 = vld [vmem:[#allocation14 + $0x3e4] sm:$0xff]
    %v3013 = vld [vmem:[#allocation14 + $0x3ec] sm:$0xf]
    %v3014 = vld [vmem:[#allocation14 + $0x3f0] sm:$0xff]
    %v3015 = vld [vmem:[#allocation14 + $0x3f8] sm:$0xff]
    %v3016 = vld [vmem:[#allocation14 + $0x400] sm:$0xff]
    %v3017 = vld [vmem:[#allocation14 + $0x408] sm:$0xf]
    %v3018 = vld [vmem:[#allocation14 + $0x40c] sm:$0xff]
    %v3019 = vld [vmem:[#allocation14 + $0x414] sm:$0xff]
    %v3020 = vld [vmem:[#allocation14 + $0x41c] sm:$0xff]
    %v3021 = vld [vmem:[#allocation14 + $0x424] sm:$0xf]
    %v3022 = vld [vmem:[#allocation14 + $0x428] sm:$0xff]
    %v3023 = vld [vmem:[#allocation14 + $0x430] sm:$0xff]
    %v3024 = vld [vmem:[#allocation14 + $0x438] sm:$0xff]
    %v3025 = vld [vmem:[#allocation14 + $0x440] sm:$0xf]
    %v3026 = vld [vmem:[#allocation14 + $0x444] sm:$0xff]
    %v3027 = vld [vmem:[#allocation14 + $0x44c] sm:$0xff]
    %v3028 = vld [vmem:[#allocation14 + $0x454] sm:$0xff]
    %v3029 = vld [vmem:[#allocation14 + $0x45c] sm:$0xf]
    %v3030 = vld [vmem:[#allocation14 + $0x460] sm:$0xff]
    %v3031 = vld [vmem:[#allocation14 + $0x468] sm:$0xff]
    %v3032 = vld [vmem:[#allocation14 + $0x470] sm:$0xff]
    %v3033 = vld [vmem:[#allocation14 + $0x478] sm:$0xf]
    %v3034 = vld [vmem:[#allocation14 + $0x47c] sm:$0xff]
    %v3035 = vld [vmem:[#allocation14 + $0x484] sm:$0xff]
    %v3036 = vld [vmem:[#allocation14 + $0x48c] sm:$0xff]
    %v3037 = vld [vmem:[#allocation14 + $0x494] sm:$0xf]
    %v3038 = vld [vmem:[#allocation14 + $0x498] sm:$0xff]
    %v3039 = vld [vmem:[#allocation14 + $0x4a0] sm:$0xff]
    %v3040 = vld [vmem:[#allocation14 + $0x4a8] sm:$0xff]
    %v3041 = vld [vmem:[#allocation14 + $0x4b0] sm:$0xf]
    %v3042 = vld [vmem:[#allocation14 + $0x4b4] sm:$0xff]
    %v3043 = vld [vmem:[#allocation14 + $0x4bc] sm:$0xff]
    %v3044 = vld [vmem:[#allocation14 + $0x4c4] sm:$0xff]
    %v3045 = vld [vmem:[#allocation14 + $0x4cc] sm:$0xf]
    %v3046 = vld [vmem:[#allocation14 + $0x4d0] sm:$0xff]
    %v3047 = vld [vmem:[#allocation14 + $0x4d8] sm:$0xff]
    %v3048 = vld [vmem:[#allocation14 + $0x4e0] sm:$0xff]
    %v3049 = vld [vmem:[#allocation14 + $0x4e8] sm:$0xf]
    %v3050 = vld [vmem:[#allocation14 + $0x4ec] sm:$0xff]
    %v3051 = vld [vmem:[#allocation14 + $0x4f4] sm:$0xff]
    %v3052 = vld [vmem:[#allocation14 + $0x4fc] sm:$0xff]
    %v3053 = vld [vmem:[#allocation14 + $0x504] sm:$0xf]
    %v3054 = vld [vmem:[#allocation14 + $0x508] sm:$0xff]
    %v3055 = vld [vmem:[#allocation14 + $0x510] sm:$0xff]
    %v3056 = vld [vmem:[#allocation14 + $0x518] sm:$0xff]
    %v3057 = vld [vmem:[#allocation14 + $0x520] sm:$0xf]
    %v3058 = vld [vmem:[#allocation14 + $0x524] sm:$0xff]
    %v3059 = vld [vmem:[#allocation14 + $0x52c] sm:$0xff]
    %v3060 = vld [vmem:[#allocation14 + $0x534] sm:$0xff]
    %v3061 = vld [vmem:[#allocation14 + $0x53c] sm:$0xf]
    %v3062 = vld [vmem:[#allocation14 + $0x540] sm:$0xff]
    %v3063 = vld [vmem:[#allocation14 + $0x548] sm:$0xff]
    %v3064 = vld [vmem:[#allocation14 + $0x550] sm:$0xff]
    %v3065 = vld [vmem:[#allocation14 + $0x558] sm:$0xf]
    %v3066 = vld [vmem:[#allocation14 + $0x55c] sm:$0xff]
    %v3067 = vld [vmem:[#allocation14 + $0x564] sm:$0xff]
    %v3068 = vld [vmem:[#allocation14 + $0x56c] sm:$0xff]
    %v3069 = vld [vmem:[#allocation14 + $0x574] sm:$0xf]
    %v3070 = vld [vmem:[#allocation14 + $0x578] sm:$0xff]
    %v3071 = vld [vmem:[#allocation14 + $0x580] sm:$0xff]
    %v3072 = vld [vmem:[#allocation14 + $0x588] sm:$0xff]
    %v3073 = vld [vmem:[#allocation14 + $0x590] sm:$0xf]
    %v3074 = vld [vmem:[#allocation14 + $0x594] sm:$0xff]
    %v3075 = vld [vmem:[#allocation14 + $0x59c] sm:$0xff]
    %v3076 = vld [vmem:[#allocation14 + $0x5a4] sm:$0xff]
    %v3077 = vld [vmem:[#allocation14 + $0x5ac] sm:$0xf]
    %v3078 = vld [vmem:[#allocation14 + $0x5b0] sm:$0xff]
    %v3079 = vld [vmem:[#allocation14 + $0x5b8] sm:$0xff]
    %v3080 = vld [vmem:[#allocation14 + $0x5c0] sm:$0xff]
    %v3081 = vld [vmem:[#allocation14 + $0x5c8] sm:$0xf]
    %v3082 = vld [vmem:[#allocation14 + $0x5cc] sm:$0xff]
    %v3083 = vld [vmem:[#allocation14 + $0x5d4] sm:$0xff]
    %v3084 = vld [vmem:[#allocation14 + $0x5dc] sm:$0xff]
    %v3085 = vld [vmem:[#allocation14 + $0x5e4] sm:$0xf]
    %v3086 = vld [vmem:[#allocation14 + $0x5e8] sm:$0xff]
    %v3087 = vld [vmem:[#allocation14 + $0x5f0] sm:$0xff]
    %v3088 = vld [vmem:[#allocation14 + $0x5f8] sm:$0xff]
    %v3089 = vld [vmem:[#allocation14 + $0x600] sm:$0xf]
    %v3090 = vld [vmem:[#allocation14 + $0x604] sm:$0xff]
    %v3091 = vld [vmem:[#allocation14 + $0x60c] sm:$0xff]
    %v3092 = vld [vmem:[#allocation14 + $0x614] sm:$0xff]
    %v3093 = vld [vmem:[#allocation14 + $0x61c] sm:$0xf]
    %v3094 = vld [vmem:[#allocation14 + $0x620] sm:$0xff]
    %v3095 = vld [vmem:[#allocation14 + $0x628] sm:$0xff]
    %v3096 = vld [vmem:[#allocation14 + $0x630] sm:$0xff]
    %v3097 = vld [vmem:[#allocation14 + $0x638] sm:$0xf]
    %v3098 = vld [vmem:[#allocation14 + $0x63c] sm:$0xff]
    %v3099 = vld [vmem:[#allocation14 + $0x644] sm:$0xff]
    %v3100 = vld [vmem:[#allocation14 + $0x64c] sm:$0xff]
    %v3101 = vld [vmem:[#allocation14 + $0x654] sm:$0xf]
    %v3102 = vld [vmem:[#allocation14 + $0x658] sm:$0xff]
    %v3103 = vld [vmem:[#allocation14 + $0x660] sm:$0xff]
    %v3104 = vld [vmem:[#allocation14 + $0x668] sm:$0xff]
    %v3105 = vld [vmem:[#allocation14 + $0x670] sm:$0xf]
    %v3106 = vld [vmem:[#allocation14 + $0x674] sm:$0xff]
    %v3107 = vld [vmem:[#allocation14 + $0x67c] sm:$0xff]
    %v3108 = vld [vmem:[#allocation14 + $0x684] sm:$0xff]
    %v3109 = vld [vmem:[#allocation14 + $0x68c] sm:$0xf]
    %v3110 = vld [vmem:[#allocation14 + $0x690] sm:$0xff]
    %v3111 = vld [vmem:[#allocation14 + $0x698] sm:$0xff]
    %v3112 = vld [vmem:[#allocation14 + $0x6a0] sm:$0xff]
    %v3113 = vld [vmem:[#allocation14 + $0x6a8] sm:$0xf]
    %v3114 = vld [vmem:[#allocation14 + $0x6ac] sm:$0xff]
    %v3115 = vld [vmem:[#allocation14 + $0x6b4] sm:$0xff]
    %v3116 = vld [vmem:[#allocation14 + $0x6bc] sm:$0xff]
    %v3117 = vld [vmem:[#allocation14 + $0x6c4] sm:$0xf]
    %v3118 = vld [vmem:[#allocation14 + $0x6c8] sm:$0xff]
    %v3119 = vld [vmem:[#allocation14 + $0x6d0] sm:$0xff]
    %v3120 = vld [vmem:[#allocation14 + $0x6d8] sm:$0xff]
    %v3121 = vld [vmem:[#allocation14 + $0x6e0] sm:$0xf]
    %v3122 = vld [vmem:[#allocation14 + $0x6e4] sm:$0xff]
    %v3123 = vld [vmem:[#allocation14 + $0x6ec] sm:$0xff]
    %v3124 = vld [vmem:[#allocation14 + $0x6f4] sm:$0xff]
    %v3125 = vld [vmem:[#allocation14 + $0x6fc] sm:$0xf]
    %v3126 = vld [vmem:[#allocation14 + $0x700] sm:$0xff]
    %v3127 = vld [vmem:[#allocation14 + $0x708] sm:$0xff]
    %v3128 = vld [vmem:[#allocation14 + $0x710] sm:$0xff]
    %v3129 = vld [vmem:[#allocation14 + $0x718] sm:$0xf]
    %v3130 = vld [vmem:[#allocation14 + $0x71c] sm:$0xff]
    %v3131 = vld [vmem:[#allocation14 + $0x724] sm:$0xff]
    %v3132 = vld [vmem:[#allocation14 + $0x72c] sm:$0xff]
    %v3133 = vld [vmem:[#allocation14 + $0x734] sm:$0xf]
    %v3134 = vld [vmem:[#allocation14 + $0x738] sm:$0xff]
    %v3135 = vld [vmem:[#allocation14 + $0x740] sm:$0xff]
    %v3136 = vld [vmem:[#allocation14 + $0x748] sm:$0xff]
    %v3137 = vld [vmem:[#allocation14 + $0x750] sm:$0xf]
    %v3138 = vld [vmem:[#allocation14 + $0x754] sm:$0xff]
    %v3139 = vld [vmem:[#allocation14 + $0x75c] sm:$0xff]
    %v3140 = vld [vmem:[#allocation14 + $0x764] sm:$0xff]
    %v3141 = vld [vmem:[#allocation14 + $0x76c] sm:$0xf]
    %v3142 = vld [vmem:[#allocation14 + $0x770] sm:$0xff]
    %v3143 = vld [vmem:[#allocation14 + $0x778] sm:$0xff]
    %v3144 = vld [vmem:[#allocation14 + $0x780] sm:$0xff]
    %v3145 = vld [vmem:[#allocation14 + $0x788] sm:$0xf]
    %v3146 = vld [vmem:[#allocation14 + $0x78c] sm:$0xff]
    %v3147 = vld [vmem:[#allocation14 + $0x794] sm:$0xff]
    %v3148 = vld [vmem:[#allocation14 + $0x79c] sm:$0xff]
    %v3149 = vld [vmem:[#allocation14 + $0x7a4] sm:$0xf]
    %v3150 = vld [vmem:[#allocation14 + $0x7a8] sm:$0xff]
    %v3151 = vld [vmem:[#allocation14 + $0x7b0] sm:$0xff]
    %v3152 = vld [vmem:[#allocation14 + $0x7b8] sm:$0xff]
    %v3153 = vld [vmem:[#allocation14 + $0x7c0] sm:$0xf]
    %v3154 = vld [vmem:[#allocation14 + $0x7c4] sm:$0xff]
    %v3155 = vld [vmem:[#allocation14 + $0x7cc] sm:$0xff]
    %v3156 = vld [vmem:[#allocation14 + $0x7d4] sm:$0xff]
    %v3157 = vld [vmem:[#allocation14 + $0x7dc] sm:$0xf]
    %v3158 = vld [vmem:[#allocation14 + $0x7e0] sm:$0xff]
    %v3159 = vld [vmem:[#allocation14 + $0x7e8] sm:$0xff]
    %v3160 = vld [vmem:[#allocation14 + $0x7f0] sm:$0xff]
    %v3161 = vld [vmem:[#allocation14 + $0x7f8] sm:$0xf]
    %v3162 = vld [vmem:[#allocation14 + $0x7fc] sm:$0xff]
    %v3163 = vld [vmem:[#allocation14 + $0x804] sm:$0xff]
    %v3164 = vld [vmem:[#allocation14 + $0x80c] sm:$0xff]
    %v3165 = vld [vmem:[#allocation14 + $0x814] sm:$0xf]
    %v3166 = vld [vmem:[#allocation14 + $0x818] sm:$0xff]
    %v3167 = vld [vmem:[#allocation14 + $0x820] sm:$0xff]
    %v3168 = vld [vmem:[#allocation14 + $0x828] sm:$0xff]
    %v3169 = vld [vmem:[#allocation14 + $0x830] sm:$0xf]
    %v3170 = vld [vmem:[#allocation14 + $0x834] sm:$0xff]
    %v3171 = vld [vmem:[#allocation14 + $0x83c] sm:$0xff]
    %v3172 = vld [vmem:[#allocation14 + $0x844] sm:$0xff]
    %v3173 = vld [vmem:[#allocation14 + $0x84c] sm:$0xf]
    %v3174 = vld [vmem:[#allocation14 + $0x850] sm:$0xff]
    %v3175 = vld [vmem:[#allocation14 + $0x858] sm:$0xff]
    %v3176 = vld [vmem:[#allocation14 + $0x860] sm:$0xff]
    %v3177 = vld [vmem:[#allocation14 + $0x868] sm:$0xf]
    %v3178 = vld [vmem:[#allocation14 + $0x86c] sm:$0xff]
    %v3179 = vld [vmem:[#allocation14 + $0x874] sm:$0xff]
    %v3180 = vld [vmem:[#allocation14 + $0x87c] sm:$0xff]
    %v3181 = vld [vmem:[#allocation14 + $0x884] sm:$0xf]
    %v3182 = vld [vmem:[#allocation14 + $0x888] sm:$0xff]
    %v3183 = vld [vmem:[#allocation14 + $0x890] sm:$0xff]
    %v3184 = vld [vmem:[#allocation14 + $0x898] sm:$0xff]
    %v3185 = vld [vmem:[#allocation14 + $0x8a0] sm:$0xf]
    %v3186 = vld [vmem:[#allocation14 + $0x8a4] sm:$0xff]
    %v3187 = vld [vmem:[#allocation14 + $0x8ac] sm:$0xff]
    %v3188 = vld [vmem:[#allocation14 + $0x8b4] sm:$0xff]
    %v3189 = vld [vmem:[#allocation14 + $0x8bc] sm:$0xf]
    %v3190 = vld [vmem:[#allocation14 + $0x8c0] sm:$0xff]
    %v3191 = vld [vmem:[#allocation14 + $0x8c8] sm:$0xff]
    %v3192 = vld [vmem:[#allocation14 + $0x8d0] sm:$0xff]
    %v3193 = vld [vmem:[#allocation14 + $0x8d8] sm:$0xf]
    %v3194 = vld [vmem:[#allocation14 + $0x8dc] sm:$0xff]
    %v3195 = vld [vmem:[#allocation14 + $0x8e4] sm:$0xff]
    %v3196 = vld [vmem:[#allocation14 + $0x8ec] sm:$0xff]
    %v3197 = vld [vmem:[#allocation14 + $0x8f4] sm:$0xf]
    %v3198 = vld [vmem:[#allocation14 + $0x8f8] sm:$0xff]
    %v3199 = vld [vmem:[#allocation14 + $0x900] sm:$0xff]
    %v3200 = vld [vmem:[#allocation14 + $0x908] sm:$0xff]
    %v3201 = vld [vmem:[#allocation14 + $0x910] sm:$0xf]
    %v3202 = vld [vmem:[#allocation14 + $0x914] sm:$0xff]
    %v3203 = vld [vmem:[#allocation14 + $0x91c] sm:$0xff]
    %v3204 = vld [vmem:[#allocation14 + $0x924] sm:$0xff]
    %v3205 = vld [vmem:[#allocation14 + $0x92c] sm:$0xf]
    %v3206 = vld [vmem:[#allocation14 + $0x930] sm:$0xff]
    %v3207 = vld [vmem:[#allocation14 + $0x938] sm:$0xff]
    %v3208 = vld [vmem:[#allocation14 + $0x940] sm:$0xff]
    %v3209 = vld [vmem:[#allocation14 + $0x948] sm:$0xf]
    %v3210 = vld [vmem:[#allocation14 + $0x94c] sm:$0xff]
    %v3211 = vld [vmem:[#allocation14 + $0x954] sm:$0xff]
    %v3212 = vld [vmem:[#allocation14 + $0x95c] sm:$0xff]
    %v3213 = vld [vmem:[#allocation14 + $0x964] sm:$0xf]
    %v3214 = vld [vmem:[#allocation14 + $0x968] sm:$0xff]
    %v3215 = vld [vmem:[#allocation14 + $0x970] sm:$0xff]
    %v3216 = vld [vmem:[#allocation14 + $0x978] sm:$0xff]
    %v3217 = vld [vmem:[#allocation14 + $0x980] sm:$0xf]
    %v3218 = vld [vmem:[#allocation14 + $0x984] sm:$0xff]
    %v3219 = vld [vmem:[#allocation14 + $0x98c] sm:$0xff]
    %v3220 = vld [vmem:[#allocation14 + $0x994] sm:$0xff]
    %v3221 = vld [vmem:[#allocation14 + $0x99c] sm:$0xf]
    %v3222 = vld [vmem:[#allocation14 + $0x9a0] sm:$0xff]
    %v3223 = vld [vmem:[#allocation14 + $0x9a8] sm:$0xff]
    %v3224 = vld [vmem:[#allocation14 + $0x9b0] sm:$0xff]
    %v3225 = vld [vmem:[#allocation14 + $0x9b8] sm:$0xf]
    %v3226 = vld [vmem:[#allocation14 + $0x9bc] sm:$0xff]
    %v3227 = vld [vmem:[#allocation14 + $0x9c4] sm:$0xff]
    %v3228 = vld [vmem:[#allocation14 + $0x9cc] sm:$0xff]
    %v3229 = vld [vmem:[#allocation14 + $0x9d4] sm:$0xf]
    %v3230 = vld [vmem:[#allocation14 + $0x9d8] sm:$0xff]
    %v3231 = vld [vmem:[#allocation14 + $0x9e0] sm:$0xff]
    %v3232 = vld [vmem:[#allocation14 + $0x9e8] sm:$0xff]
    %v3233 = vld [vmem:[#allocation14 + $0x9f0] sm:$0xf]
    %v3234 = vld [vmem:[#allocation14 + $0x9f4] sm:$0xff]
    %v3235 = vld [vmem:[#allocation14 + $0x9fc] sm:$0xff]
    %v3236 = vld [vmem:[#allocation14 + $0xa04] sm:$0xff]
    %v3237 = vld [vmem:[#allocation14 + $0xa0c] sm:$0xf]
    %v3238 = vld [vmem:[#allocation14 + $0xa10] sm:$0xff]
    %v3239 = vld [vmem:[#allocation14 + $0xa18] sm:$0xff]
    %v3240 = vld [vmem:[#allocation14 + $0xa20] sm:$0xff]
    %v3241 = vld [vmem:[#allocation14 + $0xa28] sm:$0xf]
    %v3242 = vld [vmem:[#allocation14 + $0xa2c] sm:$0xff]
    %v3243 = vld [vmem:[#allocation14 + $0xa34] sm:$0xff]
    %v3244 = vld [vmem:[#allocation14 + $0xa3c] sm:$0xff]
    %v3245 = vld [vmem:[#allocation14 + $0xa44] sm:$0xf]
    %v3246 = vld [vmem:[#allocation14 + $0xa48] sm:$0xff]
    %v3247 = vld [vmem:[#allocation14 + $0xa50] sm:$0xff]
    %v3248 = vld [vmem:[#allocation14 + $0xa58] sm:$0xff]
    %v3249 = vld [vmem:[#allocation14 + $0xa60] sm:$0xf]
    %v3250 = vld [vmem:[#allocation14 + $0xa64] sm:$0xff]
    %v3251 = vld [vmem:[#allocation14 + $0xa6c] sm:$0xff]
    %v3252 = vld [vmem:[#allocation14 + $0xa74] sm:$0xff]
    %v3253 = vld [vmem:[#allocation14 + $0xa7c] sm:$0xf]
    %v3254 = vld [vmem:[#allocation14 + $0xa80] sm:$0xff]
    %v3255 = vld [vmem:[#allocation14 + $0xa88] sm:$0xff]
    %v3256 = vld [vmem:[#allocation14 + $0xa90] sm:$0xff]
    %v3257 = vld [vmem:[#allocation14 + $0xa98] sm:$0xf]
    %v3258 = vld [vmem:[#allocation14 + $0xa9c] sm:$0xff]
    %v3259 = vld [vmem:[#allocation14 + $0xaa4] sm:$0xff]
    %v3260 = vld [vmem:[#allocation14 + $0xaac] sm:$0xff]
    %v3261 = vld [vmem:[#allocation14 + $0xab4] sm:$0xf]
    %v3262 = vld [vmem:[#allocation14 + $0xab8] sm:$0xff]
    %v3263 = vld [vmem:[#allocation14 + $0xac0] sm:$0xff]
    %v3264 = vld [vmem:[#allocation14 + $0xac8] sm:$0xff]
    %v3265 = vld [vmem:[#allocation14 + $0xad0] sm:$0xf]
    %v3266 = vld [vmem:[#allocation14 + $0xad4] sm:$0xff]
    %v3267 = vld [vmem:[#allocation14 + $0xadc] sm:$0xff]
    %v3268 = vld [vmem:[#allocation14 + $0xae4] sm:$0xff]
    %v3269 = vld [vmem:[#allocation14 + $0xaec] sm:$0xf]
    %v3270 = vld [vmem:[#allocation14 + $0xaf0] sm:$0xff]
    %v3271 = vld [vmem:[#allocation14 + $0xaf8] sm:$0xff]
    %v3272 = vld [vmem:[#allocation14 + $0xb00] sm:$0xff]
    %v3273 = vld [vmem:[#allocation14 + $0xb08] sm:$0xf]
    %v3274 = vld [vmem:[#allocation14 + $0xb0c] sm:$0xff]
    %v3275 = vld [vmem:[#allocation14 + $0xb14] sm:$0xff]
    %v3276 = vld [vmem:[#allocation14 + $0xb1c] sm:$0xff]
    %v3277 = vld [vmem:[#allocation14 + $0xb24] sm:$0xf]
    %v3278 = vld [vmem:[#allocation14 + $0xb28] sm:$0xff]
    %v3279 = vld [vmem:[#allocation14 + $0xb30] sm:$0xff]
    %v3280 = vld [vmem:[#allocation14 + $0xb38] sm:$0xff]
    %v3281 = vld [vmem:[#allocation14 + $0xb40] sm:$0xf]
    %v3282 = vld [vmem:[#allocation14 + $0xb44] sm:$0xff]
    %v3283 = vld [vmem:[#allocation14 + $0xb4c] sm:$0xff]
    %v3284 = vld [vmem:[#allocation14 + $0xb54] sm:$0xff]
    %v3285 = vld [vmem:[#allocation14 + $0xb5c] sm:$0xf]
    %v3286 = vld [vmem:[#allocation14 + $0xb60] sm:$0xff]
    %v3287 = vld [vmem:[#allocation14 + $0xb68] sm:$0xff]
    %v3288 = vld [vmem:[#allocation14 + $0xb70] sm:$0xff]
    %v3289 = vld [vmem:[#allocation14 + $0xb78] sm:$0xf]
    %v3290 = vld [vmem:[#allocation14 + $0xb7c] sm:$0xff]
    %v3291 = vld [vmem:[#allocation14 + $0xb84] sm:$0xff]
    %v3292 = vld [vmem:[#allocation14 + $0xb8c] sm:$0xff]
    %v3293 = vld [vmem:[#allocation14 + $0xb94] sm:$0xf]
    %v3294 = vld [vmem:[#allocation14 + $0xb98] sm:$0xff]
    %v3295 = vld [vmem:[#allocation14 + $0xba0] sm:$0xff]
    %v3296 = vld [vmem:[#allocation14 + $0xba8] sm:$0xff]
    %v3297 = vld [vmem:[#allocation14 + $0xbb0] sm:$0xf]
    %v3298 = vld [vmem:[#allocation14 + $0xbb4] sm:$0xff]
    %v3299 = vld [vmem:[#allocation14 + $0xbbc] sm:$0xff]
    %v3300 = vld [vmem:[#allocation14 + $0xbc4] sm:$0xff]
    %v3301 = vld [vmem:[#allocation14 + $0xbcc] sm:$0xf]
    %v3302 = vld [vmem:[#allocation14 + $0xbd0] sm:$0xff]
    %v3303 = vld [vmem:[#allocation14 + $0xbd8] sm:$0xff]
    %v3304 = vld [vmem:[#allocation14 + $0xbe0] sm:$0xff]
    %v3305 = vld [vmem:[#allocation14 + $0xbe8] sm:$0xf]
    %v3306 = vld [vmem:[#allocation14 + $0xbec] sm:$0xff]
    %v3307 = vld [vmem:[#allocation14 + $0xbf4] sm:$0xff]
    %v3308 = vld [vmem:[#allocation14 + $0xbfc] sm:$0xff]
    %v3309 = vld [vmem:[#allocation14 + $0xc04] sm:$0xf]
    %v3310 = vld [vmem:[#allocation14 + $0xc08] sm:$0xff]
    %v3311 = vld [vmem:[#allocation14 + $0xc10] sm:$0xff]
    %v3312 = vld [vmem:[#allocation14 + $0xc18] sm:$0xff]
    %v3313 = vld [vmem:[#allocation14 + $0xc20] sm:$0xf]
    %v3314 = vld [vmem:[#allocation14 + $0xc24] sm:$0xff]
    %v3315 = vld [vmem:[#allocation14 + $0xc2c] sm:$0xff]
    %v3316 = vld [vmem:[#allocation14 + $0xc34] sm:$0xff]
    %v3317 = vld [vmem:[#allocation14 + $0xc3c] sm:$0xf]
    %v3318 = vld [vmem:[#allocation14 + $0xc40] sm:$0xff]
    %v3319 = vld [vmem:[#allocation14 + $0xc48] sm:$0xff]
    %v3320 = vld [vmem:[#allocation14 + $0xc50] sm:$0xff]
    %v3321 = vld [vmem:[#allocation14 + $0xc58] sm:$0xf]
    %v3322 = vld [vmem:[#allocation14 + $0xc5c] sm:$0xff]
    %v3323 = vld [vmem:[#allocation14 + $0xc64] sm:$0xff]
    %v3324 = vld [vmem:[#allocation14 + $0xc6c] sm:$0xff]
    %v3325 = vld [vmem:[#allocation14 + $0xc74] sm:$0xf]
    %v3326 = vld [vmem:[#allocation14 + $0xc78] sm:$0xff]
    %v3327 = vld [vmem:[#allocation14 + $0xc80] sm:$0xff]
    %v3328 = vld [vmem:[#allocation14 + $0xc88] sm:$0xff]
    %v3329 = vld [vmem:[#allocation14 + $0xc90] sm:$0xf]
    %v3330 = vld [vmem:[#allocation14 + $0xc94] sm:$0xff]
    %v3331 = vld [vmem:[#allocation14 + $0xc9c] sm:$0xff]
    %v3332 = vld [vmem:[#allocation14 + $0xca4] sm:$0xff]
    %v3333 = vld [vmem:[#allocation14 + $0xcac] sm:$0xf]
    %v3334 = vld [vmem:[#allocation14 + $0xcb0] sm:$0xff]
    %v3335 = vld [vmem:[#allocation14 + $0xcb8] sm:$0xff]
    %v3336 = vld [vmem:[#allocation14 + $0xcc0] sm:$0xff]
    %v3337 = vld [vmem:[#allocation14 + $0xcc8] sm:$0xf]
    %v3338 = vld [vmem:[#allocation14 + $0xccc] sm:$0xff]
    %v3339 = vld [vmem:[#allocation14 + $0xcd4] sm:$0xff]
    %v3340 = vld [vmem:[#allocation14 + $0xcdc] sm:$0xff]
    %v3341 = vld [vmem:[#allocation14 + $0xce4] sm:$0xf]
    %v3342 = vld [vmem:[#allocation14 + $0xce8] sm:$0xff]
    %v3343 = vld [vmem:[#allocation14 + $0xcf0] sm:$0xff]
    %v3344 = vld [vmem:[#allocation14 + $0xcf8] sm:$0xff]
    %v3345 = vld [vmem:[#allocation14 + $0xd00] sm:$0xf]
    %v3346 = vld [vmem:[#allocation14 + $0xd04] sm:$0xff]
    %v3347 = vld [vmem:[#allocation14 + $0xd0c] sm:$0xff]
    %v3348 = vld [vmem:[#allocation14 + $0xd14] sm:$0xff]
    %v3349 = vld [vmem:[#allocation14 + $0xd1c] sm:$0xf]
    %v3350 = vld [vmem:[#allocation14 + $0xd20] sm:$0xff]
    %v3351 = vld [vmem:[#allocation14 + $0xd28] sm:$0xff]
    %v3352 = vld [vmem:[#allocation14 + $0xd30] sm:$0xff]
    %v3353 = vld [vmem:[#allocation14 + $0xd38] sm:$0xf]
    %v3354 = vld [vmem:[#allocation14 + $0xd3c] sm:$0xff]
    %v3355 = vld [vmem:[#allocation14 + $0xd44] sm:$0xff]
    %v3356 = vld [vmem:[#allocation14 + $0xd4c] sm:$0xff]
    %v3357 = vld [vmem:[#allocation14 + $0xd54] sm:$0xf]
    %v3358 = vld [vmem:[#allocation14 + $0xd58] sm:$0xff]
    %v3359 = vld [vmem:[#allocation14 + $0xd60] sm:$0xff]
    %v3360 = vld [vmem:[#allocation14 + $0xd68] sm:$0xff]
    %v3361 = vld [vmem:[#allocation14 + $0xd70] sm:$0xf]
    %v3362 = vld [vmem:[#allocation14 + $0xd74] sm:$0xff]
    %v3363 = vld [vmem:[#allocation14 + $0xd7c] sm:$0xff]
    %v3364 = vld [vmem:[#allocation14 + $0xd84] sm:$0xff]
    %v3365 = vld [vmem:[#allocation14 + $0xd8c] sm:$0xf]
    %v3366 = vld [vmem:[#allocation14 + $0xd90] sm:$0xff]
    %v3367 = vld [vmem:[#allocation14 + $0xd98] sm:$0xff]
    %v3368 = vld [vmem:[#allocation14 + $0xda0] sm:$0xff]
    %v3369 = vld [vmem:[#allocation14 + $0xda8] sm:$0xf]
    %v3370 = vld [vmem:[#allocation14 + $0xdac] sm:$0xff]
    %v3371 = vld [vmem:[#allocation14 + $0xdb4] sm:$0xff]
    %v3372 = vld [vmem:[#allocation14 + $0xdbc] sm:$0xff]
    %v3373 = vld [vmem:[#allocation14 + $0xdc4] sm:$0xf]
    %v3374 = vld [vmem:[#allocation14 + $0xdc8] sm:$0xff]
    %v3375 = vld [vmem:[#allocation14 + $0xdd0] sm:$0xff]
    %v3376 = vld [vmem:[#allocation14 + $0xdd8] sm:$0xff]
    %v3377 = vld [vmem:[#allocation14 + $0xde0] sm:$0xf]
    %v3378 = vld [vmem:[#allocation14 + $0xde4] sm:$0xff]
    %v3379 = vld [vmem:[#allocation14 + $0xdec] sm:$0xff]
    %v3380 = vld [vmem:[#allocation14 + $0xdf4] sm:$0xff]
    %v3381 = vld [vmem:[#allocation14 + $0xdfc] sm:$0xf]
    %v3382 = vld [vmem:[#allocation16] sm:$0xff]
    %v3384 = vlaneseq
    %v3385 = vshrl.u32 %v3384, 7
    %v3386 = vsub.s32 0, %v3385
    %v3387 = vrot.slane %v3382, %v3386
    %v3388 = vlaneseq
    %v3389 = vshrl.u32 %v3388, 7
    %v3390 = vsub.s32 1, %v3389
    %v3391 = vrot.slane %v3382, %v3390
    %v3392 = vlaneseq
    %v3393 = vshrl.u32 %v3392, 7
    %v3394 = vsub.s32 2, %v3393
    %v3395 = vrot.slane %v3382, %v3394
    %v3396 = vlaneseq
    %v3397 = vshrl.u32 %v3396, 7
    %v3398 = vsub.s32 3, %v3397
    %v3399 = vrot.slane %v3382, %v3398
    %v3400 = vlaneseq
    %v3401 = vshrl.u32 %v3400, 7
    %v3402 = vsub.s32 4, %v3401
    %v3403 = vrot.slane %v3382, %v3402
    %v3404 = vlaneseq
    %v3405 = vshrl.u32 %v3404, 7
    %v3406 = vsub.s32 5, %v3405
    %v3407 = vrot.slane %v3382, %v3406
    %v3408 = vlaneseq
    %v3409 = vshrl.u32 %v3408, 7
    %v3410 = vsub.s32 6, %v3409
    %v3411 = vrot.slane %v3382, %v3410
    %v3931 = vunpack.c.l.b16 %v2870
    %v3932 = vunpack.c.h.b16 %v2870
    %v3933 = vunpack.c.l.b16 %v2871
    %v3934 = vunpack.c.h.b16 %v2871
    %v3935 = vunpack.c.l.b16 %v2872
    %v3936 = vunpack.c.h.b16 %v2872
    %v3937 = vunpack.c.l.b16 %v2873
    %v3938 = vunpack.c.l.b16 %v2874
    %v3939 = vunpack.c.h.b16 %v2874
    %v3940 = vunpack.c.l.b16 %v2875
    %v3941 = vunpack.c.h.b16 %v2875
    %v3942 = vunpack.c.l.b16 %v2876
    %v3943 = vunpack.c.h.b16 %v2876
    %v3944 = vunpack.c.l.b16 %v2877
    %v3945 = vunpack.c.l.b16 %v2878
    %v3946 = vunpack.c.h.b16 %v2878
    %v3947 = vunpack.c.l.b16 %v2879
    %v3948 = vunpack.c.h.b16 %v2879
    %v3949 = vunpack.c.l.b16 %v2880
    %v3950 = vunpack.c.h.b16 %v2880
    %v3951 = vunpack.c.l.b16 %v2881
    %v3952 = vunpack.c.l.b16 %v2882
    %v3953 = vunpack.c.h.b16 %v2882
    %v3954 = vunpack.c.l.b16 %v2883
    %v3955 = vunpack.c.h.b16 %v2883
    %v3956 = vunpack.c.l.b16 %v2884
    %v3957 = vunpack.c.h.b16 %v2884
    %v3958 = vunpack.c.l.b16 %v2885
    %v3959 = vunpack.c.l.b16 %v2886
    %v3960 = vunpack.c.h.b16 %v2886
    %v3961 = vunpack.c.l.b16 %v2887
    %v3962 = vunpack.c.h.b16 %v2887
    %v3963 = vunpack.c.l.b16 %v2888
    %v3964 = vunpack.c.h.b16 %v2888
    %v3965 = vunpack.c.l.b16 %v2889
    %v3966 = vunpack.c.l.b16 %v2890
    %v3967 = vunpack.c.h.b16 %v2890
    %v3968 = vunpack.c.l.b16 %v2891
    %v3969 = vunpack.c.h.b16 %v2891
    %v3970 = vunpack.c.l.b16 %v2892
    %v3971 = vunpack.c.h.b16 %v2892
    %v3972 = vunpack.c.l.b16 %v2893
    %v3973 = vunpack.c.l.b16 %v2894
    %v3974 = vunpack.c.h.b16 %v2894
    %v3975 = vunpack.c.l.b16 %v2895
    %v3976 = vunpack.c.h.b16 %v2895
    %v3977 = vunpack.c.l.b16 %v2896
    %v3978 = vunpack.c.h.b16 %v2896
    %v3979 = vunpack.c.l.b16 %v2897
    %v3980 = vunpack.c.l.b16 %v2898
    %v3981 = vunpack.c.h.b16 %v2898
    %v3982 = vunpack.c.l.b16 %v2899
    %v3983 = vunpack.c.h.b16 %v2899
    %v3984 = vunpack.c.l.b16 %v2900
    %v3985 = vunpack.c.h.b16 %v2900
    %v3986 = vunpack.c.l.b16 %v2901
    %v3987 = vunpack.c.l.b16 %v2902
    %v3988 = vunpack.c.h.b16 %v2902
    %v3989 = vunpack.c.l.b16 %v2903
    %v3990 = vunpack.c.h.b16 %v2903
    %v3991 = vunpack.c.l.b16 %v2904
    %v3992 = vunpack.c.h.b16 %v2904
    %v3993 = vunpack.c.l.b16 %v2905
    %v3994 = vunpack.c.l.b16 %v2906
    %v3995 = vunpack.c.h.b16 %v2906
    %v3996 = vunpack.c.l.b16 %v2907
    %v3997 = vunpack.c.h.b16 %v2907
    %v3998 = vunpack.c.l.b16 %v2908
    %v3999 = vunpack.c.h.b16 %v2908
    %v4000 = vunpack.c.l.b16 %v2909
    %v4001 = vunpack.c.l.b16 %v2910
    %v4002 = vunpack.c.h.b16 %v2910
    %v4003 = vunpack.c.l.b16 %v2911
    %v4004 = vunpack.c.h.b16 %v2911
    %v4005 = vunpack.c.l.b16 %v2912
    %v4006 = vunpack.c.h.b16 %v2912
    %v4007 = vunpack.c.l.b16 %v2913
    %v4008 = vunpack.c.l.b16 %v2914
    %v4009 = vunpack.c.h.b16 %v2914
    %v4010 = vunpack.c.l.b16 %v2915
    %v4011 = vunpack.c.h.b16 %v2915
    %v4012 = vunpack.c.l.b16 %v2916
    %v4013 = vunpack.c.h.b16 %v2916
    %v4014 = vunpack.c.l.b16 %v2917
    %v4015 = vunpack.c.l.b16 %v2918
    %v4016 = vunpack.c.h.b16 %v2918
    %v4017 = vunpack.c.l.b16 %v2919
    %v4018 = vunpack.c.h.b16 %v2919
    %v4019 = vunpack.c.l.b16 %v2920
    %v4020 = vunpack.c.h.b16 %v2920
    %v4021 = vunpack.c.l.b16 %v2921
    %v4022 = vunpack.c.l.b16 %v2922
    %v4023 = vunpack.c.h.b16 %v2922
    %v4024 = vunpack.c.l.b16 %v2923
    %v4025 = vunpack.c.h.b16 %v2923
    %v4026 = vunpack.c.l.b16 %v2924
    %v4027 = vunpack.c.h.b16 %v2924
    %v4028 = vunpack.c.l.b16 %v2925
    %v4029 = vunpack.c.l.b16 %v2926
    %v4030 = vunpack.c.h.b16 %v2926
    %v4031 = vunpack.c.l.b16 %v2927
    %v4032 = vunpack.c.h.b16 %v2927
    %v4033 = vunpack.c.l.b16 %v2928
    %v4034 = vunpack.c.h.b16 %v2928
    %v4035 = vunpack.c.l.b16 %v2929
    %v4036 = vunpack.c.l.b16 %v2930
    %v4037 = vunpack.c.h.b16 %v2930
    %v4038 = vunpack.c.l.b16 %v2931
    %v4039 = vunpack.c.h.b16 %v2931
    %v4040 = vunpack.c.l.b16 %v2932
    %v4041 = vunpack.c.h.b16 %v2932
    %v4042 = vunpack.c.l.b16 %v2933
    %v4043 = vunpack.c.l.b16 %v2934
    %v4044 = vunpack.c.h.b16 %v2934
    %v4045 = vunpack.c.l.b16 %v2935
    %v4046 = vunpack.c.h.b16 %v2935
    %v4047 = vunpack.c.l.b16 %v2936
    %v4048 = vunpack.c.h.b16 %v2936
    %v4049 = vunpack.c.l.b16 %v2937
    %v4050 = vunpack.c.l.b16 %v2938
    %v4051 = vunpack.c.h.b16 %v2938
    %v4052 = vunpack.c.l.b16 %v2939
    %v4053 = vunpack.c.h.b16 %v2939
    %v4054 = vunpack.c.l.b16 %v2940
    %v4055 = vunpack.c.h.b16 %v2940
    %v4056 = vunpack.c.l.b16 %v2941
    %v4057 = vunpack.c.l.b16 %v2942
    %v4058 = vunpack.c.h.b16 %v2942
    %v4059 = vunpack.c.l.b16 %v2943
    %v4060 = vunpack.c.h.b16 %v2943
    %v4061 = vunpack.c.l.b16 %v2944
    %v4062 = vunpack.c.h.b16 %v2944
    %v4063 = vunpack.c.l.b16 %v2945
    %v4064 = vunpack.c.l.b16 %v2946
    %v4065 = vunpack.c.h.b16 %v2946
    %v4066 = vunpack.c.l.b16 %v2947
    %v4067 = vunpack.c.h.b16 %v2947
    %v4068 = vunpack.c.l.b16 %v2948
    %v4069 = vunpack.c.h.b16 %v2948
    %v4070 = vunpack.c.l.b16 %v2949
    %v4071 = vunpack.c.l.b16 %v2950
    %v4072 = vunpack.c.h.b16 %v2950
    %v4073 = vunpack.c.l.b16 %v2951
    %v4074 = vunpack.c.h.b16 %v2951
    %v4075 = vunpack.c.l.b16 %v2952
    %v4076 = vunpack.c.h.b16 %v2952
    %v4077 = vunpack.c.l.b16 %v2953
    %v4078 = vunpack.c.l.b16 %v2954
    %v4079 = vunpack.c.h.b16 %v2954
    %v4080 = vunpack.c.l.b16 %v2955
    %v4081 = vunpack.c.h.b16 %v2955
    %v4082 = vunpack.c.l.b16 %v2956
    %v4083 = vunpack.c.h.b16 %v2956
    %v4084 = vunpack.c.l.b16 %v2957
    %v4085 = vunpack.c.l.b16 %v2958
    %v4086 = vunpack.c.h.b16 %v2958
    %v4087 = vunpack.c.l.b16 %v2959
    %v4088 = vunpack.c.h.b16 %v2959
    %v4089 = vunpack.c.l.b16 %v2960
    %v4090 = vunpack.c.h.b16 %v2960
    %v4091 = vunpack.c.l.b16 %v2961
    %v4092 = vunpack.c.l.b16 %v2962
    %v4093 = vunpack.c.h.b16 %v2962
    %v4094 = vunpack.c.l.b16 %v2963
    %v4095 = vunpack.c.h.b16 %v2963
    %v4096 = vunpack.c.l.b16 %v2964
    %v4097 = vunpack.c.h.b16 %v2964
    %v4098 = vunpack.c.l.b16 %v2965
    %v4099 = vunpack.c.l.b16 %v2966
    %v4100 = vunpack.c.h.b16 %v2966
    %v4101 = vunpack.c.l.b16 %v2967
    %v4102 = vunpack.c.h.b16 %v2967
    %v4103 = vunpack.c.l.b16 %v2968
    %v4104 = vunpack.c.h.b16 %v2968
    %v4105 = vunpack.c.l.b16 %v2969
    %v4106 = vunpack.c.l.b16 %v2970
    %v4107 = vunpack.c.h.b16 %v2970
    %v4108 = vunpack.c.l.b16 %v2971
    %v4109 = vunpack.c.h.b16 %v2971
    %v4110 = vunpack.c.l.b16 %v2972
    %v4111 = vunpack.c.h.b16 %v2972
    %v4112 = vunpack.c.l.b16 %v2973
    %v4113 = vunpack.c.l.b16 %v2974
    %v4114 = vunpack.c.h.b16 %v2974
    %v4115 = vunpack.c.l.b16 %v2975
    %v4116 = vunpack.c.h.b16 %v2975
    %v4117 = vunpack.c.l.b16 %v2976
    %v4118 = vunpack.c.h.b16 %v2976
    %v4119 = vunpack.c.l.b16 %v2977
    %v4120 = vunpack.c.l.b16 %v2978
    %v4121 = vunpack.c.h.b16 %v2978
    %v4122 = vunpack.c.l.b16 %v2979
    %v4123 = vunpack.c.h.b16 %v2979
    %v4124 = vunpack.c.l.b16 %v2980
    %v4125 = vunpack.c.h.b16 %v2980
    %v4126 = vunpack.c.l.b16 %v2981
    %v4127 = vunpack.c.l.b16 %v2982
    %v4128 = vunpack.c.h.b16 %v2982
    %v4129 = vunpack.c.l.b16 %v2983
    %v4130 = vunpack.c.h.b16 %v2983
    %v4131 = vunpack.c.l.b16 %v2984
    %v4132 = vunpack.c.h.b16 %v2984
    %v4133 = vunpack.c.l.b16 %v2985
    %v4134 = vunpack.c.l.b16 %v2986
    %v4135 = vunpack.c.h.b16 %v2986
    %v4136 = vunpack.c.l.b16 %v2987
    %v4137 = vunpack.c.h.b16 %v2987
    %v4138 = vunpack.c.l.b16 %v2988
    %v4139 = vunpack.c.h.b16 %v2988
    %v4140 = vunpack.c.l.b16 %v2989
    %v4141 = vunpack.c.l.b16 %v2990
    %v4142 = vunpack.c.h.b16 %v2990
    %v4143 = vunpack.c.l.b16 %v2991
    %v4144 = vunpack.c.h.b16 %v2991
    %v4145 = vunpack.c.l.b16 %v2992
    %v4146 = vunpack.c.h.b16 %v2992
    %v4147 = vunpack.c.l.b16 %v2993
    %v4148 = vunpack.c.l.b16 %v2994
    %v4149 = vunpack.c.h.b16 %v2994
    %v4150 = vunpack.c.l.b16 %v2995
    %v4151 = vunpack.c.h.b16 %v2995
    %v4152 = vunpack.c.l.b16 %v2996
    %v4153 = vunpack.c.h.b16 %v2996
    %v4154 = vunpack.c.l.b16 %v2997
    %v4155 = vunpack.c.l.b16 %v2998
    %v4156 = vunpack.c.h.b16 %v2998
    %v4157 = vunpack.c.l.b16 %v2999
    %v4158 = vunpack.c.h.b16 %v2999
    %v4159 = vunpack.c.l.b16 %v3000
    %v4160 = vunpack.c.h.b16 %v3000
    %v4161 = vunpack.c.l.b16 %v3001
    %v4162 = vunpack.c.l.b16 %v3002
    %v4163 = vunpack.c.h.b16 %v3002
    %v4164 = vunpack.c.l.b16 %v3003
    %v4165 = vunpack.c.h.b16 %v3003
    %v4166 = vunpack.c.l.b16 %v3004
    %v4167 = vunpack.c.h.b16 %v3004
    %v4168 = vunpack.c.l.b16 %v3005
    %v4169 = vunpack.c.l.b16 %v3006
    %v4170 = vunpack.c.h.b16 %v3006
    %v4171 = vunpack.c.l.b16 %v3007
    %v4172 = vunpack.c.h.b16 %v3007
    %v4173 = vunpack.c.l.b16 %v3008
    %v4174 = vunpack.c.h.b16 %v3008
    %v4175 = vunpack.c.l.b16 %v3009
    %v4176 = vunpack.c.l.b16 %v3010
    %v4177 = vunpack.c.h.b16 %v3010
    %v4178 = vunpack.c.l.b16 %v3011
    %v4179 = vunpack.c.h.b16 %v3011
    %v4180 = vunpack.c.l.b16 %v3012
    %v4181 = vunpack.c.h.b16 %v3012
    %v4182 = vunpack.c.l.b16 %v3013
    %v4183 = vunpack.c.l.b16 %v3014
    %v4184 = vunpack.c.h.b16 %v3014
    %v4185 = vunpack.c.l.b16 %v3015
    %v4186 = vunpack.c.h.b16 %v3015
    %v4187 = vunpack.c.l.b16 %v3016
    %v4188 = vunpack.c.h.b16 %v3016
    %v4189 = vunpack.c.l.b16 %v3017
    %v4190 = vunpack.c.l.b16 %v3018
    %v4191 = vunpack.c.h.b16 %v3018
    %v4192 = vunpack.c.l.b16 %v3019
    %v4193 = vunpack.c.h.b16 %v3019
    %v4194 = vunpack.c.l.b16 %v3020
    %v4195 = vunpack.c.h.b16 %v3020
    %v4196 = vunpack.c.l.b16 %v3021
    %v4197 = vunpack.c.l.b16 %v3022
    %v4198 = vunpack.c.h.b16 %v3022
    %v4199 = vunpack.c.l.b16 %v3023
    %v4200 = vunpack.c.h.b16 %v3023
    %v4201 = vunpack.c.l.b16 %v3024
    %v4202 = vunpack.c.h.b16 %v3024
    %v4203 = vunpack.c.l.b16 %v3025
    %v4204 = vunpack.c.l.b16 %v3026
    %v4205 = vunpack.c.h.b16 %v3026
    %v4206 = vunpack.c.l.b16 %v3027
    %v4207 = vunpack.c.h.b16 %v3027
    %v4208 = vunpack.c.l.b16 %v3028
    %v4209 = vunpack.c.h.b16 %v3028
    %v4210 = vunpack.c.l.b16 %v3029
    %v4211 = vunpack.c.l.b16 %v3030
    %v4212 = vunpack.c.h.b16 %v3030
    %v4213 = vunpack.c.l.b16 %v3031
    %v4214 = vunpack.c.h.b16 %v3031
    %v4215 = vunpack.c.l.b16 %v3032
    %v4216 = vunpack.c.h.b16 %v3032
    %v4217 = vunpack.c.l.b16 %v3033
    %v4218 = vunpack.c.l.b16 %v3034
    %v4219 = vunpack.c.h.b16 %v3034
    %v4220 = vunpack.c.l.b16 %v3035
    %v4221 = vunpack.c.h.b16 %v3035
    %v4222 = vunpack.c.l.b16 %v3036
    %v4223 = vunpack.c.h.b16 %v3036
    %v4224 = vunpack.c.l.b16 %v3037
    %v4225 = vunpack.c.l.b16 %v3038
    %v4226 = vunpack.c.h.b16 %v3038
    %v4227 = vunpack.c.l.b16 %v3039
    %v4228 = vunpack.c.h.b16 %v3039
    %v4229 = vunpack.c.l.b16 %v3040
    %v4230 = vunpack.c.h.b16 %v3040
    %v4231 = vunpack.c.l.b16 %v3041
    %v4232 = vunpack.c.l.b16 %v3042
    %v4233 = vunpack.c.h.b16 %v3042
    %v4234 = vunpack.c.l.b16 %v3043
    %v4235 = vunpack.c.h.b16 %v3043
    %v4236 = vunpack.c.l.b16 %v3044
    %v4237 = vunpack.c.h.b16 %v3044
    %v4238 = vunpack.c.l.b16 %v3045
    %v4239 = vunpack.c.l.b16 %v3046
    %v4240 = vunpack.c.h.b16 %v3046
    %v4241 = vunpack.c.l.b16 %v3047
    %v4242 = vunpack.c.h.b16 %v3047
    %v4243 = vunpack.c.l.b16 %v3048
    %v4244 = vunpack.c.h.b16 %v3048
    %v4245 = vunpack.c.l.b16 %v3049
    %v4246 = vunpack.c.l.b16 %v3050
    %v4247 = vunpack.c.h.b16 %v3050
    %v4248 = vunpack.c.l.b16 %v3051
    %v4249 = vunpack.c.h.b16 %v3051
    %v4250 = vunpack.c.l.b16 %v3052
    %v4251 = vunpack.c.h.b16 %v3052
    %v4252 = vunpack.c.l.b16 %v3053
    %v4253 = vunpack.c.l.b16 %v3054
    %v4254 = vunpack.c.h.b16 %v3054
    %v4255 = vunpack.c.l.b16 %v3055
    %v4256 = vunpack.c.h.b16 %v3055
    %v4257 = vunpack.c.l.b16 %v3056
    %v4258 = vunpack.c.h.b16 %v3056
    %v4259 = vunpack.c.l.b16 %v3057
    %v4260 = vunpack.c.l.b16 %v3058
    %v4261 = vunpack.c.h.b16 %v3058
    %v4262 = vunpack.c.l.b16 %v3059
    %v4263 = vunpack.c.h.b16 %v3059
    %v4264 = vunpack.c.l.b16 %v3060
    %v4265 = vunpack.c.h.b16 %v3060
    %v4266 = vunpack.c.l.b16 %v3061
    %v4267 = vunpack.c.l.b16 %v3062
    %v4268 = vunpack.c.h.b16 %v3062
    %v4269 = vunpack.c.l.b16 %v3063
    %v4270 = vunpack.c.h.b16 %v3063
    %v4271 = vunpack.c.l.b16 %v3064
    %v4272 = vunpack.c.h.b16 %v3064
    %v4273 = vunpack.c.l.b16 %v3065
    %v4274 = vunpack.c.l.b16 %v3066
    %v4275 = vunpack.c.h.b16 %v3066
    %v4276 = vunpack.c.l.b16 %v3067
    %v4277 = vunpack.c.h.b16 %v3067
    %v4278 = vunpack.c.l.b16 %v3068
    %v4279 = vunpack.c.h.b16 %v3068
    %v4280 = vunpack.c.l.b16 %v3069
    %v4281 = vunpack.c.l.b16 %v3070
    %v4282 = vunpack.c.h.b16 %v3070
    %v4283 = vunpack.c.l.b16 %v3071
    %v4284 = vunpack.c.h.b16 %v3071
    %v4285 = vunpack.c.l.b16 %v3072
    %v4286 = vunpack.c.h.b16 %v3072
    %v4287 = vunpack.c.l.b16 %v3073
    %v4288 = vunpack.c.l.b16 %v3074
    %v4289 = vunpack.c.h.b16 %v3074
    %v4290 = vunpack.c.l.b16 %v3075
    %v4291 = vunpack.c.h.b16 %v3075
    %v4292 = vunpack.c.l.b16 %v3076
    %v4293 = vunpack.c.h.b16 %v3076
    %v4294 = vunpack.c.l.b16 %v3077
    %v4295 = vunpack.c.l.b16 %v3078
    %v4296 = vunpack.c.h.b16 %v3078
    %v4297 = vunpack.c.l.b16 %v3079
    %v4298 = vunpack.c.h.b16 %v3079
    %v4299 = vunpack.c.l.b16 %v3080
    %v4300 = vunpack.c.h.b16 %v3080
    %v4301 = vunpack.c.l.b16 %v3081
    %v4302 = vunpack.c.l.b16 %v3082
    %v4303 = vunpack.c.h.b16 %v3082
    %v4304 = vunpack.c.l.b16 %v3083
    %v4305 = vunpack.c.h.b16 %v3083
    %v4306 = vunpack.c.l.b16 %v3084
    %v4307 = vunpack.c.h.b16 %v3084
    %v4308 = vunpack.c.l.b16 %v3085
    %v4309 = vunpack.c.l.b16 %v3086
    %v4310 = vunpack.c.h.b16 %v3086
    %v4311 = vunpack.c.l.b16 %v3087
    %v4312 = vunpack.c.h.b16 %v3087
    %v4313 = vunpack.c.l.b16 %v3088
    %v4314 = vunpack.c.h.b16 %v3088
    %v4315 = vunpack.c.l.b16 %v3089
    %v4316 = vunpack.c.l.b16 %v3090
    %v4317 = vunpack.c.h.b16 %v3090
    %v4318 = vunpack.c.l.b16 %v3091
    %v4319 = vunpack.c.h.b16 %v3091
    %v4320 = vunpack.c.l.b16 %v3092
    %v4321 = vunpack.c.h.b16 %v3092
    %v4322 = vunpack.c.l.b16 %v3093
    %v4323 = vunpack.c.l.b16 %v3094
    %v4324 = vunpack.c.h.b16 %v3094
    %v4325 = vunpack.c.l.b16 %v3095
    %v4326 = vunpack.c.h.b16 %v3095
    %v4327 = vunpack.c.l.b16 %v3096
    %v4328 = vunpack.c.h.b16 %v3096
    %v4329 = vunpack.c.l.b16 %v3097
    %v4330 = vunpack.c.l.b16 %v3098
    %v4331 = vunpack.c.h.b16 %v3098
    %v4332 = vunpack.c.l.b16 %v3099
    %v4333 = vunpack.c.h.b16 %v3099
    %v4334 = vunpack.c.l.b16 %v3100
    %v4335 = vunpack.c.h.b16 %v3100
    %v4336 = vunpack.c.l.b16 %v3101
    %v4337 = vunpack.c.l.b16 %v3102
    %v4338 = vunpack.c.h.b16 %v3102
    %v4339 = vunpack.c.l.b16 %v3103
    %v4340 = vunpack.c.h.b16 %v3103
    %v4341 = vunpack.c.l.b16 %v3104
    %v4342 = vunpack.c.h.b16 %v3104
    %v4343 = vunpack.c.l.b16 %v3105
    %v4344 = vunpack.c.l.b16 %v3106
    %v4345 = vunpack.c.h.b16 %v3106
    %v4346 = vunpack.c.l.b16 %v3107
    %v4347 = vunpack.c.h.b16 %v3107
    %v4348 = vunpack.c.l.b16 %v3108
    %v4349 = vunpack.c.h.b16 %v3108
    %v4350 = vunpack.c.l.b16 %v3109
    %v4351 = vunpack.c.l.b16 %v3110
    %v4352 = vunpack.c.h.b16 %v3110
    %v4353 = vunpack.c.l.b16 %v3111
    %v4354 = vunpack.c.h.b16 %v3111
    %v4355 = vunpack.c.l.b16 %v3112
    %v4356 = vunpack.c.h.b16 %v3112
    %v4357 = vunpack.c.l.b16 %v3113
    %v4358 = vunpack.c.l.b16 %v3114
    %v4359 = vunpack.c.h.b16 %v3114
    %v4360 = vunpack.c.l.b16 %v3115
    %v4361 = vunpack.c.h.b16 %v3115
    %v4362 = vunpack.c.l.b16 %v3116
    %v4363 = vunpack.c.h.b16 %v3116
    %v4364 = vunpack.c.l.b16 %v3117
    %v4365 = vunpack.c.l.b16 %v3118
    %v4366 = vunpack.c.h.b16 %v3118
    %v4367 = vunpack.c.l.b16 %v3119
    %v4368 = vunpack.c.h.b16 %v3119
    %v4369 = vunpack.c.l.b16 %v3120
    %v4370 = vunpack.c.h.b16 %v3120
    %v4371 = vunpack.c.l.b16 %v3121
    %v4372 = vunpack.c.l.b16 %v3122
    %v4373 = vunpack.c.h.b16 %v3122
    %v4374 = vunpack.c.l.b16 %v3123
    %v4375 = vunpack.c.h.b16 %v3123
    %v4376 = vunpack.c.l.b16 %v3124
    %v4377 = vunpack.c.h.b16 %v3124
    %v4378 = vunpack.c.l.b16 %v3125
    %v4379 = vunpack.c.l.b16 %v3126
    %v4380 = vunpack.c.h.b16 %v3126
    %v4381 = vunpack.c.l.b16 %v3127
    %v4382 = vunpack.c.h.b16 %v3127
    %v4383 = vunpack.c.l.b16 %v3128
    %v4384 = vunpack.c.h.b16 %v3128
    %v4385 = vunpack.c.l.b16 %v3129
    %v4386 = vunpack.c.l.b16 %v3130
    %v4387 = vunpack.c.h.b16 %v3130
    %v4388 = vunpack.c.l.b16 %v3131
    %v4389 = vunpack.c.h.b16 %v3131
    %v4390 = vunpack.c.l.b16 %v3132
    %v4391 = vunpack.c.h.b16 %v3132
    %v4392 = vunpack.c.l.b16 %v3133
    %v4393 = vunpack.c.l.b16 %v3134
    %v4394 = vunpack.c.h.b16 %v3134
    %v4395 = vunpack.c.l.b16 %v3135
    %v4396 = vunpack.c.h.b16 %v3135
    %v4397 = vunpack.c.l.b16 %v3136
    %v4398 = vunpack.c.h.b16 %v3136
    %v4399 = vunpack.c.l.b16 %v3137
    %v4400 = vunpack.c.l.b16 %v3138
    %v4401 = vunpack.c.h.b16 %v3138
    %v4402 = vunpack.c.l.b16 %v3139
    %v4403 = vunpack.c.h.b16 %v3139
    %v4404 = vunpack.c.l.b16 %v3140
    %v4405 = vunpack.c.h.b16 %v3140
    %v4406 = vunpack.c.l.b16 %v3141
    %v4407 = vunpack.c.l.b16 %v3142
    %v4408 = vunpack.c.h.b16 %v3142
    %v4409 = vunpack.c.l.b16 %v3143
    %v4410 = vunpack.c.h.b16 %v3143
    %v4411 = vunpack.c.l.b16 %v3144
    %v4412 = vunpack.c.h.b16 %v3144
    %v4413 = vunpack.c.l.b16 %v3145
    %v4414 = vunpack.c.l.b16 %v3146
    %v4415 = vunpack.c.h.b16 %v3146
    %v4416 = vunpack.c.l.b16 %v3147
    %v4417 = vunpack.c.h.b16 %v3147
    %v4418 = vunpack.c.l.b16 %v3148
    %v4419 = vunpack.c.h.b16 %v3148
    %v4420 = vunpack.c.l.b16 %v3149
    %v4421 = vunpack.c.l.b16 %v3150
    %v4422 = vunpack.c.h.b16 %v3150
    %v4423 = vunpack.c.l.b16 %v3151
    %v4424 = vunpack.c.h.b16 %v3151
    %v4425 = vunpack.c.l.b16 %v3152
    %v4426 = vunpack.c.h.b16 %v3152
    %v4427 = vunpack.c.l.b16 %v3153
    %v4428 = vunpack.c.l.b16 %v3154
    %v4429 = vunpack.c.h.b16 %v3154
    %v4430 = vunpack.c.l.b16 %v3155
    %v4431 = vunpack.c.h.b16 %v3155
    %v4432 = vunpack.c.l.b16 %v3156
    %v4433 = vunpack.c.h.b16 %v3156
    %v4434 = vunpack.c.l.b16 %v3157
    %v4435 = vunpack.c.l.b16 %v3158
    %v4436 = vunpack.c.h.b16 %v3158
    %v4437 = vunpack.c.l.b16 %v3159
    %v4438 = vunpack.c.h.b16 %v3159
    %v4439 = vunpack.c.l.b16 %v3160
    %v4440 = vunpack.c.h.b16 %v3160
    %v4441 = vunpack.c.l.b16 %v3161
    %v4442 = vunpack.c.l.b16 %v3162
    %v4443 = vunpack.c.h.b16 %v3162
    %v4444 = vunpack.c.l.b16 %v3163
    %v4445 = vunpack.c.h.b16 %v3163
    %v4446 = vunpack.c.l.b16 %v3164
    %v4447 = vunpack.c.h.b16 %v3164
    %v4448 = vunpack.c.l.b16 %v3165
    %v4449 = vunpack.c.l.b16 %v3166
    %v4450 = vunpack.c.h.b16 %v3166
    %v4451 = vunpack.c.l.b16 %v3167
    %v4452 = vunpack.c.h.b16 %v3167
    %v4453 = vunpack.c.l.b16 %v3168
    %v4454 = vunpack.c.h.b16 %v3168
    %v4455 = vunpack.c.l.b16 %v3169
    %v4456 = vunpack.c.l.b16 %v3170
    %v4457 = vunpack.c.h.b16 %v3170
    %v4458 = vunpack.c.l.b16 %v3171
    %v4459 = vunpack.c.h.b16 %v3171
    %v4460 = vunpack.c.l.b16 %v3172
    %v4461 = vunpack.c.h.b16 %v3172
    %v4462 = vunpack.c.l.b16 %v3173
    %v4463 = vunpack.c.l.b16 %v3174
    %v4464 = vunpack.c.h.b16 %v3174
    %v4465 = vunpack.c.l.b16 %v3175
    %v4466 = vunpack.c.h.b16 %v3175
    %v4467 = vunpack.c.l.b16 %v3176
    %v4468 = vunpack.c.h.b16 %v3176
    %v4469 = vunpack.c.l.b16 %v3177
    %v4470 = vunpack.c.l.b16 %v3178
    %v4471 = vunpack.c.h.b16 %v3178
    %v4472 = vunpack.c.l.b16 %v3179
    %v4473 = vunpack.c.h.b16 %v3179
    %v4474 = vunpack.c.l.b16 %v3180
    %v4475 = vunpack.c.h.b16 %v3180
    %v4476 = vunpack.c.l.b16 %v3181
    %v4477 = vunpack.c.l.b16 %v3182
    %v4478 = vunpack.c.h.b16 %v3182
    %v4479 = vunpack.c.l.b16 %v3183
    %v4480 = vunpack.c.h.b16 %v3183
    %v4481 = vunpack.c.l.b16 %v3184
    %v4482 = vunpack.c.h.b16 %v3184
    %v4483 = vunpack.c.l.b16 %v3185
    %v4484 = vunpack.c.l.b16 %v3186
    %v4485 = vunpack.c.h.b16 %v3186
    %v4486 = vunpack.c.l.b16 %v3187
    %v4487 = vunpack.c.h.b16 %v3187
    %v4488 = vunpack.c.l.b16 %v3188
    %v4489 = vunpack.c.h.b16 %v3188
    %v4490 = vunpack.c.l.b16 %v3189
    %v4491 = vunpack.c.l.b16 %v3190
    %v4492 = vunpack.c.h.b16 %v3190
    %v4493 = vunpack.c.l.b16 %v3191
    %v4494 = vunpack.c.h.b16 %v3191
    %v4495 = vunpack.c.l.b16 %v3192
    %v4496 = vunpack.c.h.b16 %v3192
    %v4497 = vunpack.c.l.b16 %v3193
    %v4498 = vunpack.c.l.b16 %v3194
    %v4499 = vunpack.c.h.b16 %v3194
    %v4500 = vunpack.c.l.b16 %v3195
    %v4501 = vunpack.c.h.b16 %v3195
    %v4502 = vunpack.c.l.b16 %v3196
    %v4503 = vunpack.c.h.b16 %v3196
    %v4504 = vunpack.c.l.b16 %v3197
    %v4505 = vunpack.c.l.b16 %v3198
    %v4506 = vunpack.c.h.b16 %v3198
    %v4507 = vunpack.c.l.b16 %v3199
    %v4508 = vunpack.c.h.b16 %v3199
    %v4509 = vunpack.c.l.b16 %v3200
    %v4510 = vunpack.c.h.b16 %v3200
    %v4511 = vunpack.c.l.b16 %v3201
    %v4512 = vunpack.c.l.b16 %v3202
    %v4513 = vunpack.c.h.b16 %v3202
    %v4514 = vunpack.c.l.b16 %v3203
    %v4515 = vunpack.c.h.b16 %v3203
    %v4516 = vunpack.c.l.b16 %v3204
    %v4517 = vunpack.c.h.b16 %v3204
    %v4518 = vunpack.c.l.b16 %v3205
    %v4519 = vunpack.c.l.b16 %v3206
    %v4520 = vunpack.c.h.b16 %v3206
    %v4521 = vunpack.c.l.b16 %v3207
    %v4522 = vunpack.c.h.b16 %v3207
    %v4523 = vunpack.c.l.b16 %v3208
    %v4524 = vunpack.c.h.b16 %v3208
    %v4525 = vunpack.c.l.b16 %v3209
    %v4526 = vunpack.c.l.b16 %v3210
    %v4527 = vunpack.c.h.b16 %v3210
    %v4528 = vunpack.c.l.b16 %v3211
    %v4529 = vunpack.c.h.b16 %v3211
    %v4530 = vunpack.c.l.b16 %v3212
    %v4531 = vunpack.c.h.b16 %v3212
    %v4532 = vunpack.c.l.b16 %v3213
    %v4533 = vunpack.c.l.b16 %v3214
    %v4534 = vunpack.c.h.b16 %v3214
    %v4535 = vunpack.c.l.b16 %v3215
    %v4536 = vunpack.c.h.b16 %v3215
    %v4537 = vunpack.c.l.b16 %v3216
    %v4538 = vunpack.c.h.b16 %v3216
    %v4539 = vunpack.c.l.b16 %v3217
    %v4540 = vunpack.c.l.b16 %v3218
    %v4541 = vunpack.c.h.b16 %v3218
    %v4542 = vunpack.c.l.b16 %v3219
    %v4543 = vunpack.c.h.b16 %v3219
    %v4544 = vunpack.c.l.b16 %v3220
    %v4545 = vunpack.c.h.b16 %v3220
    %v4546 = vunpack.c.l.b16 %v3221
    %v4547 = vunpack.c.l.b16 %v3222
    %v4548 = vunpack.c.h.b16 %v3222
    %v4549 = vunpack.c.l.b16 %v3223
    %v4550 = vunpack.c.h.b16 %v3223
    %v4551 = vunpack.c.l.b16 %v3224
    %v4552 = vunpack.c.h.b16 %v3224
    %v4553 = vunpack.c.l.b16 %v3225
    %v4554 = vunpack.c.l.b16 %v3226
    %v4555 = vunpack.c.h.b16 %v3226
    %v4556 = vunpack.c.l.b16 %v3227
    %v4557 = vunpack.c.h.b16 %v3227
    %v4558 = vunpack.c.l.b16 %v3228
    %v4559 = vunpack.c.h.b16 %v3228
    %v4560 = vunpack.c.l.b16 %v3229
    %v4561 = vunpack.c.l.b16 %v3230
    %v4562 = vunpack.c.h.b16 %v3230
    %v4563 = vunpack.c.l.b16 %v3231
    %v4564 = vunpack.c.h.b16 %v3231
    %v4565 = vunpack.c.l.b16 %v3232
    %v4566 = vunpack.c.h.b16 %v3232
    %v4567 = vunpack.c.l.b16 %v3233
    %v4568 = vunpack.c.l.b16 %v3234
    %v4569 = vunpack.c.h.b16 %v3234
    %v4570 = vunpack.c.l.b16 %v3235
    %v4571 = vunpack.c.h.b16 %v3235
    %v4572 = vunpack.c.l.b16 %v3236
    %v4573 = vunpack.c.h.b16 %v3236
    %v4574 = vunpack.c.l.b16 %v3237
    %v4575 = vunpack.c.l.b16 %v3238
    %v4576 = vunpack.c.h.b16 %v3238
    %v4577 = vunpack.c.l.b16 %v3239
    %v4578 = vunpack.c.h.b16 %v3239
    %v4579 = vunpack.c.l.b16 %v3240
    %v4580 = vunpack.c.h.b16 %v3240
    %v4581 = vunpack.c.l.b16 %v3241
    %v4582 = vunpack.c.l.b16 %v3242
    %v4583 = vunpack.c.h.b16 %v3242
    %v4584 = vunpack.c.l.b16 %v3243
    %v4585 = vunpack.c.h.b16 %v3243
    %v4586 = vunpack.c.l.b16 %v3244
    %v4587 = vunpack.c.h.b16 %v3244
    %v4588 = vunpack.c.l.b16 %v3245
    %v4589 = vunpack.c.l.b16 %v3246
    %v4590 = vunpack.c.h.b16 %v3246
    %v4591 = vunpack.c.l.b16 %v3247
    %v4592 = vunpack.c.h.b16 %v3247
    %v4593 = vunpack.c.l.b16 %v3248
    %v4594 = vunpack.c.h.b16 %v3248
    %v4595 = vunpack.c.l.b16 %v3249
    %v4596 = vunpack.c.l.b16 %v3250
    %v4597 = vunpack.c.h.b16 %v3250
    %v4598 = vunpack.c.l.b16 %v3251
    %v4599 = vunpack.c.h.b16 %v3251
    %v4600 = vunpack.c.l.b16 %v3252
    %v4601 = vunpack.c.h.b16 %v3252
    %v4602 = vunpack.c.l.b16 %v3253
    %v4603 = vunpack.c.l.b16 %v3254
    %v4604 = vunpack.c.h.b16 %v3254
    %v4605 = vunpack.c.l.b16 %v3255
    %v4606 = vunpack.c.h.b16 %v3255
    %v4607 = vunpack.c.l.b16 %v3256
    %v4608 = vunpack.c.h.b16 %v3256
    %v4609 = vunpack.c.l.b16 %v3257
    %v4610 = vunpack.c.l.b16 %v3258
    %v4611 = vunpack.c.h.b16 %v3258
    %v4612 = vunpack.c.l.b16 %v3259
    %v4613 = vunpack.c.h.b16 %v3259
    %v4614 = vunpack.c.l.b16 %v3260
    %v4615 = vunpack.c.h.b16 %v3260
    %v4616 = vunpack.c.l.b16 %v3261
    %v4617 = vunpack.c.l.b16 %v3262
    %v4618 = vunpack.c.h.b16 %v3262
    %v4619 = vunpack.c.l.b16 %v3263
    %v4620 = vunpack.c.h.b16 %v3263
    %v4621 = vunpack.c.l.b16 %v3264
    %v4622 = vunpack.c.h.b16 %v3264
    %v4623 = vunpack.c.l.b16 %v3265
    %v4624 = vunpack.c.l.b16 %v3266
    %v4625 = vunpack.c.h.b16 %v3266
    %v4626 = vunpack.c.l.b16 %v3267
    %v4627 = vunpack.c.h.b16 %v3267
    %v4628 = vunpack.c.l.b16 %v3268
    %v4629 = vunpack.c.h.b16 %v3268
    %v4630 = vunpack.c.l.b16 %v3269
    %v4631 = vunpack.c.l.b16 %v3270
    %v4632 = vunpack.c.h.b16 %v3270
    %v4633 = vunpack.c.l.b16 %v3271
    %v4634 = vunpack.c.h.b16 %v3271
    %v4635 = vunpack.c.l.b16 %v3272
    %v4636 = vunpack.c.h.b16 %v3272
    %v4637 = vunpack.c.l.b16 %v3273
    %v4638 = vunpack.c.l.b16 %v3274
    %v4639 = vunpack.c.h.b16 %v3274
    %v4640 = vunpack.c.l.b16 %v3275
    %v4641 = vunpack.c.h.b16 %v3275
    %v4642 = vunpack.c.l.b16 %v3276
    %v4643 = vunpack.c.h.b16 %v3276
    %v4644 = vunpack.c.l.b16 %v3277
    %v4645 = vunpack.c.l.b16 %v3278
    %v4646 = vunpack.c.h.b16 %v3278
    %v4647 = vunpack.c.l.b16 %v3279
    %v4648 = vunpack.c.h.b16 %v3279
    %v4649 = vunpack.c.l.b16 %v3280
    %v4650 = vunpack.c.h.b16 %v3280
    %v4651 = vunpack.c.l.b16 %v3281
    %v4652 = vunpack.c.l.b16 %v3282
    %v4653 = vunpack.c.h.b16 %v3282
    %v4654 = vunpack.c.l.b16 %v3283
    %v4655 = vunpack.c.h.b16 %v3283
    %v4656 = vunpack.c.l.b16 %v3284
    %v4657 = vunpack.c.h.b16 %v3284
    %v4658 = vunpack.c.l.b16 %v3285
    %v4659 = vunpack.c.l.b16 %v3286
    %v4660 = vunpack.c.h.b16 %v3286
    %v4661 = vunpack.c.l.b16 %v3287
    %v4662 = vunpack.c.h.b16 %v3287
    %v4663 = vunpack.c.l.b16 %v3288
    %v4664 = vunpack.c.h.b16 %v3288
    %v4665 = vunpack.c.l.b16 %v3289
    %v4666 = vunpack.c.l.b16 %v3290
    %v4667 = vunpack.c.h.b16 %v3290
    %v4668 = vunpack.c.l.b16 %v3291
    %v4669 = vunpack.c.h.b16 %v3291
    %v4670 = vunpack.c.l.b16 %v3292
    %v4671 = vunpack.c.h.b16 %v3292
    %v4672 = vunpack.c.l.b16 %v3293
    %v4673 = vunpack.c.l.b16 %v3294
    %v4674 = vunpack.c.h.b16 %v3294
    %v4675 = vunpack.c.l.b16 %v3295
    %v4676 = vunpack.c.h.b16 %v3295
    %v4677 = vunpack.c.l.b16 %v3296
    %v4678 = vunpack.c.h.b16 %v3296
    %v4679 = vunpack.c.l.b16 %v3297
    %v4680 = vunpack.c.l.b16 %v3298
    %v4681 = vunpack.c.h.b16 %v3298
    %v4682 = vunpack.c.l.b16 %v3299
    %v4683 = vunpack.c.h.b16 %v3299
    %v4684 = vunpack.c.l.b16 %v3300
    %v4685 = vunpack.c.h.b16 %v3300
    %v4686 = vunpack.c.l.b16 %v3301
    %v4687 = vunpack.c.l.b16 %v3302
    %v4688 = vunpack.c.h.b16 %v3302
    %v4689 = vunpack.c.l.b16 %v3303
    %v4690 = vunpack.c.h.b16 %v3303
    %v4691 = vunpack.c.l.b16 %v3304
    %v4692 = vunpack.c.h.b16 %v3304
    %v4693 = vunpack.c.l.b16 %v3305
    %v4694 = vunpack.c.l.b16 %v3306
    %v4695 = vunpack.c.h.b16 %v3306
    %v4696 = vunpack.c.l.b16 %v3307
    %v4697 = vunpack.c.h.b16 %v3307
    %v4698 = vunpack.c.l.b16 %v3308
    %v4699 = vunpack.c.h.b16 %v3308
    %v4700 = vunpack.c.l.b16 %v3309
    %v4701 = vunpack.c.l.b16 %v3310
    %v4702 = vunpack.c.h.b16 %v3310
    %v4703 = vunpack.c.l.b16 %v3311
    %v4704 = vunpack.c.h.b16 %v3311
    %v4705 = vunpack.c.l.b16 %v3312
    %v4706 = vunpack.c.h.b16 %v3312
    %v4707 = vunpack.c.l.b16 %v3313
    %v4708 = vunpack.c.l.b16 %v3314
    %v4709 = vunpack.c.h.b16 %v3314
    %v4710 = vunpack.c.l.b16 %v3315
    %v4711 = vunpack.c.h.b16 %v3315
    %v4712 = vunpack.c.l.b16 %v3316
    %v4713 = vunpack.c.h.b16 %v3316
    %v4714 = vunpack.c.l.b16 %v3317
    %v4715 = vunpack.c.l.b16 %v3318
    %v4716 = vunpack.c.h.b16 %v3318
    %v4717 = vunpack.c.l.b16 %v3319
    %v4718 = vunpack.c.h.b16 %v3319
    %v4719 = vunpack.c.l.b16 %v3320
    %v4720 = vunpack.c.h.b16 %v3320
    %v4721 = vunpack.c.l.b16 %v3321
    %v4722 = vunpack.c.l.b16 %v3322
    %v4723 = vunpack.c.h.b16 %v3322
    %v4724 = vunpack.c.l.b16 %v3323
    %v4725 = vunpack.c.h.b16 %v3323
    %v4726 = vunpack.c.l.b16 %v3324
    %v4727 = vunpack.c.h.b16 %v3324
    %v4728 = vunpack.c.l.b16 %v3325
    %v4729 = vunpack.c.l.b16 %v3326
    %v4730 = vunpack.c.h.b16 %v3326
    %v4731 = vunpack.c.l.b16 %v3327
    %v4732 = vunpack.c.h.b16 %v3327
    %v4733 = vunpack.c.l.b16 %v3328
    %v4734 = vunpack.c.h.b16 %v3328
    %v4735 = vunpack.c.l.b16 %v3329
    %v4736 = vunpack.c.l.b16 %v3330
    %v4737 = vunpack.c.h.b16 %v3330
    %v4738 = vunpack.c.l.b16 %v3331
    %v4739 = vunpack.c.h.b16 %v3331
    %v4740 = vunpack.c.l.b16 %v3332
    %v4741 = vunpack.c.h.b16 %v3332
    %v4742 = vunpack.c.l.b16 %v3333
    %v4743 = vunpack.c.l.b16 %v3334
    %v4744 = vunpack.c.h.b16 %v3334
    %v4745 = vunpack.c.l.b16 %v3335
    %v4746 = vunpack.c.h.b16 %v3335
    %v4747 = vunpack.c.l.b16 %v3336
    %v4748 = vunpack.c.h.b16 %v3336
    %v4749 = vunpack.c.l.b16 %v3337
    %v4750 = vunpack.c.l.b16 %v3338
    %v4751 = vunpack.c.h.b16 %v3338
    %v4752 = vunpack.c.l.b16 %v3339
    %v4753 = vunpack.c.h.b16 %v3339
    %v4754 = vunpack.c.l.b16 %v3340
    %v4755 = vunpack.c.h.b16 %v3340
    %v4756 = vunpack.c.l.b16 %v3341
    %v4757 = vunpack.c.l.b16 %v3342
    %v4758 = vunpack.c.h.b16 %v3342
    %v4759 = vunpack.c.l.b16 %v3343
    %v4760 = vunpack.c.h.b16 %v3343
    %v4761 = vunpack.c.l.b16 %v3344
    %v4762 = vunpack.c.h.b16 %v3344
    %v4763 = vunpack.c.l.b16 %v3345
    %v4764 = vunpack.c.l.b16 %v3346
    %v4765 = vunpack.c.h.b16 %v3346
    %v4766 = vunpack.c.l.b16 %v3347
    %v4767 = vunpack.c.h.b16 %v3347
    %v4768 = vunpack.c.l.b16 %v3348
    %v4769 = vunpack.c.h.b16 %v3348
    %v4770 = vunpack.c.l.b16 %v3349
    %v4771 = vunpack.c.l.b16 %v3350
    %v4772 = vunpack.c.h.b16 %v3350
    %v4773 = vunpack.c.l.b16 %v3351
    %v4774 = vunpack.c.h.b16 %v3351
    %v4775 = vunpack.c.l.b16 %v3352
    %v4776 = vunpack.c.h.b16 %v3352
    %v4777 = vunpack.c.l.b16 %v3353
    %v4778 = vunpack.c.l.b16 %v3354
    %v4779 = vunpack.c.h.b16 %v3354
    %v4780 = vunpack.c.l.b16 %v3355
    %v4781 = vunpack.c.h.b16 %v3355
    %v4782 = vunpack.c.l.b16 %v3356
    %v4783 = vunpack.c.h.b16 %v3356
    %v4784 = vunpack.c.l.b16 %v3357
    %v4785 = vunpack.c.l.b16 %v3358
    %v4786 = vunpack.c.h.b16 %v3358
    %v4787 = vunpack.c.l.b16 %v3359
    %v4788 = vunpack.c.h.b16 %v3359
    %v4789 = vunpack.c.l.b16 %v3360
    %v4790 = vunpack.c.h.b16 %v3360
    %v4791 = vunpack.c.l.b16 %v3361
    %v4792 = vunpack.c.l.b16 %v3362
    %v4793 = vunpack.c.h.b16 %v3362
    %v4794 = vunpack.c.l.b16 %v3363
    %v4795 = vunpack.c.h.b16 %v3363
    %v4796 = vunpack.c.l.b16 %v3364
    %v4797 = vunpack.c.h.b16 %v3364
    %v4798 = vunpack.c.l.b16 %v3365
    %v4799 = vunpack.c.l.b16 %v3366
    %v4800 = vunpack.c.h.b16 %v3366
    %v4801 = vunpack.c.l.b16 %v3367
    %v4802 = vunpack.c.h.b16 %v3367
    %v4803 = vunpack.c.l.b16 %v3368
    %v4804 = vunpack.c.h.b16 %v3368
    %v4805 = vunpack.c.l.b16 %v3369
    %v4806 = vunpack.c.l.b16 %v3370
    %v4807 = vunpack.c.h.b16 %v3370
    %v4808 = vunpack.c.l.b16 %v3371
    %v4809 = vunpack.c.h.b16 %v3371
    %v4810 = vunpack.c.l.b16 %v3372
    %v4811 = vunpack.c.h.b16 %v3372
    %v4812 = vunpack.c.l.b16 %v3373
    %v4813 = vunpack.c.l.b16 %v3374
    %v4814 = vunpack.c.h.b16 %v3374
    %v4815 = vunpack.c.l.b16 %v3375
    %v4816 = vunpack.c.h.b16 %v3375
    %v4817 = vunpack.c.l.b16 %v3376
    %v4818 = vunpack.c.h.b16 %v3376
    %v4819 = vunpack.c.l.b16 %v3377
    %v4820 = vunpack.c.l.b16 %v3378
    %v4821 = vunpack.c.h.b16 %v3378
    %v4822 = vunpack.c.l.b16 %v3379
    %v4823 = vunpack.c.h.b16 %v3379
    %v4824 = vunpack.c.l.b16 %v3380
    %v4825 = vunpack.c.h.b16 %v3380
    %v4826 = vunpack.c.l.b16 %v3381
    %v4827 = vpack.c.b16 %v3938, %v3931
    %v4828 = vpack.c.b16 %v3939, %v3932
    %v4829 = vpack.c.b16 %v3940, %v3933
    %v4830 = vpack.c.b16 %v3941, %v3934
    %v4831 = vpack.c.b16 %v3942, %v3935
    %v4832 = vpack.c.b16 %v3943, %v3936
    %v4833 = vpack.c.b16 %v3944, %v3937
    %v4834 = vpack.c.b16 %v3952, %v3945
    %v4835 = vpack.c.b16 %v3953, %v3946
    %v4836 = vpack.c.b16 %v3954, %v3947
    %v4837 = vpack.c.b16 %v3955, %v3948
    %v4838 = vpack.c.b16 %v3956, %v3949
    %v4839 = vpack.c.b16 %v3957, %v3950
    %v4840 = vpack.c.b16 %v3958, %v3951
    %v4841 = vpack.c.b16 %v3966, %v3959
    %v4842 = vpack.c.b16 %v3967, %v3960
    %v4843 = vpack.c.b16 %v3968, %v3961
    %v4844 = vpack.c.b16 %v3969, %v3962
    %v4845 = vpack.c.b16 %v3970, %v3963
    %v4846 = vpack.c.b16 %v3971, %v3964
    %v4847 = vpack.c.b16 %v3972, %v3965
    %v4848 = vpack.c.b16 %v3980, %v3973
    %v4849 = vpack.c.b16 %v3981, %v3974
    %v4850 = vpack.c.b16 %v3982, %v3975
    %v4851 = vpack.c.b16 %v3983, %v3976
    %v4852 = vpack.c.b16 %v3984, %v3977
    %v4853 = vpack.c.b16 %v3985, %v3978
    %v4854 = vpack.c.b16 %v3986, %v3979
    %v4855 = vpack.c.b16 %v3994, %v3987
    %v4856 = vpack.c.b16 %v3995, %v3988
    %v4857 = vpack.c.b16 %v3996, %v3989
    %v4858 = vpack.c.b16 %v3997, %v3990
    %v4859 = vpack.c.b16 %v3998, %v3991
    %v4860 = vpack.c.b16 %v3999, %v3992
    %v4861 = vpack.c.b16 %v4000, %v3993
    %v4862 = vpack.c.b16 %v4008, %v4001
    %v4863 = vpack.c.b16 %v4009, %v4002
    %v4864 = vpack.c.b16 %v4010, %v4003
    %v4865 = vpack.c.b16 %v4011, %v4004
    %v4866 = vpack.c.b16 %v4012, %v4005
    %v4867 = vpack.c.b16 %v4013, %v4006
    %v4868 = vpack.c.b16 %v4014, %v4007
    %v4869 = vpack.c.b16 %v4022, %v4015
    %v4870 = vpack.c.b16 %v4023, %v4016
    %v4871 = vpack.c.b16 %v4024, %v4017
    %v4872 = vpack.c.b16 %v4025, %v4018
    %v4873 = vpack.c.b16 %v4026, %v4019
    %v4874 = vpack.c.b16 %v4027, %v4020
    %v4875 = vpack.c.b16 %v4028, %v4021
    %v4876 = vpack.c.b16 %v4036, %v4029
    %v4877 = vpack.c.b16 %v4037, %v4030
    %v4878 = vpack.c.b16 %v4038, %v4031
    %v4879 = vpack.c.b16 %v4039, %v4032
    %v4880 = vpack.c.b16 %v4040, %v4033
    %v4881 = vpack.c.b16 %v4041, %v4034
    %v4882 = vpack.c.b16 %v4042, %v4035
    %v4883 = vpack.c.b16 %v4050, %v4043
    %v4884 = vpack.c.b16 %v4051, %v4044
    %v4885 = vpack.c.b16 %v4052, %v4045
    %v4886 = vpack.c.b16 %v4053, %v4046
    %v4887 = vpack.c.b16 %v4054, %v4047
    %v4888 = vpack.c.b16 %v4055, %v4048
    %v4889 = vpack.c.b16 %v4056, %v4049
    %v4890 = vpack.c.b16 %v4064, %v4057
    %v4891 = vpack.c.b16 %v4065, %v4058
    %v4892 = vpack.c.b16 %v4066, %v4059
    %v4893 = vpack.c.b16 %v4067, %v4060
    %v4894 = vpack.c.b16 %v4068, %v4061
    %v4895 = vpack.c.b16 %v4069, %v4062
    %v4896 = vpack.c.b16 %v4070, %v4063
    %v4897 = vpack.c.b16 %v4078, %v4071
    %v4898 = vpack.c.b16 %v4079, %v4072
    %v4899 = vpack.c.b16 %v4080, %v4073
    %v4900 = vpack.c.b16 %v4081, %v4074
    %v4901 = vpack.c.b16 %v4082, %v4075
    %v4902 = vpack.c.b16 %v4083, %v4076
    %v4903 = vpack.c.b16 %v4084, %v4077
    %v4904 = vpack.c.b16 %v4092, %v4085
    %v4905 = vpack.c.b16 %v4093, %v4086
    %v4906 = vpack.c.b16 %v4094, %v4087
    %v4907 = vpack.c.b16 %v4095, %v4088
    %v4908 = vpack.c.b16 %v4096, %v4089
    %v4909 = vpack.c.b16 %v4097, %v4090
    %v4910 = vpack.c.b16 %v4098, %v4091
    %v4911 = vpack.c.b16 %v4106, %v4099
    %v4912 = vpack.c.b16 %v4107, %v4100
    %v4913 = vpack.c.b16 %v4108, %v4101
    %v4914 = vpack.c.b16 %v4109, %v4102
    %v4915 = vpack.c.b16 %v4110, %v4103
    %v4916 = vpack.c.b16 %v4111, %v4104
    %v4917 = vpack.c.b16 %v4112, %v4105
    %v4918 = vpack.c.b16 %v4120, %v4113
    %v4919 = vpack.c.b16 %v4121, %v4114
    %v4920 = vpack.c.b16 %v4122, %v4115
    %v4921 = vpack.c.b16 %v4123, %v4116
    %v4922 = vpack.c.b16 %v4124, %v4117
    %v4923 = vpack.c.b16 %v4125, %v4118
    %v4924 = vpack.c.b16 %v4126, %v4119
    %v4925 = vpack.c.b16 %v4134, %v4127
    %v4926 = vpack.c.b16 %v4135, %v4128
    %v4927 = vpack.c.b16 %v4136, %v4129
    %v4928 = vpack.c.b16 %v4137, %v4130
    %v4929 = vpack.c.b16 %v4138, %v4131
    %v4930 = vpack.c.b16 %v4139, %v4132
    %v4931 = vpack.c.b16 %v4140, %v4133
    %v4932 = vpack.c.b16 %v4148, %v4141
    %v4933 = vpack.c.b16 %v4149, %v4142
    %v4934 = vpack.c.b16 %v4150, %v4143
    %v4935 = vpack.c.b16 %v4151, %v4144
    %v4936 = vpack.c.b16 %v4152, %v4145
    %v4937 = vpack.c.b16 %v4153, %v4146
    %v4938 = vpack.c.b16 %v4154, %v4147
    %v4939 = vpack.c.b16 %v4162, %v4155
    %v4940 = vpack.c.b16 %v4163, %v4156
    %v4941 = vpack.c.b16 %v4164, %v4157
    %v4942 = vpack.c.b16 %v4165, %v4158
    %v4943 = vpack.c.b16 %v4166, %v4159
    %v4944 = vpack.c.b16 %v4167, %v4160
    %v4945 = vpack.c.b16 %v4168, %v4161
    %v4946 = vpack.c.b16 %v4176, %v4169
    %v4947 = vpack.c.b16 %v4177, %v4170
    %v4948 = vpack.c.b16 %v4178, %v4171
    %v4949 = vpack.c.b16 %v4179, %v4172
    %v4950 = vpack.c.b16 %v4180, %v4173
    %v4951 = vpack.c.b16 %v4181, %v4174
    %v4952 = vpack.c.b16 %v4182, %v4175
    %v4953 = vpack.c.b16 %v4190, %v4183
    %v4954 = vpack.c.b16 %v4191, %v4184
    %v4955 = vpack.c.b16 %v4192, %v4185
    %v4956 = vpack.c.b16 %v4193, %v4186
    %v4957 = vpack.c.b16 %v4194, %v4187
    %v4958 = vpack.c.b16 %v4195, %v4188
    %v4959 = vpack.c.b16 %v4196, %v4189
    %v4960 = vpack.c.b16 %v4204, %v4197
    %v4961 = vpack.c.b16 %v4205, %v4198
    %v4962 = vpack.c.b16 %v4206, %v4199
    %v4963 = vpack.c.b16 %v4207, %v4200
    %v4964 = vpack.c.b16 %v4208, %v4201
    %v4965 = vpack.c.b16 %v4209, %v4202
    %v4966 = vpack.c.b16 %v4210, %v4203
    %v4967 = vpack.c.b16 %v4218, %v4211
    %v4968 = vpack.c.b16 %v4219, %v4212
    %v4969 = vpack.c.b16 %v4220, %v4213
    %v4970 = vpack.c.b16 %v4221, %v4214
    %v4971 = vpack.c.b16 %v4222, %v4215
    %v4972 = vpack.c.b16 %v4223, %v4216
    %v4973 = vpack.c.b16 %v4224, %v4217
    %v4974 = vpack.c.b16 %v4232, %v4225
    %v4975 = vpack.c.b16 %v4233, %v4226
    %v4976 = vpack.c.b16 %v4234, %v4227
    %v4977 = vpack.c.b16 %v4235, %v4228
    %v4978 = vpack.c.b16 %v4236, %v4229
    %v4979 = vpack.c.b16 %v4237, %v4230
    %v4980 = vpack.c.b16 %v4238, %v4231
    %v4981 = vpack.c.b16 %v4246, %v4239
    %v4982 = vpack.c.b16 %v4247, %v4240
    %v4983 = vpack.c.b16 %v4248, %v4241
    %v4984 = vpack.c.b16 %v4249, %v4242
    %v4985 = vpack.c.b16 %v4250, %v4243
    %v4986 = vpack.c.b16 %v4251, %v4244
    %v4987 = vpack.c.b16 %v4252, %v4245
    %v4988 = vpack.c.b16 %v4260, %v4253
    %v4989 = vpack.c.b16 %v4261, %v4254
    %v4990 = vpack.c.b16 %v4262, %v4255
    %v4991 = vpack.c.b16 %v4263, %v4256
    %v4992 = vpack.c.b16 %v4264, %v4257
    %v4993 = vpack.c.b16 %v4265, %v4258
    %v4994 = vpack.c.b16 %v4266, %v4259
    %v4995 = vpack.c.b16 %v4274, %v4267
    %v4996 = vpack.c.b16 %v4275, %v4268
    %v4997 = vpack.c.b16 %v4276, %v4269
    %v4998 = vpack.c.b16 %v4277, %v4270
    %v4999 = vpack.c.b16 %v4278, %v4271
    %v5000 = vpack.c.b16 %v4279, %v4272
    %v5001 = vpack.c.b16 %v4280, %v4273
    %v5002 = vpack.c.b16 %v4288, %v4281
    %v5003 = vpack.c.b16 %v4289, %v4282
    %v5004 = vpack.c.b16 %v4290, %v4283
    %v5005 = vpack.c.b16 %v4291, %v4284
    %v5006 = vpack.c.b16 %v4292, %v4285
    %v5007 = vpack.c.b16 %v4293, %v4286
    %v5008 = vpack.c.b16 %v4294, %v4287
    %v5009 = vpack.c.b16 %v4302, %v4295
    %v5010 = vpack.c.b16 %v4303, %v4296
    %v5011 = vpack.c.b16 %v4304, %v4297
    %v5012 = vpack.c.b16 %v4305, %v4298
    %v5013 = vpack.c.b16 %v4306, %v4299
    %v5014 = vpack.c.b16 %v4307, %v4300
    %v5015 = vpack.c.b16 %v4308, %v4301
    %v5016 = vpack.c.b16 %v4316, %v4309
    %v5017 = vpack.c.b16 %v4317, %v4310
    %v5018 = vpack.c.b16 %v4318, %v4311
    %v5019 = vpack.c.b16 %v4319, %v4312
    %v5020 = vpack.c.b16 %v4320, %v4313
    %v5021 = vpack.c.b16 %v4321, %v4314
    %v5022 = vpack.c.b16 %v4322, %v4315
    %v5023 = vpack.c.b16 %v4330, %v4323
    %v5024 = vpack.c.b16 %v4331, %v4324
    %v5025 = vpack.c.b16 %v4332, %v4325
    %v5026 = vpack.c.b16 %v4333, %v4326
    %v5027 = vpack.c.b16 %v4334, %v4327
    %v5028 = vpack.c.b16 %v4335, %v4328
    %v5029 = vpack.c.b16 %v4336, %v4329
    %v5030 = vpack.c.b16 %v4344, %v4337
    %v5031 = vpack.c.b16 %v4345, %v4338
    %v5032 = vpack.c.b16 %v4346, %v4339
    %v5033 = vpack.c.b16 %v4347, %v4340
    %v5034 = vpack.c.b16 %v4348, %v4341
    %v5035 = vpack.c.b16 %v4349, %v4342
    %v5036 = vpack.c.b16 %v4350, %v4343
    %v5037 = vpack.c.b16 %v4358, %v4351
    %v5038 = vpack.c.b16 %v4359, %v4352
    %v5039 = vpack.c.b16 %v4360, %v4353
    %v5040 = vpack.c.b16 %v4361, %v4354
    %v5041 = vpack.c.b16 %v4362, %v4355
    %v5042 = vpack.c.b16 %v4363, %v4356
    %v5043 = vpack.c.b16 %v4364, %v4357
    %v5044 = vpack.c.b16 %v4372, %v4365
    %v5045 = vpack.c.b16 %v4373, %v4366
    %v5046 = vpack.c.b16 %v4374, %v4367
    %v5047 = vpack.c.b16 %v4375, %v4368
    %v5048 = vpack.c.b16 %v4376, %v4369
    %v5049 = vpack.c.b16 %v4377, %v4370
    %v5050 = vpack.c.b16 %v4378, %v4371
    %v5051 = vpack.c.b16 %v4386, %v4379
    %v5052 = vpack.c.b16 %v4387, %v4380
    %v5053 = vpack.c.b16 %v4388, %v4381
    %v5054 = vpack.c.b16 %v4389, %v4382
    %v5055 = vpack.c.b16 %v4390, %v4383
    %v5056 = vpack.c.b16 %v4391, %v4384
    %v5057 = vpack.c.b16 %v4392, %v4385
    %v5058 = vpack.c.b16 %v4400, %v4393
    %v5059 = vpack.c.b16 %v4401, %v4394
    %v5060 = vpack.c.b16 %v4402, %v4395
    %v5061 = vpack.c.b16 %v4403, %v4396
    %v5062 = vpack.c.b16 %v4404, %v4397
    %v5063 = vpack.c.b16 %v4405, %v4398
    %v5064 = vpack.c.b16 %v4406, %v4399
    %v5065 = vpack.c.b16 %v4414, %v4407
    %v5066 = vpack.c.b16 %v4415, %v4408
    %v5067 = vpack.c.b16 %v4416, %v4409
    %v5068 = vpack.c.b16 %v4417, %v4410
    %v5069 = vpack.c.b16 %v4418, %v4411
    %v5070 = vpack.c.b16 %v4419, %v4412
    %v5071 = vpack.c.b16 %v4420, %v4413
    %v5072 = vpack.c.b16 %v4428, %v4421
    %v5073 = vpack.c.b16 %v4429, %v4422
    %v5074 = vpack.c.b16 %v4430, %v4423
    %v5075 = vpack.c.b16 %v4431, %v4424
    %v5076 = vpack.c.b16 %v4432, %v4425
    %v5077 = vpack.c.b16 %v4433, %v4426
    %v5078 = vpack.c.b16 %v4434, %v4427
    %v5079 = vpack.c.b16 %v4442, %v4435
    %v5080 = vpack.c.b16 %v4443, %v4436
    %v5081 = vpack.c.b16 %v4444, %v4437
    %v5082 = vpack.c.b16 %v4445, %v4438
    %v5083 = vpack.c.b16 %v4446, %v4439
    %v5084 = vpack.c.b16 %v4447, %v4440
    %v5085 = vpack.c.b16 %v4448, %v4441
    %v5086 = vpack.c.b16 %v4456, %v4449
    %v5087 = vpack.c.b16 %v4457, %v4450
    %v5088 = vpack.c.b16 %v4458, %v4451
    %v5089 = vpack.c.b16 %v4459, %v4452
    %v5090 = vpack.c.b16 %v4460, %v4453
    %v5091 = vpack.c.b16 %v4461, %v4454
    %v5092 = vpack.c.b16 %v4462, %v4455
    %v5093 = vpack.c.b16 %v4470, %v4463
    %v5094 = vpack.c.b16 %v4471, %v4464
    %v5095 = vpack.c.b16 %v4472, %v4465
    %v5096 = vpack.c.b16 %v4473, %v4466
    %v5097 = vpack.c.b16 %v4474, %v4467
    %v5098 = vpack.c.b16 %v4475, %v4468
    %v5099 = vpack.c.b16 %v4476, %v4469
    %v5100 = vpack.c.b16 %v4484, %v4477
    %v5101 = vpack.c.b16 %v4485, %v4478
    %v5102 = vpack.c.b16 %v4486, %v4479
    %v5103 = vpack.c.b16 %v4487, %v4480
    %v5104 = vpack.c.b16 %v4488, %v4481
    %v5105 = vpack.c.b16 %v4489, %v4482
    %v5106 = vpack.c.b16 %v4490, %v4483
    %v5107 = vpack.c.b16 %v4498, %v4491
    %v5108 = vpack.c.b16 %v4499, %v4492
    %v5109 = vpack.c.b16 %v4500, %v4493
    %v5110 = vpack.c.b16 %v4501, %v4494
    %v5111 = vpack.c.b16 %v4502, %v4495
    %v5112 = vpack.c.b16 %v4503, %v4496
    %v5113 = vpack.c.b16 %v4504, %v4497
    %v5114 = vpack.c.b16 %v4512, %v4505
    %v5115 = vpack.c.b16 %v4513, %v4506
    %v5116 = vpack.c.b16 %v4514, %v4507
    %v5117 = vpack.c.b16 %v4515, %v4508
    %v5118 = vpack.c.b16 %v4516, %v4509
    %v5119 = vpack.c.b16 %v4517, %v4510
    %v5120 = vpack.c.b16 %v4518, %v4511
    %v5121 = vpack.c.b16 %v4526, %v4519
    %v5122 = vpack.c.b16 %v4527, %v4520
    %v5123 = vpack.c.b16 %v4528, %v4521
    %v5124 = vpack.c.b16 %v4529, %v4522
    %v5125 = vpack.c.b16 %v4530, %v4523
    %v5126 = vpack.c.b16 %v4531, %v4524
    %v5127 = vpack.c.b16 %v4532, %v4525
    %v5128 = vpack.c.b16 %v4540, %v4533
    %v5129 = vpack.c.b16 %v4541, %v4534
    %v5130 = vpack.c.b16 %v4542, %v4535
    %v5131 = vpack.c.b16 %v4543, %v4536
    %v5132 = vpack.c.b16 %v4544, %v4537
    %v5133 = vpack.c.b16 %v4545, %v4538
    %v5134 = vpack.c.b16 %v4546, %v4539
    %v5135 = vpack.c.b16 %v4554, %v4547
    %v5136 = vpack.c.b16 %v4555, %v4548
    %v5137 = vpack.c.b16 %v4556, %v4549
    %v5138 = vpack.c.b16 %v4557, %v4550
    %v5139 = vpack.c.b16 %v4558, %v4551
    %v5140 = vpack.c.b16 %v4559, %v4552
    %v5141 = vpack.c.b16 %v4560, %v4553
    %v5142 = vpack.c.b16 %v4568, %v4561
    %v5143 = vpack.c.b16 %v4569, %v4562
    %v5144 = vpack.c.b16 %v4570, %v4563
    %v5145 = vpack.c.b16 %v4571, %v4564
    %v5146 = vpack.c.b16 %v4572, %v4565
    %v5147 = vpack.c.b16 %v4573, %v4566
    %v5148 = vpack.c.b16 %v4574, %v4567
    %v5149 = vpack.c.b16 %v4582, %v4575
    %v5150 = vpack.c.b16 %v4583, %v4576
    %v5151 = vpack.c.b16 %v4584, %v4577
    %v5152 = vpack.c.b16 %v4585, %v4578
    %v5153 = vpack.c.b16 %v4586, %v4579
    %v5154 = vpack.c.b16 %v4587, %v4580
    %v5155 = vpack.c.b16 %v4588, %v4581
    %v5156 = vpack.c.b16 %v4596, %v4589
    %v5157 = vpack.c.b16 %v4597, %v4590
    %v5158 = vpack.c.b16 %v4598, %v4591
    %v5159 = vpack.c.b16 %v4599, %v4592
    %v5160 = vpack.c.b16 %v4600, %v4593
    %v5161 = vpack.c.b16 %v4601, %v4594
    %v5162 = vpack.c.b16 %v4602, %v4595
    %v5163 = vpack.c.b16 %v4610, %v4603
    %v5164 = vpack.c.b16 %v4611, %v4604
    %v5165 = vpack.c.b16 %v4612, %v4605
    %v5166 = vpack.c.b16 %v4613, %v4606
    %v5167 = vpack.c.b16 %v4614, %v4607
    %v5168 = vpack.c.b16 %v4615, %v4608
    %v5169 = vpack.c.b16 %v4616, %v4609
    %v5170 = vpack.c.b16 %v4624, %v4617
    %v5171 = vpack.c.b16 %v4625, %v4618
    %v5172 = vpack.c.b16 %v4626, %v4619
    %v5173 = vpack.c.b16 %v4627, %v4620
    %v5174 = vpack.c.b16 %v4628, %v4621
    %v5175 = vpack.c.b16 %v4629, %v4622
    %v5176 = vpack.c.b16 %v4630, %v4623
    %v5177 = vpack.c.b16 %v4638, %v4631
    %v5178 = vpack.c.b16 %v4639, %v4632
    %v5179 = vpack.c.b16 %v4640, %v4633
    %v5180 = vpack.c.b16 %v4641, %v4634
    %v5181 = vpack.c.b16 %v4642, %v4635
    %v5182 = vpack.c.b16 %v4643, %v4636
    %v5183 = vpack.c.b16 %v4644, %v4637
    %v5184 = vpack.c.b16 %v4652, %v4645
    %v5185 = vpack.c.b16 %v4653, %v4646
    %v5186 = vpack.c.b16 %v4654, %v4647
    %v5187 = vpack.c.b16 %v4655, %v4648
    %v5188 = vpack.c.b16 %v4656, %v4649
    %v5189 = vpack.c.b16 %v4657, %v4650
    %v5190 = vpack.c.b16 %v4658, %v4651
    %v5191 = vpack.c.b16 %v4666, %v4659
    %v5192 = vpack.c.b16 %v4667, %v4660
    %v5193 = vpack.c.b16 %v4668, %v4661
    %v5194 = vpack.c.b16 %v4669, %v4662
    %v5195 = vpack.c.b16 %v4670, %v4663
    %v5196 = vpack.c.b16 %v4671, %v4664
    %v5197 = vpack.c.b16 %v4672, %v4665
    %v5198 = vpack.c.b16 %v4680, %v4673
    %v5199 = vpack.c.b16 %v4681, %v4674
    %v5200 = vpack.c.b16 %v4682, %v4675
    %v5201 = vpack.c.b16 %v4683, %v4676
    %v5202 = vpack.c.b16 %v4684, %v4677
    %v5203 = vpack.c.b16 %v4685, %v4678
    %v5204 = vpack.c.b16 %v4686, %v4679
    %v5205 = vpack.c.b16 %v4694, %v4687
    %v5206 = vpack.c.b16 %v4695, %v4688
    %v5207 = vpack.c.b16 %v4696, %v4689
    %v5208 = vpack.c.b16 %v4697, %v4690
    %v5209 = vpack.c.b16 %v4698, %v4691
    %v5210 = vpack.c.b16 %v4699, %v4692
    %v5211 = vpack.c.b16 %v4700, %v4693
    %v5212 = vpack.c.b16 %v4708, %v4701
    %v5213 = vpack.c.b16 %v4709, %v4702
    %v5214 = vpack.c.b16 %v4710, %v4703
    %v5215 = vpack.c.b16 %v4711, %v4704
    %v5216 = vpack.c.b16 %v4712, %v4705
    %v5217 = vpack.c.b16 %v4713, %v4706
    %v5218 = vpack.c.b16 %v4714, %v4707
    %v5219 = vpack.c.b16 %v4722, %v4715
    %v5220 = vpack.c.b16 %v4723, %v4716
    %v5221 = vpack.c.b16 %v4724, %v4717
    %v5222 = vpack.c.b16 %v4725, %v4718
    %v5223 = vpack.c.b16 %v4726, %v4719
    %v5224 = vpack.c.b16 %v4727, %v4720
    %v5225 = vpack.c.b16 %v4728, %v4721
    %v5226 = vpack.c.b16 %v4736, %v4729
    %v5227 = vpack.c.b16 %v4737, %v4730
    %v5228 = vpack.c.b16 %v4738, %v4731
    %v5229 = vpack.c.b16 %v4739, %v4732
    %v5230 = vpack.c.b16 %v4740, %v4733
    %v5231 = vpack.c.b16 %v4741, %v4734
    %v5232 = vpack.c.b16 %v4742, %v4735
    %v5233 = vpack.c.b16 %v4750, %v4743
    %v5234 = vpack.c.b16 %v4751, %v4744
    %v5235 = vpack.c.b16 %v4752, %v4745
    %v5236 = vpack.c.b16 %v4753, %v4746
    %v5237 = vpack.c.b16 %v4754, %v4747
    %v5238 = vpack.c.b16 %v4755, %v4748
    %v5239 = vpack.c.b16 %v4756, %v4749
    %v5240 = vpack.c.b16 %v4764, %v4757
    %v5241 = vpack.c.b16 %v4765, %v4758
    %v5242 = vpack.c.b16 %v4766, %v4759
    %v5243 = vpack.c.b16 %v4767, %v4760
    %v5244 = vpack.c.b16 %v4768, %v4761
    %v5245 = vpack.c.b16 %v4769, %v4762
    %v5246 = vpack.c.b16 %v4770, %v4763
    %v5247 = vpack.c.b16 %v4778, %v4771
    %v5248 = vpack.c.b16 %v4779, %v4772
    %v5249 = vpack.c.b16 %v4780, %v4773
    %v5250 = vpack.c.b16 %v4781, %v4774
    %v5251 = vpack.c.b16 %v4782, %v4775
    %v5252 = vpack.c.b16 %v4783, %v4776
    %v5253 = vpack.c.b16 %v4784, %v4777
    %v5254 = vpack.c.b16 %v4792, %v4785
    %v5255 = vpack.c.b16 %v4793, %v4786
    %v5256 = vpack.c.b16 %v4794, %v4787
    %v5257 = vpack.c.b16 %v4795, %v4788
    %v5258 = vpack.c.b16 %v4796, %v4789
    %v5259 = vpack.c.b16 %v4797, %v4790
    %v5260 = vpack.c.b16 %v4798, %v4791
    %v5261 = vpack.c.b16 %v4806, %v4799
    %v5262 = vpack.c.b16 %v4807, %v4800
    %v5263 = vpack.c.b16 %v4808, %v4801
    %v5264 = vpack.c.b16 %v4809, %v4802
    %v5265 = vpack.c.b16 %v4810, %v4803
    %v5266 = vpack.c.b16 %v4811, %v4804
    %v5267 = vpack.c.b16 %v4812, %v4805
    %v5268 = vpack.c.b16 %v4820, %v4813
    %v5269 = vpack.c.b16 %v4821, %v4814
    %v5270 = vpack.c.b16 %v4822, %v4815
    %v5271 = vpack.c.b16 %v4823, %v4816
    %v5272 = vpack.c.b16 %v4824, %v4817
    %v5273 = vpack.c.b16 %v4825, %v4818
    %v5274 = vpack.c.b16 %v4826, %v4819
    %5723 = vmatprep.subr.bf16.mxu0 %v4828
    %5724 = vmatpush1.bf16.msra.mxu0 %v4827
    %5725 = vmatprep.subr.bf16.mxu0 %v4835
    %5726 = vmatpush1.bf16.msra.mxu0 %v4834
    %5727 = vmatprep.subr.bf16.mxu0 %v4842
    %5728 = vmatpush1.bf16.msra.mxu0 %v4841
    %5729 = vmatprep.subr.bf16.mxu0 %v4849
    %5730 = vmatpush1.bf16.msra.mxu0 %v4848
    %5731 = vmatprep.subr.bf16.mxu0 %v4856
    %5732 = vmatpush1.bf16.msra.mxu0 %v4855
    %5733 = vmatprep.subr.bf16.mxu0 %v4863
    %5734 = vmatpush1.bf16.msra.mxu0 %v4862
    %5735 = vmatprep.subr.bf16.mxu0 %v4870
    %5736 = vmatpush1.bf16.msra.mxu0 %v4869
    %5737 = vmatprep.subr.bf16.mxu0 %v4877
    %5738 = vmatpush1.bf16.msra.mxu0 %v4876
    %5739 = vmatprep.subr.bf16.mxu0 %v4884
    %5740 = vmatpush1.bf16.msra.mxu0 %v4883
    %5741 = vmatprep.subr.bf16.mxu0 %v4891
    %5742 = vmatpush1.bf16.msra.mxu0 %v4890
    %5743 = vmatprep.subr.bf16.mxu0 %v4898
    %5744 = vmatpush1.bf16.msra.mxu0 %v4897
    %5745 = vmatprep.subr.bf16.mxu0 %v4905
    %5746 = vmatpush1.bf16.msra.mxu0 %v4904
    %5747 = vmatprep.subr.bf16.mxu0 %v4912
    %5748 = vmatpush1.bf16.msra.mxu0 %v4911
    %5749 = vmatprep.subr.bf16.mxu0 %v4919
    %5750 = vmatpush1.bf16.msra.mxu0 %v4918
    %5751 = vmatprep.subr.bf16.mxu0 %v4926
    %5752 = vmatpush1.bf16.msra.mxu0 %v4925
    %5753 = vmatprep.subr.bf16.mxu0 %v4933
    %5754 = vmatpush1.bf16.msra.mxu0 %v4932
    %5755 = vmatprep.mubr.bf16.mxu0 %v2863
    %5756 = vmatmul.mubr.bf16.gmra.mrb[0].mxu0 %v2862
    %v5757 = vpop.f32.mrb[0].mxu0
    %v5758 = vadd.f32 %v3387, %v5757
    %v5759 = vpop.f32.mrb[0].mxu0
    %v5760 = vadd.f32 %v3391, %v5759
    %v5761 = vpop.f32.mrb[0].mxu0
    %v5762 = vpop.f32.mrb[0].mxu0
    %5763 = vdwg.mxu0
    %5764 = vmatprep.subr.bf16.mxu0 %v4940
    %5765 = vmatpush1.bf16.msra.mxu0 %v4939
    %5766 = vmatprep.subr.bf16.mxu0 %v4947
    %5767 = vmatpush1.bf16.msra.mxu0 %v4946
    %5768 = vmatprep.subr.bf16.mxu0 %v4954
    %5769 = vmatpush1.bf16.msra.mxu0 %v4953
    %5770 = vmatprep.subr.bf16.mxu0 %v4961
    %5771 = vmatpush1.bf16.msra.mxu0 %v4960
    %5772 = vmatprep.subr.bf16.mxu0 %v4968
    %5773 = vmatpush1.bf16.msra.mxu0 %v4967
    %5774 = vmatprep.subr.bf16.mxu0 %v4975
    %5775 = vmatpush1.bf16.msra.mxu0 %v4974
    %5776 = vmatprep.subr.bf16.mxu0 %v4982
    %5777 = vmatpush1.bf16.msra.mxu0 %v4981
    %5778 = vmatprep.subr.bf16.mxu0 %v4989
    %5779 = vmatpush1.bf16.msra.mxu0 %v4988
    %5780 = vmatprep.subr.bf16.mxu0 %v4996
    %5781 = vmatpush1.bf16.msra.mxu0 %v4995
    %5782 = vmatprep.subr.bf16.mxu0 %v5003
    %5783 = vmatpush1.bf16.msra.mxu0 %v5002
    %5784 = vmatprep.subr.bf16.mxu0 %v5010
    %5785 = vmatpush1.bf16.msra.mxu0 %v5009
    %5786 = vmatprep.subr.bf16.mxu0 %v5017
    %5787 = vmatpush1.bf16.msra.mxu0 %v5016
    %5788 = vmatprep.subr.bf16.mxu0 %v5024
    %5789 = vmatpush1.bf16.msra.mxu0 %v5023
    %5790 = vmatprep.subr.bf16.mxu0 %v5031
    %5791 = vmatpush1.bf16.msra.mxu0 %v5030
    %5792 = vmatprep.subr.bf16.mxu0 %v5038
    %5793 = vmatpush1.bf16.msra.mxu0 %v5037
    %5794 = vmatprep.subr.bf16.mxu0 %v5045
    %5795 = vmatpush1.bf16.msra.mxu0 %v5044
    %5796 = vmatprep.mubr.bf16.mxu0 %v2865
    %5797 = vmatmul.mubr.bf16.gmra.mrb[0].mxu0 %v2864
    %v5798 = vpop.f32.mrb[0].mxu0
    %v5799 = vadd.f32 %v5758, %v5798
    %v5800 = vpop.f32.mrb[0].mxu0
    %v5801 = vadd.f32 %v5760, %v5800
    %v5802 = vpop.f32.mrb[0].mxu0
    %v5803 = vpop.f32.mrb[0].mxu0
    %5804 = vdwg.mxu0
    %5805 = vmatprep.subr.bf16.mxu0 %v5052
    %5806 = vmatpush1.bf16.msra.mxu0 %v5051
    %5807 = vmatprep.subr.bf16.mxu0 %v5059
    %5808 = vmatpush1.bf16.msra.mxu0 %v5058
    %5809 = vmatprep.subr.bf16.mxu0 %v5066
    %5810 = vmatpush1.bf16.msra.mxu0 %v5065
    %5811 = vmatprep.subr.bf16.mxu0 %v5073
    %5812 = vmatpush1.bf16.msra.mxu0 %v5072
    %5813 = vmatprep.subr.bf16.mxu0 %v5080
    %5814 = vmatpush1.bf16.msra.mxu0 %v5079
    %5815 = vmatprep.subr.bf16.mxu0 %v5087
    %5816 = vmatpush1.bf16.msra.mxu0 %v5086
    %5817 = vmatprep.subr.bf16.mxu0 %v5094
    %5818 = vmatpush1.bf16.msra.mxu0 %v5093
    %5819 = vmatprep.subr.bf16.mxu0 %v5101
    %5820 = vmatpush1.bf16.msra.mxu0 %v5100
    %5821 = vmatprep.subr.bf16.mxu0 %v5108
    %5822 = vmatpush1.bf16.msra.mxu0 %v5107
    %5823 = vmatprep.subr.bf16.mxu0 %v5115
    %5824 = vmatpush1.bf16.msra.mxu0 %v5114
    %5825 = vmatprep.subr.bf16.mxu0 %v5122
    %5826 = vmatpush1.bf16.msra.mxu0 %v5121
    %5827 = vmatprep.subr.bf16.mxu0 %v5129
    %5828 = vmatpush1.bf16.msra.mxu0 %v5128
    %5829 = vmatprep.subr.bf16.mxu0 %v5136
    %5830 = vmatpush1.bf16.msra.mxu0 %v5135
    %5831 = vmatprep.subr.bf16.mxu0 %v5143
    %5832 = vmatpush1.bf16.msra.mxu0 %v5142
    %5833 = vmatprep.subr.bf16.mxu0 %v5150
    %5834 = vmatpush1.bf16.msra.mxu0 %v5149
    %5835 = vmatprep.subr.bf16.mxu0 %v5157
    %5836 = vmatpush1.bf16.msra.mxu0 %v5156
    %5837 = vmatprep.mubr.bf16.mxu0 %v2867
    %5838 = vmatmul.mubr.bf16.gmra.mrb[0].mxu0 %v2866
    %v5839 = vpop.f32.mrb[0].mxu0
    %v5840 = vadd.f32 %v5799, %v5839
    %v5841 = vpop.f32.mrb[0].mxu0
    %v5842 = vadd.f32 %v5801, %v5841
    %v5843 = vpop.f32.mrb[0].mxu0
    %v5844 = vpop.f32.mrb[0].mxu0
    %5845 = vdwg.mxu0
    %5846 = vmatprep.subr.bf16.mxu0 %v5164
    %5847 = vmatpush1.bf16.msra.mxu0 %v5163
    %5848 = vmatprep.subr.bf16.mxu0 %v5171
    %5849 = vmatpush1.bf16.msra.mxu0 %v5170
    %5850 = vmatprep.subr.bf16.mxu0 %v5178
    %5851 = vmatpush1.bf16.msra.mxu0 %v5177
    %5852 = vmatprep.subr.bf16.mxu0 %v5185
    %5853 = vmatpush1.bf16.msra.mxu0 %v5184
    %5854 = vmatprep.subr.bf16.mxu0 %v5192
    %5855 = vmatpush1.bf16.msra.mxu0 %v5191
    %5856 = vmatprep.subr.bf16.mxu0 %v5199
    %5857 = vmatpush1.bf16.msra.mxu0 %v5198
    %5858 = vmatprep.subr.bf16.mxu0 %v5206
    %5859 = vmatpush1.bf16.msra.mxu0 %v5205
    %5860 = vmatprep.subr.bf16.mxu0 %v5213
    %5861 = vmatpush1.bf16.msra.mxu0 %v5212
    %5862 = vmatprep.subr.bf16.mxu0 %v5220
    %5863 = vmatpush1.bf16.msra.mxu0 %v5219
    %5864 = vmatprep.subr.bf16.mxu0 %v5227
    %5865 = vmatpush1.bf16.msra.mxu0 %v5226
    %5866 = vmatprep.subr.bf16.mxu0 %v5234
    %5867 = vmatpush1.bf16.msra.mxu0 %v5233
    %5868 = vmatprep.subr.bf16.mxu0 %v5241
    %5869 = vmatpush1.bf16.msra.mxu0 %v5240
    %5870 = vmatprep.subr.bf16.mxu0 %v5248
    %5871 = vmatpush1.bf16.msra.mxu0 %v5247
    %5872 = vmatprep.subr.bf16.mxu0 %v5255
    %5873 = vmatpush1.bf16.msra.mxu0 %v5254
    %5874 = vmatprep.subr.bf16.mxu0 %v5262
    %5875 = vmatpush1.bf16.msra.mxu0 %v5261
    %5876 = vmatprep.subr.bf16.mxu0 %v5269
    %5877 = vmatpush1.bf16.msra.mxu0 %v5268
    %5878 = vmatprep.mubr.bf16.mxu0 %v2869
    %5879 = vmatmul.mubr.bf16.gmra.mrb[0].mxu0 %v2868
    %v5880 = vpop.f32.mrb[0].mxu0
    %v5881 = vadd.f32 %v5840, %v5880
    %v5882 = vpop.f32.mrb[0].mxu0
    %v5883 = vadd.f32 %v5842, %v5882
    %v5884 = vpop.f32.mrb[0].mxu0
    %v5885 = vpop.f32.mrb[0].mxu0
    %5886 = vdwg.mxu0
    %5887 = vmatprep.subr.bf16.mxu0 %v4830
    %5888 = vmatpush1.bf16.msra.mxu0 %v4829
    %5889 = vmatprep.subr.bf16.mxu0 %v4837
    %5890 = vmatpush1.bf16.msra.mxu0 %v4836
    %5891 = vmatprep.subr.bf16.mxu0 %v4844
    %5892 = vmatpush1.bf16.msra.mxu0 %v4843
    %5893 = vmatprep.subr.bf16.mxu0 %v4851
    %5894 = vmatpush1.bf16.msra.mxu0 %v4850
    %5895 = vmatprep.subr.bf16.mxu0 %v4858
    %5896 = vmatpush1.bf16.msra.mxu0 %v4857
    %5897 = vmatprep.subr.bf16.mxu0 %v4865
    %5898 = vmatpush1.bf16.msra.mxu0 %v4864
    %5899 = vmatprep.subr.bf16.mxu0 %v4872
    %5900 = vmatpush1.bf16.msra.mxu0 %v4871
    %5901 = vmatprep.subr.bf16.mxu0 %v4879
    %5902 = vmatpush1.bf16.msra.mxu0 %v4878
    %5903 = vmatprep.subr.bf16.mxu0 %v4886
    %5904 = vmatpush1.bf16.msra.mxu0 %v4885
    %5905 = vmatprep.subr.bf16.mxu0 %v4893
    %5906 = vmatpush1.bf16.msra.mxu0 %v4892
    %5907 = vmatprep.subr.bf16.mxu0 %v4900
    %5908 = vmatpush1.bf16.msra.mxu0 %v4899
    %5909 = vmatprep.subr.bf16.mxu0 %v4907
    %5910 = vmatpush1.bf16.msra.mxu0 %v4906
    %5911 = vmatprep.subr.bf16.mxu0 %v4914
    %5912 = vmatpush1.bf16.msra.mxu0 %v4913
    %5913 = vmatprep.subr.bf16.mxu0 %v4921
    %5914 = vmatpush1.bf16.msra.mxu0 %v4920
    %5915 = vmatprep.subr.bf16.mxu0 %v4928
    %5916 = vmatpush1.bf16.msra.mxu0 %v4927
    %5917 = vmatprep.subr.bf16.mxu0 %v4935
    %5918 = vmatpush1.bf16.msra.mxu0 %v4934
    %5919 = vmatprep.mubr.bf16.mxu0 %v2863
    %5920 = vmatmul.mubr.bf16.gmra.mrb[0].mxu0 %v2862
    %v5921 = vpop.f32.mrb[0].mxu0
    %v5922 = vadd.f32 %v3395, %v5921
    %v5923 = vpop.f32.mrb[0].mxu0
    %v5924 = vadd.f32 %v3399, %v5923
    %v5925 = vpop.f32.mrb[0].mxu0
    %v5926 = vpop.f32.mrb[0].mxu0
    %5927 = vdwg.mxu0
    %5928 = vmatprep.subr.bf16.mxu0 %v4942
    %5929 = vmatpush1.bf16.msra.mxu0 %v4941
    %5930 = vmatprep.subr.bf16.mxu0 %v4949
    %5931 = vmatpush1.bf16.msra.mxu0 %v4948
    %5932 = vmatprep.subr.bf16.mxu0 %v4956
    %5933 = vmatpush1.bf16.msra.mxu0 %v4955
    %5934 = vmatprep.subr.bf16.mxu0 %v4963
    %5935 = vmatpush1.bf16.msra.mxu0 %v4962
    %5936 = vmatprep.subr.bf16.mxu0 %v4970
    %5937 = vmatpush1.bf16.msra.mxu0 %v4969
    %5938 = vmatprep.subr.bf16.mxu0 %v4977
    %5939 = vmatpush1.bf16.msra.mxu0 %v4976
    %5940 = vmatprep.subr.bf16.mxu0 %v4984
    %5941 = vmatpush1.bf16.msra.mxu0 %v4983
    %5942 = vmatprep.subr.bf16.mxu0 %v4991
    %5943 = vmatpush1.bf16.msra.mxu0 %v4990
    %5944 = vmatprep.subr.bf16.mxu0 %v4998
    %5945 = vmatpush1.bf16.msra.mxu0 %v4997
    %5946 = vmatprep.subr.bf16.mxu0 %v5005
    %5947 = vmatpush1.bf16.msra.mxu0 %v5004
    %5948 = vmatprep.subr.bf16.mxu0 %v5012
    %5949 = vmatpush1.bf16.msra.mxu0 %v5011
    %5950 = vmatprep.subr.bf16.mxu0 %v5019
    %5951 = vmatpush1.bf16.msra.mxu0 %v5018
    %5952 = vmatprep.subr.bf16.mxu0 %v5026
    %5953 = vmatpush1.bf16.msra.mxu0 %v5025
    %5954 = vmatprep.subr.bf16.mxu0 %v5033
    %5955 = vmatpush1.bf16.msra.mxu0 %v5032
    %5956 = vmatprep.subr.bf16.mxu0 %v5040
    %5957 = vmatpush1.bf16.msra.mxu0 %v5039
    %5958 = vmatprep.subr.bf16.mxu0 %v5047
    %5959 = vmatpush1.bf16.msra.mxu0 %v5046
    %5960 = vmatprep.mubr.bf16.mxu0 %v2865
    %5961 = vmatmul.mubr.bf16.gmra.mrb[0].mxu0 %v2864
    %v5962 = vpop.f32.mrb[0].mxu0
    %v5963 = vadd.f32 %v5922, %v5962
    %v5964 = vpop.f32.mrb[0].mxu0
    %v5965 = vadd.f32 %v5924, %v5964
    %v5966 = vpop.f32.mrb[0].mxu0
    %v5967 = vpop.f32.mrb[0].mxu0
    %5968 = vdwg.mxu0
    %5969 = vmatprep.subr.bf16.mxu0 %v5054
    %5970 = vmatpush1.bf16.msra.mxu0 %v5053
    %5971 = vmatprep.subr.bf16.mxu0 %v5061
    %5972 = vmatpush1.bf16.msra.mxu0 %v5060
    %5973 = vmatprep.subr.bf16.mxu0 %v5068
    %5974 = vmatpush1.bf16.msra.mxu0 %v5067
    %5975 = vmatprep.subr.bf16.mxu0 %v5075
    %5976 = vmatpush1.bf16.msra.mxu0 %v5074
    %5977 = vmatprep.subr.bf16.mxu0 %v5082
    %5978 = vmatpush1.bf16.msra.mxu0 %v5081
    %5979 = vmatprep.subr.bf16.mxu0 %v5089
    %5980 = vmatpush1.bf16.msra.mxu0 %v5088
    %5981 = vmatprep.subr.bf16.mxu0 %v5096
    %5982 = vmatpush1.bf16.msra.mxu0 %v5095
    %5983 = vmatprep.subr.bf16.mxu0 %v5103
    %5984 = vmatpush1.bf16.msra.mxu0 %v5102
    %5985 = vmatprep.subr.bf16.mxu0 %v5110
    %5986 = vmatpush1.bf16.msra.mxu0 %v5109
    %5987 = vmatprep.subr.bf16.mxu0 %v5117
    %5988 = vmatpush1.bf16.msra.mxu0 %v5116
    %5989 = vmatprep.subr.bf16.mxu0 %v5124
    %5990 = vmatpush1.bf16.msra.mxu0 %v5123
    %5991 = vmatprep.subr.bf16.mxu0 %v5131
    %5992 = vmatpush1.bf16.msra.mxu0 %v5130
    %5993 = vmatprep.subr.bf16.mxu0 %v5138
    %5994 = vmatpush1.bf16.msra.mxu0 %v5137
    %5995 = vmatprep.subr.bf16.mxu0 %v5145
    %5996 = vmatpush1.bf16.msra.mxu0 %v5144
    %5997 = vmatprep.subr.bf16.mxu0 %v5152
    %5998 = vmatpush1.bf16.msra.mxu0 %v5151
    %5999 = vmatprep.subr.bf16.mxu0 %v5159
    %6000 = vmatpush1.bf16.msra.mxu0 %v5158
    %6001 = vmatprep.mubr.bf16.mxu0 %v2867
    %6002 = vmatmul.mubr.bf16.gmra.mrb[0].mxu0 %v2866
    %v6003 = vpop.f32.mrb[0].mxu0
    %v6004 = vadd.f32 %v5963, %v6003
    %v6005 = vpop.f32.mrb[0].mxu0
    %v6006 = vadd.f32 %v5965, %v6005
    %v6007 = vpop.f32.mrb[0].mxu0
    %v6008 = vpop.f32.mrb[0].mxu0
    %6009 = vdwg.mxu0
    %6010 = vmatprep.subr.bf16.mxu0 %v5166
    %6011 = vmatpush1.bf16.msra.mxu0 %v5165
    %6012 = vmatprep.subr.bf16.mxu0 %v5173
    %6013 = vmatpush1.bf16.msra.mxu0 %v5172
    %6014 = vmatprep.subr.bf16.mxu0 %v5180
    %6015 = vmatpush1.bf16.msra.mxu0 %v5179
    %6016 = vmatprep.subr.bf16.mxu0 %v5187
    %6017 = vmatpush1.bf16.msra.mxu0 %v5186
    %6018 = vmatprep.subr.bf16.mxu0 %v5194
    %6019 = vmatpush1.bf16.msra.mxu0 %v5193
    %6020 = vmatprep.subr.bf16.mxu0 %v5201
    %6021 = vmatpush1.bf16.msra.mxu0 %v5200
    %6022 = vmatprep.subr.bf16.mxu0 %v5208
    %6023 = vmatpush1.bf16.msra.mxu0 %v5207
    %6024 = vmatprep.subr.bf16.mxu0 %v5215
    %6025 = vmatpush1.bf16.msra.mxu0 %v5214
    %6026 = vmatprep.subr.bf16.mxu0 %v5222
    %6027 = vmatpush1.bf16.msra.mxu0 %v5221
    %6028 = vmatprep.subr.bf16.mxu0 %v5229
    %6029 = vmatpush1.bf16.msra.mxu0 %v5228
    %6030 = vmatprep.subr.bf16.mxu0 %v5236
    %6031 = vmatpush1.bf16.msra.mxu0 %v5235
    %6032 = vmatprep.subr.bf16.mxu0 %v5243
    %6033 = vmatpush1.bf16.msra.mxu0 %v5242
    %6034 = vmatprep.subr.bf16.mxu0 %v5250
    %6035 = vmatpush1.bf16.msra.mxu0 %v5249
    %6036 = vmatprep.subr.bf16.mxu0 %v5257
    %6037 = vmatpush1.bf16.msra.mxu0 %v5256
    %6038 = vmatprep.subr.bf16.mxu0 %v5264
    %6039 = vmatpush1.bf16.msra.mxu0 %v5263
    %6040 = vmatprep.subr.bf16.mxu0 %v5271
    %6041 = vmatpush1.bf16.msra.mxu0 %v5270
    %6042 = vmatprep.mubr.bf16.mxu0 %v2869
    %6043 = vmatmul.mubr.bf16.gmra.mrb[0].mxu0 %v2868
    %v6044 = vpop.f32.mrb[0].mxu0
    %v6045 = vadd.f32 %v6004, %v6044
    %v6046 = vpop.f32.mrb[0].mxu0
    %v6047 = vadd.f32 %v6006, %v6046
    %v6048 = vpop.f32.mrb[0].mxu0
    %v6049 = vpop.f32.mrb[0].mxu0
    %6050 = vdwg.mxu0
    %6051 = vmatprep.subr.bf16.mxu0 %v4832
    %6052 = vmatpush1.bf16.msra.mxu0 %v4831
    %6053 = vmatprep.subr.bf16.mxu0 %v4839
    %6054 = vmatpush1.bf16.msra.mxu0 %v4838
    %6055 = vmatprep.subr.bf16.mxu0 %v4846
    %6056 = vmatpush1.bf16.msra.mxu0 %v4845
    %6057 = vmatprep.subr.bf16.mxu0 %v4853
    %6058 = vmatpush1.bf16.msra.mxu0 %v4852
    %6059 = vmatprep.subr.bf16.mxu0 %v4860
    %6060 = vmatpush1.bf16.msra.mxu0 %v4859
    %6061 = vmatprep.subr.bf16.mxu0 %v4867
    %6062 = vmatpush1.bf16.msra.mxu0 %v4866
    %6063 = vmatprep.subr.bf16.mxu0 %v4874
    %6064 = vmatpush1.bf16.msra.mxu0 %v4873
    %6065 = vmatprep.subr.bf16.mxu0 %v4881
    %6066 = vmatpush1.bf16.msra.mxu0 %v4880
    %6067 = vmatprep.subr.bf16.mxu0 %v4888
    %6068 = vmatpush1.bf16.msra.mxu0 %v4887
    %6069 = vmatprep.subr.bf16.mxu0 %v4895
    %6070 = vmatpush1.bf16.msra.mxu0 %v4894
    %6071 = vmatprep.subr.bf16.mxu0 %v4902
    %6072 = vmatpush1.bf16.msra.mxu0 %v4901
    %6073 = vmatprep.subr.bf16.mxu0 %v4909
    %6074 = vmatpush1.bf16.msra.mxu0 %v4908
    %6075 = vmatprep.subr.bf16.mxu0 %v4916
    %6076 = vmatpush1.bf16.msra.mxu0 %v4915
    %6077 = vmatprep.subr.bf16.mxu0 %v4923
    %6078 = vmatpush1.bf16.msra.mxu0 %v4922
    %6079 = vmatprep.subr.bf16.mxu0 %v4930
    %6080 = vmatpush1.bf16.msra.mxu0 %v4929
    %6081 = vmatprep.subr.bf16.mxu0 %v4937
    %6082 = vmatpush1.bf16.msra.mxu0 %v4936
    %6083 = vmatprep.mubr.bf16.mxu0 %v2863
    %6084 = vmatmul.mubr.bf16.gmra.mrb[0].mxu0 %v2862
    %v6085 = vpop.f32.mrb[0].mxu0
    %v6086 = vadd.f32 %v3403, %v6085
    %v6087 = vpop.f32.mrb[0].mxu0
    %v6088 = vadd.f32 %v3407, %v6087
    %v6089 = vpop.f32.mrb[0].mxu0
    %v6090 = vpop.f32.mrb[0].mxu0
    %6091 = vdwg.mxu0
    %6092 = vmatprep.subr.bf16.mxu0 %v4944
    %6093 = vmatpush1.bf16.msra.mxu0 %v4943
    %6094 = vmatprep.subr.bf16.mxu0 %v4951
    %6095 = vmatpush1.bf16.msra.mxu0 %v4950
    %6096 = vmatprep.subr.bf16.mxu0 %v4958
    %6097 = vmatpush1.bf16.msra.mxu0 %v4957
    %6098 = vmatprep.subr.bf16.mxu0 %v4965
    %6099 = vmatpush1.bf16.msra.mxu0 %v4964
    %6100 = vmatprep.subr.bf16.mxu0 %v4972
    %6101 = vmatpush1.bf16.msra.mxu0 %v4971
    %6102 = vmatprep.subr.bf16.mxu0 %v4979
    %6103 = vmatpush1.bf16.msra.mxu0 %v4978
    %6104 = vmatprep.subr.bf16.mxu0 %v4986
    %6105 = vmatpush1.bf16.msra.mxu0 %v4985
    %6106 = vmatprep.subr.bf16.mxu0 %v4993
    %6107 = vmatpush1.bf16.msra.mxu0 %v4992
    %6108 = vmatprep.subr.bf16.mxu0 %v5000
    %6109 = vmatpush1.bf16.msra.mxu0 %v4999
    %6110 = vmatprep.subr.bf16.mxu0 %v5007
    %6111 = vmatpush1.bf16.msra.mxu0 %v5006
    %6112 = vmatprep.subr.bf16.mxu0 %v5014
    %6113 = vmatpush1.bf16.msra.mxu0 %v5013
    %6114 = vmatprep.subr.bf16.mxu0 %v5021
    %6115 = vmatpush1.bf16.msra.mxu0 %v5020
    %6116 = vmatprep.subr.bf16.mxu0 %v5028
    %6117 = vmatpush1.bf16.msra.mxu0 %v5027
    %6118 = vmatprep.subr.bf16.mxu0 %v5035
    %6119 = vmatpush1.bf16.msra.mxu0 %v5034
    %6120 = vmatprep.subr.bf16.mxu0 %v5042
    %6121 = vmatpush1.bf16.msra.mxu0 %v5041
    %6122 = vmatprep.subr.bf16.mxu0 %v5049
    %6123 = vmatpush1.bf16.msra.mxu0 %v5048
    %6124 = vmatprep.mubr.bf16.mxu0 %v2865
    %6125 = vmatmul.mubr.bf16.gmra.mrb[0].mxu0 %v2864
    %v6126 = vpop.f32.mrb[0].mxu0
    %v6127 = vadd.f32 %v6086, %v6126
    %v6128 = vpop.f32.mrb[0].mxu0
    %v6129 = vadd.f32 %v6088, %v6128
    %v6130 = vpop.f32.mrb[0].mxu0
    %v6131 = vpop.f32.mrb[0].mxu0
    %6132 = vdwg.mxu0
    %6133 = vmatprep.subr.bf16.mxu0 %v5056
    %6134 = vmatpush1.bf16.msra.mxu0 %v5055
    %6135 = vmatprep.subr.bf16.mxu0 %v5063
    %6136 = vmatpush1.bf16.msra.mxu0 %v5062
    %6137 = vmatprep.subr.bf16.mxu0 %v5070
    %6138 = vmatpush1.bf16.msra.mxu0 %v5069
    %6139 = vmatprep.subr.bf16.mxu0 %v5077
    %6140 = vmatpush1.bf16.msra.mxu0 %v5076
    %6141 = vmatprep.subr.bf16.mxu0 %v5084
    %6142 = vmatpush1.bf16.msra.mxu0 %v5083
    %6143 = vmatprep.subr.bf16.mxu0 %v5091
    %6144 = vmatpush1.bf16.msra.mxu0 %v5090
    %6145 = vmatprep.subr.bf16.mxu0 %v5098
    %6146 = vmatpush1.bf16.msra.mxu0 %v5097
    %6147 = vmatprep.subr.bf16.mxu0 %v5105
    %6148 = vmatpush1.bf16.msra.mxu0 %v5104
    %6149 = vmatprep.subr.bf16.mxu0 %v5112
    %6150 = vmatpush1.bf16.msra.mxu0 %v5111
    %6151 = vmatprep.subr.bf16.mxu0 %v5119
    %6152 = vmatpush1.bf16.msra.mxu0 %v5118
    %6153 = vmatprep.subr.bf16.mxu0 %v5126
    %6154 = vmatpush1.bf16.msra.mxu0 %v5125
    %6155 = vmatprep.subr.bf16.mxu0 %v5133
    %6156 = vmatpush1.bf16.msra.mxu0 %v5132
    %6157 = vmatprep.subr.bf16.mxu0 %v5140
    %6158 = vmatpush1.bf16.msra.mxu0 %v5139
    %6159 = vmatprep.subr.bf16.mxu0 %v5147
    %6160 = vmatpush1.bf16.msra.mxu0 %v5146
    %6161 = vmatprep.subr.bf16.mxu0 %v5154
    %6162 = vmatpush1.bf16.msra.mxu0 %v5153
    %6163 = vmatprep.subr.bf16.mxu0 %v5161
    %6164 = vmatpush1.bf16.msra.mxu0 %v5160
    %6165 = vmatprep.mubr.bf16.mxu0 %v2867
    %6166 = vmatmul.mubr.bf16.gmra.mrb[0].mxu0 %v2866
    %v6167 = vpop.f32.mrb[0].mxu0
    %v6168 = vadd.f32 %v6127, %v6167
    %v6169 = vpop.f32.mrb[0].mxu0
    %v6170 = vadd.f32 %v6129, %v6169
    %v6171 = vpop.f32.mrb[0].mxu0
    %v6172 = vpop.f32.mrb[0].mxu0
    %6173 = vdwg.mxu0
    %6174 = vmatprep.subr.bf16.mxu0 %v5168
    %6175 = vmatpush1.bf16.msra.mxu0 %v5167
    %6176 = vmatprep.subr.bf16.mxu0 %v5175
    %6177 = vmatpush1.bf16.msra.mxu0 %v5174
    %6178 = vmatprep.subr.bf16.mxu0 %v5182
    %6179 = vmatpush1.bf16.msra.mxu0 %v5181
    %6180 = vmatprep.subr.bf16.mxu0 %v5189
    %6181 = vmatpush1.bf16.msra.mxu0 %v5188
    %6182 = vmatprep.subr.bf16.mxu0 %v5196
    %6183 = vmatpush1.bf16.msra.mxu0 %v5195
    %6184 = vmatprep.subr.bf16.mxu0 %v5203
    %6185 = vmatpush1.bf16.msra.mxu0 %v5202
    %6186 = vmatprep.subr.bf16.mxu0 %v5210
    %6187 = vmatpush1.bf16.msra.mxu0 %v5209
    %6188 = vmatprep.subr.bf16.mxu0 %v5217
    %6189 = vmatpush1.bf16.msra.mxu0 %v5216
    %6190 = vmatprep.subr.bf16.mxu0 %v5224
    %6191 = vmatpush1.bf16.msra.mxu0 %v5223
    %6192 = vmatprep.subr.bf16.mxu0 %v5231
    %6193 = vmatpush1.bf16.msra.mxu0 %v5230
    %6194 = vmatprep.subr.bf16.mxu0 %v5238
    %6195 = vmatpush1.bf16.msra.mxu0 %v5237
    %6196 = vmatprep.subr.bf16.mxu0 %v5245
    %6197 = vmatpush1.bf16.msra.mxu0 %v5244
    %6198 = vmatprep.subr.bf16.mxu0 %v5252
    %6199 = vmatpush1.bf16.msra.mxu0 %v5251
    %6200 = vmatprep.subr.bf16.mxu0 %v5259
    %6201 = vmatpush1.bf16.msra.mxu0 %v5258
    %6202 = vmatprep.subr.bf16.mxu0 %v5266
    %6203 = vmatpush1.bf16.msra.mxu0 %v5265
    %6204 = vmatprep.subr.bf16.mxu0 %v5273
    %6205 = vmatpush1.bf16.msra.mxu0 %v5272
    %6206 = vmatprep.mubr.bf16.mxu0 %v2869
    %6207 = vmatmul.mubr.bf16.gmra.mrb[0].mxu0 %v2868
    %v6208 = vpop.f32.mrb[0].mxu0
    %v6209 = vadd.f32 %v6168, %v6208
    %v6210 = vpop.f32.mrb[0].mxu0
    %v6211 = vadd.f32 %v6170, %v6210
    %v6212 = vpop.f32.mrb[0].mxu0
    %v6213 = vpop.f32.mrb[0].mxu0
    %6214 = vdwg.mxu0
    %6215 = vmatprep.subr.bf16.mxu0 0
    %6216 = vmatpush1.bf16.msra.mxu0 %v4833
    %6217 = vmatprep.subr.bf16.mxu0 0
    %6218 = vmatpush1.bf16.msra.mxu0 %v4840
    %6219 = vmatprep.subr.bf16.mxu0 0
    %6220 = vmatpush1.bf16.msra.mxu0 %v4847
    %6221 = vmatprep.subr.bf16.mxu0 0
    %6222 = vmatpush1.bf16.msra.mxu0 %v4854
    %6223 = vmatprep.subr.bf16.mxu0 0
    %6224 = vmatpush1.bf16.msra.mxu0 %v4861
    %6225 = vmatprep.subr.bf16.mxu0 0
    %6226 = vmatpush1.bf16.msra.mxu0 %v4868
    %6227 = vmatprep.subr.bf16.mxu0 0
    %6228 = vmatpush1.bf16.msra.mxu0 %v4875
    %6229 = vmatprep.subr.bf16.mxu0 0
    %6230 = vmatpush1.bf16.msra.mxu0 %v4882
    %6231 = vmatprep.subr.bf16.mxu0 0
    %6232 = vmatpush1.bf16.msra.mxu0 %v4889
    %6233 = vmatprep.subr.bf16.mxu0 0
    %6234 = vmatpush1.bf16.msra.mxu0 %v4896
    %6235 = vmatprep.subr.bf16.mxu0 0
    %6236 = vmatpush1.bf16.msra.mxu0 %v4903
    %6237 = vmatprep.subr.bf16.mxu0 0
    %6238 = vmatpush1.bf16.msra.mxu0 %v4910
    %6239 = vmatprep.subr.bf16.mxu0 0
    %6240 = vmatpush1.bf16.msra.mxu0 %v4917
    %6241 = vmatprep.subr.bf16.mxu0 0
    %6242 = vmatpush1.bf16.msra.mxu0 %v4924
    %6243 = vmatprep.subr.bf16.mxu0 0
    %6244 = vmatpush1.bf16.msra.mxu0 %v4931
    %6245 = vmatprep.subr.bf16.mxu0 0
    %6246 = vmatpush1.bf16.msra.mxu0 %v4938
    %6247 = vmatprep.mubr.bf16.mxu0 %v2863
    %6248 = vmatmul.mubr.bf16.gmra.mrb[0].mxu0 %v2862
    %v6249 = vpop.f32.mrb[0].mxu0
    %v6250 = vadd.f32 %v3411, %v6249
    %v6251 = vpop.f32.mrb[0].mxu0
    %v6252 = vpop.f32.mrb[0].mxu0
    %v6253 = vpop.f32.mrb[0].mxu0
    %6254 = vdwg.mxu0
    %6255 = vmatprep.subr.bf16.mxu0 0
    %6256 = vmatpush1.bf16.msra.mxu0 %v4945
    %6257 = vmatprep.subr.bf16.mxu0 0
    %6258 = vmatpush1.bf16.msra.mxu0 %v4952
    %6259 = vmatprep.subr.bf16.mxu0 0
    %6260 = vmatpush1.bf16.msra.mxu0 %v4959
    %6261 = vmatprep.subr.bf16.mxu0 0
    %6262 = vmatpush1.bf16.msra.mxu0 %v4966
    %6263 = vmatprep.subr.bf16.mxu0 0
    %6264 = vmatpush1.bf16.msra.mxu0 %v4973
    %6265 = vmatprep.subr.bf16.mxu0 0
    %6266 = vmatpush1.bf16.msra.mxu0 %v4980
    %6267 = vmatprep.subr.bf16.mxu0 0
    %6268 = vmatpush1.bf16.msra.mxu0 %v4987
    %6269 = vmatprep.subr.bf16.mxu0 0
    %6270 = vmatpush1.bf16.msra.mxu0 %v4994
    %6271 = vmatprep.subr.bf16.mxu0 0
    %6272 = vmatpush1.bf16.msra.mxu0 %v5001
    %6273 = vmatprep.subr.bf16.mxu0 0
    %6274 = vmatpush1.bf16.msra.mxu0 %v5008
    %6275 = vmatprep.subr.bf16.mxu0 0
    %6276 = vmatpush1.bf16.msra.mxu0 %v5015
    %6277 = vmatprep.subr.bf16.mxu0 0
    %6278 = vmatpush1.bf16.msra.mxu0 %v5022
    %6279 = vmatprep.subr.bf16.mxu0 0
    %6280 = vmatpush1.bf16.msra.mxu0 %v5029
    %6281 = vmatprep.subr.bf16.mxu0 0
    %6282 = vmatpush1.bf16.msra.mxu0 %v5036
    %6283 = vmatprep.subr.bf16.mxu0 0
    %6284 = vmatpush1.bf16.msra.mxu0 %v5043
    %6285 = vmatprep.subr.bf16.mxu0 0
    %6286 = vmatpush1.bf16.msra.mxu0 %v5050
    %6287 = vmatprep.mubr.bf16.mxu0 %v2865
    %6288 = vmatmul.mubr.bf16.gmra.mrb[0].mxu0 %v2864
    %v6289 = vpop.f32.mrb[0].mxu0
    %v6290 = vadd.f32 %v6250, %v6289
    %v6291 = vpop.f32.mrb[0].mxu0
    %v6292 = vpop.f32.mrb[0].mxu0
    %v6293 = vpop.f32.mrb[0].mxu0
    %6294 = vdwg.mxu0
    %6295 = vmatprep.subr.bf16.mxu0 0
    %6296 = vmatpush1.bf16.msra.mxu0 %v5057
    %6297 = vmatprep.subr.bf16.mxu0 0
    %6298 = vmatpush1.bf16.msra.mxu0 %v5064
    %6299 = vmatprep.subr.bf16.mxu0 0
    %6300 = vmatpush1.bf16.msra.mxu0 %v5071
    %6301 = vmatprep.subr.bf16.mxu0 0
    %6302 = vmatpush1.bf16.msra.mxu0 %v5078
    %6303 = vmatprep.subr.bf16.mxu0 0
    %6304 = vmatpush1.bf16.msra.mxu0 %v5085
    %6305 = vmatprep.subr.bf16.mxu0 0
    %6306 = vmatpush1.bf16.msra.mxu0 %v5092
    %6307 = vmatprep.subr.bf16.mxu0 0
    %6308 = vmatpush1.bf16.msra.mxu0 %v5099
    %6309 = vmatprep.subr.bf16.mxu0 0
    %6310 = vmatpush1.bf16.msra.mxu0 %v5106
    %6311 = vmatprep.subr.bf16.mxu0 0
    %6312 = vmatpush1.bf16.msra.mxu0 %v5113
    %6313 = vmatprep.subr.bf16.mxu0 0
    %6314 = vmatpush1.bf16.msra.mxu0 %v5120
    %6315 = vmatprep.subr.bf16.mxu0 0
    %6316 = vmatpush1.bf16.msra.mxu0 %v5127
    %6317 = vmatprep.subr.bf16.mxu0 0
    %6318 = vmatpush1.bf16.msra.mxu0 %v5134
    %6319 = vmatprep.subr.bf16.mxu0 0
    %6320 = vmatpush1.bf16.msra.mxu0 %v5141
    %6321 = vmatprep.subr.bf16.mxu0 0
    %6322 = vmatpush1.bf16.msra.mxu0 %v5148
    %6323 = vmatprep.subr.bf16.mxu0 0
    %6324 = vmatpush1.bf16.msra.mxu0 %v5155
    %6325 = vmatprep.subr.bf16.mxu0 0
    %6326 = vmatpush1.bf16.msra.mxu0 %v5162
    %6327 = vmatprep.mubr.bf16.mxu0 %v2867
    %6328 = vmatmul.mubr.bf16.gmra.mrb[0].mxu0 %v2866
    %v6329 = vpop.f32.mrb[0].mxu0
    %v6330 = vadd.f32 %v6290, %v6329
    %v6331 = vpop.f32.mrb[0].mxu0
    %v6332 = vpop.f32.mrb[0].mxu0
    %v6333 = vpop.f32.mrb[0].mxu0
    %6334 = vdwg.mxu0
    %6335 = vmatprep.subr.bf16.mxu0 0
    %6336 = vmatpush1.bf16.msra.mxu0 %v5169
    %6337 = vmatprep.subr.bf16.mxu0 0
    %6338 = vmatpush1.bf16.msra.mxu0 %v5176
    %6339 = vmatprep.subr.bf16.mxu0 0
    %6340 = vmatpush1.bf16.msra.mxu0 %v5183
    %6341 = vmatprep.subr.bf16.mxu0 0
    %6342 = vmatpush1.bf16.msra.mxu0 %v5190
    %6343 = vmatprep.subr.bf16.mxu0 0
    %6344 = vmatpush1.bf16.msra.mxu0 %v5197
    %6345 = vmatprep.subr.bf16.mxu0 0
    %6346 = vmatpush1.bf16.msra.mxu0 %v5204
    %6347 = vmatprep.subr.bf16.mxu0 0
    %6348 = vmatpush1.bf16.msra.mxu0 %v5211
    %6349 = vmatprep.subr.bf16.mxu0 0
    %6350 = vmatpush1.bf16.msra.mxu0 %v5218
    %6351 = vmatprep.subr.bf16.mxu0 0
    %6352 = vmatpush1.bf16.msra.mxu0 %v5225
    %6353 = vmatprep.subr.bf16.mxu0 0
    %6354 = vmatpush1.bf16.msra.mxu0 %v5232
    %6355 = vmatprep.subr.bf16.mxu0 0
    %6356 = vmatpush1.bf16.msra.mxu0 %v5239
    %6357 = vmatprep.subr.bf16.mxu0 0
    %6358 = vmatpush1.bf16.msra.mxu0 %v5246
    %6359 = vmatprep.subr.bf16.mxu0 0
    %6360 = vmatpush1.bf16.msra.mxu0 %v5253
    %6361 = vmatprep.subr.bf16.mxu0 0
    %6362 = vmatpush1.bf16.msra.mxu0 %v5260
    %6363 = vmatprep.subr.bf16.mxu0 0
    %6364 = vmatpush1.bf16.msra.mxu0 %v5267
    %6365 = vmatprep.subr.bf16.mxu0 0
    %6366 = vmatpush1.bf16.msra.mxu0 %v5274
    %6367 = vmatprep.mubr.bf16.mxu0 %v2869
    %6368 = vmatmul.mubr.bf16.gmra.mrb[0].mxu0 %v2868
    %v6369 = vpop.f32.mrb[0].mxu0
    %v6370 = vadd.f32 %v6330, %v6369
    %v6371 = vpop.f32.mrb[0].mxu0
    %v6372 = vpop.f32.mrb[0].mxu0
    %v6373 = vpop.f32.mrb[0].mxu0
    %6374 = vdwg.mxu0
    %v6375 = vtanh.pop %v5881
    %v6376 = vtanh.pop %v5883
    %v6377 = vtanh.pop %v6045
    %v6378 = vtanh.pop %v6047
    %v6379 = vtanh.pop %v6209
    %v6380 = vtanh.pop %v6211
    %v6381 = vtanh.pop %v6370
    %6382 = vst [vmem:[#allocation17] sm:$0xff] %v6375
    %6383 = vst [vmem:[#allocation17 + $0x8] sm:$0xff] %v6376
    %6384 = vst [vmem:[#allocation17 + $0x10] sm:$0xff] %v6377
    %6385 = vst [vmem:[#allocation17 + $0x18] sm:$0xff] %v6378
    %6386 = vst [vmem:[#allocation17 + $0x20] sm:$0xff] %v6379
    %6387 = vst [vmem:[#allocation17 + $0x28] sm:$0xff] %v6380
    %6388 = vst [vmem:[#allocation17 + $0x30] sm:$0xff] %v6381
    // Predicated region
    $region74: #{tpu_custom_call.1} parent=1 // pred_check
      _
    $region75: #{tpu_custom_call.1} parent=1 // pred_check_branch
      %6390 = sbr.rel (0) target = $region77
    $region76: #{tpu_custom_call.1} parent=1 // pred_region
      %s6392 = ssub.s32 896, 896
      %6393 = vsyncadd [#allocation4], %s6392
      %s6395 = sshll.u32 [#allocation17], 4
      %s6396 = int_to_ptr.vmem [resolvable:$true] %s6395
      %6398 = dma.vmem_to_hbm [thread:$0]  %s6396, 896, %s9, [#allocation4]
    $region77: #{tpu_custom_call.1} parent=1 // pred_fallthru
      _
    // Predicated region
    $region78: #{tpu_custom_call.1} parent=1 // pred_check
      _
    $region79: #{tpu_custom_call.1} parent=1 // pred_check_branch
      %6400 = sbr.rel (0) target = $region81
    $region80: #{tpu_custom_call.1} parent=1 // pred_region
      %6401 = dma.done [#allocation4], 896
    $region81: #{tpu_custom_call.1} parent=1 // pred_fallthru
      _
    %6402 = vsyncpa [#allocation3], 1
    %6403 = vsyncpa [#allocation6], 1
    %6404 = vsyncpa [#allocation9], 1
    %6405 = vsyncpa [#allocation12], 1
    %6406 = vsyncpa [#allocation15], 1
    %6407 = vsyncpa [#allocation4], 1

</llo_original>
